<compile_context>
chip_gen: v7x
topology: tpu7x:2x2x1
jax: 0.10.0
libtpu: 0.0.40
codegen_flags: <defaults>
</compile_context>

<pallas_src>
import jax
import jax.numpy as jnp
from jax.experimental import pallas as pl
from jax.experimental.pallas import tpu as pltpu

_LANE = 128


def _resblock_kernel(
    pts_ref, views_ref, h_ref,                     # activations [TN, *]
    w0p_ref, w0h_ref, b0_ref,                      # pts_linears[0] (split)
    w1_ref, b1_ref,                                # pts_linears[1]
    wfa_ref, bfa_ref,                              # feature_linear + alpha_linear (fused, lane padded)
    wvf_ref, wvv_ref, bv_ref,                      # views_linear (split)
    wr_ref, br_ref,                                # rgb_linear (lane padded to 128)
    packed_ref, hout_ref,                          # outputs
):
    f32 = jnp.float32
    bf16 = jnp.bfloat16

    W = w0h_ref.shape[0]              # net width
    input_ch = w0p_ref.shape[0]
    input_ch_views = wvv_ref.shape[0]

    # ---- layer 0: h = relu(cat([pts, h]) @ W0 + b0) -------------------------
    # K=W half on the MXU (bf16 inputs, f32 accumulate).
    acc = jnp.dot(h_ref[...], w0h_ref[...], preferred_element_type=f32)
    acc = acc + b0_ref[...]
    # K=3 half on the VPU: broadcast FMAs (overlaps with MXU work, no wasted
    # MXU push for a 3-deep contraction).
    pts = pts_ref[...]
    for k in range(input_ch):
        acc = acc + pts[:, k:k + 1] * w0p_ref[k:k + 1, :]
    h = jnp.maximum(acc, 0.0)

    # ---- layer 1: h = relu(h @ W1 + b1) --------------------------------------
    h = jnp.dot(h.astype(bf16), w1_ref[...], preferred_element_type=f32) + b1_ref[...]
    h = jnp.maximum(h, 0.0)

    # ---- fused feature_linear + alpha_linear ---------------------------------
    # wfa = [wf | wa | 0...] -> one MXU pass produces feature0 and alpha.
    fa = jnp.dot(h.astype(bf16), wfa_ref[...], preferred_element_type=f32) + bfa_ref[...]
    feature0 = fa[:, :W]
    alpha = fa[:, W:W + 1]

    # ---- views_linear: h0 = relu(cat([feature0, views]) @ Wv + bv) -----------
    acc0 = jnp.dot(feature0.astype(bf16), wvf_ref[...], preferred_element_type=f32)
    acc0 = acc0 + bv_ref[...]
    views = views_ref[...]
    for k in range(input_ch_views):
        acc0 = acc0 + views[:, k:k + 1] * wvv_ref[k:k + 1, :]
    h0 = jnp.maximum(acc0, 0.0)

    # ---- rgb_linear (output lane-padded to 128, cols 3: are zero) ------------
    rgb_slab = jnp.dot(h0.astype(bf16), wr_ref[...], preferred_element_type=f32) + br_ref[...]

    # Pack rgb (cols 0:3) and alpha (col 3) into one lane-dense slab.
    col = jax.lax.broadcasted_iota(jnp.int32, rgb_slab.shape, 1)
    packed_ref[...] = jnp.where(col == 3, alpha, rgb_slab)
    hout_ref[...] = h


def bungee_nerf_resblock(input_pts, input_views, h, params, *, tile_n=512):
    """Pallas implementation of Bungee_NeRF_resblock.forward.

    input_pts:   [N, input_ch]        float32
    input_views: [N, input_ch_views]  float32
    h:           [N, net_width]       float32
    returns (rgb [N,3], alpha [N,1], h [N,net_width])
    """
    N, input_ch = input_pts.shape
    input_ch_views = input_views.shape[-1]
    W = h.shape[-1]
    Wh = W // 2

    (w0p, w0h, b0, w1, b1, wa, ba, wf, bf, wvf, wvv, bv, wr, br) = params

    f32 = jnp.float32
    bf16 = jnp.bfloat16

    # ---- parameter prep (layout plumbing) ------------------------------------
    # Fuse alpha_linear into feature_linear and pad to a multiple of 128 lanes.
    wfa = jnp.concatenate([wf, wa, jnp.zeros((W, _LANE - 1), f32)], axis=1).astype(bf16)
    bfa = jnp.concatenate([bf, ba, jnp.zeros((_LANE - 1,), f32)]).reshape(1, -1)
    # Pad rgb_linear output to a full 128-lane slab (cols 3: stay zero).
    wr_pad = jnp.pad(wr, ((0, 0), (0, _LANE - 3))).astype(bf16)
    br_pad = jnp.pad(br, ((0, _LANE - 3),)).reshape(1, -1)

    # bf16 weights for the MXU-bound matmuls; tiny K=3 weights stay f32 (VPU path).
    w0h_b = w0h.astype(bf16)
    w1_b = w1.astype(bf16)
    wvf_b = wvf.astype(bf16)

    b0 = b0.reshape(1, -1)
    b1 = b1.reshape(1, -1)
    bv = bv.reshape(1, -1)

    # bf16 h activation halves its HBM read bytes; pts/views stay f32.
    h_b = h.astype(bf16)

    # ---- pad batch to a multiple of tile_n ------------------------------------
    n_tiles = (N + tile_n - 1) // tile_n
    Npad = n_tiles * tile_n
    pad = Npad - N
    if pad:
        input_pts = jnp.pad(input_pts, ((0, pad), (0, 0)))
        input_views = jnp.pad(input_views, ((0, pad), (0, 0)))
        h_b = jnp.pad(h_b, ((0, pad), (0, 0)))

    grid = (n_tiles,)

    def act_spec(feat):
        return pl.BlockSpec((tile_n, feat), lambda i: (i, 0))

    def full_spec(shape):
        return pl.BlockSpec(shape, lambda i: (0, 0))

    in_specs = [
        act_spec(input_ch),          # input_pts
        act_spec(input_ch_views),    # input_views
        act_spec(W),                 # h (bf16)
        full_spec(w0p.shape), full_spec(w0h_b.shape), full_spec(b0.shape),
        full_spec(w1_b.shape), full_spec(b1.shape),
        full_spec(wfa.shape), full_spec(bfa.shape),
        full_spec(wvf_b.shape), full_spec(wvv.shape), full_spec(bv.shape),
        full_spec(wr_pad.shape), full_spec(br_pad.shape),
    ]
    out_specs = [
        act_spec(_LANE),   # packed rgb/alpha slab
        act_spec(W),       # h
    ]
    out_shapes = (
        jax.ShapeDtypeStruct((Npad, _LANE), f32),
        jax.ShapeDtypeStruct((Npad, W), f32),
    )

    flops = 2 * Npad * ((input_ch + W) * W + W * W + W * (W + 1)
                        + (W + input_ch_views) * Wh + Wh * 3)
    weight_bytes = ((input_ch * W + input_ch_views * Wh) * 4            # f32 K=3 weights
                    + (W * W * 2 + W * (W + _LANE) + W * Wh + Wh * _LANE) * 2  # bf16 weights
                    + (W * 2 + (W + _LANE) + Wh + _LANE) * 4)            # biases
    bytes_accessed = (Npad * (input_ch + input_ch_views) * 4 + Npad * W * 2   # inputs
                      + weight_bytes
                      + Npad * (_LANE + W) * 4)                               # outputs
    cost = pl.CostEstimate(flops=flops, transcendentals=0,
                           bytes_accessed=bytes_accessed)

    packed, h_out = pl.pallas_call(
        _resblock_kernel,
        out_shape=out_shapes,
        grid_spec=pltpu.PrefetchScalarGridSpec(
            num_scalar_prefetch=0,
            grid=grid,
            in_specs=in_specs,
            out_specs=out_specs,
        ),
        compiler_params=pltpu.CompilerParams(
            dimension_semantics=("parallel",),
            vmem_limit_bytes=48 * 1024 * 1024,
        ),
        cost_estimate=cost,
    )(input_pts, input_views, h_b,
      w0p, w0h_b, b0, w1_b, b1, wfa, bfa, wvf_b, wvv, bv, wr_pad, br_pad)

    rgb = packed[:N, :3]
    alpha = packed[:N, 3:4]
    return rgb, alpha, h_out[:N]


def init_params(key, net_width=256, input_ch=3, input_ch_views=3):
    """Deterministic synthetic parameters, stored as [in, out]."""
    W, Wh = net_width, net_width // 2
    ks = jax.random.split(key, 14)

    def lin(k, fin, fout):
        scale = 1.0 / jnp.sqrt(jnp.float32(fin))
        return jax.random.uniform(k, (fin, fout), jnp.float32, -scale, scale)

    # pts_linears[0]: Linear(input_ch + W, W)  -> split into pts / h parts
    w0_full = lin(ks[0], input_ch + W, W)
    w0p, w0h = w0_full[:input_ch], w0_full[input_ch:]
    b0 = jax.random.uniform(ks[1], (W,), jnp.float32, -0.05, 0.05)
    # pts_linears[1]: Linear(W, W)
    w1 = lin(ks[2], W, W)
    b1 = jax.random.uniform(ks[3], (W,), jnp.float32, -0.05, 0.05)
    # alpha_linear: Linear(W, 1)
    wa = lin(ks[4], W, 1)
    ba = jax.random.uniform(ks[5], (1,), jnp.float32, -0.05, 0.05)
    # feature_linear: Linear(W, W)
    wf = lin(ks[6], W, W)
    bf = jax.random.uniform(ks[7], (W,), jnp.float32, -0.05, 0.05)
    # views_linear: Linear(input_ch_views + W, W//2) -> split feature / views
    wv_full = lin(ks[8], W + input_ch_views, Wh)
    wvf, wvv = wv_full[:W], wv_full[W:]
    bv = jax.random.uniform(ks[9], (Wh,), jnp.float32, -0.05, 0.05)
    # rgb_linear: Linear(W//2, 3)
    wr = lin(ks[10], Wh, 3)
    br = jax.random.uniform(ks[11], (3,), jnp.float32, -0.05, 0.05)

    return (w0p, w0h, b0, w1, b1, wa, ba, wf, bf, wvf, wvv, bv, wr, br)


def reference_forward(input_pts, input_views, h, params):
    """Pure-JAX f32 reference (mirrors the PyTorch module)."""
    (w0p, w0h, b0, w1, b1, wa, ba, wf, bf, wvf, wvv, bv, wr, br) = params
    x = jnp.concatenate([input_pts, h], -1)
    w0 = jnp.concatenate([w0p, w0h], 0)
    h = jax.nn.relu(x @ w0 + b0)
    h = jax.nn.relu(h @ w1 + b1)
    alpha = h @ wa + ba
    feature0 = h @ wf + bf
    h0 = jnp.concatenate([feature0, input_views], -1)
    wv = jnp.concatenate([wvf, wvv], 0)
    h0 = jax.nn.relu(h0 @ wv + bv)
    rgb = h0 @ wr + br
    return rgb, alpha, h


if __name__ == "__main__":
    net_width = 256
    input_ch = 3
    input_ch_views = 3
    N = 600            # deliberately not a tile multiple: exercises tail padding

    key = jax.random.PRNGKey(0)
    kp, kv, kh, kw = jax.random.split(key, 4)
    input_pts = jax.random.normal(kp, (N, input_ch), jnp.float32)
    input_views = jax.random.normal(kv, (N, input_ch_views), jnp.float32)
    h_in = jax.random.normal(kh, (N, net_width), jnp.float32)
    params = init_params(kw, net_width, input_ch, input_ch_views)

    rgb, alpha, h_out = bungee_nerf_resblock(
        input_pts, input_views, h_in, params, tile_n=512)
    jax.block_until_ready((rgb, alpha, h_out))

    rgb_ref, alpha_ref, h_ref = reference_forward(
        input_pts, input_views, h_in, params)

    # bf16 matmul inputs (f32 accumulation) -> loosened tolerances vs f32 reference.
    assert jnp.allclose(rgb, rgb_ref, atol=5e-2, rtol=5e-2), \
        float(jnp.max(jnp.abs(rgb - rgb_ref)))
    assert jnp.allclose(alpha, alpha_ref, atol=5e-2, rtol=5e-2), \
        float(jnp.max(jnp.abs(alpha - alpha_ref)))
    assert jnp.allclose(h_out, h_ref, atol=5e-2, rtol=5e-2), \
        float(jnp.max(jnp.abs(h_out - h_ref)))

    print("KERNEL_OK")
</pallas_src>

<mosaic_0001>
module attributes {stable_mosaic.version = 11 : i64} {
  func.func @_resblock_kernel(%arg0: i32, %arg1: memref<512x3xf32, #tpu.memory_space<vmem>>, %arg2: memref<512x3xf32, #tpu.memory_space<vmem>>, %arg3: memref<512x256xbf16, #tpu.memory_space<vmem>>, %arg4: memref<3x256xf32, #tpu.memory_space<vmem>>, %arg5: memref<256x256xbf16, #tpu.memory_space<vmem>>, %arg6: memref<1x256xf32, #tpu.memory_space<vmem>>, %arg7: memref<256x256xbf16, #tpu.memory_space<vmem>>, %arg8: memref<1x256xf32, #tpu.memory_space<vmem>>, %arg9: memref<256x384xbf16, #tpu.memory_space<vmem>>, %arg10: memref<1x384xf32, #tpu.memory_space<vmem>>, %arg11: memref<256x128xbf16, #tpu.memory_space<vmem>>, %arg12: memref<3x128xf32, #tpu.memory_space<vmem>>, %arg13: memref<1x128xf32, #tpu.memory_space<vmem>>, %arg14: memref<128x128xbf16, #tpu.memory_space<vmem>>, %arg15: memref<1x128xf32, #tpu.memory_space<vmem>>, %arg16: memref<512x128xf32, #tpu.memory_space<vmem>>, %arg17: memref<512x256xf32, #tpu.memory_space<vmem>>) attributes {dimension_semantics = [#tpu.dimension_semantics<parallel>], iteration_bounds = array<i64: 2>, scalar_prefetch = 0 : i64, scratch_operands = 0 : i64, tpu.core_type = #tpu.core_type<tc>, window_params = [{transform_indices = @transform_0, window_bounds = array<i64: 512, 3>}, {transform_indices = @transform_1, window_bounds = array<i64: 512, 3>}, {transform_indices = @transform_2, window_bounds = array<i64: 512, 256>}, {pipeline_mode = #tpu.pipeline_mode<synchronous>, transform_indices = @transform_3, window_bounds = array<i64: 3, 256>}, {pipeline_mode = #tpu.pipeline_mode<synchronous>, transform_indices = @transform_4, window_bounds = array<i64: 256, 256>}, {pipeline_mode = #tpu.pipeline_mode<synchronous>, transform_indices = @transform_5, window_bounds = array<i64: 1, 256>}, {pipeline_mode = #tpu.pipeline_mode<synchronous>, transform_indices = @transform_6, window_bounds = array<i64: 256, 256>}, {pipeline_mode = #tpu.pipeline_mode<synchronous>, transform_indices = @transform_7, window_bounds = array<i64: 1, 256>}, {pipeline_mode = #tpu.pipeline_mode<synchronous>, transform_indices = @transform_8, window_bounds = array<i64: 256, 384>}, {pipeline_mode = #tpu.pipeline_mode<synchronous>, transform_indices = @transform_9, window_bounds = array<i64: 1, 384>}, {pipeline_mode = #tpu.pipeline_mode<synchronous>, transform_indices = @transform_10, window_bounds = array<i64: 256, 128>}, {pipeline_mode = #tpu.pipeline_mode<synchronous>, transform_indices = @transform_11, window_bounds = array<i64: 3, 128>}, {pipeline_mode = #tpu.pipeline_mode<synchronous>, transform_indices = @transform_12, window_bounds = array<i64: 1, 128>}, {pipeline_mode = #tpu.pipeline_mode<synchronous>, transform_indices = @transform_13, window_bounds = array<i64: 128, 128>}, {pipeline_mode = #tpu.pipeline_mode<synchronous>, transform_indices = @transform_14, window_bounds = array<i64: 1, 128>}, {transform_indices = @transform_15, window_bounds = array<i64: 512, 128>}, {transform_indices = @transform_16, window_bounds = array<i64: 512, 256>}]} {
    %c0 = arith.constant 0 : index
    %c0_0 = arith.constant 0 : index
    %0 = vector.load %arg3[%c0, %c0_0] : memref<512x256xbf16, #tpu.memory_space<vmem>>, vector<512x256xbf16>
    %c0_1 = arith.constant 0 : index
    %c0_2 = arith.constant 0 : index
    %1 = vector.load %arg5[%c0_1, %c0_2] : memref<256x256xbf16, #tpu.memory_space<vmem>>, vector<256x256xbf16>
    %cst = arith.constant dense<0.000000e+00> : vector<512x256xf32>
    %2 = tpu.matmul %0, %1, %cst {dimension_numbers = #tpu.dot_dimension_numbers<[1], [0], [0], [1], [0, 0, 1, 1], [], []>} : vector<512x256xbf16>, vector<256x256xbf16>, vector<512x256xf32> -> vector<512x256xf32>
    %c0_3 = arith.constant 0 : index
    %c0_4 = arith.constant 0 : index
    %3 = vector.load %arg6[%c0_3, %c0_4] : memref<1x256xf32, #tpu.memory_space<vmem>>, vector<1x256xf32>
    %4 = vector.broadcast %3 : vector<1x256xf32> to vector<512x256xf32>
    %5 = arith.addf %2, %4 : vector<512x256xf32>
    %c0_5 = arith.constant 0 : index
    %c0_6 = arith.constant 0 : index
    %6 = vector.load %arg1[%c0_5, %c0_6] : memref<512x3xf32, #tpu.memory_space<vmem>>, vector<512x3xf32>
    %7 = vector.extract_strided_slice %6 {offsets = [0, 0], sizes = [512, 1], strides = [1, 1]} : vector<512x3xf32> to vector<512x1xf32>
    %c0_7 = arith.constant 0 : index
    %c0_8 = arith.constant 0 : index
    %8 = vector.load %arg4[%c0_7, %c0_8] : memref<3x256xf32, #tpu.memory_space<vmem>>, vector<1x256xf32>
    %9 = vector.broadcast %7 : vector<512x1xf32> to vector<512x256xf32>
    %10 = vector.broadcast %8 : vector<1x256xf32> to vector<512x256xf32>
    %11 = arith.mulf %9, %10 : vector<512x256xf32>
    %12 = arith.addf %5, %11 : vector<512x256xf32>
    %13 = vector.extract_strided_slice %6 {offsets = [0, 1], sizes = [512, 1], strides = [1, 1]} : vector<512x3xf32> to vector<512x1xf32>
    %c1 = arith.constant 1 : index
    %c0_9 = arith.constant 0 : index
    %14 = vector.load %arg4[%c1, %c0_9] : memref<3x256xf32, #tpu.memory_space<vmem>>, vector<1x256xf32>
    %15 = vector.broadcast %13 : vector<512x1xf32> to vector<512x256xf32>
    %16 = vector.broadcast %14 : vector<1x256xf32> to vector<512x256xf32>
    %17 = arith.mulf %15, %16 : vector<512x256xf32>
    %18 = arith.addf %12, %17 : vector<512x256xf32>
    %19 = vector.extract_strided_slice %6 {offsets = [0, 2], sizes = [512, 1], strides = [1, 1]} : vector<512x3xf32> to vector<512x1xf32>
    %c2 = arith.constant 2 : index
    %c0_10 = arith.constant 0 : index
    %20 = vector.load %arg4[%c2, %c0_10] : memref<3x256xf32, #tpu.memory_space<vmem>>, vector<1x256xf32>
    %21 = vector.broadcast %19 : vector<512x1xf32> to vector<512x256xf32>
    %22 = vector.broadcast %20 : vector<1x256xf32> to vector<512x256xf32>
    %23 = arith.mulf %21, %22 : vector<512x256xf32>
    %24 = arith.addf %18, %23 : vector<512x256xf32>
    %cst_11 = arith.constant 0.000000e+00 : f32
    %25 = vector.broadcast %cst_11 : f32 to vector<512x256xf32>
    %26 = arith.maximumf %24, %25 : vector<512x256xf32>
    %27 = arith.truncf %26 : vector<512x256xf32> to vector<512x256xbf16>
    %c0_12 = arith.constant 0 : index
    %c0_13 = arith.constant 0 : index
    %28 = vector.load %arg7[%c0_12, %c0_13] : memref<256x256xbf16, #tpu.memory_space<vmem>>, vector<256x256xbf16>
    %cst_14 = arith.constant dense<0.000000e+00> : vector<512x256xf32>
    %29 = tpu.matmul %27, %28, %cst_14 {dimension_numbers = #tpu.dot_dimension_numbers<[1], [0], [0], [1], [0, 0, 1, 1], [], []>} : vector<512x256xbf16>, vector<256x256xbf16>, vector<512x256xf32> -> vector<512x256xf32>
    %c0_15 = arith.constant 0 : index
    %c0_16 = arith.constant 0 : index
    %30 = vector.load %arg8[%c0_15, %c0_16] : memref<1x256xf32, #tpu.memory_space<vmem>>, vector<1x256xf32>
    %31 = vector.broadcast %30 : vector<1x256xf32> to vector<512x256xf32>
    %32 = arith.addf %29, %31 : vector<512x256xf32>
    %cst_17 = arith.constant 0.000000e+00 : f32
    %33 = vector.broadcast %cst_17 : f32 to vector<512x256xf32>
    %34 = arith.maximumf %32, %33 : vector<512x256xf32>
    %35 = arith.truncf %34 : vector<512x256xf32> to vector<512x256xbf16>
    %c0_18 = arith.constant 0 : index
    %c0_19 = arith.constant 0 : index
    %36 = vector.load %arg9[%c0_18, %c0_19] : memref<256x384xbf16, #tpu.memory_space<vmem>>, vector<256x384xbf16>
    %cst_20 = arith.constant dense<0.000000e+00> : vector<512x384xf32>
    %37 = tpu.matmul %35, %36, %cst_20 {dimension_numbers = #tpu.dot_dimension_numbers<[1], [0], [0], [1], [0, 0, 1, 1], [], []>} : vector<512x256xbf16>, vector<256x384xbf16>, vector<512x384xf32> -> vector<512x384xf32>
    %c0_21 = arith.constant 0 : index
    %c0_22 = arith.constant 0 : index
    %38 = vector.load %arg10[%c0_21, %c0_22] : memref<1x384xf32, #tpu.memory_space<vmem>>, vector<1x384xf32>
    %39 = vector.broadcast %38 : vector<1x384xf32> to vector<512x384xf32>
    %40 = arith.addf %37, %39 : vector<512x384xf32>
    %41 = vector.extract_strided_slice %40 {offsets = [0, 0], sizes = [512, 256], strides = [1, 1]} : vector<512x384xf32> to vector<512x256xf32>
    %42 = vector.extract_strided_slice %40 {offsets = [0, 256], sizes = [512, 1], strides = [1, 1]} : vector<512x384xf32> to vector<512x1xf32>
    %43 = arith.truncf %41 : vector<512x256xf32> to vector<512x256xbf16>
    %c0_23 = arith.constant 0 : index
    %c0_24 = arith.constant 0 : index
    %44 = vector.load %arg11[%c0_23, %c0_24] : memref<256x128xbf16, #tpu.memory_space<vmem>>, vector<256x128xbf16>
    %cst_25 = arith.constant dense<0.000000e+00> : vector<512x128xf32>
    %45 = tpu.matmul %43, %44, %cst_25 {dimension_numbers = #tpu.dot_dimension_numbers<[1], [0], [0], [1], [0, 0, 1, 1], [], []>} : vector<512x256xbf16>, vector<256x128xbf16>, vector<512x128xf32> -> vector<512x128xf32>
    %c0_26 = arith.constant 0 : index
    %c0_27 = arith.constant 0 : index
    %46 = vector.load %arg13[%c0_26, %c0_27] : memref<1x128xf32, #tpu.memory_space<vmem>>, vector<1x128xf32>
    %47 = vector.broadcast %46 : vector<1x128xf32> to vector<512x128xf32>
    %48 = arith.addf %45, %47 : vector<512x128xf32>
    %c0_28 = arith.constant 0 : index
    %c0_29 = arith.constant 0 : index
    %49 = vector.load %arg2[%c0_28, %c0_29] : memref<512x3xf32, #tpu.memory_space<vmem>>, vector<512x3xf32>
    %50 = vector.extract_strided_slice %49 {offsets = [0, 0], sizes = [512, 1], strides = [1, 1]} : vector<512x3xf32> to vector<512x1xf32>
    %c0_30 = arith.constant 0 : index
    %c0_31 = arith.constant 0 : index
    %51 = vector.load %arg12[%c0_30, %c0_31] : memref<3x128xf32, #tpu.memory_space<vmem>>, vector<1x128xf32>
    %52 = vector.broadcast %50 : vector<512x1xf32> to vector<512x128xf32>
    %53 = vector.broadcast %51 : vector<1x128xf32> to vector<512x128xf32>
    %54 = arith.mulf %52, %53 : vector<512x128xf32>
    %55 = arith.addf %48, %54 : vector<512x128xf32>
    %56 = vector.extract_strided_slice %49 {offsets = [0, 1], sizes = [512, 1], strides = [1, 1]} : vector<512x3xf32> to vector<512x1xf32>
    %c1_32 = arith.constant 1 : index
    %c0_33 = arith.constant 0 : index
    %57 = vector.load %arg12[%c1_32, %c0_33] : memref<3x128xf32, #tpu.memory_space<vmem>>, vector<1x128xf32>
    %58 = vector.broadcast %56 : vector<512x1xf32> to vector<512x128xf32>
    %59 = vector.broadcast %57 : vector<1x128xf32> to vector<512x128xf32>
    %60 = arith.mulf %58, %59 : vector<512x128xf32>
    %61 = arith.addf %55, %60 : vector<512x128xf32>
    %62 = vector.extract_strided_slice %49 {offsets = [0, 2], sizes = [512, 1], strides = [1, 1]} : vector<512x3xf32> to vector<512x1xf32>
    %c2_34 = arith.constant 2 : index
    %c0_35 = arith.constant 0 : index
    %63 = vector.load %arg12[%c2_34, %c0_35] : memref<3x128xf32, #tpu.memory_space<vmem>>, vector<1x128xf32>
    %64 = vector.broadcast %62 : vector<512x1xf32> to vector<512x128xf32>
    %65 = vector.broadcast %63 : vector<1x128xf32> to vector<512x128xf32>
    %66 = arith.mulf %64, %65 : vector<512x128xf32>
    %67 = arith.addf %61, %66 : vector<512x128xf32>
    %cst_36 = arith.constant 0.000000e+00 : f32
    %68 = vector.broadcast %cst_36 : f32 to vector<512x128xf32>
    %69 = arith.maximumf %67, %68 : vector<512x128xf32>
    %70 = arith.truncf %69 : vector<512x128xf32> to vector<512x128xbf16>
    %c0_37 = arith.constant 0 : index
    %c0_38 = arith.constant 0 : index
    %71 = vector.load %arg14[%c0_37, %c0_38] : memref<128x128xbf16, #tpu.memory_space<vmem>>, vector<128x128xbf16>
    %cst_39 = arith.constant dense<0.000000e+00> : vector<512x128xf32>
    %72 = tpu.matmul %70, %71, %cst_39 {dimension_numbers = #tpu.dot_dimension_numbers<[1], [0], [0], [1], [0, 0, 1, 1], [], []>} : vector<512x128xbf16>, vector<128x128xbf16>, vector<512x128xf32> -> vector<512x128xf32>
    %c0_40 = arith.constant 0 : index
    %c0_41 = arith.constant 0 : index
    %73 = vector.load %arg15[%c0_40, %c0_41] : memref<1x128xf32, #tpu.memory_space<vmem>>, vector<1x128xf32>
    %74 = vector.broadcast %73 : vector<1x128xf32> to vector<512x128xf32>
    %75 = arith.addf %72, %74 : vector<512x128xf32>
    %76 = tpu.iota {dimensions = array<i32: 1>} : vector<512x128xi32>
    %c3_i32 = arith.constant 3 : i32
    %77 = vector.broadcast %c3_i32 : i32 to vector<512x128xi32>
    %78 = arith.cmpi eq, %76, %77 : vector<512x128xi32>
    %79 = vector.shape_cast %42 : vector<512x1xf32> to vector<512x1xf32>
    %80 = vector.broadcast %79 : vector<512x1xf32> to vector<512x128xf32>
    %81 = arith.select %78, %80, %75 : vector<512x128xi1>, vector<512x128xf32>
    %c0_42 = arith.constant 0 : index
    %c0_43 = arith.constant 0 : index
    %82 = vector.load %arg16[%c0_42, %c0_43] : memref<512x128xf32, #tpu.memory_space<vmem>>, vector<512x128xf32>
    tpu.vector_store %arg16[%c0_42, %c0_43], %81 {strides = array<i32>} : memref<512x128xf32, #tpu.memory_space<vmem>>, vector<512x128xf32>,
    %c0_44 = arith.constant 0 : index
    %c0_45 = arith.constant 0 : index
    %83 = vector.load %arg17[%c0_44, %c0_45] : memref<512x256xf32, #tpu.memory_space<vmem>>, vector<512x256xf32>
    tpu.vector_store %arg17[%c0_44, %c0_45], %34 {strides = array<i32>} : memref<512x256xf32, #tpu.memory_space<vmem>>, vector<512x256xf32>,
    return
  }
  func.func @transform_0(%arg0: i32) -> (i32, i32) {
    %c0_i32 = arith.constant 0 : i32
    %c0_i32_0 = arith.constant 0 : i32
    return %arg0, %c0_i32 : i32, i32
  }
  func.func @transform_1(%arg0: i32) -> (i32, i32) {
    %c0_i32 = arith.constant 0 : i32
    %c0_i32_0 = arith.constant 0 : i32
    return %arg0, %c0_i32 : i32, i32
  }
  func.func @transform_2(%arg0: i32) -> (i32, i32) {
    %c0_i32 = arith.constant 0 : i32
    %c0_i32_0 = arith.constant 0 : i32
    return %arg0, %c0_i32 : i32, i32
  }
  func.func @transform_3(%arg0: i32) -> (i32, i32) {
    %c0_i32 = arith.constant 0 : i32
    %c0_i32_0 = arith.constant 0 : i32
    %c0_i32_1 = arith.constant 0 : i32
    return %c0_i32, %c0_i32_0 : i32, i32
  }
  func.func @transform_4(%arg0: i32) -> (i32, i32) {
    %c0_i32 = arith.constant 0 : i32
    %c0_i32_0 = arith.constant 0 : i32
    %c0_i32_1 = arith.constant 0 : i32
    return %c0_i32, %c0_i32_0 : i32, i32
  }
  func.func @transform_5(%arg0: i32) -> (i32, i32) {
    %c0_i32 = arith.constant 0 : i32
    %c0_i32_0 = arith.constant 0 : i32
    %c0_i32_1 = arith.constant 0 : i32
    return %c0_i32, %c0_i32_0 : i32, i32
  }
  func.func @transform_6(%arg0: i32) -> (i32, i32) {
    %c0_i32 = arith.constant 0 : i32
    %c0_i32_0 = arith.constant 0 : i32
    %c0_i32_1 = arith.constant 0 : i32
    return %c0_i32, %c0_i32_0 : i32, i32
  }
  func.func @transform_7(%arg0: i32) -> (i32, i32) {
    %c0_i32 = arith.constant 0 : i32
    %c0_i32_0 = arith.constant 0 : i32
    %c0_i32_1 = arith.constant 0 : i32
    return %c0_i32, %c0_i32_0 : i32, i32
  }
  func.func @transform_8(%arg0: i32) -> (i32, i32) {
    %c0_i32 = arith.constant 0 : i32
    %c0_i32_0 = arith.constant 0 : i32
    %c0_i32_1 = arith.constant 0 : i32
    return %c0_i32, %c0_i32_0 : i32, i32
  }
  func.func @transform_9(%arg0: i32) -> (i32, i32) {
    %c0_i32 = arith.constant 0 : i32
    %c0_i32_0 = arith.constant 0 : i32
    %c0_i32_1 = arith.constant 0 : i32
    return %c0_i32, %c0_i32_0 : i32, i32
  }
  func.func @transform_10(%arg0: i32) -> (i32, i32) {
    %c0_i32 = arith.constant 0 : i32
    %c0_i32_0 = arith.constant 0 : i32
    %c0_i32_1 = arith.constant 0 : i32
    return %c0_i32, %c0_i32_0 : i32, i32
  }
  func.func @transform_11(%arg0: i32) -> (i32, i32) {
    %c0_i32 = arith.constant 0 : i32
    %c0_i32_0 = arith.constant 0 : i32
    %c0_i32_1 = arith.constant 0 : i32
    return %c0_i32, %c0_i32_0 : i32, i32
  }
  func.func @transform_12(%arg0: i32) -> (i32, i32) {
    %c0_i32 = arith.constant 0 : i32
    %c0_i32_0 = arith.constant 0 : i32
    %c0_i32_1 = arith.constant 0 : i32
    return %c0_i32, %c0_i32_0 : i32, i32
  }
  func.func @transform_13(%arg0: i32) -> (i32, i32) {
    %c0_i32 = arith.constant 0 : i32
    %c0_i32_0 = arith.constant 0 : i32
    %c0_i32_1 = arith.constant 0 : i32
    return %c0_i32, %c0_i32_0 : i32, i32
  }
  func.func @transform_14(%arg0: i32) -> (i32, i32) {
    %c0_i32 = arith.constant 0 : i32
    %c0_i32_0 = arith.constant 0 : i32
    %c0_i32_1 = arith.constant 0 : i32
    return %c0_i32, %c0_i32_0 : i32, i32
  }
  func.func @transform_15(%arg0: i32) -> (i32, i32) {
    %c0_i32 = arith.constant 0 : i32
    %c0_i32_0 = arith.constant 0 : i32
    return %arg0, %c0_i32 : i32, i32
  }
  func.func @transform_16(%arg0: i32) -> (i32, i32) {
    %c0_i32 = arith.constant 0 : i32
    %c0_i32_0 = arith.constant 0 : i32
    return %arg0, %c0_i32 : i32, i32
  }
}

</mosaic_0001>

<llo_original>
// kernel: tpu_custom_call.1
$region0: #{tpu_custom_call.1}
  #allocation0 [shape = 'u32[]', space=smem, size = 0x4, offset = 0x4, fixed_abs, tag = 'smem constant byte address 0x4 - core index']
  #allocation1 [shape = 'u32[144,128]{1,0:T(1,128)}', space=vmem, size = 0x12000, scoped, tag = 'internal scratch']
  %s0 = inlined_call_operand.vmem [shape: f32[1024,3], index: 0, kind: input, shape index: {}]
  %s1 = inlined_call_operand.vmem [shape: f32[1024,3], index: 1, kind: input, shape index: {}]
  %s2 = inlined_call_operand.vmem [shape: bf16[1024,256], index: 2, kind: input, shape index: {}]
  %s3 = inlined_call_operand.hbm [shape: f32[3,256], index: 3, kind: input, shape index: {}]
  %s4 = inlined_call_operand.vmem [shape: bf16[256,256], index: 4, kind: input, shape index: {}]
  %s5 = inlined_call_operand.hbm [shape: f32[1,256], index: 5, kind: input, shape index: {}]
  %s6 = inlined_call_operand.vmem [shape: bf16[256,256], index: 6, kind: input, shape index: {}]
  %s7 = inlined_call_operand.vmem [shape: f32[1,256], index: 7, kind: input, shape index: {}]
  %s8 = inlined_call_operand.vmem [shape: bf16[256,384], index: 8, kind: input, shape index: {}]
  %s9 = inlined_call_operand.vmem [shape: f32[1,384], index: 9, kind: input, shape index: {}]
  %s10 = inlined_call_operand.vmem [shape: bf16[256,128], index: 10, kind: input, shape index: {}]
  %s11 = inlined_call_operand.vmem [shape: f32[3,128], index: 11, kind: input, shape index: {}]
  %s12 = inlined_call_operand.vmem [shape: f32[1,128], index: 12, kind: input, shape index: {}]
  %s13 = inlined_call_operand.vmem [shape: bf16[128,128], index: 13, kind: input, shape index: {}]
  %s14 = inlined_call_operand.vmem [shape: f32[1,128], index: 14, kind: input, shape index: {}]
  %s15 = inlined_call_operand.hbm [shape: f32[1024,128], index: 15, kind: output, shape index: {0}]
  %s16 = inlined_call_operand.hbm [shape: f32[1024,256], index: 16, kind: output, shape index: {1}]
  %17 = xla_tuple %s15, %s16
  %s18 = sld [smem:[#allocation0]]
  $region109: #{tpu_custom_call.1} parent=0
    _
  %s20 = ssub.s32 1, %s18
  %s21 = scalar_select 0, %s20, %s18
  $region1: #{tpu_custom_call.1} parent=0
    #allocation2 [shape = 'u8[4096]{0}', space=vmem, size = 0x1000, scoped, tag = 'input window, operand 3, single buffered']
    #allocation3 [shape = 's32[2]{0}', space=sflag, size = 0x8, scoped, tag = 'scoped memory for tpu_custom_call.1']
    #allocation4 [shape = 's32[2]{0}', space=sflag, size = 0x8, scoped, tag = 'scoped memory for tpu_custom_call.1']
    #allocation5 [shape = 'u8[1024]{0}', space=vmem, size = 0x400, scoped, tag = 'input window, operand 5, single buffered']
    #allocation6 [shape = 's32[1]{0}', space=sflag, size = 0x4, scoped, tag = 'scoped memory for tpu_custom_call.1']
    #allocation7 [shape = 'u8[524288]{0}', space=vmem, size = 0x80000, scoped, tag = 'output window, operand 0']
    #allocation8 [shape = 'u8[1048576]{0}', space=vmem, size = 0x100000, scoped, tag = 'output window, operand 1']
    #allocation9 [shape = 's32[2]{0}', space=sflag, size = 0x8, scoped, tag = 'scoped memory for tpu_custom_call.1']
    %22 = vsyncpa [#allocation3], 0
    %23 = vsyncpa [#allocation6], 0
    %24 = vsyncpa [#allocation4], 0
    %s25 = scalar_lea.sflag [#allocation4], 1
    %26 = vsyncpa %s25, 0
    %27 = vsyncpa [#allocation9], 0
    %s28 = scalar_lea.sflag [#allocation9], 1
    %29 = vsyncpa %s28, 0
    loop: start=0, step=1, limit=4
    $region2: #{tpu_custom_call.1} parent=1 // loop_pre_header
      _
    $region3: #{tpu_custom_call.1} parent=1 // loop_header
      %s31 = sphi 0, %s35
      %p32 = scmp.ge.s32.totalorder %s31, 4
      %s41 = sphi 0, %s43
      %s44 = sphi 0, %s41
      %s45 = sphi 0, %s44
      %s61 = sphi 0, %s45
      %s67 = sphi 0, %s69
      %s70 = sphi 0, %s67
      %s71 = sphi 0, %s70
      %s87 = sphi 0, %s71
      %s93 = sphi 0, %s95
      %s96 = sphi 0, %s93
      %s97 = sphi 0, %s96
      %s113 = sphi 0, %s97
      %s117 = sphi 0, %s117
      %s119 = sphi 0, %s117
      %s120 = sphi 0, %s119
      %s134 = sphi 0, %s120
      %s138 = sphi 0, %s138
      %s140 = sphi 0, %s138
      %s141 = sphi 0, %s140
      %s155 = sphi 0, %s141
      %s159 = sphi 0, %s159
      %s161 = sphi 0, %s159
      %s162 = sphi 0, %s161
      %s176 = sphi 0, %s162
      %s180 = sphi 0, %s180
      %s182 = sphi 0, %s180
      %s183 = sphi 0, %s182
      %s197 = sphi 0, %s183
      %s201 = sphi 0, %s201
      %s203 = sphi 0, %s201
      %s204 = sphi 0, %s203
      %s218 = sphi 0, %s204
      %s222 = sphi 0, %s222
      %s224 = sphi 0, %s222
      %s225 = sphi 0, %s224
      %s239 = sphi 0, %s225
      %s243 = sphi 0, %s243
      %s245 = sphi 0, %s243
      %s246 = sphi 0, %s245
      %s260 = sphi 0, %s246
      %s264 = sphi 0, %s264
      %s266 = sphi 0, %s264
      %s267 = sphi 0, %s266
      %s281 = sphi 0, %s267
      %s285 = sphi 0, %s285
      %s287 = sphi 0, %s285
      %s288 = sphi 0, %s287
      %s302 = sphi 0, %s288
      %s306 = sphi 0, %s306
      %s308 = sphi 0, %s306
      %s309 = sphi 0, %s308
      %s323 = sphi 0, %s309
      %s327 = sphi 0, %s327
      %s329 = sphi 0, %s327
      %s330 = sphi 0, %s329
      %s344 = sphi 0, %s330
      %s348 = sphi 0, %s348
      %s350 = sphi 0, %s348
      %s351 = sphi 0, %s350
      %s365 = sphi 0, %s351
      %s371 = sphi 0, %s373
      %s374 = sphi 0, %s371
      %s375 = sphi 0, %s374
      %s391 = sphi 0, %s375
      %s397 = sphi 0, %s399
      %s400 = sphi 0, %s397
      %s401 = sphi 0, %s400
      %s417 = sphi 0, %s401
    $region4: #{tpu_custom_call.1} parent=1 // loop_header_branch
      %34 = sbr.rel (%p32) target = $region8
    $region5: #{tpu_custom_call.1} parent=1 // loop_body
      %s36 = ssub.s32 %s31, 1
      %s37 = ssub.s32 %s31, 2
      %s38 = sadd.s32 %s31, 1
      %s39 = ssub.s32 %s31, %s38
      %p40 = scmp.eq.s32.totalorder %s39, 0
      %s42 = sadd.s32 %s41, 1
      %s43 = scalar_select %p40, %s41, %s42
      %p46 = pneg %p40
      %p47 = scmp.eq.s32.totalorder %s31, 1
      %p48 = por %p46, %p47
      %p49 = scmp.ne.s32.totalorder %s41, %s44
      %p50 = scmp.eq.s32.totalorder %s31, 0
      %p51 = por %p49, %p50
      %p52 = scmp.ne.s32.totalorder %s41, %s44
      %p53 = scmp.eq.s32.totalorder %s36, 1
      %p54 = por %p52, %p53
      %p55 = scmp.ne.s32.totalorder %s44, %s45
      %p56 = scmp.eq.s32.totalorder %s36, 0
      %p57 = por %p55, %p56
      %p58 = scmp.ne.s32.totalorder %s44, %s45
      %p59 = scmp.eq.s32.totalorder %s37, 1
      %p60 = por %p58, %p59
      %p62 = scmp.ne.s32.totalorder %s45, %s61
      %p63 = scmp.eq.s32.totalorder %s37, 0
      %p64 = por %p62, %p63
      %s65 = ssub.s32 %s31, %s38
      %p66 = scmp.eq.s32.totalorder %s65, 0
      %s68 = sadd.s32 %s67, 1
      %s69 = scalar_select %p66, %s67, %s68
      %p72 = pneg %p66
      %p73 = scmp.eq.s32.totalorder %s31, 1
      %p74 = por %p72, %p73
      %p75 = scmp.ne.s32.totalorder %s67, %s70
      %p76 = scmp.eq.s32.totalorder %s31, 0
      %p77 = por %p75, %p76
      %p78 = scmp.ne.s32.totalorder %s67, %s70
      %p79 = scmp.eq.s32.totalorder %s36, 1
      %p80 = por %p78, %p79
      %p81 = scmp.ne.s32.totalorder %s70, %s71
      %p82 = scmp.eq.s32.totalorder %s36, 0
      %p83 = por %p81, %p82
      %p84 = scmp.ne.s32.totalorder %s70, %s71
      %p85 = scmp.eq.s32.totalorder %s37, 1
      %p86 = por %p84, %p85
      %p88 = scmp.ne.s32.totalorder %s71, %s87
      %p89 = scmp.eq.s32.totalorder %s37, 0
      %p90 = por %p88, %p89
      %s91 = ssub.s32 %s31, %s38
      %p92 = scmp.eq.s32.totalorder %s91, 0
      %s94 = sadd.s32 %s93, 1
      %s95 = scalar_select %p92, %s93, %s94
      %p98 = pneg %p92
      %p99 = scmp.eq.s32.totalorder %s31, 1
      %p100 = por %p98, %p99
      %p101 = scmp.ne.s32.totalorder %s93, %s96
      %p102 = scmp.eq.s32.totalorder %s31, 0
      %p103 = por %p101, %p102
      %p104 = scmp.ne.s32.totalorder %s93, %s96
      %p105 = scmp.eq.s32.totalorder %s36, 1
      %p106 = por %p104, %p105
      %p107 = scmp.ne.s32.totalorder %s96, %s97
      %p108 = scmp.eq.s32.totalorder %s36, 0
      %p109 = por %p107, %p108
      %p110 = scmp.ne.s32.totalorder %s96, %s97
      %p111 = scmp.eq.s32.totalorder %s37, 1
      %p112 = por %p110, %p111
      %p114 = scmp.ne.s32.totalorder %s97, %s113
      %p115 = scmp.eq.s32.totalorder %s37, 0
      %p116 = por %p114, %p115
      %s118 = sadd.s32 %s117, 1
      %p121 = scmp.eq.s32.totalorder %s31, 1
      %p122 = scmp.ne.s32.totalorder %s117, %s119
      %p123 = scmp.eq.s32.totalorder %s31, 0
      %p124 = por %p122, %p123
      %p125 = scmp.ne.s32.totalorder %s117, %s119
      %p126 = scmp.eq.s32.totalorder %s36, 1
      %p127 = por %p125, %p126
      %p128 = scmp.ne.s32.totalorder %s119, %s120
      %p129 = scmp.eq.s32.totalorder %s36, 0
      %p130 = por %p128, %p129
      %p131 = scmp.ne.s32.totalorder %s119, %s120
      %p132 = scmp.eq.s32.totalorder %s37, 1
      %p133 = por %p131, %p132
      %p135 = scmp.ne.s32.totalorder %s120, %s134
      %p136 = scmp.eq.s32.totalorder %s37, 0
      %p137 = por %p135, %p136
      %s139 = sadd.s32 %s138, 1
      %p142 = scmp.eq.s32.totalorder %s31, 1
      %p143 = scmp.ne.s32.totalorder %s138, %s140
      %p144 = scmp.eq.s32.totalorder %s31, 0
      %p145 = por %p143, %p144
      %p146 = scmp.ne.s32.totalorder %s138, %s140
      %p147 = scmp.eq.s32.totalorder %s36, 1
      %p148 = por %p146, %p147
      %p149 = scmp.ne.s32.totalorder %s140, %s141
      %p150 = scmp.eq.s32.totalorder %s36, 0
      %p151 = por %p149, %p150
      %p152 = scmp.ne.s32.totalorder %s140, %s141
      %p153 = scmp.eq.s32.totalorder %s37, 1
      %p154 = por %p152, %p153
      %p156 = scmp.ne.s32.totalorder %s141, %s155
      %p157 = scmp.eq.s32.totalorder %s37, 0
      %p158 = por %p156, %p157
      %s160 = sadd.s32 %s159, 1
      %p163 = scmp.eq.s32.totalorder %s31, 1
      %p164 = scmp.ne.s32.totalorder %s159, %s161
      %p165 = scmp.eq.s32.totalorder %s31, 0
      %p166 = por %p164, %p165
      %p167 = scmp.ne.s32.totalorder %s159, %s161
      %p168 = scmp.eq.s32.totalorder %s36, 1
      %p169 = por %p167, %p168
      %p170 = scmp.ne.s32.totalorder %s161, %s162
      %p171 = scmp.eq.s32.totalorder %s36, 0
      %p172 = por %p170, %p171
      %p173 = scmp.ne.s32.totalorder %s161, %s162
      %p174 = scmp.eq.s32.totalorder %s37, 1
      %p175 = por %p173, %p174
      %p177 = scmp.ne.s32.totalorder %s162, %s176
      %p178 = scmp.eq.s32.totalorder %s37, 0
      %p179 = por %p177, %p178
      %s181 = sadd.s32 %s180, 1
      %p184 = scmp.eq.s32.totalorder %s31, 1
      %p185 = scmp.ne.s32.totalorder %s180, %s182
      %p186 = scmp.eq.s32.totalorder %s31, 0
      %p187 = por %p185, %p186
      %p188 = scmp.ne.s32.totalorder %s180, %s182
      %p189 = scmp.eq.s32.totalorder %s36, 1
      %p190 = por %p188, %p189
      %p191 = scmp.ne.s32.totalorder %s182, %s183
      %p192 = scmp.eq.s32.totalorder %s36, 0
      %p193 = por %p191, %p192
      %p194 = scmp.ne.s32.totalorder %s182, %s183
      %p195 = scmp.eq.s32.totalorder %s37, 1
      %p196 = por %p194, %p195
      %p198 = scmp.ne.s32.totalorder %s183, %s197
      %p199 = scmp.eq.s32.totalorder %s37, 0
      %p200 = por %p198, %p199
      %s202 = sadd.s32 %s201, 1
      %p205 = scmp.eq.s32.totalorder %s31, 1
      %p206 = scmp.ne.s32.totalorder %s201, %s203
      %p207 = scmp.eq.s32.totalorder %s31, 0
      %p208 = por %p206, %p207
      %p209 = scmp.ne.s32.totalorder %s201, %s203
      %p210 = scmp.eq.s32.totalorder %s36, 1
      %p211 = por %p209, %p210
      %p212 = scmp.ne.s32.totalorder %s203, %s204
      %p213 = scmp.eq.s32.totalorder %s36, 0
      %p214 = por %p212, %p213
      %p215 = scmp.ne.s32.totalorder %s203, %s204
      %p216 = scmp.eq.s32.totalorder %s37, 1
      %p217 = por %p215, %p216
      %p219 = scmp.ne.s32.totalorder %s204, %s218
      %p220 = scmp.eq.s32.totalorder %s37, 0
      %p221 = por %p219, %p220
      %s223 = sadd.s32 %s222, 1
      %p226 = scmp.eq.s32.totalorder %s31, 1
      %p227 = scmp.ne.s32.totalorder %s222, %s224
      %p228 = scmp.eq.s32.totalorder %s31, 0
      %p229 = por %p227, %p228
      %p230 = scmp.ne.s32.totalorder %s222, %s224
      %p231 = scmp.eq.s32.totalorder %s36, 1
      %p232 = por %p230, %p231
      %p233 = scmp.ne.s32.totalorder %s224, %s225
      %p234 = scmp.eq.s32.totalorder %s36, 0
      %p235 = por %p233, %p234
      %p236 = scmp.ne.s32.totalorder %s224, %s225
      %p237 = scmp.eq.s32.totalorder %s37, 1
      %p238 = por %p236, %p237
      %p240 = scmp.ne.s32.totalorder %s225, %s239
      %p241 = scmp.eq.s32.totalorder %s37, 0
      %p242 = por %p240, %p241
      %s244 = sadd.s32 %s243, 1
      %p247 = scmp.eq.s32.totalorder %s31, 1
      %p248 = scmp.ne.s32.totalorder %s243, %s245
      %p249 = scmp.eq.s32.totalorder %s31, 0
      %p250 = por %p248, %p249
      %p251 = scmp.ne.s32.totalorder %s243, %s245
      %p252 = scmp.eq.s32.totalorder %s36, 1
      %p253 = por %p251, %p252
      %p254 = scmp.ne.s32.totalorder %s245, %s246
      %p255 = scmp.eq.s32.totalorder %s36, 0
      %p256 = por %p254, %p255
      %p257 = scmp.ne.s32.totalorder %s245, %s246
      %p258 = scmp.eq.s32.totalorder %s37, 1
      %p259 = por %p257, %p258
      %p261 = scmp.ne.s32.totalorder %s246, %s260
      %p262 = scmp.eq.s32.totalorder %s37, 0
      %p263 = por %p261, %p262
      %s265 = sadd.s32 %s264, 1
      %p268 = scmp.eq.s32.totalorder %s31, 1
      %p269 = scmp.ne.s32.totalorder %s264, %s266
      %p270 = scmp.eq.s32.totalorder %s31, 0
      %p271 = por %p269, %p270
      %p272 = scmp.ne.s32.totalorder %s264, %s266
      %p273 = scmp.eq.s32.totalorder %s36, 1
      %p274 = por %p272, %p273
      %p275 = scmp.ne.s32.totalorder %s266, %s267
      %p276 = scmp.eq.s32.totalorder %s36, 0
      %p277 = por %p275, %p276
      %p278 = scmp.ne.s32.totalorder %s266, %s267
      %p279 = scmp.eq.s32.totalorder %s37, 1
      %p280 = por %p278, %p279
      %p282 = scmp.ne.s32.totalorder %s267, %s281
      %p283 = scmp.eq.s32.totalorder %s37, 0
      %p284 = por %p282, %p283
      %s286 = sadd.s32 %s285, 1
      %p289 = scmp.eq.s32.totalorder %s31, 1
      %p290 = scmp.ne.s32.totalorder %s285, %s287
      %p291 = scmp.eq.s32.totalorder %s31, 0
      %p292 = por %p290, %p291
      %p293 = scmp.ne.s32.totalorder %s285, %s287
      %p294 = scmp.eq.s32.totalorder %s36, 1
      %p295 = por %p293, %p294
      %p296 = scmp.ne.s32.totalorder %s287, %s288
      %p297 = scmp.eq.s32.totalorder %s36, 0
      %p298 = por %p296, %p297
      %p299 = scmp.ne.s32.totalorder %s287, %s288
      %p300 = scmp.eq.s32.totalorder %s37, 1
      %p301 = por %p299, %p300
      %p303 = scmp.ne.s32.totalorder %s288, %s302
      %p304 = scmp.eq.s32.totalorder %s37, 0
      %p305 = por %p303, %p304
      %s307 = sadd.s32 %s306, 1
      %p310 = scmp.eq.s32.totalorder %s31, 1
      %p311 = scmp.ne.s32.totalorder %s306, %s308
      %p312 = scmp.eq.s32.totalorder %s31, 0
      %p313 = por %p311, %p312
      %p314 = scmp.ne.s32.totalorder %s306, %s308
      %p315 = scmp.eq.s32.totalorder %s36, 1
      %p316 = por %p314, %p315
      %p317 = scmp.ne.s32.totalorder %s308, %s309
      %p318 = scmp.eq.s32.totalorder %s36, 0
      %p319 = por %p317, %p318
      %p320 = scmp.ne.s32.totalorder %s308, %s309
      %p321 = scmp.eq.s32.totalorder %s37, 1
      %p322 = por %p320, %p321
      %p324 = scmp.ne.s32.totalorder %s309, %s323
      %p325 = scmp.eq.s32.totalorder %s37, 0
      %p326 = por %p324, %p325
      %s328 = sadd.s32 %s327, 1
      %p331 = scmp.eq.s32.totalorder %s31, 1
      %p332 = scmp.ne.s32.totalorder %s327, %s329
      %p333 = scmp.eq.s32.totalorder %s31, 0
      %p334 = por %p332, %p333
      %p335 = scmp.ne.s32.totalorder %s327, %s329
      %p336 = scmp.eq.s32.totalorder %s36, 1
      %p337 = por %p335, %p336
      %p338 = scmp.ne.s32.totalorder %s329, %s330
      %p339 = scmp.eq.s32.totalorder %s36, 0
      %p340 = por %p338, %p339
      %p341 = scmp.ne.s32.totalorder %s329, %s330
      %p342 = scmp.eq.s32.totalorder %s37, 1
      %p343 = por %p341, %p342
      %p345 = scmp.ne.s32.totalorder %s330, %s344
      %p346 = scmp.eq.s32.totalorder %s37, 0
      %p347 = por %p345, %p346
      %s349 = sadd.s32 %s348, 1
      %p352 = scmp.eq.s32.totalorder %s31, 1
      %p353 = scmp.ne.s32.totalorder %s348, %s350
      %p354 = scmp.eq.s32.totalorder %s31, 0
      %p355 = por %p353, %p354
      %p356 = scmp.ne.s32.totalorder %s348, %s350
      %p357 = scmp.eq.s32.totalorder %s36, 1
      %p358 = por %p356, %p357
      %p359 = scmp.ne.s32.totalorder %s350, %s351
      %p360 = scmp.eq.s32.totalorder %s36, 0
      %p361 = por %p359, %p360
      %p362 = scmp.ne.s32.totalorder %s350, %s351
      %p363 = scmp.eq.s32.totalorder %s37, 1
      %p364 = por %p362, %p363
      %p366 = scmp.ne.s32.totalorder %s351, %s365
      %p367 = scmp.eq.s32.totalorder %s37, 0
      %p368 = por %p366, %p367
      %s369 = ssub.s32 %s31, %s38
      %p370 = scmp.eq.s32.totalorder %s369, 0
      %s372 = sadd.s32 %s371, 1
      %s373 = scalar_select %p370, %s371, %s372
      %p376 = pneg %p370
      %p377 = scmp.eq.s32.totalorder %s31, 1
      %p378 = por %p376, %p377
      %p379 = scmp.ne.s32.totalorder %s371, %s374
      %p380 = scmp.eq.s32.totalorder %s31, 0
      %p381 = por %p379, %p380
      %p382 = scmp.ne.s32.totalorder %s371, %s374
      %p383 = scmp.eq.s32.totalorder %s36, 1
      %p384 = por %p382, %p383
      %p385 = scmp.ne.s32.totalorder %s374, %s375
      %p386 = scmp.eq.s32.totalorder %s36, 0
      %p387 = por %p385, %p386
      %p388 = scmp.ne.s32.totalorder %s374, %s375
      %p389 = scmp.eq.s32.totalorder %s37, 1
      %p390 = por %p388, %p389
      %p392 = scmp.ne.s32.totalorder %s375, %s391
      %p393 = scmp.eq.s32.totalorder %s37, 0
      %p394 = por %p392, %p393
      %s395 = ssub.s32 %s31, %s38
      %p396 = scmp.eq.s32.totalorder %s395, 0
      %s398 = sadd.s32 %s397, 1
      %s399 = scalar_select %p396, %s397, %s398
      %p402 = pneg %p396
      %p403 = scmp.eq.s32.totalorder %s31, 1
      %p404 = por %p402, %p403
      %p405 = scmp.ne.s32.totalorder %s397, %s400
      %p406 = scmp.eq.s32.totalorder %s31, 0
      %p407 = por %p405, %p406
      %p408 = scmp.ne.s32.totalorder %s397, %s400
      %p409 = scmp.eq.s32.totalorder %s36, 1
      %p410 = por %p408, %p409
      %p411 = scmp.ne.s32.totalorder %s400, %s401
      %p412 = scmp.eq.s32.totalorder %s36, 0
      %p413 = por %p411, %p412
      %p414 = scmp.ne.s32.totalorder %s400, %s401
      %p415 = scmp.eq.s32.totalorder %s37, 1
      %p416 = por %p414, %p415
      %p418 = scmp.ne.s32.totalorder %s401, %s417
      %p419 = scmp.eq.s32.totalorder %s37, 0
      %p420 = por %p418, %p419
      %p421 = scmp.le.s32.totalorder 1, %s31
      %p422 = scmp.lt.s32.totalorder %s31, 3
      %p423 = pnand %p421, %p422
      %p424 = pneg %p423
      // Predicated region
      $region9: #{tpu_custom_call.1} parent=5 // pred_check
        _
      $region10: #{tpu_custom_call.1} parent=5 // pred_check_branch
        %426 = sbr.rel (%p423) target = $region12
      $region11: #{tpu_custom_call.1} parent=5 // pred_region
        %s427 = ssub.s32 %s31, 1
        // Predicated region
        $region13: #{tpu_custom_call.1} parent=11 // pred_check
          %p428 = pneg %p130
        $region14: #{tpu_custom_call.1} parent=11 // pred_check_branch
          %430 = sbr.rel (%p428) target = $region16
        $region15: #{tpu_custom_call.1} parent=11 // pred_region
          %s432 = ssub.s32 128, 128
          %433 = vsyncadd [#allocation3], %s432
          %s435 = sshll.u32 [#allocation2], 4
          %s436 = int_to_ptr.vmem [resolvable:$true] %s435
          %438 = dma.hbm_to_vmem [thread:$0]  %s3, 128, %s436, [#allocation3]
        $region16: #{tpu_custom_call.1} parent=11 // pred_fallthru
          _
        // Predicated region
        $region17: #{tpu_custom_call.1} parent=11 // pred_check
          %p439 = pneg %p151
        $region18: #{tpu_custom_call.1} parent=11 // pred_check_branch
          %441 = sbr.rel (%p439) target = $region20
        $region19: #{tpu_custom_call.1} parent=11 // pred_region
          _
        $region20: #{tpu_custom_call.1} parent=11 // pred_fallthru
          _
        // Predicated region
        $region21: #{tpu_custom_call.1} parent=11 // pred_check
          %p442 = pneg %p172
        $region22: #{tpu_custom_call.1} parent=11 // pred_check_branch
          %444 = sbr.rel (%p442) target = $region24
        $region23: #{tpu_custom_call.1} parent=11 // pred_region
          %s446 = ssub.s32 32, 32
          %447 = vsyncadd [#allocation6], %s446
          %s449 = sshll.u32 [#allocation5], 4
          %s450 = int_to_ptr.vmem [resolvable:$true] %s449
          %452 = dma.hbm_to_vmem [thread:$0]  %s5, 32, %s450, [#allocation6]
        $region24: #{tpu_custom_call.1} parent=11 // pred_fallthru
          _
        // Predicated region
        $region25: #{tpu_custom_call.1} parent=11 // pred_check
          %p453 = pneg %p193
        $region26: #{tpu_custom_call.1} parent=11 // pred_check_branch
          %455 = sbr.rel (%p453) target = $region28
        $region27: #{tpu_custom_call.1} parent=11 // pred_region
          _
        $region28: #{tpu_custom_call.1} parent=11 // pred_fallthru
          _
        // Predicated region
        $region29: #{tpu_custom_call.1} parent=11 // pred_check
          %p456 = pneg %p214
        $region30: #{tpu_custom_call.1} parent=11 // pred_check_branch
          %458 = sbr.rel (%p456) target = $region32
        $region31: #{tpu_custom_call.1} parent=11 // pred_region
          _
        $region32: #{tpu_custom_call.1} parent=11 // pred_fallthru
          _
        // Predicated region
        $region33: #{tpu_custom_call.1} parent=11 // pred_check
          %p459 = pneg %p235
        $region34: #{tpu_custom_call.1} parent=11 // pred_check_branch
          %461 = sbr.rel (%p459) target = $region36
        $region35: #{tpu_custom_call.1} parent=11 // pred_region
          _
        $region36: #{tpu_custom_call.1} parent=11 // pred_fallthru
          _
        // Predicated region
        $region37: #{tpu_custom_call.1} parent=11 // pred_check
          %p462 = pneg %p256
        $region38: #{tpu_custom_call.1} parent=11 // pred_check_branch
          %464 = sbr.rel (%p462) target = $region40
        $region39: #{tpu_custom_call.1} parent=11 // pred_region
          _
        $region40: #{tpu_custom_call.1} parent=11 // pred_fallthru
          _
        // Predicated region
        $region41: #{tpu_custom_call.1} parent=11 // pred_check
          %p465 = pneg %p277
        $region42: #{tpu_custom_call.1} parent=11 // pred_check_branch
          %467 = sbr.rel (%p465) target = $region44
        $region43: #{tpu_custom_call.1} parent=11 // pred_region
          _
        $region44: #{tpu_custom_call.1} parent=11 // pred_fallthru
          _
        // Predicated region
        $region45: #{tpu_custom_call.1} parent=11 // pred_check
          %p468 = pneg %p298
        $region46: #{tpu_custom_call.1} parent=11 // pred_check_branch
          %470 = sbr.rel (%p468) target = $region48
        $region47: #{tpu_custom_call.1} parent=11 // pred_region
          _
        $region48: #{tpu_custom_call.1} parent=11 // pred_fallthru
          _
        // Predicated region
        $region49: #{tpu_custom_call.1} parent=11 // pred_check
          %p471 = pneg %p319
        $region50: #{tpu_custom_call.1} parent=11 // pred_check_branch
          %473 = sbr.rel (%p471) target = $region52
        $region51: #{tpu_custom_call.1} parent=11 // pred_region
          _
        $region52: #{tpu_custom_call.1} parent=11 // pred_fallthru
          _
        // Predicated region
        $region53: #{tpu_custom_call.1} parent=11 // pred_check
          %p474 = pneg %p340
        $region54: #{tpu_custom_call.1} parent=11 // pred_check_branch
          %476 = sbr.rel (%p474) target = $region56
        $region55: #{tpu_custom_call.1} parent=11 // pred_region
          _
        $region56: #{tpu_custom_call.1} parent=11 // pred_fallthru
          _
        // Predicated region
        $region57: #{tpu_custom_call.1} parent=11 // pred_check
          %p477 = pneg %p361
        $region58: #{tpu_custom_call.1} parent=11 // pred_check_branch
          %479 = sbr.rel (%p477) target = $region60
        $region59: #{tpu_custom_call.1} parent=11 // pred_region
          _
        $region60: #{tpu_custom_call.1} parent=11 // pred_fallthru
          _
      $region12: #{tpu_custom_call.1} parent=5 // pred_fallthru
        _
      %p480 = scmp.lt.s32.totalorder %s31, 2
      // Predicated region
      $region61: #{tpu_custom_call.1} parent=5 // pred_check
        %p481 = pneg %p480
      $region62: #{tpu_custom_call.1} parent=5 // pred_check_branch
        %483 = sbr.rel (%p481) target = $region64
      $region63: #{tpu_custom_call.1} parent=5 // pred_region
        // Predicated region
        $region65: #{tpu_custom_call.1} parent=63 // pred_check
          %p484 = pneg %p51
        $region66: #{tpu_custom_call.1} parent=63 // pred_check_branch
          %486 = sbr.rel (%p484) target = $region68
        $region67: #{tpu_custom_call.1} parent=63 // pred_region
          %s487 = smul.u32 64, %s31
          %p488 = scmp.lt.s32.totalorder %s487, 127
          %s489 = scalar_select %p488, %s487, 127
          %s490 = smul.addr %s489, 8
          %s491 = scalar_lea.vmem %s0, %s490
          %s492 = smul.u32 64, %s31
        $region68: #{tpu_custom_call.1} parent=63 // pred_fallthru
          _
        // Predicated region
        $region69: #{tpu_custom_call.1} parent=63 // pred_check
          %p493 = pneg %p77
        $region70: #{tpu_custom_call.1} parent=63 // pred_check_branch
          %495 = sbr.rel (%p493) target = $region72
        $region71: #{tpu_custom_call.1} parent=63 // pred_region
          %s496 = smul.u32 64, %s31
          %p497 = scmp.lt.s32.totalorder %s496, 127
          %s498 = scalar_select %p497, %s496, 127
          %s499 = smul.addr %s498, 8
          %s500 = scalar_lea.vmem %s1, %s499
          %s501 = smul.u32 64, %s31
        $region72: #{tpu_custom_call.1} parent=63 // pred_fallthru
          _
        // Predicated region
        $region73: #{tpu_custom_call.1} parent=63 // pred_check
          %p502 = pneg %p103
        $region74: #{tpu_custom_call.1} parent=63 // pred_check_branch
          %504 = sbr.rel (%p502) target = $region76
        $region75: #{tpu_custom_call.1} parent=63 // pred_region
          %s505 = smul.u32 64, %s31
          %p506 = scmp.lt.s32.totalorder %s505, 127
          %s507 = scalar_select %p506, %s505, 127
          %s508 = smul.addr %s507, 2
          %s509 = smul.addr %s508, 4
          %s510 = scalar_lea.vmem %s2, %s509
          %s511 = smul.u32 64, %s31
        $region76: #{tpu_custom_call.1} parent=63 // pred_fallthru
          _
      $region64: #{tpu_custom_call.1} parent=5 // pred_fallthru
        _
      %p512 = scmp.le.s32.totalorder 1, %s31
      %p513 = scmp.lt.s32.totalorder %s31, 3
      %p514 = pnand %p512, %p513
      %p515 = pneg %p514
      // Predicated region
      $region77: #{tpu_custom_call.1} parent=5 // pred_check
        _
      $region78: #{tpu_custom_call.1} parent=5 // pred_check_branch
        %517 = sbr.rel (%p514) target = $region80
      $region79: #{tpu_custom_call.1} parent=5 // pred_region
        %s518 = ssub.s32 %s31, 1
        // Predicated region
        $region81: #{tpu_custom_call.1} parent=79 // pred_check
          %p519 = pneg %p130
        $region82: #{tpu_custom_call.1} parent=79 // pred_check_branch
          %521 = sbr.rel (%p519) target = $region84
        $region83: #{tpu_custom_call.1} parent=79 // pred_region
          %522 = dma.done [#allocation3], 128
        $region84: #{tpu_custom_call.1} parent=79 // pred_fallthru
          _
        // Predicated region
        $region85: #{tpu_custom_call.1} parent=79 // pred_check
          %p523 = pneg %p172
        $region86: #{tpu_custom_call.1} parent=79 // pred_check_branch
          %525 = sbr.rel (%p523) target = $region88
        $region87: #{tpu_custom_call.1} parent=79 // pred_region
          %526 = dma.done [#allocation6], 32
        $region88: #{tpu_custom_call.1} parent=79 // pred_fallthru
          _
        %s527 = smul.u32 64, %s36
        %p528 = scmp.lt.s32.totalorder %s527, 127
        %s529 = scalar_select %p528, %s527, 127
        %s530 = smul.addr %s529, 8
        %s531 = scalar_lea.vmem %s0, %s530
        %p532 = pneg %p57
        %p533 = pneg %p54
        %s534 = smul.u32 64, %s36
        %p535 = scmp.lt.s32.totalorder %s534, 127
        %s536 = scalar_select %p535, %s534, 127
        %s537 = smul.addr %s536, 8
        %s538 = scalar_lea.vmem %s1, %s537
        %p539 = pneg %p83
        %p540 = pneg %p80
        %s541 = smul.u32 64, %s36
        %p542 = scmp.lt.s32.totalorder %s541, 127
        %s543 = scalar_select %p542, %s541, 127
        %s544 = smul.addr %s543, 2
        %s545 = smul.addr %s544, 4
        %s546 = scalar_lea.vmem %s2, %s545
        %p547 = pneg %p109
        %p548 = pneg %p106
        %p549 = pneg %p130
        %p550 = pneg %p127
        %p551 = pneg %p151
        %p552 = pneg %p148
        %p553 = pneg %p172
        %p554 = pneg %p169
        %p555 = pneg %p193
        %p556 = pneg %p190
        %p557 = pneg %p214
        %p558 = pneg %p211
        %p559 = pneg %p235
        %p560 = pneg %p232
        %p561 = pneg %p256
        %p562 = pneg %p253
        %p563 = pneg %p277
        %p564 = pneg %p274
        %p565 = pneg %p298
        %p566 = pneg %p295
        %p567 = pneg %p319
        %p568 = pneg %p316
        %p569 = pneg %p340
        %p570 = pneg %p337
        %p571 = pneg %p361
        %p572 = pneg %p358
        %p573 = pneg %p387
        %p574 = pneg %p384
        %s575 = sand.u32 %s374, 1
        %s576 = scalar_lea.sflag [#allocation4], %s575
        %s577 = sand.u32 %s374, 1
        %s578 = smul.addr %s577, 512
        %s579 = scalar_lea.vmem [#allocation7], %s578
        %p580 = pneg %p413
        %p581 = pneg %p410
        %s582 = sand.u32 %s400, 1
        %s583 = scalar_lea.sflag [#allocation9], %s582
        %s584 = sand.u32 %s400, 1
        %s585 = smul.addr %s584, 1024
        %s586 = scalar_lea.vmem [#allocation8], %s585
        %s587 = smul.u32 64, %s36
        %p588 = scmp.lt.s32.totalorder %s587, 127
        %s589 = scalar_select %p588, %s587, 127
        %s590 = smul.addr %s589, 8
        %s591 = scalar_lea.vmem %s0, %s590
        %s592 = smul.u32 64, %s36
        %s593 = smul.u32 64, %s36
        %p594 = scmp.lt.s32.totalorder %s593, 127
        %s595 = scalar_select %p594, %s593, 127
        %s596 = smul.addr %s595, 8
        %s597 = scalar_lea.vmem %s1, %s596
        %s598 = smul.u32 64, %s36
        %s599 = smul.u32 64, %s36
        %p600 = scmp.lt.s32.totalorder %s599, 127
        %s601 = scalar_select %p600, %s599, 127
        %s602 = smul.addr %s601, 2
        %s603 = smul.addr %s602, 4
        %s604 = scalar_lea.vmem %s2, %s603
        %s605 = smul.u32 64, %s36
        %s606 = smul.u32 64, %s36
        %s607 = smul.u32 64, %s36
        %v609 = vld [vmem:[%s604] sm:$0xff]
        %v610 = vld [vmem:[%s604 + $0x8] sm:$0xff]
        %v611 = vld [vmem:[%s604 + $0x10] sm:$0xff]
        %v612 = vld [vmem:[%s604 + $0x18] sm:$0xff]
        %v613 = vld [vmem:[%s604 + $0x20] sm:$0xff]
        %v614 = vld [vmem:[%s604 + $0x28] sm:$0xff]
        %v615 = vld [vmem:[%s604 + $0x30] sm:$0xff]
        %v616 = vld [vmem:[%s604 + $0x38] sm:$0xff]
        %v617 = vld [vmem:[%s604 + $0x40] sm:$0xff]
        %v618 = vld [vmem:[%s604 + $0x48] sm:$0xff]
        %v619 = vld [vmem:[%s604 + $0x50] sm:$0xff]
        %v620 = vld [vmem:[%s604 + $0x58] sm:$0xff]
        %v621 = vld [vmem:[%s604 + $0x60] sm:$0xff]
        %v622 = vld [vmem:[%s604 + $0x68] sm:$0xff]
        %v623 = vld [vmem:[%s604 + $0x70] sm:$0xff]
        %v624 = vld [vmem:[%s604 + $0x78] sm:$0xff]
        %v625 = vld [vmem:[%s604 + $0x80] sm:$0xff]
        %v626 = vld [vmem:[%s604 + $0x88] sm:$0xff]
        %v627 = vld [vmem:[%s604 + $0x90] sm:$0xff]
        %v628 = vld [vmem:[%s604 + $0x98] sm:$0xff]
        %v629 = vld [vmem:[%s604 + $0xa0] sm:$0xff]
        %v630 = vld [vmem:[%s604 + $0xa8] sm:$0xff]
        %v631 = vld [vmem:[%s604 + $0xb0] sm:$0xff]
        %v632 = vld [vmem:[%s604 + $0xb8] sm:$0xff]
        %v633 = vld [vmem:[%s604 + $0xc0] sm:$0xff]
        %v634 = vld [vmem:[%s604 + $0xc8] sm:$0xff]
        %v635 = vld [vmem:[%s604 + $0xd0] sm:$0xff]
        %v636 = vld [vmem:[%s604 + $0xd8] sm:$0xff]
        %v637 = vld [vmem:[%s604 + $0xe0] sm:$0xff]
        %v638 = vld [vmem:[%s604 + $0xe8] sm:$0xff]
        %v639 = vld [vmem:[%s604 + $0xf0] sm:$0xff]
        %v640 = vld [vmem:[%s604 + $0xf8] sm:$0xff]
        %v641 = vld [vmem:[%s604 + $0x100] sm:$0xff]
        %v642 = vld [vmem:[%s604 + $0x108] sm:$0xff]
        %v643 = vld [vmem:[%s604 + $0x110] sm:$0xff]
        %v644 = vld [vmem:[%s604 + $0x118] sm:$0xff]
        %v645 = vld [vmem:[%s604 + $0x120] sm:$0xff]
        %v646 = vld [vmem:[%s604 + $0x128] sm:$0xff]
        %v647 = vld [vmem:[%s604 + $0x130] sm:$0xff]
        %v648 = vld [vmem:[%s604 + $0x138] sm:$0xff]
        %v649 = vld [vmem:[%s604 + $0x140] sm:$0xff]
        %v650 = vld [vmem:[%s604 + $0x148] sm:$0xff]
        %v651 = vld [vmem:[%s604 + $0x150] sm:$0xff]
        %v652 = vld [vmem:[%s604 + $0x158] sm:$0xff]
        %v653 = vld [vmem:[%s604 + $0x160] sm:$0xff]
        %v654 = vld [vmem:[%s604 + $0x168] sm:$0xff]
        %v655 = vld [vmem:[%s604 + $0x170] sm:$0xff]
        %v656 = vld [vmem:[%s604 + $0x178] sm:$0xff]
        %v657 = vld [vmem:[%s604 + $0x180] sm:$0xff]
        %v658 = vld [vmem:[%s604 + $0x188] sm:$0xff]
        %v659 = vld [vmem:[%s604 + $0x190] sm:$0xff]
        %v660 = vld [vmem:[%s604 + $0x198] sm:$0xff]
        %v661 = vld [vmem:[%s604 + $0x1a0] sm:$0xff]
        %v662 = vld [vmem:[%s604 + $0x1a8] sm:$0xff]
        %v663 = vld [vmem:[%s604 + $0x1b0] sm:$0xff]
        %v664 = vld [vmem:[%s604 + $0x1b8] sm:$0xff]
        %v665 = vld [vmem:[%s604 + $0x1c0] sm:$0xff]
        %v666 = vld [vmem:[%s604 + $0x1c8] sm:$0xff]
        %v667 = vld [vmem:[%s604 + $0x1d0] sm:$0xff]
        %v668 = vld [vmem:[%s604 + $0x1d8] sm:$0xff]
        %v669 = vld [vmem:[%s604 + $0x1e0] sm:$0xff]
        %v670 = vld [vmem:[%s604 + $0x1e8] sm:$0xff]
        %v671 = vld [vmem:[%s604 + $0x1f0] sm:$0xff]
        %v672 = vld [vmem:[%s604 + $0x1f8] sm:$0xff]
        %v673 = vld [vmem:[%s4] sm:$0xff]
        %v674 = vld [vmem:[%s4 + $0x8] sm:$0xff]
        %v675 = vld [vmem:[%s4 + $0x10] sm:$0xff]
        %v676 = vld [vmem:[%s4 + $0x18] sm:$0xff]
        %v677 = vld [vmem:[%s4 + $0x20] sm:$0xff]
        %v678 = vld [vmem:[%s4 + $0x28] sm:$0xff]
        %v679 = vld [vmem:[%s4 + $0x30] sm:$0xff]
        %v680 = vld [vmem:[%s4 + $0x38] sm:$0xff]
        %v681 = vld [vmem:[%s4 + $0x40] sm:$0xff]
        %v682 = vld [vmem:[%s4 + $0x48] sm:$0xff]
        %v683 = vld [vmem:[%s4 + $0x50] sm:$0xff]
        %v684 = vld [vmem:[%s4 + $0x58] sm:$0xff]
        %v685 = vld [vmem:[%s4 + $0x60] sm:$0xff]
        %v686 = vld [vmem:[%s4 + $0x68] sm:$0xff]
        %v687 = vld [vmem:[%s4 + $0x70] sm:$0xff]
        %v688 = vld [vmem:[%s4 + $0x78] sm:$0xff]
        %v689 = vld [vmem:[%s4 + $0x80] sm:$0xff]
        %v690 = vld [vmem:[%s4 + $0x88] sm:$0xff]
        %v691 = vld [vmem:[%s4 + $0x90] sm:$0xff]
        %v692 = vld [vmem:[%s4 + $0x98] sm:$0xff]
        %v693 = vld [vmem:[%s4 + $0xa0] sm:$0xff]
        %v694 = vld [vmem:[%s4 + $0xa8] sm:$0xff]
        %v695 = vld [vmem:[%s4 + $0xb0] sm:$0xff]
        %v696 = vld [vmem:[%s4 + $0xb8] sm:$0xff]
        %v697 = vld [vmem:[%s4 + $0xc0] sm:$0xff]
        %v698 = vld [vmem:[%s4 + $0xc8] sm:$0xff]
        %v699 = vld [vmem:[%s4 + $0xd0] sm:$0xff]
        %v700 = vld [vmem:[%s4 + $0xd8] sm:$0xff]
        %v701 = vld [vmem:[%s4 + $0xe0] sm:$0xff]
        %v702 = vld [vmem:[%s4 + $0xe8] sm:$0xff]
        %v703 = vld [vmem:[%s4 + $0xf0] sm:$0xff]
        %v704 = vld [vmem:[%s4 + $0xf8] sm:$0xff]
        %v705 = vld [vmem:[#allocation5] sm:$0x3]
        %v707 = vlaneseq
        %v708 = vshrl.u32 %v707, 7
        %v709 = vsub.s32 0, %v708
        %v710 = vrot.slane %v705, %v709
        %v711 = vlaneseq
        %v712 = vshrl.u32 %v711, 7
        %v713 = vsub.s32 1, %v712
        %v714 = vrot.slane %v705, %v713
        %v781 = vunpack.c.l.b16 %v609
        %v782 = vunpack.c.h.b16 %v609
        %v783 = vunpack.c.l.b16 %v610
        %v784 = vunpack.c.h.b16 %v610
        %v785 = vunpack.c.l.b16 %v611
        %v786 = vunpack.c.h.b16 %v611
        %v787 = vunpack.c.l.b16 %v612
        %v788 = vunpack.c.h.b16 %v612
        %v789 = vunpack.c.l.b16 %v613
        %v790 = vunpack.c.h.b16 %v613
        %v791 = vunpack.c.l.b16 %v614
        %v792 = vunpack.c.h.b16 %v614
        %v793 = vunpack.c.l.b16 %v615
        %v794 = vunpack.c.h.b16 %v615
        %v795 = vunpack.c.l.b16 %v616
        %v796 = vunpack.c.h.b16 %v616
        %v797 = vunpack.c.l.b16 %v617
        %v798 = vunpack.c.h.b16 %v617
        %v799 = vunpack.c.l.b16 %v618
        %v800 = vunpack.c.h.b16 %v618
        %v801 = vunpack.c.l.b16 %v619
        %v802 = vunpack.c.h.b16 %v619
        %v803 = vunpack.c.l.b16 %v620
        %v804 = vunpack.c.h.b16 %v620
        %v805 = vunpack.c.l.b16 %v621
        %v806 = vunpack.c.h.b16 %v621
        %v807 = vunpack.c.l.b16 %v622
        %v808 = vunpack.c.h.b16 %v622
        %v809 = vunpack.c.l.b16 %v623
        %v810 = vunpack.c.h.b16 %v623
        %v811 = vunpack.c.l.b16 %v624
        %v812 = vunpack.c.h.b16 %v624
        %v813 = vunpack.c.l.b16 %v625
        %v814 = vunpack.c.h.b16 %v625
        %v815 = vunpack.c.l.b16 %v626
        %v816 = vunpack.c.h.b16 %v626
        %v817 = vunpack.c.l.b16 %v627
        %v818 = vunpack.c.h.b16 %v627
        %v819 = vunpack.c.l.b16 %v628
        %v820 = vunpack.c.h.b16 %v628
        %v821 = vunpack.c.l.b16 %v629
        %v822 = vunpack.c.h.b16 %v629
        %v823 = vunpack.c.l.b16 %v630
        %v824 = vunpack.c.h.b16 %v630
        %v825 = vunpack.c.l.b16 %v631
        %v826 = vunpack.c.h.b16 %v631
        %v827 = vunpack.c.l.b16 %v632
        %v828 = vunpack.c.h.b16 %v632
        %v829 = vunpack.c.l.b16 %v633
        %v830 = vunpack.c.h.b16 %v633
        %v831 = vunpack.c.l.b16 %v634
        %v832 = vunpack.c.h.b16 %v634
        %v833 = vunpack.c.l.b16 %v635
        %v834 = vunpack.c.h.b16 %v635
        %v835 = vunpack.c.l.b16 %v636
        %v836 = vunpack.c.h.b16 %v636
        %v837 = vunpack.c.l.b16 %v637
        %v838 = vunpack.c.h.b16 %v637
        %v839 = vunpack.c.l.b16 %v638
        %v840 = vunpack.c.h.b16 %v638
        %v841 = vunpack.c.l.b16 %v639
        %v842 = vunpack.c.h.b16 %v639
        %v843 = vunpack.c.l.b16 %v640
        %v844 = vunpack.c.h.b16 %v640
        %v845 = vunpack.c.l.b16 %v641
        %v846 = vunpack.c.h.b16 %v641
        %v847 = vunpack.c.l.b16 %v642
        %v848 = vunpack.c.h.b16 %v642
        %v849 = vunpack.c.l.b16 %v643
        %v850 = vunpack.c.h.b16 %v643
        %v851 = vunpack.c.l.b16 %v644
        %v852 = vunpack.c.h.b16 %v644
        %v853 = vunpack.c.l.b16 %v645
        %v854 = vunpack.c.h.b16 %v645
        %v855 = vunpack.c.l.b16 %v646
        %v856 = vunpack.c.h.b16 %v646
        %v857 = vunpack.c.l.b16 %v647
        %v858 = vunpack.c.h.b16 %v647
        %v859 = vunpack.c.l.b16 %v648
        %v860 = vunpack.c.h.b16 %v648
        %v861 = vunpack.c.l.b16 %v649
        %v862 = vunpack.c.h.b16 %v649
        %v863 = vunpack.c.l.b16 %v650
        %v864 = vunpack.c.h.b16 %v650
        %v865 = vunpack.c.l.b16 %v651
        %v866 = vunpack.c.h.b16 %v651
        %v867 = vunpack.c.l.b16 %v652
        %v868 = vunpack.c.h.b16 %v652
        %v869 = vunpack.c.l.b16 %v653
        %v870 = vunpack.c.h.b16 %v653
        %v871 = vunpack.c.l.b16 %v654
        %v872 = vunpack.c.h.b16 %v654
        %v873 = vunpack.c.l.b16 %v655
        %v874 = vunpack.c.h.b16 %v655
        %v875 = vunpack.c.l.b16 %v656
        %v876 = vunpack.c.h.b16 %v656
        %v877 = vunpack.c.l.b16 %v657
        %v878 = vunpack.c.h.b16 %v657
        %v879 = vunpack.c.l.b16 %v658
        %v880 = vunpack.c.h.b16 %v658
        %v881 = vunpack.c.l.b16 %v659
        %v882 = vunpack.c.h.b16 %v659
        %v883 = vunpack.c.l.b16 %v660
        %v884 = vunpack.c.h.b16 %v660
        %v885 = vunpack.c.l.b16 %v661
        %v886 = vunpack.c.h.b16 %v661
        %v887 = vunpack.c.l.b16 %v662
        %v888 = vunpack.c.h.b16 %v662
        %v889 = vunpack.c.l.b16 %v663
        %v890 = vunpack.c.h.b16 %v663
        %v891 = vunpack.c.l.b16 %v664
        %v892 = vunpack.c.h.b16 %v664
        %v893 = vunpack.c.l.b16 %v665
        %v894 = vunpack.c.h.b16 %v665
        %v895 = vunpack.c.l.b16 %v666
        %v896 = vunpack.c.h.b16 %v666
        %v897 = vunpack.c.l.b16 %v667
        %v898 = vunpack.c.h.b16 %v667
        %v899 = vunpack.c.l.b16 %v668
        %v900 = vunpack.c.h.b16 %v668
        %v901 = vunpack.c.l.b16 %v669
        %v902 = vunpack.c.h.b16 %v669
        %v903 = vunpack.c.l.b16 %v670
        %v904 = vunpack.c.h.b16 %v670
        %v905 = vunpack.c.l.b16 %v671
        %v906 = vunpack.c.h.b16 %v671
        %v907 = vunpack.c.l.b16 %v672
        %v908 = vunpack.c.h.b16 %v672
        %v909 = vpack.c.b16 %v783, %v781
        %v910 = vpack.c.b16 %v784, %v782
        %v911 = vpack.c.b16 %v787, %v785
        %v912 = vpack.c.b16 %v788, %v786
        %v913 = vpack.c.b16 %v791, %v789
        %v914 = vpack.c.b16 %v792, %v790
        %v915 = vpack.c.b16 %v795, %v793
        %v916 = vpack.c.b16 %v796, %v794
        %v917 = vpack.c.b16 %v799, %v797
        %v918 = vpack.c.b16 %v800, %v798
        %v919 = vpack.c.b16 %v803, %v801
        %v920 = vpack.c.b16 %v804, %v802
        %v921 = vpack.c.b16 %v807, %v805
        %v922 = vpack.c.b16 %v808, %v806
        %v923 = vpack.c.b16 %v811, %v809
        %v924 = vpack.c.b16 %v812, %v810
        %v925 = vpack.c.b16 %v815, %v813
        %v926 = vpack.c.b16 %v816, %v814
        %v927 = vpack.c.b16 %v819, %v817
        %v928 = vpack.c.b16 %v820, %v818
        %v929 = vpack.c.b16 %v823, %v821
        %v930 = vpack.c.b16 %v824, %v822
        %v931 = vpack.c.b16 %v827, %v825
        %v932 = vpack.c.b16 %v828, %v826
        %v933 = vpack.c.b16 %v831, %v829
        %v934 = vpack.c.b16 %v832, %v830
        %v935 = vpack.c.b16 %v835, %v833
        %v936 = vpack.c.b16 %v836, %v834
        %v937 = vpack.c.b16 %v839, %v837
        %v938 = vpack.c.b16 %v840, %v838
        %v939 = vpack.c.b16 %v843, %v841
        %v940 = vpack.c.b16 %v844, %v842
        %v941 = vpack.c.b16 %v847, %v845
        %v942 = vpack.c.b16 %v848, %v846
        %v943 = vpack.c.b16 %v851, %v849
        %v944 = vpack.c.b16 %v852, %v850
        %v945 = vpack.c.b16 %v855, %v853
        %v946 = vpack.c.b16 %v856, %v854
        %v947 = vpack.c.b16 %v859, %v857
        %v948 = vpack.c.b16 %v860, %v858
        %v949 = vpack.c.b16 %v863, %v861
        %v950 = vpack.c.b16 %v864, %v862
        %v951 = vpack.c.b16 %v867, %v865
        %v952 = vpack.c.b16 %v868, %v866
        %v953 = vpack.c.b16 %v871, %v869
        %v954 = vpack.c.b16 %v872, %v870
        %v955 = vpack.c.b16 %v875, %v873
        %v956 = vpack.c.b16 %v876, %v874
        %v957 = vpack.c.b16 %v879, %v877
        %v958 = vpack.c.b16 %v880, %v878
        %v959 = vpack.c.b16 %v883, %v881
        %v960 = vpack.c.b16 %v884, %v882
        %v961 = vpack.c.b16 %v887, %v885
        %v962 = vpack.c.b16 %v888, %v886
        %v963 = vpack.c.b16 %v891, %v889
        %v964 = vpack.c.b16 %v892, %v890
        %v965 = vpack.c.b16 %v895, %v893
        %v966 = vpack.c.b16 %v896, %v894
        %v967 = vpack.c.b16 %v899, %v897
        %v968 = vpack.c.b16 %v900, %v898
        %v969 = vpack.c.b16 %v903, %v901
        %v970 = vpack.c.b16 %v904, %v902
        %v971 = vpack.c.b16 %v907, %v905
        %v972 = vpack.c.b16 %v908, %v906
        %v1069 = vunpack.c.l.b16 %v673
        %v1070 = vunpack.c.h.b16 %v673
        %v1071 = vunpack.c.l.b16 %v674
        %v1072 = vunpack.c.h.b16 %v674
        %v1073 = vunpack.c.l.b16 %v675
        %v1074 = vunpack.c.h.b16 %v675
        %v1075 = vunpack.c.l.b16 %v676
        %v1076 = vunpack.c.h.b16 %v676
        %v1077 = vunpack.c.l.b16 %v677
        %v1078 = vunpack.c.h.b16 %v677
        %v1079 = vunpack.c.l.b16 %v678
        %v1080 = vunpack.c.h.b16 %v678
        %v1081 = vunpack.c.l.b16 %v679
        %v1082 = vunpack.c.h.b16 %v679
        %v1083 = vunpack.c.l.b16 %v680
        %v1084 = vunpack.c.h.b16 %v680
        %v1085 = vunpack.c.l.b16 %v681
        %v1086 = vunpack.c.h.b16 %v681
        %v1087 = vunpack.c.l.b16 %v682
        %v1088 = vunpack.c.h.b16 %v682
        %v1089 = vunpack.c.l.b16 %v683
        %v1090 = vunpack.c.h.b16 %v683
        %v1091 = vunpack.c.l.b16 %v684
        %v1092 = vunpack.c.h.b16 %v684
        %v1093 = vunpack.c.l.b16 %v685
        %v1094 = vunpack.c.h.b16 %v685
        %v1095 = vunpack.c.l.b16 %v686
        %v1096 = vunpack.c.h.b16 %v686
        %v1097 = vunpack.c.l.b16 %v687
        %v1098 = vunpack.c.h.b16 %v687
        %v1099 = vunpack.c.l.b16 %v688
        %v1100 = vunpack.c.h.b16 %v688
        %v1101 = vunpack.c.l.b16 %v689
        %v1102 = vunpack.c.h.b16 %v689
        %v1103 = vunpack.c.l.b16 %v690
        %v1104 = vunpack.c.h.b16 %v690
        %v1105 = vunpack.c.l.b16 %v691
        %v1106 = vunpack.c.h.b16 %v691
        %v1107 = vunpack.c.l.b16 %v692
        %v1108 = vunpack.c.h.b16 %v692
        %v1109 = vunpack.c.l.b16 %v693
        %v1110 = vunpack.c.h.b16 %v693
        %v1111 = vunpack.c.l.b16 %v694
        %v1112 = vunpack.c.h.b16 %v694
        %v1113 = vunpack.c.l.b16 %v695
        %v1114 = vunpack.c.h.b16 %v695
        %v1115 = vunpack.c.l.b16 %v696
        %v1116 = vunpack.c.h.b16 %v696
        %v1117 = vunpack.c.l.b16 %v697
        %v1118 = vunpack.c.h.b16 %v697
        %v1119 = vunpack.c.l.b16 %v698
        %v1120 = vunpack.c.h.b16 %v698
        %v1121 = vunpack.c.l.b16 %v699
        %v1122 = vunpack.c.h.b16 %v699
        %v1123 = vunpack.c.l.b16 %v700
        %v1124 = vunpack.c.h.b16 %v700
        %v1125 = vunpack.c.l.b16 %v701
        %v1126 = vunpack.c.h.b16 %v701
        %v1127 = vunpack.c.l.b16 %v702
        %v1128 = vunpack.c.h.b16 %v702
        %v1129 = vunpack.c.l.b16 %v703
        %v1130 = vunpack.c.h.b16 %v703
        %v1131 = vunpack.c.l.b16 %v704
        %v1132 = vunpack.c.h.b16 %v704
        %v1133 = vpack.c.b16 %v1071, %v1069
        %v1134 = vpack.c.b16 %v1072, %v1070
        %v1135 = vpack.c.b16 %v1075, %v1073
        %v1136 = vpack.c.b16 %v1076, %v1074
        %v1137 = vpack.c.b16 %v1079, %v1077
        %v1138 = vpack.c.b16 %v1080, %v1078
        %v1139 = vpack.c.b16 %v1083, %v1081
        %v1140 = vpack.c.b16 %v1084, %v1082
        %v1141 = vpack.c.b16 %v1087, %v1085
        %v1142 = vpack.c.b16 %v1088, %v1086
        %v1143 = vpack.c.b16 %v1091, %v1089
        %v1144 = vpack.c.b16 %v1092, %v1090
        %v1145 = vpack.c.b16 %v1095, %v1093
        %v1146 = vpack.c.b16 %v1096, %v1094
        %v1147 = vpack.c.b16 %v1099, %v1097
        %v1148 = vpack.c.b16 %v1100, %v1098
        %v1149 = vpack.c.b16 %v1103, %v1101
        %v1150 = vpack.c.b16 %v1104, %v1102
        %v1151 = vpack.c.b16 %v1107, %v1105
        %v1152 = vpack.c.b16 %v1108, %v1106
        %v1153 = vpack.c.b16 %v1111, %v1109
        %v1154 = vpack.c.b16 %v1112, %v1110
        %v1155 = vpack.c.b16 %v1115, %v1113
        %v1156 = vpack.c.b16 %v1116, %v1114
        %v1157 = vpack.c.b16 %v1119, %v1117
        %v1158 = vpack.c.b16 %v1120, %v1118
        %v1159 = vpack.c.b16 %v1123, %v1121
        %v1160 = vpack.c.b16 %v1124, %v1122
        %v1161 = vpack.c.b16 %v1127, %v1125
        %v1162 = vpack.c.b16 %v1128, %v1126
        %v1163 = vpack.c.b16 %v1131, %v1129
        %v1164 = vpack.c.b16 %v1132, %v1130
        %1197 = vmatprep.subr.bf16.mxu0 %v1134
        %1198 = vmatpush1.bf16.msra.mxu0 %v1133
        %1199 = vmatprep.subr.bf16.mxu0 %v1136
        %1200 = vmatpush1.bf16.msra.mxu0 %v1135
        %1201 = vmatprep.subr.bf16.mxu0 %v1138
        %1202 = vmatpush1.bf16.msra.mxu0 %v1137
        %1203 = vmatprep.subr.bf16.mxu0 %v1140
        %1204 = vmatpush1.bf16.msra.mxu0 %v1139
        %1205 = vmatprep.subr.bf16.mxu0 %v1142
        %1206 = vmatpush1.bf16.msra.mxu0 %v1141
        %1207 = vmatprep.subr.bf16.mxu0 %v1144
        %1208 = vmatpush1.bf16.msra.mxu0 %v1143
        %1209 = vmatprep.subr.bf16.mxu0 %v1146
        %1210 = vmatpush1.bf16.msra.mxu0 %v1145
        %1211 = vmatprep.subr.bf16.mxu0 %v1148
        %1212 = vmatpush1.bf16.msra.mxu0 %v1147
        %1213 = vmatprep.subr.bf16.mxu0 %v1150
        %1214 = vmatpush1.bf16.msra.mxu0 %v1149
        %1215 = vmatprep.subr.bf16.mxu0 %v1152
        %1216 = vmatpush1.bf16.msra.mxu0 %v1151
        %1217 = vmatprep.subr.bf16.mxu0 %v1154
        %1218 = vmatpush1.bf16.msra.mxu0 %v1153
        %1219 = vmatprep.subr.bf16.mxu0 %v1156
        %1220 = vmatpush1.bf16.msra.mxu0 %v1155
        %1221 = vmatprep.subr.bf16.mxu0 %v1158
        %1222 = vmatpush1.bf16.msra.mxu0 %v1157
        %1223 = vmatprep.subr.bf16.mxu0 %v1160
        %1224 = vmatpush1.bf16.msra.mxu0 %v1159
        %1225 = vmatprep.subr.bf16.mxu0 %v1162
        %1226 = vmatpush1.bf16.msra.mxu0 %v1161
        %1227 = vmatprep.subr.bf16.mxu0 %v1164
        %1228 = vmatpush1.bf16.msra.mxu0 %v1163
        %1229 = vmatprep.mubr.bf16.mxu0 %v910
        %1230 = vmatmul.mubr.bf16.gmra.mrb[0].mxu0 %v909
        %v1231 = vpop.f32.mrb[0].mxu0
        %v1232 = vadd.f32 %v710, %v1231
        %v1233 = vpop.f32.mrb[0].mxu0
        %v1234 = vadd.f32 %v714, %v1233
        %v1235 = vpop.f32.mrb[0].mxu0
        %v1236 = vadd.f32 %v710, %v1235
        %v1237 = vpop.f32.mrb[0].mxu0
        %v1238 = vadd.f32 %v714, %v1237
        %1239 = vmatprep.mubr.bf16.mxu0 %v912
        %1240 = vmatmul.mubr.bf16.gmra.mrb[0].mxu0 %v911
        %v1241 = vpop.f32.mrb[0].mxu0
        %v1242 = vadd.f32 %v710, %v1241
        %v1243 = vpop.f32.mrb[0].mxu0
        %v1244 = vadd.f32 %v714, %v1243
        %v1245 = vpop.f32.mrb[0].mxu0
        %v1246 = vadd.f32 %v710, %v1245
        %v1247 = vpop.f32.mrb[0].mxu0
        %v1248 = vadd.f32 %v714, %v1247
        %1249 = vmatprep.mubr.bf16.mxu0 %v914
        %1250 = vmatmul.mubr.bf16.gmra.mrb[0].mxu0 %v913
        %v1251 = vpop.f32.mrb[0].mxu0
        %v1252 = vadd.f32 %v710, %v1251
        %v1253 = vpop.f32.mrb[0].mxu0
        %v1254 = vadd.f32 %v714, %v1253
        %v1255 = vpop.f32.mrb[0].mxu0
        %v1256 = vadd.f32 %v710, %v1255
        %v1257 = vpop.f32.mrb[0].mxu0
        %v1258 = vadd.f32 %v714, %v1257
        %1259 = vmatprep.mubr.bf16.mxu0 %v916
        %1260 = vmatmul.mubr.bf16.gmra.mrb[0].mxu0 %v915
        %v1261 = vpop.f32.mrb[0].mxu0
        %v1262 = vadd.f32 %v710, %v1261
        %v1263 = vpop.f32.mrb[0].mxu0
        %v1264 = vadd.f32 %v714, %v1263
        %v1265 = vpop.f32.mrb[0].mxu0
        %v1266 = vadd.f32 %v710, %v1265
        %v1267 = vpop.f32.mrb[0].mxu0
        %v1268 = vadd.f32 %v714, %v1267
        %1269 = vmatprep.mubr.bf16.mxu0 %v918
        %1270 = vmatmul.mubr.bf16.gmra.mrb[0].mxu0 %v917
        %v1271 = vpop.f32.mrb[0].mxu0
        %v1272 = vadd.f32 %v710, %v1271
        %v1273 = vpop.f32.mrb[0].mxu0
        %v1274 = vadd.f32 %v714, %v1273
        %v1275 = vpop.f32.mrb[0].mxu0
        %v1276 = vadd.f32 %v710, %v1275
        %v1277 = vpop.f32.mrb[0].mxu0
        %v1278 = vadd.f32 %v714, %v1277
        %1279 = vmatprep.mubr.bf16.mxu0 %v920
        %1280 = vmatmul.mubr.bf16.gmra.mrb[0].mxu0 %v919
        %v1281 = vpop.f32.mrb[0].mxu0
        %v1282 = vadd.f32 %v710, %v1281
        %v1283 = vpop.f32.mrb[0].mxu0
        %v1284 = vadd.f32 %v714, %v1283
        %v1285 = vpop.f32.mrb[0].mxu0
        %v1286 = vadd.f32 %v710, %v1285
        %v1287 = vpop.f32.mrb[0].mxu0
        %v1288 = vadd.f32 %v714, %v1287
        %1289 = vmatprep.mubr.bf16.mxu0 %v922
        %1290 = vmatmul.mubr.bf16.gmra.mrb[0].mxu0 %v921
        %v1291 = vpop.f32.mrb[0].mxu0
        %v1292 = vadd.f32 %v710, %v1291
        %v1293 = vpop.f32.mrb[0].mxu0
        %v1294 = vadd.f32 %v714, %v1293
        %v1295 = vpop.f32.mrb[0].mxu0
        %v1296 = vadd.f32 %v710, %v1295
        %v1297 = vpop.f32.mrb[0].mxu0
        %v1298 = vadd.f32 %v714, %v1297
        %1299 = vmatprep.mubr.bf16.mxu0 %v924
        %1300 = vmatmul.mubr.bf16.gmra.mrb[0].mxu0 %v923
        %v1301 = vpop.f32.mrb[0].mxu0
        %v1302 = vadd.f32 %v710, %v1301
        %v1303 = vpop.f32.mrb[0].mxu0
        %v1304 = vadd.f32 %v714, %v1303
        %v1305 = vpop.f32.mrb[0].mxu0
        %v1306 = vadd.f32 %v710, %v1305
        %v1307 = vpop.f32.mrb[0].mxu0
        %v1308 = vadd.f32 %v714, %v1307
        %1309 = vmatprep.mubr.bf16.mxu0 %v926
        %1310 = vmatmul.mubr.bf16.gmra.mrb[0].mxu0 %v925
        %v1311 = vpop.f32.mrb[0].mxu0
        %v1312 = vadd.f32 %v710, %v1311
        %v1313 = vpop.f32.mrb[0].mxu0
        %v1314 = vadd.f32 %v714, %v1313
        %v1315 = vpop.f32.mrb[0].mxu0
        %v1316 = vadd.f32 %v710, %v1315
        %v1317 = vpop.f32.mrb[0].mxu0
        %v1318 = vadd.f32 %v714, %v1317
        %1319 = vmatprep.mubr.bf16.mxu0 %v928
        %1320 = vmatmul.mubr.bf16.gmra.mrb[0].mxu0 %v927
        %v1321 = vpop.f32.mrb[0].mxu0
        %v1322 = vadd.f32 %v710, %v1321
        %v1323 = vpop.f32.mrb[0].mxu0
        %v1324 = vadd.f32 %v714, %v1323
        %v1325 = vpop.f32.mrb[0].mxu0
        %v1326 = vadd.f32 %v710, %v1325
        %v1327 = vpop.f32.mrb[0].mxu0
        %v1328 = vadd.f32 %v714, %v1327
        %1329 = vmatprep.mubr.bf16.mxu0 %v930
        %1330 = vmatmul.mubr.bf16.gmra.mrb[0].mxu0 %v929
        %v1331 = vpop.f32.mrb[0].mxu0
        %v1332 = vadd.f32 %v710, %v1331
        %v1333 = vpop.f32.mrb[0].mxu0
        %v1334 = vadd.f32 %v714, %v1333
        %v1335 = vpop.f32.mrb[0].mxu0
        %v1336 = vadd.f32 %v710, %v1335
        %v1337 = vpop.f32.mrb[0].mxu0
        %v1338 = vadd.f32 %v714, %v1337
        %1339 = vmatprep.mubr.bf16.mxu0 %v932
        %1340 = vmatmul.mubr.bf16.gmra.mrb[0].mxu0 %v931
        %v1341 = vpop.f32.mrb[0].mxu0
        %v1342 = vadd.f32 %v710, %v1341
        %v1343 = vpop.f32.mrb[0].mxu0
        %v1344 = vadd.f32 %v714, %v1343
        %v1345 = vpop.f32.mrb[0].mxu0
        %v1346 = vadd.f32 %v710, %v1345
        %v1347 = vpop.f32.mrb[0].mxu0
        %v1348 = vadd.f32 %v714, %v1347
        %1349 = vmatprep.mubr.bf16.mxu0 %v934
        %1350 = vmatmul.mubr.bf16.gmra.mrb[0].mxu0 %v933
        %v1351 = vpop.f32.mrb[0].mxu0
        %v1352 = vadd.f32 %v710, %v1351
        %v1353 = vpop.f32.mrb[0].mxu0
        %v1354 = vadd.f32 %v714, %v1353
        %v1355 = vpop.f32.mrb[0].mxu0
        %v1356 = vadd.f32 %v710, %v1355
        %v1357 = vpop.f32.mrb[0].mxu0
        %v1358 = vadd.f32 %v714, %v1357
        %1359 = vmatprep.mubr.bf16.mxu0 %v936
        %1360 = vmatmul.mubr.bf16.gmra.mrb[0].mxu0 %v935
        %v1361 = vpop.f32.mrb[0].mxu0
        %v1362 = vadd.f32 %v710, %v1361
        %v1363 = vpop.f32.mrb[0].mxu0
        %v1364 = vadd.f32 %v714, %v1363
        %v1365 = vpop.f32.mrb[0].mxu0
        %v1366 = vadd.f32 %v710, %v1365
        %v1367 = vpop.f32.mrb[0].mxu0
        %v1368 = vadd.f32 %v714, %v1367
        %1369 = vmatprep.mubr.bf16.mxu0 %v938
        %1370 = vmatmul.mubr.bf16.gmra.mrb[0].mxu0 %v937
        %v1371 = vpop.f32.mrb[0].mxu0
        %v1372 = vadd.f32 %v710, %v1371
        %v1373 = vpop.f32.mrb[0].mxu0
        %v1374 = vadd.f32 %v714, %v1373
        %v1375 = vpop.f32.mrb[0].mxu0
        %v1376 = vadd.f32 %v710, %v1375
        %v1377 = vpop.f32.mrb[0].mxu0
        %v1378 = vadd.f32 %v714, %v1377
        %1379 = vmatprep.mubr.bf16.mxu0 %v940
        %1380 = vmatmul.mubr.bf16.gmra.mrb[0].mxu0 %v939
        %v1381 = vpop.f32.mrb[0].mxu0
        %v1382 = vadd.f32 %v710, %v1381
        %v1383 = vpop.f32.mrb[0].mxu0
        %v1384 = vadd.f32 %v714, %v1383
        %v1385 = vpop.f32.mrb[0].mxu0
        %v1386 = vadd.f32 %v710, %v1385
        %v1387 = vpop.f32.mrb[0].mxu0
        %v1388 = vadd.f32 %v714, %v1387
        %1389 = vmatprep.mubr.bf16.mxu0 %v942
        %1390 = vmatmul.mubr.bf16.gmra.mrb[0].mxu0 %v941
        %v1391 = vpop.f32.mrb[0].mxu0
        %v1392 = vadd.f32 %v710, %v1391
        %v1393 = vpop.f32.mrb[0].mxu0
        %v1394 = vadd.f32 %v714, %v1393
        %v1395 = vpop.f32.mrb[0].mxu0
        %v1396 = vadd.f32 %v710, %v1395
        %v1397 = vpop.f32.mrb[0].mxu0
        %v1398 = vadd.f32 %v714, %v1397
        %1399 = vmatprep.mubr.bf16.mxu0 %v944
        %1400 = vmatmul.mubr.bf16.gmra.mrb[0].mxu0 %v943
        %v1401 = vpop.f32.mrb[0].mxu0
        %v1402 = vadd.f32 %v710, %v1401
        %v1403 = vpop.f32.mrb[0].mxu0
        %v1404 = vadd.f32 %v714, %v1403
        %v1405 = vpop.f32.mrb[0].mxu0
        %v1406 = vadd.f32 %v710, %v1405
        %v1407 = vpop.f32.mrb[0].mxu0
        %v1408 = vadd.f32 %v714, %v1407
        %1409 = vmatprep.mubr.bf16.mxu0 %v946
        %1410 = vmatmul.mubr.bf16.gmra.mrb[0].mxu0 %v945
        %v1411 = vpop.f32.mrb[0].mxu0
        %v1412 = vadd.f32 %v710, %v1411
        %v1413 = vpop.f32.mrb[0].mxu0
        %v1414 = vadd.f32 %v714, %v1413
        %v1415 = vpop.f32.mrb[0].mxu0
        %v1416 = vadd.f32 %v710, %v1415
        %v1417 = vpop.f32.mrb[0].mxu0
        %v1418 = vadd.f32 %v714, %v1417
        %1419 = vmatprep.mubr.bf16.mxu0 %v948
        %1420 = vmatmul.mubr.bf16.gmra.mrb[0].mxu0 %v947
        %v1421 = vpop.f32.mrb[0].mxu0
        %v1422 = vadd.f32 %v710, %v1421
        %v1423 = vpop.f32.mrb[0].mxu0
        %v1424 = vadd.f32 %v714, %v1423
        %v1425 = vpop.f32.mrb[0].mxu0
        %v1426 = vadd.f32 %v710, %v1425
        %v1427 = vpop.f32.mrb[0].mxu0
        %v1428 = vadd.f32 %v714, %v1427
        %1429 = vmatprep.mubr.bf16.mxu0 %v950
        %1430 = vmatmul.mubr.bf16.gmra.mrb[0].mxu0 %v949
        %v1431 = vpop.f32.mrb[0].mxu0
        %v1432 = vadd.f32 %v710, %v1431
        %v1433 = vpop.f32.mrb[0].mxu0
        %v1434 = vadd.f32 %v714, %v1433
        %v1435 = vpop.f32.mrb[0].mxu0
        %v1436 = vadd.f32 %v710, %v1435
        %v1437 = vpop.f32.mrb[0].mxu0
        %v1438 = vadd.f32 %v714, %v1437
        %1439 = vmatprep.mubr.bf16.mxu0 %v952
        %1440 = vmatmul.mubr.bf16.gmra.mrb[0].mxu0 %v951
        %v1441 = vpop.f32.mrb[0].mxu0
        %v1442 = vadd.f32 %v710, %v1441
        %v1443 = vpop.f32.mrb[0].mxu0
        %v1444 = vadd.f32 %v714, %v1443
        %v1445 = vpop.f32.mrb[0].mxu0
        %v1446 = vadd.f32 %v710, %v1445
        %v1447 = vpop.f32.mrb[0].mxu0
        %v1448 = vadd.f32 %v714, %v1447
        %1449 = vmatprep.mubr.bf16.mxu0 %v954
        %1450 = vmatmul.mubr.bf16.gmra.mrb[0].mxu0 %v953
        %v1451 = vpop.f32.mrb[0].mxu0
        %v1452 = vadd.f32 %v710, %v1451
        %v1453 = vpop.f32.mrb[0].mxu0
        %v1454 = vadd.f32 %v714, %v1453
        %v1455 = vpop.f32.mrb[0].mxu0
        %v1456 = vadd.f32 %v710, %v1455
        %v1457 = vpop.f32.mrb[0].mxu0
        %v1458 = vadd.f32 %v714, %v1457
        %1459 = vmatprep.mubr.bf16.mxu0 %v956
        %1460 = vmatmul.mubr.bf16.gmra.mrb[0].mxu0 %v955
        %v1461 = vpop.f32.mrb[0].mxu0
        %v1462 = vadd.f32 %v710, %v1461
        %v1463 = vpop.f32.mrb[0].mxu0
        %v1464 = vadd.f32 %v714, %v1463
        %v1465 = vpop.f32.mrb[0].mxu0
        %v1466 = vadd.f32 %v710, %v1465
        %v1467 = vpop.f32.mrb[0].mxu0
        %v1468 = vadd.f32 %v714, %v1467
        %1469 = vmatprep.mubr.bf16.mxu0 %v958
        %1470 = vmatmul.mubr.bf16.gmra.mrb[0].mxu0 %v957
        %v1471 = vpop.f32.mrb[0].mxu0
        %v1472 = vadd.f32 %v710, %v1471
        %v1473 = vpop.f32.mrb[0].mxu0
        %v1474 = vadd.f32 %v714, %v1473
        %v1475 = vpop.f32.mrb[0].mxu0
        %v1476 = vadd.f32 %v710, %v1475
        %v1477 = vpop.f32.mrb[0].mxu0
        %v1478 = vadd.f32 %v714, %v1477
        %1479 = vmatprep.mubr.bf16.mxu0 %v960
        %1480 = vmatmul.mubr.bf16.gmra.mrb[0].mxu0 %v959
        %v1481 = vpop.f32.mrb[0].mxu0
        %v1482 = vadd.f32 %v710, %v1481
        %v1483 = vpop.f32.mrb[0].mxu0
        %v1484 = vadd.f32 %v714, %v1483
        %v1485 = vpop.f32.mrb[0].mxu0
        %v1486 = vadd.f32 %v710, %v1485
        %v1487 = vpop.f32.mrb[0].mxu0
        %v1488 = vadd.f32 %v714, %v1487
        %1489 = vmatprep.mubr.bf16.mxu0 %v962
        %1490 = vmatmul.mubr.bf16.gmra.mrb[0].mxu0 %v961
        %v1491 = vpop.f32.mrb[0].mxu0
        %v1492 = vadd.f32 %v710, %v1491
        %v1493 = vpop.f32.mrb[0].mxu0
        %v1494 = vadd.f32 %v714, %v1493
        %v1495 = vpop.f32.mrb[0].mxu0
        %v1496 = vadd.f32 %v710, %v1495
        %v1497 = vpop.f32.mrb[0].mxu0
        %v1498 = vadd.f32 %v714, %v1497
        %1499 = vmatprep.mubr.bf16.mxu0 %v964
        %1500 = vmatmul.mubr.bf16.gmra.mrb[0].mxu0 %v963
        %v1501 = vpop.f32.mrb[0].mxu0
        %v1502 = vadd.f32 %v710, %v1501
        %v1503 = vpop.f32.mrb[0].mxu0
        %v1504 = vadd.f32 %v714, %v1503
        %v1505 = vpop.f32.mrb[0].mxu0
        %v1506 = vadd.f32 %v710, %v1505
        %v1507 = vpop.f32.mrb[0].mxu0
        %v1508 = vadd.f32 %v714, %v1507
        %1509 = vmatprep.mubr.bf16.mxu0 %v966
        %1510 = vmatmul.mubr.bf16.gmra.mrb[0].mxu0 %v965
        %v1511 = vpop.f32.mrb[0].mxu0
        %v1512 = vadd.f32 %v710, %v1511
        %v1513 = vpop.f32.mrb[0].mxu0
        %v1514 = vadd.f32 %v714, %v1513
        %v1515 = vpop.f32.mrb[0].mxu0
        %v1516 = vadd.f32 %v710, %v1515
        %v1517 = vpop.f32.mrb[0].mxu0
        %v1518 = vadd.f32 %v714, %v1517
        %1519 = vmatprep.mubr.bf16.mxu0 %v968
        %1520 = vmatmul.mubr.bf16.gmra.mrb[0].mxu0 %v967
        %v1521 = vpop.f32.mrb[0].mxu0
        %v1522 = vadd.f32 %v710, %v1521
        %v1523 = vpop.f32.mrb[0].mxu0
        %v1524 = vadd.f32 %v714, %v1523
        %v1525 = vpop.f32.mrb[0].mxu0
        %v1526 = vadd.f32 %v710, %v1525
        %v1527 = vpop.f32.mrb[0].mxu0
        %v1528 = vadd.f32 %v714, %v1527
        %1529 = vmatprep.mubr.bf16.mxu0 %v970
        %1530 = vmatmul.mubr.bf16.gmra.mrb[0].mxu0 %v969
        %v1531 = vpop.f32.mrb[0].mxu0
        %v1532 = vadd.f32 %v710, %v1531
        %v1533 = vpop.f32.mrb[0].mxu0
        %v1534 = vadd.f32 %v714, %v1533
        %v1535 = vpop.f32.mrb[0].mxu0
        %v1536 = vadd.f32 %v710, %v1535
        %v1537 = vpop.f32.mrb[0].mxu0
        %v1538 = vadd.f32 %v714, %v1537
        %1539 = vmatprep.mubr.bf16.mxu0 %v972
        %1540 = vmatmul.mubr.bf16.gmra.mrb[0].mxu0 %v971
        %v1541 = vpop.f32.mrb[0].mxu0
        %v1542 = vadd.f32 %v710, %v1541
        %v1543 = vpop.f32.mrb[0].mxu0
        %v1544 = vadd.f32 %v714, %v1543
        %v1545 = vpop.f32.mrb[0].mxu0
        %v1546 = vadd.f32 %v710, %v1545
        %v1547 = vpop.f32.mrb[0].mxu0
        %v1548 = vadd.f32 %v714, %v1547
        %1549 = vdwg.mxu0
        %v1550 = vld [vmem:[%s591] sm:$0xff]
        %v1551 = vld [vmem:[%s591 + $0x8] sm:$0xff]
        %v1552 = vld [vmem:[%s591 + $0x10] sm:$0xff]
        %v1553 = vld [vmem:[%s591 + $0x18] sm:$0xff]
        %v1554 = vld [vmem:[%s591 + $0x20] sm:$0xff]
        %v1555 = vld [vmem:[%s591 + $0x28] sm:$0xff]
        %v1556 = vld [vmem:[%s591 + $0x30] sm:$0xff]
        %v1557 = vld [vmem:[%s591 + $0x38] sm:$0xff]
        %v1558 = vld [vmem:[%s591 + $0x40] sm:$0xff]
        %v1559 = vld [vmem:[%s591 + $0x48] sm:$0xff]
        %v1560 = vld [vmem:[%s591 + $0x50] sm:$0xff]
        %v1561 = vld [vmem:[%s591 + $0x58] sm:$0xff]
        %v1562 = vld [vmem:[%s591 + $0x60] sm:$0xff]
        %v1563 = vld [vmem:[%s591 + $0x68] sm:$0xff]
        %v1564 = vld [vmem:[%s591 + $0x70] sm:$0xff]
        %v1565 = vld [vmem:[%s591 + $0x78] sm:$0xff]
        %v1566 = vld [vmem:[%s591 + $0x80] sm:$0xff]
        %v1567 = vld [vmem:[%s591 + $0x88] sm:$0xff]
        %v1568 = vld [vmem:[%s591 + $0x90] sm:$0xff]
        %v1569 = vld [vmem:[%s591 + $0x98] sm:$0xff]
        %v1570 = vld [vmem:[%s591 + $0xa0] sm:$0xff]
        %v1571 = vld [vmem:[%s591 + $0xa8] sm:$0xff]
        %v1572 = vld [vmem:[%s591 + $0xb0] sm:$0xff]
        %v1573 = vld [vmem:[%s591 + $0xb8] sm:$0xff]
        %v1574 = vld [vmem:[%s591 + $0xc0] sm:$0xff]
        %v1575 = vld [vmem:[%s591 + $0xc8] sm:$0xff]
        %v1576 = vld [vmem:[%s591 + $0xd0] sm:$0xff]
        %v1577 = vld [vmem:[%s591 + $0xd8] sm:$0xff]
        %v1578 = vld [vmem:[%s591 + $0xe0] sm:$0xff]
        %v1579 = vld [vmem:[%s591 + $0xe8] sm:$0xff]
        %v1580 = vld [vmem:[%s591 + $0xf0] sm:$0xff]
        %v1581 = vld [vmem:[%s591 + $0xf8] sm:$0xff]
        %v1582 = vld [vmem:[%s591 + $0x100] sm:$0xff]
        %v1583 = vld [vmem:[%s591 + $0x108] sm:$0xff]
        %v1584 = vld [vmem:[%s591 + $0x110] sm:$0xff]
        %v1585 = vld [vmem:[%s591 + $0x118] sm:$0xff]
        %v1586 = vld [vmem:[%s591 + $0x120] sm:$0xff]
        %v1587 = vld [vmem:[%s591 + $0x128] sm:$0xff]
        %v1588 = vld [vmem:[%s591 + $0x130] sm:$0xff]
        %v1589 = vld [vmem:[%s591 + $0x138] sm:$0xff]
        %v1590 = vld [vmem:[%s591 + $0x140] sm:$0xff]
        %v1591 = vld [vmem:[%s591 + $0x148] sm:$0xff]
        %v1592 = vld [vmem:[%s591 + $0x150] sm:$0xff]
        %v1593 = vld [vmem:[%s591 + $0x158] sm:$0xff]
        %v1594 = vld [vmem:[%s591 + $0x160] sm:$0xff]
        %v1595 = vld [vmem:[%s591 + $0x168] sm:$0xff]
        %v1596 = vld [vmem:[%s591 + $0x170] sm:$0xff]
        %v1597 = vld [vmem:[%s591 + $0x178] sm:$0xff]
        %v1598 = vld [vmem:[%s591 + $0x180] sm:$0xff]
        %v1599 = vld [vmem:[%s591 + $0x188] sm:$0xff]
        %v1600 = vld [vmem:[%s591 + $0x190] sm:$0xff]
        %v1601 = vld [vmem:[%s591 + $0x198] sm:$0xff]
        %v1602 = vld [vmem:[%s591 + $0x1a0] sm:$0xff]
        %v1603 = vld [vmem:[%s591 + $0x1a8] sm:$0xff]
        %v1604 = vld [vmem:[%s591 + $0x1b0] sm:$0xff]
        %v1605 = vld [vmem:[%s591 + $0x1b8] sm:$0xff]
        %v1606 = vld [vmem:[%s591 + $0x1c0] sm:$0xff]
        %v1607 = vld [vmem:[%s591 + $0x1c8] sm:$0xff]
        %v1608 = vld [vmem:[%s591 + $0x1d0] sm:$0xff]
        %v1609 = vld [vmem:[%s591 + $0x1d8] sm:$0xff]
        %v1610 = vld [vmem:[%s591 + $0x1e0] sm:$0xff]
        %v1611 = vld [vmem:[%s591 + $0x1e8] sm:$0xff]
        %v1612 = vld [vmem:[%s591 + $0x1f0] sm:$0xff]
        %v1613 = vld [vmem:[%s591 + $0x1f8] sm:$0xff]
        %v1614 = vld [vmem:[#allocation2] ss:$4 sm:$0x3]
        %1616 = vset.pattern.permute.xlu0 0
        %1617 = vperm.xlu0 %1616, %v1550
        %v1618 = vpop.permute.xlu0 %1617
        %1621 = vset.pattern.permute.xlu0 0
        %1622 = vperm.xlu0 %1621, %v1551
        %v1623 = vpop.permute.xlu0 %1622
        %1626 = vset.pattern.permute.xlu0 0
        %1627 = vperm.xlu0 %1626, %v1552
        %v1628 = vpop.permute.xlu0 %1627
        %1631 = vset.pattern.permute.xlu0 0
        %1632 = vperm.xlu0 %1631, %v1553
        %v1633 = vpop.permute.xlu0 %1632
        %1636 = vset.pattern.permute.xlu0 0
        %1637 = vperm.xlu0 %1636, %v1554
        %v1638 = vpop.permute.xlu0 %1637
        %1641 = vset.pattern.permute.xlu0 0
        %1642 = vperm.xlu0 %1641, %v1555
        %v1643 = vpop.permute.xlu0 %1642
        %1646 = vset.pattern.permute.xlu0 0
        %1647 = vperm.xlu0 %1646, %v1556
        %v1648 = vpop.permute.xlu0 %1647
        %1651 = vset.pattern.permute.xlu0 0
        %1652 = vperm.xlu0 %1651, %v1557
        %v1653 = vpop.permute.xlu0 %1652
        %1656 = vset.pattern.permute.xlu0 0
        %1657 = vperm.xlu0 %1656, %v1558
        %v1658 = vpop.permute.xlu0 %1657
        %1661 = vset.pattern.permute.xlu0 0
        %1662 = vperm.xlu0 %1661, %v1559
        %v1663 = vpop.permute.xlu0 %1662
        %1666 = vset.pattern.permute.xlu0 0
        %1667 = vperm.xlu0 %1666, %v1560
        %v1668 = vpop.permute.xlu0 %1667
        %1671 = vset.pattern.permute.xlu0 0
        %1672 = vperm.xlu0 %1671, %v1561
        %v1673 = vpop.permute.xlu0 %1672
        %1676 = vset.pattern.permute.xlu0 0
        %1677 = vperm.xlu0 %1676, %v1562
        %v1678 = vpop.permute.xlu0 %1677
        %1681 = vset.pattern.permute.xlu0 0
        %1682 = vperm.xlu0 %1681, %v1563
        %v1683 = vpop.permute.xlu0 %1682
        %1686 = vset.pattern.permute.xlu0 0
        %1687 = vperm.xlu0 %1686, %v1564
        %v1688 = vpop.permute.xlu0 %1687
        %1691 = vset.pattern.permute.xlu0 0
        %1692 = vperm.xlu0 %1691, %v1565
        %v1693 = vpop.permute.xlu0 %1692
        %1696 = vset.pattern.permute.xlu0 0
        %1697 = vperm.xlu0 %1696, %v1566
        %v1698 = vpop.permute.xlu0 %1697
        %1701 = vset.pattern.permute.xlu0 0
        %1702 = vperm.xlu0 %1701, %v1567
        %v1703 = vpop.permute.xlu0 %1702
        %1706 = vset.pattern.permute.xlu0 0
        %1707 = vperm.xlu0 %1706, %v1568
        %v1708 = vpop.permute.xlu0 %1707
        %1711 = vset.pattern.permute.xlu0 0
        %1712 = vperm.xlu0 %1711, %v1569
        %v1713 = vpop.permute.xlu0 %1712
        %1716 = vset.pattern.permute.xlu0 0
        %1717 = vperm.xlu0 %1716, %v1570
        %v1718 = vpop.permute.xlu0 %1717
        %1721 = vset.pattern.permute.xlu0 0
        %1722 = vperm.xlu0 %1721, %v1571
        %v1723 = vpop.permute.xlu0 %1722
        %1726 = vset.pattern.permute.xlu0 0
        %1727 = vperm.xlu0 %1726, %v1572
        %v1728 = vpop.permute.xlu0 %1727
        %1731 = vset.pattern.permute.xlu0 0
        %1732 = vperm.xlu0 %1731, %v1573
        %v1733 = vpop.permute.xlu0 %1732
        %1736 = vset.pattern.permute.xlu0 0
        %1737 = vperm.xlu0 %1736, %v1574
        %v1738 = vpop.permute.xlu0 %1737
        %1741 = vset.pattern.permute.xlu0 0
        %1742 = vperm.xlu0 %1741, %v1575
        %v1743 = vpop.permute.xlu0 %1742
        %1746 = vset.pattern.permute.xlu0 0
        %1747 = vperm.xlu0 %1746, %v1576
        %v1748 = vpop.permute.xlu0 %1747
        %1751 = vset.pattern.permute.xlu0 0
        %1752 = vperm.xlu0 %1751, %v1577
        %v1753 = vpop.permute.xlu0 %1752
        %1756 = vset.pattern.permute.xlu0 0
        %1757 = vperm.xlu0 %1756, %v1578
        %v1758 = vpop.permute.xlu0 %1757
        %1761 = vset.pattern.permute.xlu0 0
        %1762 = vperm.xlu0 %1761, %v1579
        %v1763 = vpop.permute.xlu0 %1762
        %1766 = vset.pattern.permute.xlu0 0
        %1767 = vperm.xlu0 %1766, %v1580
        %v1768 = vpop.permute.xlu0 %1767
        %1771 = vset.pattern.permute.xlu0 0
        %1772 = vperm.xlu0 %1771, %v1581
        %v1773 = vpop.permute.xlu0 %1772
        %1776 = vset.pattern.permute.xlu0 0
        %1777 = vperm.xlu0 %1776, %v1582
        %v1778 = vpop.permute.xlu0 %1777
        %1781 = vset.pattern.permute.xlu0 0
        %1782 = vperm.xlu0 %1781, %v1583
        %v1783 = vpop.permute.xlu0 %1782
        %1786 = vset.pattern.permute.xlu0 0
        %1787 = vperm.xlu0 %1786, %v1584
        %v1788 = vpop.permute.xlu0 %1787
        %1791 = vset.pattern.permute.xlu0 0
        %1792 = vperm.xlu0 %1791, %v1585
        %v1793 = vpop.permute.xlu0 %1792
        %1796 = vset.pattern.permute.xlu0 0
        %1797 = vperm.xlu0 %1796, %v1586
        %v1798 = vpop.permute.xlu0 %1797
        %1801 = vset.pattern.permute.xlu0 0
        %1802 = vperm.xlu0 %1801, %v1587
        %v1803 = vpop.permute.xlu0 %1802
        %1806 = vset.pattern.permute.xlu0 0
        %1807 = vperm.xlu0 %1806, %v1588
        %v1808 = vpop.permute.xlu0 %1807
        %1811 = vset.pattern.permute.xlu0 0
        %1812 = vperm.xlu0 %1811, %v1589
        %v1813 = vpop.permute.xlu0 %1812
        %1816 = vset.pattern.permute.xlu0 0
        %1817 = vperm.xlu0 %1816, %v1590
        %v1818 = vpop.permute.xlu0 %1817
        %1821 = vset.pattern.permute.xlu0 0
        %1822 = vperm.xlu0 %1821, %v1591
        %v1823 = vpop.permute.xlu0 %1822
        %1826 = vset.pattern.permute.xlu0 0
        %1827 = vperm.xlu0 %1826, %v1592
        %v1828 = vpop.permute.xlu0 %1827
        %1831 = vset.pattern.permute.xlu0 0
        %1832 = vperm.xlu0 %1831, %v1593
        %v1833 = vpop.permute.xlu0 %1832
        %1836 = vset.pattern.permute.xlu0 0
        %1837 = vperm.xlu0 %1836, %v1594
        %v1838 = vpop.permute.xlu0 %1837
        %1841 = vset.pattern.permute.xlu0 0
        %1842 = vperm.xlu0 %1841, %v1595
        %v1843 = vpop.permute.xlu0 %1842
        %1846 = vset.pattern.permute.xlu0 0
        %1847 = vperm.xlu0 %1846, %v1596
        %v1848 = vpop.permute.xlu0 %1847
        %1851 = vset.pattern.permute.xlu0 0
        %1852 = vperm.xlu0 %1851, %v1597
        %v1853 = vpop.permute.xlu0 %1852
        %1856 = vset.pattern.permute.xlu0 0
        %1857 = vperm.xlu0 %1856, %v1598
        %v1858 = vpop.permute.xlu0 %1857
        %1861 = vset.pattern.permute.xlu0 0
        %1862 = vperm.xlu0 %1861, %v1599
        %v1863 = vpop.permute.xlu0 %1862
        %1866 = vset.pattern.permute.xlu0 0
        %1867 = vperm.xlu0 %1866, %v1600
        %v1868 = vpop.permute.xlu0 %1867
        %1871 = vset.pattern.permute.xlu0 0
        %1872 = vperm.xlu0 %1871, %v1601
        %v1873 = vpop.permute.xlu0 %1872
        %1876 = vset.pattern.permute.xlu0 0
        %1877 = vperm.xlu0 %1876, %v1602
        %v1878 = vpop.permute.xlu0 %1877
        %1881 = vset.pattern.permute.xlu0 0
        %1882 = vperm.xlu0 %1881, %v1603
        %v1883 = vpop.permute.xlu0 %1882
        %1886 = vset.pattern.permute.xlu0 0
        %1887 = vperm.xlu0 %1886, %v1604
        %v1888 = vpop.permute.xlu0 %1887
        %1891 = vset.pattern.permute.xlu0 0
        %1892 = vperm.xlu0 %1891, %v1605
        %v1893 = vpop.permute.xlu0 %1892
        %1896 = vset.pattern.permute.xlu0 0
        %1897 = vperm.xlu0 %1896, %v1606
        %v1898 = vpop.permute.xlu0 %1897
        %1901 = vset.pattern.permute.xlu0 0
        %1902 = vperm.xlu0 %1901, %v1607
        %v1903 = vpop.permute.xlu0 %1902
        %1906 = vset.pattern.permute.xlu0 0
        %1907 = vperm.xlu0 %1906, %v1608
        %v1908 = vpop.permute.xlu0 %1907
        %1911 = vset.pattern.permute.xlu0 0
        %1912 = vperm.xlu0 %1911, %v1609
        %v1913 = vpop.permute.xlu0 %1912
        %1916 = vset.pattern.permute.xlu0 0
        %1917 = vperm.xlu0 %1916, %v1610
        %v1918 = vpop.permute.xlu0 %1917
        %1921 = vset.pattern.permute.xlu0 0
        %1922 = vperm.xlu0 %1921, %v1611
        %v1923 = vpop.permute.xlu0 %1922
        %1926 = vset.pattern.permute.xlu0 0
        %1927 = vperm.xlu0 %1926, %v1612
        %v1928 = vpop.permute.xlu0 %1927
        %1931 = vset.pattern.permute.xlu0 0
        %1932 = vperm.xlu0 %1931, %v1613
        %v1933 = vpop.permute.xlu0 %1932
        %v1936 = vlaneseq
        %v1937 = vshrl.u32 %v1936, 7
        %v1938 = vsub.s32 0, %v1937
        %v1939 = vrot.slane %v1614, %v1938
        %v1940 = vlaneseq
        %v1941 = vshrl.u32 %v1940, 7
        %v1942 = vsub.s32 1, %v1941
        %v1943 = vrot.slane %v1614, %v1942
        %v1946 = vmul.f32 %v1618, %v1939
        %v1947 = vmul.f32 %v1618, %v1943
        %v1948 = vmul.f32 %v1623, %v1939
        %v1949 = vmul.f32 %v1623, %v1943
        %v1950 = vmul.f32 %v1628, %v1939
        %v1951 = vmul.f32 %v1628, %v1943
        %v1952 = vmul.f32 %v1633, %v1939
        %v1953 = vmul.f32 %v1633, %v1943
        %v1954 = vmul.f32 %v1638, %v1939
        %v1955 = vmul.f32 %v1638, %v1943
        %v1956 = vmul.f32 %v1643, %v1939
        %v1957 = vmul.f32 %v1643, %v1943
        %v1958 = vmul.f32 %v1648, %v1939
        %v1959 = vmul.f32 %v1648, %v1943
        %v1960 = vmul.f32 %v1653, %v1939
        %v1961 = vmul.f32 %v1653, %v1943
        %v1962 = vmul.f32 %v1658, %v1939
        %v1963 = vmul.f32 %v1658, %v1943
        %v1964 = vmul.f32 %v1663, %v1939
        %v1965 = vmul.f32 %v1663, %v1943
        %v1966 = vmul.f32 %v1668, %v1939
        %v1967 = vmul.f32 %v1668, %v1943
        %v1968 = vmul.f32 %v1673, %v1939
        %v1969 = vmul.f32 %v1673, %v1943
        %v1970 = vmul.f32 %v1678, %v1939
        %v1971 = vmul.f32 %v1678, %v1943
        %v1972 = vmul.f32 %v1683, %v1939
        %v1973 = vmul.f32 %v1683, %v1943
        %v1974 = vmul.f32 %v1688, %v1939
        %v1975 = vmul.f32 %v1688, %v1943
        %v1976 = vmul.f32 %v1693, %v1939
        %v1977 = vmul.f32 %v1693, %v1943
        %v1978 = vmul.f32 %v1698, %v1939
        %v1979 = vmul.f32 %v1698, %v1943
        %v1980 = vmul.f32 %v1703, %v1939
        %v1981 = vmul.f32 %v1703, %v1943
        %v1982 = vmul.f32 %v1708, %v1939
        %v1983 = vmul.f32 %v1708, %v1943
        %v1984 = vmul.f32 %v1713, %v1939
        %v1985 = vmul.f32 %v1713, %v1943
        %v1986 = vmul.f32 %v1718, %v1939
        %v1987 = vmul.f32 %v1718, %v1943
        %v1988 = vmul.f32 %v1723, %v1939
        %v1989 = vmul.f32 %v1723, %v1943
        %v1990 = vmul.f32 %v1728, %v1939
        %v1991 = vmul.f32 %v1728, %v1943
        %v1992 = vmul.f32 %v1733, %v1939
        %v1993 = vmul.f32 %v1733, %v1943
        %v1994 = vmul.f32 %v1738, %v1939
        %v1995 = vmul.f32 %v1738, %v1943
        %v1996 = vmul.f32 %v1743, %v1939
        %v1997 = vmul.f32 %v1743, %v1943
        %v1998 = vmul.f32 %v1748, %v1939
        %v1999 = vmul.f32 %v1748, %v1943
        %v2000 = vmul.f32 %v1753, %v1939
        %v2001 = vmul.f32 %v1753, %v1943
        %v2002 = vmul.f32 %v1758, %v1939
        %v2003 = vmul.f32 %v1758, %v1943
        %v2004 = vmul.f32 %v1763, %v1939
        %v2005 = vmul.f32 %v1763, %v1943
        %v2006 = vmul.f32 %v1768, %v1939
        %v2007 = vmul.f32 %v1768, %v1943
        %v2008 = vmul.f32 %v1773, %v1939
        %v2009 = vmul.f32 %v1773, %v1943
        %v2010 = vmul.f32 %v1778, %v1939
        %v2011 = vmul.f32 %v1778, %v1943
        %v2012 = vmul.f32 %v1783, %v1939
        %v2013 = vmul.f32 %v1783, %v1943
        %v2014 = vmul.f32 %v1788, %v1939
        %v2015 = vmul.f32 %v1788, %v1943
        %v2016 = vmul.f32 %v1793, %v1939
        %v2017 = vmul.f32 %v1793, %v1943
        %v2018 = vmul.f32 %v1798, %v1939
        %v2019 = vmul.f32 %v1798, %v1943
        %v2020 = vmul.f32 %v1803, %v1939
        %v2021 = vmul.f32 %v1803, %v1943
        %v2022 = vmul.f32 %v1808, %v1939
        %v2023 = vmul.f32 %v1808, %v1943
        %v2024 = vmul.f32 %v1813, %v1939
        %v2025 = vmul.f32 %v1813, %v1943
        %v2026 = vmul.f32 %v1818, %v1939
        %v2027 = vmul.f32 %v1818, %v1943
        %v2028 = vmul.f32 %v1823, %v1939
        %v2029 = vmul.f32 %v1823, %v1943
        %v2030 = vmul.f32 %v1828, %v1939
        %v2031 = vmul.f32 %v1828, %v1943
        %v2032 = vmul.f32 %v1833, %v1939
        %v2033 = vmul.f32 %v1833, %v1943
        %v2034 = vmul.f32 %v1838, %v1939
        %v2035 = vmul.f32 %v1838, %v1943
        %v2036 = vmul.f32 %v1843, %v1939
        %v2037 = vmul.f32 %v1843, %v1943
        %v2038 = vmul.f32 %v1848, %v1939
        %v2039 = vmul.f32 %v1848, %v1943
        %v2040 = vmul.f32 %v1853, %v1939
        %v2041 = vmul.f32 %v1853, %v1943
        %v2042 = vmul.f32 %v1858, %v1939
        %v2043 = vmul.f32 %v1858, %v1943
        %v2044 = vmul.f32 %v1863, %v1939
        %v2045 = vmul.f32 %v1863, %v1943
        %v2046 = vmul.f32 %v1868, %v1939
        %v2047 = vmul.f32 %v1868, %v1943
        %v2048 = vmul.f32 %v1873, %v1939
        %v2049 = vmul.f32 %v1873, %v1943
        %v2050 = vmul.f32 %v1878, %v1939
        %v2051 = vmul.f32 %v1878, %v1943
        %v2052 = vmul.f32 %v1883, %v1939
        %v2053 = vmul.f32 %v1883, %v1943
        %v2054 = vmul.f32 %v1888, %v1939
        %v2055 = vmul.f32 %v1888, %v1943
        %v2056 = vmul.f32 %v1893, %v1939
        %v2057 = vmul.f32 %v1893, %v1943
        %v2058 = vmul.f32 %v1898, %v1939
        %v2059 = vmul.f32 %v1898, %v1943
        %v2060 = vmul.f32 %v1903, %v1939
        %v2061 = vmul.f32 %v1903, %v1943
        %v2062 = vmul.f32 %v1908, %v1939
        %v2063 = vmul.f32 %v1908, %v1943
        %v2064 = vmul.f32 %v1913, %v1939
        %v2065 = vmul.f32 %v1913, %v1943
        %v2066 = vmul.f32 %v1918, %v1939
        %v2067 = vmul.f32 %v1918, %v1943
        %v2068 = vmul.f32 %v1923, %v1939
        %v2069 = vmul.f32 %v1923, %v1943
        %v2070 = vmul.f32 %v1928, %v1939
        %v2071 = vmul.f32 %v1928, %v1943
        %v2072 = vmul.f32 %v1933, %v1939
        %v2073 = vmul.f32 %v1933, %v1943
        %v2074 = vadd.f32 %v1232, %v1946
        %v2075 = vadd.f32 %v1234, %v1947
        %v2076 = vadd.f32 %v1236, %v1948
        %v2077 = vadd.f32 %v1238, %v1949
        %v2078 = vadd.f32 %v1242, %v1950
        %v2079 = vadd.f32 %v1244, %v1951
        %v2080 = vadd.f32 %v1246, %v1952
        %v2081 = vadd.f32 %v1248, %v1953
        %v2082 = vadd.f32 %v1252, %v1954
        %v2083 = vadd.f32 %v1254, %v1955
        %v2084 = vadd.f32 %v1256, %v1956
        %v2085 = vadd.f32 %v1258, %v1957
        %v2086 = vadd.f32 %v1262, %v1958
        %v2087 = vadd.f32 %v1264, %v1959
        %v2088 = vadd.f32 %v1266, %v1960
        %v2089 = vadd.f32 %v1268, %v1961
        %v2090 = vadd.f32 %v1272, %v1962
        %v2091 = vadd.f32 %v1274, %v1963
        %v2092 = vadd.f32 %v1276, %v1964
        %v2093 = vadd.f32 %v1278, %v1965
        %v2094 = vadd.f32 %v1282, %v1966
        %v2095 = vadd.f32 %v1284, %v1967
        %v2096 = vadd.f32 %v1286, %v1968
        %v2097 = vadd.f32 %v1288, %v1969
        %v2098 = vadd.f32 %v1292, %v1970
        %v2099 = vadd.f32 %v1294, %v1971
        %v2100 = vadd.f32 %v1296, %v1972
        %v2101 = vadd.f32 %v1298, %v1973
        %v2102 = vadd.f32 %v1302, %v1974
        %v2103 = vadd.f32 %v1304, %v1975
        %v2104 = vadd.f32 %v1306, %v1976
        %v2105 = vadd.f32 %v1308, %v1977
        %v2106 = vadd.f32 %v1312, %v1978
        %v2107 = vadd.f32 %v1314, %v1979
        %v2108 = vadd.f32 %v1316, %v1980
        %v2109 = vadd.f32 %v1318, %v1981
        %v2110 = vadd.f32 %v1322, %v1982
        %v2111 = vadd.f32 %v1324, %v1983
        %v2112 = vadd.f32 %v1326, %v1984
        %v2113 = vadd.f32 %v1328, %v1985
        %v2114 = vadd.f32 %v1332, %v1986
        %v2115 = vadd.f32 %v1334, %v1987
        %v2116 = vadd.f32 %v1336, %v1988
        %v2117 = vadd.f32 %v1338, %v1989
        %v2118 = vadd.f32 %v1342, %v1990
        %v2119 = vadd.f32 %v1344, %v1991
        %v2120 = vadd.f32 %v1346, %v1992
        %v2121 = vadd.f32 %v1348, %v1993
        %v2122 = vadd.f32 %v1352, %v1994
        %v2123 = vadd.f32 %v1354, %v1995
        %v2124 = vadd.f32 %v1356, %v1996
        %v2125 = vadd.f32 %v1358, %v1997
        %v2126 = vadd.f32 %v1362, %v1998
        %v2127 = vadd.f32 %v1364, %v1999
        %v2128 = vadd.f32 %v1366, %v2000
        %v2129 = vadd.f32 %v1368, %v2001
        %v2130 = vadd.f32 %v1372, %v2002
        %v2131 = vadd.f32 %v1374, %v2003
        %v2132 = vadd.f32 %v1376, %v2004
        %v2133 = vadd.f32 %v1378, %v2005
        %v2134 = vadd.f32 %v1382, %v2006
        %v2135 = vadd.f32 %v1384, %v2007
        %v2136 = vadd.f32 %v1386, %v2008
        %v2137 = vadd.f32 %v1388, %v2009
        %v2138 = vadd.f32 %v1392, %v2010
        %v2139 = vadd.f32 %v1394, %v2011
        %v2140 = vadd.f32 %v1396, %v2012
        %v2141 = vadd.f32 %v1398, %v2013
        %v2142 = vadd.f32 %v1402, %v2014
        %v2143 = vadd.f32 %v1404, %v2015
        %v2144 = vadd.f32 %v1406, %v2016
        %v2145 = vadd.f32 %v1408, %v2017
        %v2146 = vadd.f32 %v1412, %v2018
        %v2147 = vadd.f32 %v1414, %v2019
        %v2148 = vadd.f32 %v1416, %v2020
        %v2149 = vadd.f32 %v1418, %v2021
        %v2150 = vadd.f32 %v1422, %v2022
        %v2151 = vadd.f32 %v1424, %v2023
        %v2152 = vadd.f32 %v1426, %v2024
        %v2153 = vadd.f32 %v1428, %v2025
        %v2154 = vadd.f32 %v1432, %v2026
        %v2155 = vadd.f32 %v1434, %v2027
        %v2156 = vadd.f32 %v1436, %v2028
        %v2157 = vadd.f32 %v1438, %v2029
        %v2158 = vadd.f32 %v1442, %v2030
        %v2159 = vadd.f32 %v1444, %v2031
        %v2160 = vadd.f32 %v1446, %v2032
        %v2161 = vadd.f32 %v1448, %v2033
        %v2162 = vadd.f32 %v1452, %v2034
        %v2163 = vadd.f32 %v1454, %v2035
        %v2164 = vadd.f32 %v1456, %v2036
        %v2165 = vadd.f32 %v1458, %v2037
        %v2166 = vadd.f32 %v1462, %v2038
        %v2167 = vadd.f32 %v1464, %v2039
        %v2168 = vadd.f32 %v1466, %v2040
        %v2169 = vadd.f32 %v1468, %v2041
        %v2170 = vadd.f32 %v1472, %v2042
        %v2171 = vadd.f32 %v1474, %v2043
        %v2172 = vadd.f32 %v1476, %v2044
        %v2173 = vadd.f32 %v1478, %v2045
        %v2174 = vadd.f32 %v1482, %v2046
        %v2175 = vadd.f32 %v1484, %v2047
        %v2176 = vadd.f32 %v1486, %v2048
        %v2177 = vadd.f32 %v1488, %v2049
        %v2178 = vadd.f32 %v1492, %v2050
        %v2179 = vadd.f32 %v1494, %v2051
        %v2180 = vadd.f32 %v1496, %v2052
        %v2181 = vadd.f32 %v1498, %v2053
        %v2182 = vadd.f32 %v1502, %v2054
        %v2183 = vadd.f32 %v1504, %v2055
        %v2184 = vadd.f32 %v1506, %v2056
        %v2185 = vadd.f32 %v1508, %v2057
        %v2186 = vadd.f32 %v1512, %v2058
        %v2187 = vadd.f32 %v1514, %v2059
        %v2188 = vadd.f32 %v1516, %v2060
        %v2189 = vadd.f32 %v1518, %v2061
        %v2190 = vadd.f32 %v1522, %v2062
        %v2191 = vadd.f32 %v1524, %v2063
        %v2192 = vadd.f32 %v1526, %v2064
        %v2193 = vadd.f32 %v1528, %v2065
        %v2194 = vadd.f32 %v1532, %v2066
        %v2195 = vadd.f32 %v1534, %v2067
        %v2196 = vadd.f32 %v1536, %v2068
        %v2197 = vadd.f32 %v1538, %v2069
        %v2198 = vadd.f32 %v1542, %v2070
        %v2199 = vadd.f32 %v1544, %v2071
        %v2200 = vadd.f32 %v1546, %v2072
        %v2201 = vadd.f32 %v1548, %v2073
        %s2202 = scalar_lea.vmem [#allocation2], 1
        %v2203 = vld [vmem:[%s2202] ss:$4 sm:$0x3]
        %2204 = vset.pattern.permute.xlu0 1
        %2205 = vperm.xlu0 %2204, %v1550
        %v2206 = vpop.permute.xlu0 %2205
        %2208 = vset.pattern.permute.xlu0 1
        %2209 = vperm.xlu0 %2208, %v1551
        %v2210 = vpop.permute.xlu0 %2209
        %2212 = vset.pattern.permute.xlu0 1
        %2213 = vperm.xlu0 %2212, %v1552
        %v2214 = vpop.permute.xlu0 %2213
        %2216 = vset.pattern.permute.xlu0 1
        %2217 = vperm.xlu0 %2216, %v1553
        %v2218 = vpop.permute.xlu0 %2217
        %2220 = vset.pattern.permute.xlu0 1
        %2221 = vperm.xlu0 %2220, %v1554
        %v2222 = vpop.permute.xlu0 %2221
        %2224 = vset.pattern.permute.xlu0 1
        %2225 = vperm.xlu0 %2224, %v1555
        %v2226 = vpop.permute.xlu0 %2225
        %2228 = vset.pattern.permute.xlu0 1
        %2229 = vperm.xlu0 %2228, %v1556
        %v2230 = vpop.permute.xlu0 %2229
        %2232 = vset.pattern.permute.xlu0 1
        %2233 = vperm.xlu0 %2232, %v1557
        %v2234 = vpop.permute.xlu0 %2233
        %2236 = vset.pattern.permute.xlu0 1
        %2237 = vperm.xlu0 %2236, %v1558
        %v2238 = vpop.permute.xlu0 %2237
        %2240 = vset.pattern.permute.xlu0 1
        %2241 = vperm.xlu0 %2240, %v1559
        %v2242 = vpop.permute.xlu0 %2241
        %2244 = vset.pattern.permute.xlu0 1
        %2245 = vperm.xlu0 %2244, %v1560
        %v2246 = vpop.permute.xlu0 %2245
        %2248 = vset.pattern.permute.xlu0 1
        %2249 = vperm.xlu0 %2248, %v1561
        %v2250 = vpop.permute.xlu0 %2249
        %2252 = vset.pattern.permute.xlu0 1
        %2253 = vperm.xlu0 %2252, %v1562
        %v2254 = vpop.permute.xlu0 %2253
        %2256 = vset.pattern.permute.xlu0 1
        %2257 = vperm.xlu0 %2256, %v1563
        %v2258 = vpop.permute.xlu0 %2257
        %2260 = vset.pattern.permute.xlu0 1
        %2261 = vperm.xlu0 %2260, %v1564
        %v2262 = vpop.permute.xlu0 %2261
        %2264 = vset.pattern.permute.xlu0 1
        %2265 = vperm.xlu0 %2264, %v1565
        %v2266 = vpop.permute.xlu0 %2265
        %2268 = vset.pattern.permute.xlu0 1
        %2269 = vperm.xlu0 %2268, %v1566
        %v2270 = vpop.permute.xlu0 %2269
        %2272 = vset.pattern.permute.xlu0 1
        %2273 = vperm.xlu0 %2272, %v1567
        %v2274 = vpop.permute.xlu0 %2273
        %2276 = vset.pattern.permute.xlu0 1
        %2277 = vperm.xlu0 %2276, %v1568
        %v2278 = vpop.permute.xlu0 %2277
        %2280 = vset.pattern.permute.xlu0 1
        %2281 = vperm.xlu0 %2280, %v1569
        %v2282 = vpop.permute.xlu0 %2281
        %2284 = vset.pattern.permute.xlu0 1
        %2285 = vperm.xlu0 %2284, %v1570
        %v2286 = vpop.permute.xlu0 %2285
        %2288 = vset.pattern.permute.xlu0 1
        %2289 = vperm.xlu0 %2288, %v1571
        %v2290 = vpop.permute.xlu0 %2289
        %2292 = vset.pattern.permute.xlu0 1
        %2293 = vperm.xlu0 %2292, %v1572
        %v2294 = vpop.permute.xlu0 %2293
        %2296 = vset.pattern.permute.xlu0 1
        %2297 = vperm.xlu0 %2296, %v1573
        %v2298 = vpop.permute.xlu0 %2297
        %2300 = vset.pattern.permute.xlu0 1
        %2301 = vperm.xlu0 %2300, %v1574
        %v2302 = vpop.permute.xlu0 %2301
        %2304 = vset.pattern.permute.xlu0 1
        %2305 = vperm.xlu0 %2304, %v1575
        %v2306 = vpop.permute.xlu0 %2305
        %2308 = vset.pattern.permute.xlu0 1
        %2309 = vperm.xlu0 %2308, %v1576
        %v2310 = vpop.permute.xlu0 %2309
        %2312 = vset.pattern.permute.xlu0 1
        %2313 = vperm.xlu0 %2312, %v1577
        %v2314 = vpop.permute.xlu0 %2313
        %2316 = vset.pattern.permute.xlu0 1
        %2317 = vperm.xlu0 %2316, %v1578
        %v2318 = vpop.permute.xlu0 %2317
        %2320 = vset.pattern.permute.xlu0 1
        %2321 = vperm.xlu0 %2320, %v1579
        %v2322 = vpop.permute.xlu0 %2321
        %2324 = vset.pattern.permute.xlu0 1
        %2325 = vperm.xlu0 %2324, %v1580
        %v2326 = vpop.permute.xlu0 %2325
        %2328 = vset.pattern.permute.xlu0 1
        %2329 = vperm.xlu0 %2328, %v1581
        %v2330 = vpop.permute.xlu0 %2329
        %2332 = vset.pattern.permute.xlu0 1
        %2333 = vperm.xlu0 %2332, %v1582
        %v2334 = vpop.permute.xlu0 %2333
        %2336 = vset.pattern.permute.xlu0 1
        %2337 = vperm.xlu0 %2336, %v1583
        %v2338 = vpop.permute.xlu0 %2337
        %2340 = vset.pattern.permute.xlu0 1
        %2341 = vperm.xlu0 %2340, %v1584
        %v2342 = vpop.permute.xlu0 %2341
        %2344 = vset.pattern.permute.xlu0 1
        %2345 = vperm.xlu0 %2344, %v1585
        %v2346 = vpop.permute.xlu0 %2345
        %2348 = vset.pattern.permute.xlu0 1
        %2349 = vperm.xlu0 %2348, %v1586
        %v2350 = vpop.permute.xlu0 %2349
        %2352 = vset.pattern.permute.xlu0 1
        %2353 = vperm.xlu0 %2352, %v1587
        %v2354 = vpop.permute.xlu0 %2353
        %2356 = vset.pattern.permute.xlu0 1
        %2357 = vperm.xlu0 %2356, %v1588
        %v2358 = vpop.permute.xlu0 %2357
        %2360 = vset.pattern.permute.xlu0 1
        %2361 = vperm.xlu0 %2360, %v1589
        %v2362 = vpop.permute.xlu0 %2361
        %2364 = vset.pattern.permute.xlu0 1
        %2365 = vperm.xlu0 %2364, %v1590
        %v2366 = vpop.permute.xlu0 %2365
        %2368 = vset.pattern.permute.xlu0 1
        %2369 = vperm.xlu0 %2368, %v1591
        %v2370 = vpop.permute.xlu0 %2369
        %2372 = vset.pattern.permute.xlu0 1
        %2373 = vperm.xlu0 %2372, %v1592
        %v2374 = vpop.permute.xlu0 %2373
        %2376 = vset.pattern.permute.xlu0 1
        %2377 = vperm.xlu0 %2376, %v1593
        %v2378 = vpop.permute.xlu0 %2377
        %2380 = vset.pattern.permute.xlu0 1
        %2381 = vperm.xlu0 %2380, %v1594
        %v2382 = vpop.permute.xlu0 %2381
        %2384 = vset.pattern.permute.xlu0 1
        %2385 = vperm.xlu0 %2384, %v1595
        %v2386 = vpop.permute.xlu0 %2385
        %2388 = vset.pattern.permute.xlu0 1
        %2389 = vperm.xlu0 %2388, %v1596
        %v2390 = vpop.permute.xlu0 %2389
        %2392 = vset.pattern.permute.xlu0 1
        %2393 = vperm.xlu0 %2392, %v1597
        %v2394 = vpop.permute.xlu0 %2393
        %2396 = vset.pattern.permute.xlu0 1
        %2397 = vperm.xlu0 %2396, %v1598
        %v2398 = vpop.permute.xlu0 %2397
        %2400 = vset.pattern.permute.xlu0 1
        %2401 = vperm.xlu0 %2400, %v1599
        %v2402 = vpop.permute.xlu0 %2401
        %2404 = vset.pattern.permute.xlu0 1
        %2405 = vperm.xlu0 %2404, %v1600
        %v2406 = vpop.permute.xlu0 %2405
        %2408 = vset.pattern.permute.xlu0 1
        %2409 = vperm.xlu0 %2408, %v1601
        %v2410 = vpop.permute.xlu0 %2409
        %2412 = vset.pattern.permute.xlu0 1
        %2413 = vperm.xlu0 %2412, %v1602
        %v2414 = vpop.permute.xlu0 %2413
        %2416 = vset.pattern.permute.xlu0 1
        %2417 = vperm.xlu0 %2416, %v1603
        %v2418 = vpop.permute.xlu0 %2417
        %2420 = vset.pattern.permute.xlu0 1
        %2421 = vperm.xlu0 %2420, %v1604
        %v2422 = vpop.permute.xlu0 %2421
        %2424 = vset.pattern.permute.xlu0 1
        %2425 = vperm.xlu0 %2424, %v1605
        %v2426 = vpop.permute.xlu0 %2425
        %2428 = vset.pattern.permute.xlu0 1
        %2429 = vperm.xlu0 %2428, %v1606
        %v2430 = vpop.permute.xlu0 %2429
        %2432 = vset.pattern.permute.xlu0 1
        %2433 = vperm.xlu0 %2432, %v1607
        %v2434 = vpop.permute.xlu0 %2433
        %2436 = vset.pattern.permute.xlu0 1
        %2437 = vperm.xlu0 %2436, %v1608
        %v2438 = vpop.permute.xlu0 %2437
        %2440 = vset.pattern.permute.xlu0 1
        %2441 = vperm.xlu0 %2440, %v1609
        %v2442 = vpop.permute.xlu0 %2441
        %2444 = vset.pattern.permute.xlu0 1
        %2445 = vperm.xlu0 %2444, %v1610
        %v2446 = vpop.permute.xlu0 %2445
        %2448 = vset.pattern.permute.xlu0 1
        %2449 = vperm.xlu0 %2448, %v1611
        %v2450 = vpop.permute.xlu0 %2449
        %2452 = vset.pattern.permute.xlu0 1
        %2453 = vperm.xlu0 %2452, %v1612
        %v2454 = vpop.permute.xlu0 %2453
        %2456 = vset.pattern.permute.xlu0 1
        %2457 = vperm.xlu0 %2456, %v1613
        %v2458 = vpop.permute.xlu0 %2457
        %v2461 = vlaneseq
        %v2462 = vshrl.u32 %v2461, 7
        %v2463 = vsub.s32 0, %v2462
        %v2464 = vrot.slane %v2203, %v2463
        %v2465 = vlaneseq
        %v2466 = vshrl.u32 %v2465, 7
        %v2467 = vsub.s32 1, %v2466
        %v2468 = vrot.slane %v2203, %v2467
        %v2471 = vmul.f32 %v2206, %v2464
        %v2472 = vmul.f32 %v2206, %v2468
        %v2473 = vmul.f32 %v2210, %v2464
        %v2474 = vmul.f32 %v2210, %v2468
        %v2475 = vmul.f32 %v2214, %v2464
        %v2476 = vmul.f32 %v2214, %v2468
        %v2477 = vmul.f32 %v2218, %v2464
        %v2478 = vmul.f32 %v2218, %v2468
        %v2479 = vmul.f32 %v2222, %v2464
        %v2480 = vmul.f32 %v2222, %v2468
        %v2481 = vmul.f32 %v2226, %v2464
        %v2482 = vmul.f32 %v2226, %v2468
        %v2483 = vmul.f32 %v2230, %v2464
        %v2484 = vmul.f32 %v2230, %v2468
        %v2485 = vmul.f32 %v2234, %v2464
        %v2486 = vmul.f32 %v2234, %v2468
        %v2487 = vmul.f32 %v2238, %v2464
        %v2488 = vmul.f32 %v2238, %v2468
        %v2489 = vmul.f32 %v2242, %v2464
        %v2490 = vmul.f32 %v2242, %v2468
        %v2491 = vmul.f32 %v2246, %v2464
        %v2492 = vmul.f32 %v2246, %v2468
        %v2493 = vmul.f32 %v2250, %v2464
        %v2494 = vmul.f32 %v2250, %v2468
        %v2495 = vmul.f32 %v2254, %v2464
        %v2496 = vmul.f32 %v2254, %v2468
        %v2497 = vmul.f32 %v2258, %v2464
        %v2498 = vmul.f32 %v2258, %v2468
        %v2499 = vmul.f32 %v2262, %v2464
        %v2500 = vmul.f32 %v2262, %v2468
        %v2501 = vmul.f32 %v2266, %v2464
        %v2502 = vmul.f32 %v2266, %v2468
        %v2503 = vmul.f32 %v2270, %v2464
        %v2504 = vmul.f32 %v2270, %v2468
        %v2505 = vmul.f32 %v2274, %v2464
        %v2506 = vmul.f32 %v2274, %v2468
        %v2507 = vmul.f32 %v2278, %v2464
        %v2508 = vmul.f32 %v2278, %v2468
        %v2509 = vmul.f32 %v2282, %v2464
        %v2510 = vmul.f32 %v2282, %v2468
        %v2511 = vmul.f32 %v2286, %v2464
        %v2512 = vmul.f32 %v2286, %v2468
        %v2513 = vmul.f32 %v2290, %v2464
        %v2514 = vmul.f32 %v2290, %v2468
        %v2515 = vmul.f32 %v2294, %v2464
        %v2516 = vmul.f32 %v2294, %v2468
        %v2517 = vmul.f32 %v2298, %v2464
        %v2518 = vmul.f32 %v2298, %v2468
        %v2519 = vmul.f32 %v2302, %v2464
        %v2520 = vmul.f32 %v2302, %v2468
        %v2521 = vmul.f32 %v2306, %v2464
        %v2522 = vmul.f32 %v2306, %v2468
        %v2523 = vmul.f32 %v2310, %v2464
        %v2524 = vmul.f32 %v2310, %v2468
        %v2525 = vmul.f32 %v2314, %v2464
        %v2526 = vmul.f32 %v2314, %v2468
        %v2527 = vmul.f32 %v2318, %v2464
        %v2528 = vmul.f32 %v2318, %v2468
        %v2529 = vmul.f32 %v2322, %v2464
        %v2530 = vmul.f32 %v2322, %v2468
        %v2531 = vmul.f32 %v2326, %v2464
        %v2532 = vmul.f32 %v2326, %v2468
        %v2533 = vmul.f32 %v2330, %v2464
        %v2534 = vmul.f32 %v2330, %v2468
        %v2535 = vmul.f32 %v2334, %v2464
        %v2536 = vmul.f32 %v2334, %v2468
        %v2537 = vmul.f32 %v2338, %v2464
        %v2538 = vmul.f32 %v2338, %v2468
        %v2539 = vmul.f32 %v2342, %v2464
        %v2540 = vmul.f32 %v2342, %v2468
        %v2541 = vmul.f32 %v2346, %v2464
        %v2542 = vmul.f32 %v2346, %v2468
        %v2543 = vmul.f32 %v2350, %v2464
        %v2544 = vmul.f32 %v2350, %v2468
        %v2545 = vmul.f32 %v2354, %v2464
        %v2546 = vmul.f32 %v2354, %v2468
        %v2547 = vmul.f32 %v2358, %v2464
        %v2548 = vmul.f32 %v2358, %v2468
        %v2549 = vmul.f32 %v2362, %v2464
        %v2550 = vmul.f32 %v2362, %v2468
        %v2551 = vmul.f32 %v2366, %v2464
        %v2552 = vmul.f32 %v2366, %v2468
        %v2553 = vmul.f32 %v2370, %v2464
        %v2554 = vmul.f32 %v2370, %v2468
        %v2555 = vmul.f32 %v2374, %v2464
        %v2556 = vmul.f32 %v2374, %v2468
        %v2557 = vmul.f32 %v2378, %v2464
        %v2558 = vmul.f32 %v2378, %v2468
        %v2559 = vmul.f32 %v2382, %v2464
        %v2560 = vmul.f32 %v2382, %v2468
        %v2561 = vmul.f32 %v2386, %v2464
        %v2562 = vmul.f32 %v2386, %v2468
        %v2563 = vmul.f32 %v2390, %v2464
        %v2564 = vmul.f32 %v2390, %v2468
        %v2565 = vmul.f32 %v2394, %v2464
        %v2566 = vmul.f32 %v2394, %v2468
        %v2567 = vmul.f32 %v2398, %v2464
        %v2568 = vmul.f32 %v2398, %v2468
        %v2569 = vmul.f32 %v2402, %v2464
        %v2570 = vmul.f32 %v2402, %v2468
        %v2571 = vmul.f32 %v2406, %v2464
        %v2572 = vmul.f32 %v2406, %v2468
        %v2573 = vmul.f32 %v2410, %v2464
        %v2574 = vmul.f32 %v2410, %v2468
        %v2575 = vmul.f32 %v2414, %v2464
        %v2576 = vmul.f32 %v2414, %v2468
        %v2577 = vmul.f32 %v2418, %v2464
        %v2578 = vmul.f32 %v2418, %v2468
        %v2579 = vmul.f32 %v2422, %v2464
        %v2580 = vmul.f32 %v2422, %v2468
        %v2581 = vmul.f32 %v2426, %v2464
        %v2582 = vmul.f32 %v2426, %v2468
        %v2583 = vmul.f32 %v2430, %v2464
        %v2584 = vmul.f32 %v2430, %v2468
        %v2585 = vmul.f32 %v2434, %v2464
        %v2586 = vmul.f32 %v2434, %v2468
        %v2587 = vmul.f32 %v2438, %v2464
        %v2588 = vmul.f32 %v2438, %v2468
        %v2589 = vmul.f32 %v2442, %v2464
        %v2590 = vmul.f32 %v2442, %v2468
        %v2591 = vmul.f32 %v2446, %v2464
        %v2592 = vmul.f32 %v2446, %v2468
        %v2593 = vmul.f32 %v2450, %v2464
        %v2594 = vmul.f32 %v2450, %v2468
        %v2595 = vmul.f32 %v2454, %v2464
        %v2596 = vmul.f32 %v2454, %v2468
        %v2597 = vmul.f32 %v2458, %v2464
        %v2598 = vmul.f32 %v2458, %v2468
        %v2599 = vadd.f32 %v2074, %v2471
        %v2600 = vadd.f32 %v2075, %v2472
        %v2601 = vadd.f32 %v2076, %v2473
        %v2602 = vadd.f32 %v2077, %v2474
        %v2603 = vadd.f32 %v2078, %v2475
        %v2604 = vadd.f32 %v2079, %v2476
        %v2605 = vadd.f32 %v2080, %v2477
        %v2606 = vadd.f32 %v2081, %v2478
        %v2607 = vadd.f32 %v2082, %v2479
        %v2608 = vadd.f32 %v2083, %v2480
        %v2609 = vadd.f32 %v2084, %v2481
        %v2610 = vadd.f32 %v2085, %v2482
        %v2611 = vadd.f32 %v2086, %v2483
        %v2612 = vadd.f32 %v2087, %v2484
        %v2613 = vadd.f32 %v2088, %v2485
        %v2614 = vadd.f32 %v2089, %v2486
        %v2615 = vadd.f32 %v2090, %v2487
        %v2616 = vadd.f32 %v2091, %v2488
        %v2617 = vadd.f32 %v2092, %v2489
        %v2618 = vadd.f32 %v2093, %v2490
        %v2619 = vadd.f32 %v2094, %v2491
        %v2620 = vadd.f32 %v2095, %v2492
        %v2621 = vadd.f32 %v2096, %v2493
        %v2622 = vadd.f32 %v2097, %v2494
        %v2623 = vadd.f32 %v2098, %v2495
        %v2624 = vadd.f32 %v2099, %v2496
        %v2625 = vadd.f32 %v2100, %v2497
        %v2626 = vadd.f32 %v2101, %v2498
        %v2627 = vadd.f32 %v2102, %v2499
        %v2628 = vadd.f32 %v2103, %v2500
        %v2629 = vadd.f32 %v2104, %v2501
        %v2630 = vadd.f32 %v2105, %v2502
        %v2631 = vadd.f32 %v2106, %v2503
        %v2632 = vadd.f32 %v2107, %v2504
        %v2633 = vadd.f32 %v2108, %v2505
        %v2634 = vadd.f32 %v2109, %v2506
        %v2635 = vadd.f32 %v2110, %v2507
        %v2636 = vadd.f32 %v2111, %v2508
        %v2637 = vadd.f32 %v2112, %v2509
        %v2638 = vadd.f32 %v2113, %v2510
        %v2639 = vadd.f32 %v2114, %v2511
        %v2640 = vadd.f32 %v2115, %v2512
        %v2641 = vadd.f32 %v2116, %v2513
        %v2642 = vadd.f32 %v2117, %v2514
        %v2643 = vadd.f32 %v2118, %v2515
        %v2644 = vadd.f32 %v2119, %v2516
        %v2645 = vadd.f32 %v2120, %v2517
        %v2646 = vadd.f32 %v2121, %v2518
        %v2647 = vadd.f32 %v2122, %v2519
        %v2648 = vadd.f32 %v2123, %v2520
        %v2649 = vadd.f32 %v2124, %v2521
        %v2650 = vadd.f32 %v2125, %v2522
        %v2651 = vadd.f32 %v2126, %v2523
        %v2652 = vadd.f32 %v2127, %v2524
        %v2653 = vadd.f32 %v2128, %v2525
        %v2654 = vadd.f32 %v2129, %v2526
        %v2655 = vadd.f32 %v2130, %v2527
        %v2656 = vadd.f32 %v2131, %v2528
        %v2657 = vadd.f32 %v2132, %v2529
        %v2658 = vadd.f32 %v2133, %v2530
        %v2659 = vadd.f32 %v2134, %v2531
        %v2660 = vadd.f32 %v2135, %v2532
        %v2661 = vadd.f32 %v2136, %v2533
        %v2662 = vadd.f32 %v2137, %v2534
        %v2663 = vadd.f32 %v2138, %v2535
        %v2664 = vadd.f32 %v2139, %v2536
        %v2665 = vadd.f32 %v2140, %v2537
        %v2666 = vadd.f32 %v2141, %v2538
        %v2667 = vadd.f32 %v2142, %v2539
        %v2668 = vadd.f32 %v2143, %v2540
        %v2669 = vadd.f32 %v2144, %v2541
        %v2670 = vadd.f32 %v2145, %v2542
        %v2671 = vadd.f32 %v2146, %v2543
        %v2672 = vadd.f32 %v2147, %v2544
        %v2673 = vadd.f32 %v2148, %v2545
        %v2674 = vadd.f32 %v2149, %v2546
        %v2675 = vadd.f32 %v2150, %v2547
        %v2676 = vadd.f32 %v2151, %v2548
        %v2677 = vadd.f32 %v2152, %v2549
        %v2678 = vadd.f32 %v2153, %v2550
        %v2679 = vadd.f32 %v2154, %v2551
        %v2680 = vadd.f32 %v2155, %v2552
        %v2681 = vadd.f32 %v2156, %v2553
        %v2682 = vadd.f32 %v2157, %v2554
        %v2683 = vadd.f32 %v2158, %v2555
        %v2684 = vadd.f32 %v2159, %v2556
        %v2685 = vadd.f32 %v2160, %v2557
        %v2686 = vadd.f32 %v2161, %v2558
        %v2687 = vadd.f32 %v2162, %v2559
        %v2688 = vadd.f32 %v2163, %v2560
        %v2689 = vadd.f32 %v2164, %v2561
        %v2690 = vadd.f32 %v2165, %v2562
        %v2691 = vadd.f32 %v2166, %v2563
        %v2692 = vadd.f32 %v2167, %v2564
        %v2693 = vadd.f32 %v2168, %v2565
        %v2694 = vadd.f32 %v2169, %v2566
        %v2695 = vadd.f32 %v2170, %v2567
        %v2696 = vadd.f32 %v2171, %v2568
        %v2697 = vadd.f32 %v2172, %v2569
        %v2698 = vadd.f32 %v2173, %v2570
        %v2699 = vadd.f32 %v2174, %v2571
        %v2700 = vadd.f32 %v2175, %v2572
        %v2701 = vadd.f32 %v2176, %v2573
        %v2702 = vadd.f32 %v2177, %v2574
        %v2703 = vadd.f32 %v2178, %v2575
        %v2704 = vadd.f32 %v2179, %v2576
        %v2705 = vadd.f32 %v2180, %v2577
        %v2706 = vadd.f32 %v2181, %v2578
        %v2707 = vadd.f32 %v2182, %v2579
        %v2708 = vadd.f32 %v2183, %v2580
        %v2709 = vadd.f32 %v2184, %v2581
        %v2710 = vadd.f32 %v2185, %v2582
        %v2711 = vadd.f32 %v2186, %v2583
        %v2712 = vadd.f32 %v2187, %v2584
        %v2713 = vadd.f32 %v2188, %v2585
        %v2714 = vadd.f32 %v2189, %v2586
        %v2715 = vadd.f32 %v2190, %v2587
        %v2716 = vadd.f32 %v2191, %v2588
        %v2717 = vadd.f32 %v2192, %v2589
        %v2718 = vadd.f32 %v2193, %v2590
        %v2719 = vadd.f32 %v2194, %v2591
        %v2720 = vadd.f32 %v2195, %v2592
        %v2721 = vadd.f32 %v2196, %v2593
        %v2722 = vadd.f32 %v2197, %v2594
        %v2723 = vadd.f32 %v2198, %v2595
        %v2724 = vadd.f32 %v2199, %v2596
        %v2725 = vadd.f32 %v2200, %v2597
        %v2726 = vadd.f32 %v2201, %v2598
        %s2727 = scalar_lea.vmem [#allocation2], 2
        %v2728 = vld [vmem:[%s2727] ss:$4 sm:$0x3]
        %2729 = vset.pattern.permute.xlu0 2
        %2730 = vperm.xlu0 %2729, %v1550
        %v2731 = vpop.permute.xlu0 %2730
        %2733 = vset.pattern.permute.xlu0 2
        %2734 = vperm.xlu0 %2733, %v1551
        %v2735 = vpop.permute.xlu0 %2734
        %2737 = vset.pattern.permute.xlu0 2
        %2738 = vperm.xlu0 %2737, %v1552
        %v2739 = vpop.permute.xlu0 %2738
        %2741 = vset.pattern.permute.xlu0 2
        %2742 = vperm.xlu0 %2741, %v1553
        %v2743 = vpop.permute.xlu0 %2742
        %2745 = vset.pattern.permute.xlu0 2
        %2746 = vperm.xlu0 %2745, %v1554
        %v2747 = vpop.permute.xlu0 %2746
        %2749 = vset.pattern.permute.xlu0 2
        %2750 = vperm.xlu0 %2749, %v1555
        %v2751 = vpop.permute.xlu0 %2750
        %2753 = vset.pattern.permute.xlu0 2
        %2754 = vperm.xlu0 %2753, %v1556
        %v2755 = vpop.permute.xlu0 %2754
        %2757 = vset.pattern.permute.xlu0 2
        %2758 = vperm.xlu0 %2757, %v1557
        %v2759 = vpop.permute.xlu0 %2758
        %2761 = vset.pattern.permute.xlu0 2
        %2762 = vperm.xlu0 %2761, %v1558
        %v2763 = vpop.permute.xlu0 %2762
        %2765 = vset.pattern.permute.xlu0 2
        %2766 = vperm.xlu0 %2765, %v1559
        %v2767 = vpop.permute.xlu0 %2766
        %2769 = vset.pattern.permute.xlu0 2
        %2770 = vperm.xlu0 %2769, %v1560
        %v2771 = vpop.permute.xlu0 %2770
        %2773 = vset.pattern.permute.xlu0 2
        %2774 = vperm.xlu0 %2773, %v1561
        %v2775 = vpop.permute.xlu0 %2774
        %2777 = vset.pattern.permute.xlu0 2
        %2778 = vperm.xlu0 %2777, %v1562
        %v2779 = vpop.permute.xlu0 %2778
        %2781 = vset.pattern.permute.xlu0 2
        %2782 = vperm.xlu0 %2781, %v1563
        %v2783 = vpop.permute.xlu0 %2782
        %2785 = vset.pattern.permute.xlu0 2
        %2786 = vperm.xlu0 %2785, %v1564
        %v2787 = vpop.permute.xlu0 %2786
        %2789 = vset.pattern.permute.xlu0 2
        %2790 = vperm.xlu0 %2789, %v1565
        %v2791 = vpop.permute.xlu0 %2790
        %2793 = vset.pattern.permute.xlu0 2
        %2794 = vperm.xlu0 %2793, %v1566
        %v2795 = vpop.permute.xlu0 %2794
        %2797 = vset.pattern.permute.xlu0 2
        %2798 = vperm.xlu0 %2797, %v1567
        %v2799 = vpop.permute.xlu0 %2798
        %2801 = vset.pattern.permute.xlu0 2
        %2802 = vperm.xlu0 %2801, %v1568
        %v2803 = vpop.permute.xlu0 %2802
        %2805 = vset.pattern.permute.xlu0 2
        %2806 = vperm.xlu0 %2805, %v1569
        %v2807 = vpop.permute.xlu0 %2806
        %2809 = vset.pattern.permute.xlu0 2
        %2810 = vperm.xlu0 %2809, %v1570
        %v2811 = vpop.permute.xlu0 %2810
        %2813 = vset.pattern.permute.xlu0 2
        %2814 = vperm.xlu0 %2813, %v1571
        %v2815 = vpop.permute.xlu0 %2814
        %2817 = vset.pattern.permute.xlu0 2
        %2818 = vperm.xlu0 %2817, %v1572
        %v2819 = vpop.permute.xlu0 %2818
        %2821 = vset.pattern.permute.xlu0 2
        %2822 = vperm.xlu0 %2821, %v1573
        %v2823 = vpop.permute.xlu0 %2822
        %2825 = vset.pattern.permute.xlu0 2
        %2826 = vperm.xlu0 %2825, %v1574
        %v2827 = vpop.permute.xlu0 %2826
        %2829 = vset.pattern.permute.xlu0 2
        %2830 = vperm.xlu0 %2829, %v1575
        %v2831 = vpop.permute.xlu0 %2830
        %2833 = vset.pattern.permute.xlu0 2
        %2834 = vperm.xlu0 %2833, %v1576
        %v2835 = vpop.permute.xlu0 %2834
        %2837 = vset.pattern.permute.xlu0 2
        %2838 = vperm.xlu0 %2837, %v1577
        %v2839 = vpop.permute.xlu0 %2838
        %2841 = vset.pattern.permute.xlu0 2
        %2842 = vperm.xlu0 %2841, %v1578
        %v2843 = vpop.permute.xlu0 %2842
        %2845 = vset.pattern.permute.xlu0 2
        %2846 = vperm.xlu0 %2845, %v1579
        %v2847 = vpop.permute.xlu0 %2846
        %2849 = vset.pattern.permute.xlu0 2
        %2850 = vperm.xlu0 %2849, %v1580
        %v2851 = vpop.permute.xlu0 %2850
        %2853 = vset.pattern.permute.xlu0 2
        %2854 = vperm.xlu0 %2853, %v1581
        %v2855 = vpop.permute.xlu0 %2854
        %2857 = vset.pattern.permute.xlu0 2
        %2858 = vperm.xlu0 %2857, %v1582
        %v2859 = vpop.permute.xlu0 %2858
        %2861 = vset.pattern.permute.xlu0 2
        %2862 = vperm.xlu0 %2861, %v1583
        %v2863 = vpop.permute.xlu0 %2862
        %2865 = vset.pattern.permute.xlu0 2
        %2866 = vperm.xlu0 %2865, %v1584
        %v2867 = vpop.permute.xlu0 %2866
        %2869 = vset.pattern.permute.xlu0 2
        %2870 = vperm.xlu0 %2869, %v1585
        %v2871 = vpop.permute.xlu0 %2870
        %2873 = vset.pattern.permute.xlu0 2
        %2874 = vperm.xlu0 %2873, %v1586
        %v2875 = vpop.permute.xlu0 %2874
        %2877 = vset.pattern.permute.xlu0 2
        %2878 = vperm.xlu0 %2877, %v1587
        %v2879 = vpop.permute.xlu0 %2878
        %2881 = vset.pattern.permute.xlu0 2
        %2882 = vperm.xlu0 %2881, %v1588
        %v2883 = vpop.permute.xlu0 %2882
        %2885 = vset.pattern.permute.xlu0 2
        %2886 = vperm.xlu0 %2885, %v1589
        %v2887 = vpop.permute.xlu0 %2886
        %2889 = vset.pattern.permute.xlu0 2
        %2890 = vperm.xlu0 %2889, %v1590
        %v2891 = vpop.permute.xlu0 %2890
        %2893 = vset.pattern.permute.xlu0 2
        %2894 = vperm.xlu0 %2893, %v1591
        %v2895 = vpop.permute.xlu0 %2894
        %2897 = vset.pattern.permute.xlu0 2
        %2898 = vperm.xlu0 %2897, %v1592
        %v2899 = vpop.permute.xlu0 %2898
        %2901 = vset.pattern.permute.xlu0 2
        %2902 = vperm.xlu0 %2901, %v1593
        %v2903 = vpop.permute.xlu0 %2902
        %2905 = vset.pattern.permute.xlu0 2
        %2906 = vperm.xlu0 %2905, %v1594
        %v2907 = vpop.permute.xlu0 %2906
        %2909 = vset.pattern.permute.xlu0 2
        %2910 = vperm.xlu0 %2909, %v1595
        %v2911 = vpop.permute.xlu0 %2910
        %2913 = vset.pattern.permute.xlu0 2
        %2914 = vperm.xlu0 %2913, %v1596
        %v2915 = vpop.permute.xlu0 %2914
        %2917 = vset.pattern.permute.xlu0 2
        %2918 = vperm.xlu0 %2917, %v1597
        %v2919 = vpop.permute.xlu0 %2918
        %2921 = vset.pattern.permute.xlu0 2
        %2922 = vperm.xlu0 %2921, %v1598
        %v2923 = vpop.permute.xlu0 %2922
        %2925 = vset.pattern.permute.xlu0 2
        %2926 = vperm.xlu0 %2925, %v1599
        %v2927 = vpop.permute.xlu0 %2926
        %2929 = vset.pattern.permute.xlu0 2
        %2930 = vperm.xlu0 %2929, %v1600
        %v2931 = vpop.permute.xlu0 %2930
        %2933 = vset.pattern.permute.xlu0 2
        %2934 = vperm.xlu0 %2933, %v1601
        %v2935 = vpop.permute.xlu0 %2934
        %2937 = vset.pattern.permute.xlu0 2
        %2938 = vperm.xlu0 %2937, %v1602
        %v2939 = vpop.permute.xlu0 %2938
        %2941 = vset.pattern.permute.xlu0 2
        %2942 = vperm.xlu0 %2941, %v1603
        %v2943 = vpop.permute.xlu0 %2942
        %2945 = vset.pattern.permute.xlu0 2
        %2946 = vperm.xlu0 %2945, %v1604
        %v2947 = vpop.permute.xlu0 %2946
        %2949 = vset.pattern.permute.xlu0 2
        %2950 = vperm.xlu0 %2949, %v1605
        %v2951 = vpop.permute.xlu0 %2950
        %2953 = vset.pattern.permute.xlu0 2
        %2954 = vperm.xlu0 %2953, %v1606
        %v2955 = vpop.permute.xlu0 %2954
        %2957 = vset.pattern.permute.xlu0 2
        %2958 = vperm.xlu0 %2957, %v1607
        %v2959 = vpop.permute.xlu0 %2958
        %2961 = vset.pattern.permute.xlu0 2
        %2962 = vperm.xlu0 %2961, %v1608
        %v2963 = vpop.permute.xlu0 %2962
        %2965 = vset.pattern.permute.xlu0 2
        %2966 = vperm.xlu0 %2965, %v1609
        %v2967 = vpop.permute.xlu0 %2966
        %2969 = vset.pattern.permute.xlu0 2
        %2970 = vperm.xlu0 %2969, %v1610
        %v2971 = vpop.permute.xlu0 %2970
        %2973 = vset.pattern.permute.xlu0 2
        %2974 = vperm.xlu0 %2973, %v1611
        %v2975 = vpop.permute.xlu0 %2974
        %2977 = vset.pattern.permute.xlu0 2
        %2978 = vperm.xlu0 %2977, %v1612
        %v2979 = vpop.permute.xlu0 %2978
        %2981 = vset.pattern.permute.xlu0 2
        %2982 = vperm.xlu0 %2981, %v1613
        %v2983 = vpop.permute.xlu0 %2982
        %v2986 = vlaneseq
        %v2987 = vshrl.u32 %v2986, 7
        %v2988 = vsub.s32 0, %v2987
        %v2989 = vrot.slane %v2728, %v2988
        %v2990 = vlaneseq
        %v2991 = vshrl.u32 %v2990, 7
        %v2992 = vsub.s32 1, %v2991
        %v2993 = vrot.slane %v2728, %v2992
        %v2996 = vmul.f32 %v2731, %v2989
        %v2997 = vmul.f32 %v2731, %v2993
        %v2998 = vmul.f32 %v2735, %v2989
        %v2999 = vmul.f32 %v2735, %v2993
        %v3000 = vmul.f32 %v2739, %v2989
        %v3001 = vmul.f32 %v2739, %v2993
        %v3002 = vmul.f32 %v2743, %v2989
        %v3003 = vmul.f32 %v2743, %v2993
        %v3004 = vmul.f32 %v2747, %v2989
        %v3005 = vmul.f32 %v2747, %v2993
        %v3006 = vmul.f32 %v2751, %v2989
        %v3007 = vmul.f32 %v2751, %v2993
        %v3008 = vmul.f32 %v2755, %v2989
        %v3009 = vmul.f32 %v2755, %v2993
        %v3010 = vmul.f32 %v2759, %v2989
        %v3011 = vmul.f32 %v2759, %v2993
        %v3012 = vmul.f32 %v2763, %v2989
        %v3013 = vmul.f32 %v2763, %v2993
        %v3014 = vmul.f32 %v2767, %v2989
        %v3015 = vmul.f32 %v2767, %v2993
        %v3016 = vmul.f32 %v2771, %v2989
        %v3017 = vmul.f32 %v2771, %v2993
        %v3018 = vmul.f32 %v2775, %v2989
        %v3019 = vmul.f32 %v2775, %v2993
        %v3020 = vmul.f32 %v2779, %v2989
        %v3021 = vmul.f32 %v2779, %v2993
        %v3022 = vmul.f32 %v2783, %v2989
        %v3023 = vmul.f32 %v2783, %v2993
        %v3024 = vmul.f32 %v2787, %v2989
        %v3025 = vmul.f32 %v2787, %v2993
        %v3026 = vmul.f32 %v2791, %v2989
        %v3027 = vmul.f32 %v2791, %v2993
        %v3028 = vmul.f32 %v2795, %v2989
        %v3029 = vmul.f32 %v2795, %v2993
        %v3030 = vmul.f32 %v2799, %v2989
        %v3031 = vmul.f32 %v2799, %v2993
        %v3032 = vmul.f32 %v2803, %v2989
        %v3033 = vmul.f32 %v2803, %v2993
        %v3034 = vmul.f32 %v2807, %v2989
        %v3035 = vmul.f32 %v2807, %v2993
        %v3036 = vmul.f32 %v2811, %v2989
        %v3037 = vmul.f32 %v2811, %v2993
        %v3038 = vmul.f32 %v2815, %v2989
        %v3039 = vmul.f32 %v2815, %v2993
        %v3040 = vmul.f32 %v2819, %v2989
        %v3041 = vmul.f32 %v2819, %v2993
        %v3042 = vmul.f32 %v2823, %v2989
        %v3043 = vmul.f32 %v2823, %v2993
        %v3044 = vmul.f32 %v2827, %v2989
        %v3045 = vmul.f32 %v2827, %v2993
        %v3046 = vmul.f32 %v2831, %v2989
        %v3047 = vmul.f32 %v2831, %v2993
        %v3048 = vmul.f32 %v2835, %v2989
        %v3049 = vmul.f32 %v2835, %v2993
        %v3050 = vmul.f32 %v2839, %v2989
        %v3051 = vmul.f32 %v2839, %v2993
        %v3052 = vmul.f32 %v2843, %v2989
        %v3053 = vmul.f32 %v2843, %v2993
        %v3054 = vmul.f32 %v2847, %v2989
        %v3055 = vmul.f32 %v2847, %v2993
        %v3056 = vmul.f32 %v2851, %v2989
        %v3057 = vmul.f32 %v2851, %v2993
        %v3058 = vmul.f32 %v2855, %v2989
        %v3059 = vmul.f32 %v2855, %v2993
        %v3060 = vmul.f32 %v2859, %v2989
        %v3061 = vmul.f32 %v2859, %v2993
        %v3062 = vmul.f32 %v2863, %v2989
        %v3063 = vmul.f32 %v2863, %v2993
        %v3064 = vmul.f32 %v2867, %v2989
        %v3065 = vmul.f32 %v2867, %v2993
        %v3066 = vmul.f32 %v2871, %v2989
        %v3067 = vmul.f32 %v2871, %v2993
        %v3068 = vmul.f32 %v2875, %v2989
        %v3069 = vmul.f32 %v2875, %v2993
        %v3070 = vmul.f32 %v2879, %v2989
        %v3071 = vmul.f32 %v2879, %v2993
        %v3072 = vmul.f32 %v2883, %v2989
        %v3073 = vmul.f32 %v2883, %v2993
        %v3074 = vmul.f32 %v2887, %v2989
        %v3075 = vmul.f32 %v2887, %v2993
        %v3076 = vmul.f32 %v2891, %v2989
        %v3077 = vmul.f32 %v2891, %v2993
        %v3078 = vmul.f32 %v2895, %v2989
        %v3079 = vmul.f32 %v2895, %v2993
        %v3080 = vmul.f32 %v2899, %v2989
        %v3081 = vmul.f32 %v2899, %v2993
        %v3082 = vmul.f32 %v2903, %v2989
        %v3083 = vmul.f32 %v2903, %v2993
        %v3084 = vmul.f32 %v2907, %v2989
        %v3085 = vmul.f32 %v2907, %v2993
        %v3086 = vmul.f32 %v2911, %v2989
        %v3087 = vmul.f32 %v2911, %v2993
        %v3088 = vmul.f32 %v2915, %v2989
        %v3089 = vmul.f32 %v2915, %v2993
        %v3090 = vmul.f32 %v2919, %v2989
        %v3091 = vmul.f32 %v2919, %v2993
        %v3092 = vmul.f32 %v2923, %v2989
        %v3093 = vmul.f32 %v2923, %v2993
        %v3094 = vmul.f32 %v2927, %v2989
        %v3095 = vmul.f32 %v2927, %v2993
        %v3096 = vmul.f32 %v2931, %v2989
        %v3097 = vmul.f32 %v2931, %v2993
        %v3098 = vmul.f32 %v2935, %v2989
        %v3099 = vmul.f32 %v2935, %v2993
        %v3100 = vmul.f32 %v2939, %v2989
        %v3101 = vmul.f32 %v2939, %v2993
        %v3102 = vmul.f32 %v2943, %v2989
        %v3103 = vmul.f32 %v2943, %v2993
        %v3104 = vmul.f32 %v2947, %v2989
        %v3105 = vmul.f32 %v2947, %v2993
        %v3106 = vmul.f32 %v2951, %v2989
        %v3107 = vmul.f32 %v2951, %v2993
        %v3108 = vmul.f32 %v2955, %v2989
        %v3109 = vmul.f32 %v2955, %v2993
        %v3110 = vmul.f32 %v2959, %v2989
        %v3111 = vmul.f32 %v2959, %v2993
        %v3112 = vmul.f32 %v2963, %v2989
        %v3113 = vmul.f32 %v2963, %v2993
        %v3114 = vmul.f32 %v2967, %v2989
        %v3115 = vmul.f32 %v2967, %v2993
        %v3116 = vmul.f32 %v2971, %v2989
        %v3117 = vmul.f32 %v2971, %v2993
        %v3118 = vmul.f32 %v2975, %v2989
        %v3119 = vmul.f32 %v2975, %v2993
        %v3120 = vmul.f32 %v2979, %v2989
        %v3121 = vmul.f32 %v2979, %v2993
        %v3122 = vmul.f32 %v2983, %v2989
        %v3123 = vmul.f32 %v2983, %v2993
        %v3124 = vadd.f32 %v2599, %v2996
        %v3125 = vadd.f32 %v2600, %v2997
        %v3126 = vadd.f32 %v2601, %v2998
        %v3127 = vadd.f32 %v2602, %v2999
        %v3128 = vadd.f32 %v2603, %v3000
        %v3129 = vadd.f32 %v2604, %v3001
        %v3130 = vadd.f32 %v2605, %v3002
        %v3131 = vadd.f32 %v2606, %v3003
        %v3132 = vadd.f32 %v2607, %v3004
        %v3133 = vadd.f32 %v2608, %v3005
        %v3134 = vadd.f32 %v2609, %v3006
        %v3135 = vadd.f32 %v2610, %v3007
        %v3136 = vadd.f32 %v2611, %v3008
        %v3137 = vadd.f32 %v2612, %v3009
        %v3138 = vadd.f32 %v2613, %v3010
        %v3139 = vadd.f32 %v2614, %v3011
        %v3140 = vadd.f32 %v2615, %v3012
        %v3141 = vadd.f32 %v2616, %v3013
        %v3142 = vadd.f32 %v2617, %v3014
        %v3143 = vadd.f32 %v2618, %v3015
        %v3144 = vadd.f32 %v2619, %v3016
        %v3145 = vadd.f32 %v2620, %v3017
        %v3146 = vadd.f32 %v2621, %v3018
        %v3147 = vadd.f32 %v2622, %v3019
        %v3148 = vadd.f32 %v2623, %v3020
        %v3149 = vadd.f32 %v2624, %v3021
        %v3150 = vadd.f32 %v2625, %v3022
        %v3151 = vadd.f32 %v2626, %v3023
        %v3152 = vadd.f32 %v2627, %v3024
        %v3153 = vadd.f32 %v2628, %v3025
        %v3154 = vadd.f32 %v2629, %v3026
        %v3155 = vadd.f32 %v2630, %v3027
        %v3156 = vadd.f32 %v2631, %v3028
        %v3157 = vadd.f32 %v2632, %v3029
        %v3158 = vadd.f32 %v2633, %v3030
        %v3159 = vadd.f32 %v2634, %v3031
        %v3160 = vadd.f32 %v2635, %v3032
        %v3161 = vadd.f32 %v2636, %v3033
        %v3162 = vadd.f32 %v2637, %v3034
        %v3163 = vadd.f32 %v2638, %v3035
        %v3164 = vadd.f32 %v2639, %v3036
        %v3165 = vadd.f32 %v2640, %v3037
        %v3166 = vadd.f32 %v2641, %v3038
        %v3167 = vadd.f32 %v2642, %v3039
        %v3168 = vadd.f32 %v2643, %v3040
        %v3169 = vadd.f32 %v2644, %v3041
        %v3170 = vadd.f32 %v2645, %v3042
        %v3171 = vadd.f32 %v2646, %v3043
        %v3172 = vadd.f32 %v2647, %v3044
        %v3173 = vadd.f32 %v2648, %v3045
        %v3174 = vadd.f32 %v2649, %v3046
        %v3175 = vadd.f32 %v2650, %v3047
        %v3176 = vadd.f32 %v2651, %v3048
        %v3177 = vadd.f32 %v2652, %v3049
        %v3178 = vadd.f32 %v2653, %v3050
        %v3179 = vadd.f32 %v2654, %v3051
        %v3180 = vadd.f32 %v2655, %v3052
        %v3181 = vadd.f32 %v2656, %v3053
        %v3182 = vadd.f32 %v2657, %v3054
        %v3183 = vadd.f32 %v2658, %v3055
        %v3184 = vadd.f32 %v2659, %v3056
        %v3185 = vadd.f32 %v2660, %v3057
        %v3186 = vadd.f32 %v2661, %v3058
        %v3187 = vadd.f32 %v2662, %v3059
        %v3188 = vadd.f32 %v2663, %v3060
        %v3189 = vadd.f32 %v2664, %v3061
        %v3190 = vadd.f32 %v2665, %v3062
        %v3191 = vadd.f32 %v2666, %v3063
        %v3192 = vadd.f32 %v2667, %v3064
        %v3193 = vadd.f32 %v2668, %v3065
        %v3194 = vadd.f32 %v2669, %v3066
        %v3195 = vadd.f32 %v2670, %v3067
        %v3196 = vadd.f32 %v2671, %v3068
        %v3197 = vadd.f32 %v2672, %v3069
        %v3198 = vadd.f32 %v2673, %v3070
        %v3199 = vadd.f32 %v2674, %v3071
        %v3200 = vadd.f32 %v2675, %v3072
        %v3201 = vadd.f32 %v2676, %v3073
        %v3202 = vadd.f32 %v2677, %v3074
        %v3203 = vadd.f32 %v2678, %v3075
        %v3204 = vadd.f32 %v2679, %v3076
        %v3205 = vadd.f32 %v2680, %v3077
        %v3206 = vadd.f32 %v2681, %v3078
        %v3207 = vadd.f32 %v2682, %v3079
        %v3208 = vadd.f32 %v2683, %v3080
        %v3209 = vadd.f32 %v2684, %v3081
        %v3210 = vadd.f32 %v2685, %v3082
        %v3211 = vadd.f32 %v2686, %v3083
        %v3212 = vadd.f32 %v2687, %v3084
        %v3213 = vadd.f32 %v2688, %v3085
        %v3214 = vadd.f32 %v2689, %v3086
        %v3215 = vadd.f32 %v2690, %v3087
        %v3216 = vadd.f32 %v2691, %v3088
        %v3217 = vadd.f32 %v2692, %v3089
        %v3218 = vadd.f32 %v2693, %v3090
        %v3219 = vadd.f32 %v2694, %v3091
        %v3220 = vadd.f32 %v2695, %v3092
        %v3221 = vadd.f32 %v2696, %v3093
        %v3222 = vadd.f32 %v2697, %v3094
        %v3223 = vadd.f32 %v2698, %v3095
        %v3224 = vadd.f32 %v2699, %v3096
        %v3225 = vadd.f32 %v2700, %v3097
        %v3226 = vadd.f32 %v2701, %v3098
        %v3227 = vadd.f32 %v2702, %v3099
        %v3228 = vadd.f32 %v2703, %v3100
        %v3229 = vadd.f32 %v2704, %v3101
        %v3230 = vadd.f32 %v2705, %v3102
        %v3231 = vadd.f32 %v2706, %v3103
        %v3232 = vadd.f32 %v2707, %v3104
        %v3233 = vadd.f32 %v2708, %v3105
        %v3234 = vadd.f32 %v2709, %v3106
        %v3235 = vadd.f32 %v2710, %v3107
        %v3236 = vadd.f32 %v2711, %v3108
        %v3237 = vadd.f32 %v2712, %v3109
        %v3238 = vadd.f32 %v2713, %v3110
        %v3239 = vadd.f32 %v2714, %v3111
        %v3240 = vadd.f32 %v2715, %v3112
        %v3241 = vadd.f32 %v2716, %v3113
        %v3242 = vadd.f32 %v2717, %v3114
        %v3243 = vadd.f32 %v2718, %v3115
        %v3244 = vadd.f32 %v2719, %v3116
        %v3245 = vadd.f32 %v2720, %v3117
        %v3246 = vadd.f32 %v2721, %v3118
        %v3247 = vadd.f32 %v2722, %v3119
        %v3248 = vadd.f32 %v2723, %v3120
        %v3249 = vadd.f32 %v2724, %v3121
        %v3250 = vadd.f32 %v2725, %v3122
        %v3251 = vadd.f32 %v2726, %v3123
        %v3252 = vmax.f32 %v3124, 0.0
        %v3253 = vmax.f32 %v3125, 0.0
        %v3254 = vmax.f32 %v3126, 0.0
        %v3255 = vmax.f32 %v3127, 0.0
        %v3256 = vmax.f32 %v3128, 0.0
        %v3257 = vmax.f32 %v3129, 0.0
        %v3258 = vmax.f32 %v3130, 0.0
        %v3259 = vmax.f32 %v3131, 0.0
        %v3260 = vmax.f32 %v3132, 0.0
        %v3261 = vmax.f32 %v3133, 0.0
        %v3262 = vmax.f32 %v3134, 0.0
        %v3263 = vmax.f32 %v3135, 0.0
        %v3264 = vmax.f32 %v3136, 0.0
        %v3265 = vmax.f32 %v3137, 0.0
        %v3266 = vmax.f32 %v3138, 0.0
        %v3267 = vmax.f32 %v3139, 0.0
        %v3268 = vmax.f32 %v3140, 0.0
        %v3269 = vmax.f32 %v3141, 0.0
        %v3270 = vmax.f32 %v3142, 0.0
        %v3271 = vmax.f32 %v3143, 0.0
        %v3272 = vmax.f32 %v3144, 0.0
        %v3273 = vmax.f32 %v3145, 0.0
        %v3274 = vmax.f32 %v3146, 0.0
        %v3275 = vmax.f32 %v3147, 0.0
        %v3276 = vmax.f32 %v3148, 0.0
        %v3277 = vmax.f32 %v3149, 0.0
        %v3278 = vmax.f32 %v3150, 0.0
        %v3279 = vmax.f32 %v3151, 0.0
        %v3280 = vmax.f32 %v3152, 0.0
        %v3281 = vmax.f32 %v3153, 0.0
        %v3282 = vmax.f32 %v3154, 0.0
        %v3283 = vmax.f32 %v3155, 0.0
        %v3284 = vmax.f32 %v3156, 0.0
        %v3285 = vmax.f32 %v3157, 0.0
        %v3286 = vmax.f32 %v3158, 0.0
        %v3287 = vmax.f32 %v3159, 0.0
        %v3288 = vmax.f32 %v3160, 0.0
        %v3289 = vmax.f32 %v3161, 0.0
        %v3290 = vmax.f32 %v3162, 0.0
        %v3291 = vmax.f32 %v3163, 0.0
        %v3292 = vmax.f32 %v3164, 0.0
        %v3293 = vmax.f32 %v3165, 0.0
        %v3294 = vmax.f32 %v3166, 0.0
        %v3295 = vmax.f32 %v3167, 0.0
        %v3296 = vmax.f32 %v3168, 0.0
        %v3297 = vmax.f32 %v3169, 0.0
        %v3298 = vmax.f32 %v3170, 0.0
        %v3299 = vmax.f32 %v3171, 0.0
        %v3300 = vmax.f32 %v3172, 0.0
        %v3301 = vmax.f32 %v3173, 0.0
        %v3302 = vmax.f32 %v3174, 0.0
        %v3303 = vmax.f32 %v3175, 0.0
        %v3304 = vmax.f32 %v3176, 0.0
        %v3305 = vmax.f32 %v3177, 0.0
        %v3306 = vmax.f32 %v3178, 0.0
        %v3307 = vmax.f32 %v3179, 0.0
        %v3308 = vmax.f32 %v3180, 0.0
        %v3309 = vmax.f32 %v3181, 0.0
        %v3310 = vmax.f32 %v3182, 0.0
        %v3311 = vmax.f32 %v3183, 0.0
        %v3312 = vmax.f32 %v3184, 0.0
        %v3313 = vmax.f32 %v3185, 0.0
        %v3314 = vmax.f32 %v3186, 0.0
        %v3315 = vmax.f32 %v3187, 0.0
        %v3316 = vmax.f32 %v3188, 0.0
        %v3317 = vmax.f32 %v3189, 0.0
        %v3318 = vmax.f32 %v3190, 0.0
        %v3319 = vmax.f32 %v3191, 0.0
        %v3320 = vmax.f32 %v3192, 0.0
        %v3321 = vmax.f32 %v3193, 0.0
        %v3322 = vmax.f32 %v3194, 0.0
        %v3323 = vmax.f32 %v3195, 0.0
        %v3324 = vmax.f32 %v3196, 0.0
        %v3325 = vmax.f32 %v3197, 0.0
        %v3326 = vmax.f32 %v3198, 0.0
        %v3327 = vmax.f32 %v3199, 0.0
        %v3328 = vmax.f32 %v3200, 0.0
        %v3329 = vmax.f32 %v3201, 0.0
        %v3330 = vmax.f32 %v3202, 0.0
        %v3331 = vmax.f32 %v3203, 0.0
        %v3332 = vmax.f32 %v3204, 0.0
        %v3333 = vmax.f32 %v3205, 0.0
        %v3334 = vmax.f32 %v3206, 0.0
        %v3335 = vmax.f32 %v3207, 0.0
        %v3336 = vmax.f32 %v3208, 0.0
        %v3337 = vmax.f32 %v3209, 0.0
        %v3338 = vmax.f32 %v3210, 0.0
        %v3339 = vmax.f32 %v3211, 0.0
        %v3340 = vmax.f32 %v3212, 0.0
        %v3341 = vmax.f32 %v3213, 0.0
        %v3342 = vmax.f32 %v3214, 0.0
        %v3343 = vmax.f32 %v3215, 0.0
        %v3344 = vmax.f32 %v3216, 0.0
        %v3345 = vmax.f32 %v3217, 0.0
        %v3346 = vmax.f32 %v3218, 0.0
        %v3347 = vmax.f32 %v3219, 0.0
        %v3348 = vmax.f32 %v3220, 0.0
        %v3349 = vmax.f32 %v3221, 0.0
        %v3350 = vmax.f32 %v3222, 0.0
        %v3351 = vmax.f32 %v3223, 0.0
        %v3352 = vmax.f32 %v3224, 0.0
        %v3353 = vmax.f32 %v3225, 0.0
        %v3354 = vmax.f32 %v3226, 0.0
        %v3355 = vmax.f32 %v3227, 0.0
        %v3356 = vmax.f32 %v3228, 0.0
        %v3357 = vmax.f32 %v3229, 0.0
        %v3358 = vmax.f32 %v3230, 0.0
        %v3359 = vmax.f32 %v3231, 0.0
        %v3360 = vmax.f32 %v3232, 0.0
        %v3361 = vmax.f32 %v3233, 0.0
        %v3362 = vmax.f32 %v3234, 0.0
        %v3363 = vmax.f32 %v3235, 0.0
        %v3364 = vmax.f32 %v3236, 0.0
        %v3365 = vmax.f32 %v3237, 0.0
        %v3366 = vmax.f32 %v3238, 0.0
        %v3367 = vmax.f32 %v3239, 0.0
        %v3368 = vmax.f32 %v3240, 0.0
        %v3369 = vmax.f32 %v3241, 0.0
        %v3370 = vmax.f32 %v3242, 0.0
        %v3371 = vmax.f32 %v3243, 0.0
        %v3372 = vmax.f32 %v3244, 0.0
        %v3373 = vmax.f32 %v3245, 0.0
        %v3374 = vmax.f32 %v3246, 0.0
        %v3375 = vmax.f32 %v3247, 0.0
        %v3376 = vmax.f32 %v3248, 0.0
        %v3377 = vmax.f32 %v3249, 0.0
        %v3378 = vmax.f32 %v3250, 0.0
        %v3379 = vmax.f32 %v3251, 0.0
        %v3380 = vpack.c.bf16 %v3254, %v3252
        %v3381 = vpack.c.bf16 %v3255, %v3253
        %v3382 = vpack.c.bf16 %v3258, %v3256
        %v3383 = vpack.c.bf16 %v3259, %v3257
        %v3384 = vpack.c.bf16 %v3262, %v3260
        %v3385 = vpack.c.bf16 %v3263, %v3261
        %v3386 = vpack.c.bf16 %v3266, %v3264
        %v3387 = vpack.c.bf16 %v3267, %v3265
        %v3388 = vpack.c.bf16 %v3270, %v3268
        %v3389 = vpack.c.bf16 %v3271, %v3269
        %v3390 = vpack.c.bf16 %v3274, %v3272
        %v3391 = vpack.c.bf16 %v3275, %v3273
        %v3392 = vpack.c.bf16 %v3278, %v3276
        %v3393 = vpack.c.bf16 %v3279, %v3277
        %v3394 = vpack.c.bf16 %v3282, %v3280
        %v3395 = vpack.c.bf16 %v3283, %v3281
        %v3396 = vpack.c.bf16 %v3286, %v3284
        %v3397 = vpack.c.bf16 %v3287, %v3285
        %v3398 = vpack.c.bf16 %v3290, %v3288
        %v3399 = vpack.c.bf16 %v3291, %v3289
        %v3400 = vpack.c.bf16 %v3294, %v3292
        %v3401 = vpack.c.bf16 %v3295, %v3293
        %v3402 = vpack.c.bf16 %v3298, %v3296
        %v3403 = vpack.c.bf16 %v3299, %v3297
        %v3404 = vpack.c.bf16 %v3302, %v3300
        %v3405 = vpack.c.bf16 %v3303, %v3301
        %v3406 = vpack.c.bf16 %v3306, %v3304
        %v3407 = vpack.c.bf16 %v3307, %v3305
        %v3408 = vpack.c.bf16 %v3310, %v3308
        %v3409 = vpack.c.bf16 %v3311, %v3309
        %v3410 = vpack.c.bf16 %v3314, %v3312
        %v3411 = vpack.c.bf16 %v3315, %v3313
        %v3412 = vpack.c.bf16 %v3318, %v3316
        %v3413 = vpack.c.bf16 %v3319, %v3317
        %v3414 = vpack.c.bf16 %v3322, %v3320
        %v3415 = vpack.c.bf16 %v3323, %v3321
        %v3416 = vpack.c.bf16 %v3326, %v3324
        %v3417 = vpack.c.bf16 %v3327, %v3325
        %v3418 = vpack.c.bf16 %v3330, %v3328
        %v3419 = vpack.c.bf16 %v3331, %v3329
        %v3420 = vpack.c.bf16 %v3334, %v3332
        %v3421 = vpack.c.bf16 %v3335, %v3333
        %v3422 = vpack.c.bf16 %v3338, %v3336
        %v3423 = vpack.c.bf16 %v3339, %v3337
        %v3424 = vpack.c.bf16 %v3342, %v3340
        %v3425 = vpack.c.bf16 %v3343, %v3341
        %v3426 = vpack.c.bf16 %v3346, %v3344
        %v3427 = vpack.c.bf16 %v3347, %v3345
        %v3428 = vpack.c.bf16 %v3350, %v3348
        %v3429 = vpack.c.bf16 %v3351, %v3349
        %v3430 = vpack.c.bf16 %v3354, %v3352
        %v3431 = vpack.c.bf16 %v3355, %v3353
        %v3432 = vpack.c.bf16 %v3358, %v3356
        %v3433 = vpack.c.bf16 %v3359, %v3357
        %v3434 = vpack.c.bf16 %v3362, %v3360
        %v3435 = vpack.c.bf16 %v3363, %v3361
        %v3436 = vpack.c.bf16 %v3366, %v3364
        %v3437 = vpack.c.bf16 %v3367, %v3365
        %v3438 = vpack.c.bf16 %v3370, %v3368
        %v3439 = vpack.c.bf16 %v3371, %v3369
        %v3440 = vpack.c.bf16 %v3374, %v3372
        %v3441 = vpack.c.bf16 %v3375, %v3373
        %v3442 = vpack.c.bf16 %v3378, %v3376
        %v3443 = vpack.c.bf16 %v3379, %v3377
        %v3444 = vld [vmem:[%s6] sm:$0xff]
        %v3445 = vld [vmem:[%s6 + $0x8] sm:$0xff]
        %v3446 = vld [vmem:[%s6 + $0x10] sm:$0xff]
        %v3447 = vld [vmem:[%s6 + $0x18] sm:$0xff]
        %v3448 = vld [vmem:[%s6 + $0x20] sm:$0xff]
        %v3449 = vld [vmem:[%s6 + $0x28] sm:$0xff]
        %v3450 = vld [vmem:[%s6 + $0x30] sm:$0xff]
        %v3451 = vld [vmem:[%s6 + $0x38] sm:$0xff]
        %v3452 = vld [vmem:[%s6 + $0x40] sm:$0xff]
        %v3453 = vld [vmem:[%s6 + $0x48] sm:$0xff]
        %v3454 = vld [vmem:[%s6 + $0x50] sm:$0xff]
        %v3455 = vld [vmem:[%s6 + $0x58] sm:$0xff]
        %v3456 = vld [vmem:[%s6 + $0x60] sm:$0xff]
        %v3457 = vld [vmem:[%s6 + $0x68] sm:$0xff]
        %v3458 = vld [vmem:[%s6 + $0x70] sm:$0xff]
        %v3459 = vld [vmem:[%s6 + $0x78] sm:$0xff]
        %v3460 = vld [vmem:[%s6 + $0x80] sm:$0xff]
        %v3461 = vld [vmem:[%s6 + $0x88] sm:$0xff]
        %v3462 = vld [vmem:[%s6 + $0x90] sm:$0xff]
        %v3463 = vld [vmem:[%s6 + $0x98] sm:$0xff]
        %v3464 = vld [vmem:[%s6 + $0xa0] sm:$0xff]
        %v3465 = vld [vmem:[%s6 + $0xa8] sm:$0xff]
        %v3466 = vld [vmem:[%s6 + $0xb0] sm:$0xff]
        %v3467 = vld [vmem:[%s6 + $0xb8] sm:$0xff]
        %v3468 = vld [vmem:[%s6 + $0xc0] sm:$0xff]
        %v3469 = vld [vmem:[%s6 + $0xc8] sm:$0xff]
        %v3470 = vld [vmem:[%s6 + $0xd0] sm:$0xff]
        %v3471 = vld [vmem:[%s6 + $0xd8] sm:$0xff]
        %v3472 = vld [vmem:[%s6 + $0xe0] sm:$0xff]
        %v3473 = vld [vmem:[%s6 + $0xe8] sm:$0xff]
        %v3474 = vld [vmem:[%s6 + $0xf0] sm:$0xff]
        %v3475 = vld [vmem:[%s6 + $0xf8] sm:$0xff]
        %v3476 = vld [vmem:[%s7] sm:$0x3]
        %v3478 = vlaneseq
        %v3479 = vshrl.u32 %v3478, 7
        %v3480 = vsub.s32 0, %v3479
        %v3481 = vrot.slane %v3476, %v3480
        %v3482 = vlaneseq
        %v3483 = vshrl.u32 %v3482, 7
        %v3484 = vsub.s32 1, %v3483
        %v3485 = vrot.slane %v3476, %v3484
        %v3520 = vunpack.c.l.b16 %v3444
        %v3521 = vunpack.c.h.b16 %v3444
        %v3522 = vunpack.c.l.b16 %v3445
        %v3523 = vunpack.c.h.b16 %v3445
        %v3524 = vunpack.c.l.b16 %v3446
        %v3525 = vunpack.c.h.b16 %v3446
        %v3526 = vunpack.c.l.b16 %v3447
        %v3527 = vunpack.c.h.b16 %v3447
        %v3528 = vunpack.c.l.b16 %v3448
        %v3529 = vunpack.c.h.b16 %v3448
        %v3530 = vunpack.c.l.b16 %v3449
        %v3531 = vunpack.c.h.b16 %v3449
        %v3532 = vunpack.c.l.b16 %v3450
        %v3533 = vunpack.c.h.b16 %v3450
        %v3534 = vunpack.c.l.b16 %v3451
        %v3535 = vunpack.c.h.b16 %v3451
        %v3536 = vunpack.c.l.b16 %v3452
        %v3537 = vunpack.c.h.b16 %v3452
        %v3538 = vunpack.c.l.b16 %v3453
        %v3539 = vunpack.c.h.b16 %v3453
        %v3540 = vunpack.c.l.b16 %v3454
        %v3541 = vunpack.c.h.b16 %v3454
        %v3542 = vunpack.c.l.b16 %v3455
        %v3543 = vunpack.c.h.b16 %v3455
        %v3544 = vunpack.c.l.b16 %v3456
        %v3545 = vunpack.c.h.b16 %v3456
        %v3546 = vunpack.c.l.b16 %v3457
        %v3547 = vunpack.c.h.b16 %v3457
        %v3548 = vunpack.c.l.b16 %v3458
        %v3549 = vunpack.c.h.b16 %v3458
        %v3550 = vunpack.c.l.b16 %v3459
        %v3551 = vunpack.c.h.b16 %v3459
        %v3552 = vunpack.c.l.b16 %v3460
        %v3553 = vunpack.c.h.b16 %v3460
        %v3554 = vunpack.c.l.b16 %v3461
        %v3555 = vunpack.c.h.b16 %v3461
        %v3556 = vunpack.c.l.b16 %v3462
        %v3557 = vunpack.c.h.b16 %v3462
        %v3558 = vunpack.c.l.b16 %v3463
        %v3559 = vunpack.c.h.b16 %v3463
        %v3560 = vunpack.c.l.b16 %v3464
        %v3561 = vunpack.c.h.b16 %v3464
        %v3562 = vunpack.c.l.b16 %v3465
        %v3563 = vunpack.c.h.b16 %v3465
        %v3564 = vunpack.c.l.b16 %v3466
        %v3565 = vunpack.c.h.b16 %v3466
        %v3566 = vunpack.c.l.b16 %v3467
        %v3567 = vunpack.c.h.b16 %v3467
        %v3568 = vunpack.c.l.b16 %v3468
        %v3569 = vunpack.c.h.b16 %v3468
        %v3570 = vunpack.c.l.b16 %v3469
        %v3571 = vunpack.c.h.b16 %v3469
        %v3572 = vunpack.c.l.b16 %v3470
        %v3573 = vunpack.c.h.b16 %v3470
        %v3574 = vunpack.c.l.b16 %v3471
        %v3575 = vunpack.c.h.b16 %v3471
        %v3576 = vunpack.c.l.b16 %v3472
        %v3577 = vunpack.c.h.b16 %v3472
        %v3578 = vunpack.c.l.b16 %v3473
        %v3579 = vunpack.c.h.b16 %v3473
        %v3580 = vunpack.c.l.b16 %v3474
        %v3581 = vunpack.c.h.b16 %v3474
        %v3582 = vunpack.c.l.b16 %v3475
        %v3583 = vunpack.c.h.b16 %v3475
        %v3584 = vpack.c.b16 %v3522, %v3520
        %v3585 = vpack.c.b16 %v3523, %v3521
        %v3586 = vpack.c.b16 %v3526, %v3524
        %v3587 = vpack.c.b16 %v3527, %v3525
        %v3588 = vpack.c.b16 %v3530, %v3528
        %v3589 = vpack.c.b16 %v3531, %v3529
        %v3590 = vpack.c.b16 %v3534, %v3532
        %v3591 = vpack.c.b16 %v3535, %v3533
        %v3592 = vpack.c.b16 %v3538, %v3536
        %v3593 = vpack.c.b16 %v3539, %v3537
        %v3594 = vpack.c.b16 %v3542, %v3540
        %v3595 = vpack.c.b16 %v3543, %v3541
        %v3596 = vpack.c.b16 %v3546, %v3544
        %v3597 = vpack.c.b16 %v3547, %v3545
        %v3598 = vpack.c.b16 %v3550, %v3548
        %v3599 = vpack.c.b16 %v3551, %v3549
        %v3600 = vpack.c.b16 %v3554, %v3552
        %v3601 = vpack.c.b16 %v3555, %v3553
        %v3602 = vpack.c.b16 %v3558, %v3556
        %v3603 = vpack.c.b16 %v3559, %v3557
        %v3604 = vpack.c.b16 %v3562, %v3560
        %v3605 = vpack.c.b16 %v3563, %v3561
        %v3606 = vpack.c.b16 %v3566, %v3564
        %v3607 = vpack.c.b16 %v3567, %v3565
        %v3608 = vpack.c.b16 %v3570, %v3568
        %v3609 = vpack.c.b16 %v3571, %v3569
        %v3610 = vpack.c.b16 %v3574, %v3572
        %v3611 = vpack.c.b16 %v3575, %v3573
        %v3612 = vpack.c.b16 %v3578, %v3576
        %v3613 = vpack.c.b16 %v3579, %v3577
        %v3614 = vpack.c.b16 %v3582, %v3580
        %v3615 = vpack.c.b16 %v3583, %v3581
        %3648 = vmatprep.subr.bf16.mxu0 %v3585
        %3649 = vmatpush1.bf16.msra.mxu0 %v3584
        %3650 = vmatprep.subr.bf16.mxu0 %v3587
        %3651 = vmatpush1.bf16.msra.mxu0 %v3586
        %3652 = vmatprep.subr.bf16.mxu0 %v3589
        %3653 = vmatpush1.bf16.msra.mxu0 %v3588
        %3654 = vmatprep.subr.bf16.mxu0 %v3591
        %3655 = vmatpush1.bf16.msra.mxu0 %v3590
        %3656 = vmatprep.subr.bf16.mxu0 %v3593
        %3657 = vmatpush1.bf16.msra.mxu0 %v3592
        %3658 = vmatprep.subr.bf16.mxu0 %v3595
        %3659 = vmatpush1.bf16.msra.mxu0 %v3594
        %3660 = vmatprep.subr.bf16.mxu0 %v3597
        %3661 = vmatpush1.bf16.msra.mxu0 %v3596
        %3662 = vmatprep.subr.bf16.mxu0 %v3599
        %3663 = vmatpush1.bf16.msra.mxu0 %v3598
        %3664 = vmatprep.subr.bf16.mxu0 %v3601
        %3665 = vmatpush1.bf16.msra.mxu0 %v3600
        %3666 = vmatprep.subr.bf16.mxu0 %v3603
        %3667 = vmatpush1.bf16.msra.mxu0 %v3602
        %3668 = vmatprep.subr.bf16.mxu0 %v3605
        %3669 = vmatpush1.bf16.msra.mxu0 %v3604
        %3670 = vmatprep.subr.bf16.mxu0 %v3607
        %3671 = vmatpush1.bf16.msra.mxu0 %v3606
        %3672 = vmatprep.subr.bf16.mxu0 %v3609
        %3673 = vmatpush1.bf16.msra.mxu0 %v3608
        %3674 = vmatprep.subr.bf16.mxu0 %v3611
        %3675 = vmatpush1.bf16.msra.mxu0 %v3610
        %3676 = vmatprep.subr.bf16.mxu0 %v3613
        %3677 = vmatpush1.bf16.msra.mxu0 %v3612
        %3678 = vmatprep.subr.bf16.mxu0 %v3615
        %3679 = vmatpush1.bf16.msra.mxu0 %v3614
        %3680 = vmatprep.mubr.bf16.mxu0 %v3381
        %3681 = vmatmul.mubr.bf16.gmra.mrb[0].mxu0 %v3380
        %v3682 = vpop.f32.mrb[0].mxu0
        %v3683 = vadd.f32 %v3481, %v3682
        %v3684 = vpop.f32.mrb[0].mxu0
        %v3685 = vadd.f32 %v3485, %v3684
        %v3686 = vpop.f32.mrb[0].mxu0
        %v3687 = vadd.f32 %v3481, %v3686
        %v3688 = vpop.f32.mrb[0].mxu0
        %v3689 = vadd.f32 %v3485, %v3688
        %3690 = vmatprep.mubr.bf16.mxu0 %v3383
        %3691 = vmatmul.mubr.bf16.gmra.mrb[0].mxu0 %v3382
        %v3692 = vpop.f32.mrb[0].mxu0
        %v3693 = vadd.f32 %v3481, %v3692
        %v3694 = vpop.f32.mrb[0].mxu0
        %v3695 = vadd.f32 %v3485, %v3694
        %v3696 = vpop.f32.mrb[0].mxu0
        %v3697 = vadd.f32 %v3481, %v3696
        %v3698 = vpop.f32.mrb[0].mxu0
        %v3699 = vadd.f32 %v3485, %v3698
        %3700 = vmatprep.mubr.bf16.mxu0 %v3385
        %3701 = vmatmul.mubr.bf16.gmra.mrb[0].mxu0 %v3384
        %v3702 = vpop.f32.mrb[0].mxu0
        %v3703 = vadd.f32 %v3481, %v3702
        %v3704 = vpop.f32.mrb[0].mxu0
        %v3705 = vadd.f32 %v3485, %v3704
        %v3706 = vpop.f32.mrb[0].mxu0
        %v3707 = vadd.f32 %v3481, %v3706
        %v3708 = vpop.f32.mrb[0].mxu0
        %v3709 = vadd.f32 %v3485, %v3708
        %3710 = vmatprep.mubr.bf16.mxu0 %v3387
        %3711 = vmatmul.mubr.bf16.gmra.mrb[0].mxu0 %v3386
        %v3712 = vpop.f32.mrb[0].mxu0
        %v3713 = vadd.f32 %v3481, %v3712
        %v3714 = vpop.f32.mrb[0].mxu0
        %v3715 = vadd.f32 %v3485, %v3714
        %v3716 = vpop.f32.mrb[0].mxu0
        %v3717 = vadd.f32 %v3481, %v3716
        %v3718 = vpop.f32.mrb[0].mxu0
        %v3719 = vadd.f32 %v3485, %v3718
        %3720 = vmatprep.mubr.bf16.mxu0 %v3389
        %3721 = vmatmul.mubr.bf16.gmra.mrb[0].mxu0 %v3388
        %v3722 = vpop.f32.mrb[0].mxu0
        %v3723 = vadd.f32 %v3481, %v3722
        %v3724 = vpop.f32.mrb[0].mxu0
        %v3725 = vadd.f32 %v3485, %v3724
        %v3726 = vpop.f32.mrb[0].mxu0
        %v3727 = vadd.f32 %v3481, %v3726
        %v3728 = vpop.f32.mrb[0].mxu0
        %v3729 = vadd.f32 %v3485, %v3728
        %3730 = vmatprep.mubr.bf16.mxu0 %v3391
        %3731 = vmatmul.mubr.bf16.gmra.mrb[0].mxu0 %v3390
        %v3732 = vpop.f32.mrb[0].mxu0
        %v3733 = vadd.f32 %v3481, %v3732
        %v3734 = vpop.f32.mrb[0].mxu0
        %v3735 = vadd.f32 %v3485, %v3734
        %v3736 = vpop.f32.mrb[0].mxu0
        %v3737 = vadd.f32 %v3481, %v3736
        %v3738 = vpop.f32.mrb[0].mxu0
        %v3739 = vadd.f32 %v3485, %v3738
        %3740 = vmatprep.mubr.bf16.mxu0 %v3393
        %3741 = vmatmul.mubr.bf16.gmra.mrb[0].mxu0 %v3392
        %v3742 = vpop.f32.mrb[0].mxu0
        %v3743 = vadd.f32 %v3481, %v3742
        %v3744 = vpop.f32.mrb[0].mxu0
        %v3745 = vadd.f32 %v3485, %v3744
        %v3746 = vpop.f32.mrb[0].mxu0
        %v3747 = vadd.f32 %v3481, %v3746
        %v3748 = vpop.f32.mrb[0].mxu0
        %v3749 = vadd.f32 %v3485, %v3748
        %3750 = vmatprep.mubr.bf16.mxu0 %v3395
        %3751 = vmatmul.mubr.bf16.gmra.mrb[0].mxu0 %v3394
        %v3752 = vpop.f32.mrb[0].mxu0
        %v3753 = vadd.f32 %v3481, %v3752
        %v3754 = vpop.f32.mrb[0].mxu0
        %v3755 = vadd.f32 %v3485, %v3754
        %v3756 = vpop.f32.mrb[0].mxu0
        %v3757 = vadd.f32 %v3481, %v3756
        %v3758 = vpop.f32.mrb[0].mxu0
        %v3759 = vadd.f32 %v3485, %v3758
        %3760 = vmatprep.mubr.bf16.mxu0 %v3397
        %3761 = vmatmul.mubr.bf16.gmra.mrb[0].mxu0 %v3396
        %v3762 = vpop.f32.mrb[0].mxu0
        %v3763 = vadd.f32 %v3481, %v3762
        %v3764 = vpop.f32.mrb[0].mxu0
        %v3765 = vadd.f32 %v3485, %v3764
        %v3766 = vpop.f32.mrb[0].mxu0
        %v3767 = vadd.f32 %v3481, %v3766
        %v3768 = vpop.f32.mrb[0].mxu0
        %v3769 = vadd.f32 %v3485, %v3768
        %3770 = vmatprep.mubr.bf16.mxu0 %v3399
        %3771 = vmatmul.mubr.bf16.gmra.mrb[0].mxu0 %v3398
        %v3772 = vpop.f32.mrb[0].mxu0
        %v3773 = vadd.f32 %v3481, %v3772
        %v3774 = vpop.f32.mrb[0].mxu0
        %v3775 = vadd.f32 %v3485, %v3774
        %v3776 = vpop.f32.mrb[0].mxu0
        %v3777 = vadd.f32 %v3481, %v3776
        %v3778 = vpop.f32.mrb[0].mxu0
        %v3779 = vadd.f32 %v3485, %v3778
        %3780 = vmatprep.mubr.bf16.mxu0 %v3401
        %3781 = vmatmul.mubr.bf16.gmra.mrb[0].mxu0 %v3400
        %v3782 = vpop.f32.mrb[0].mxu0
        %v3783 = vadd.f32 %v3481, %v3782
        %v3784 = vpop.f32.mrb[0].mxu0
        %v3785 = vadd.f32 %v3485, %v3784
        %v3786 = vpop.f32.mrb[0].mxu0
        %v3787 = vadd.f32 %v3481, %v3786
        %v3788 = vpop.f32.mrb[0].mxu0
        %v3789 = vadd.f32 %v3485, %v3788
        %3790 = vmatprep.mubr.bf16.mxu0 %v3403
        %3791 = vmatmul.mubr.bf16.gmra.mrb[0].mxu0 %v3402
        %v3792 = vpop.f32.mrb[0].mxu0
        %v3793 = vadd.f32 %v3481, %v3792
        %v3794 = vpop.f32.mrb[0].mxu0
        %v3795 = vadd.f32 %v3485, %v3794
        %v3796 = vpop.f32.mrb[0].mxu0
        %v3797 = vadd.f32 %v3481, %v3796
        %v3798 = vpop.f32.mrb[0].mxu0
        %v3799 = vadd.f32 %v3485, %v3798
        %3800 = vmatprep.mubr.bf16.mxu0 %v3405
        %3801 = vmatmul.mubr.bf16.gmra.mrb[0].mxu0 %v3404
        %v3802 = vpop.f32.mrb[0].mxu0
        %v3803 = vadd.f32 %v3481, %v3802
        %v3804 = vpop.f32.mrb[0].mxu0
        %v3805 = vadd.f32 %v3485, %v3804
        %v3806 = vpop.f32.mrb[0].mxu0
        %v3807 = vadd.f32 %v3481, %v3806
        %v3808 = vpop.f32.mrb[0].mxu0
        %v3809 = vadd.f32 %v3485, %v3808
        %3810 = vmatprep.mubr.bf16.mxu0 %v3407
        %3811 = vmatmul.mubr.bf16.gmra.mrb[0].mxu0 %v3406
        %v3812 = vpop.f32.mrb[0].mxu0
        %v3813 = vadd.f32 %v3481, %v3812
        %v3814 = vpop.f32.mrb[0].mxu0
        %v3815 = vadd.f32 %v3485, %v3814
        %v3816 = vpop.f32.mrb[0].mxu0
        %v3817 = vadd.f32 %v3481, %v3816
        %v3818 = vpop.f32.mrb[0].mxu0
        %v3819 = vadd.f32 %v3485, %v3818
        %3820 = vmatprep.mubr.bf16.mxu0 %v3409
        %3821 = vmatmul.mubr.bf16.gmra.mrb[0].mxu0 %v3408
        %v3822 = vpop.f32.mrb[0].mxu0
        %v3823 = vadd.f32 %v3481, %v3822
        %v3824 = vpop.f32.mrb[0].mxu0
        %v3825 = vadd.f32 %v3485, %v3824
        %v3826 = vpop.f32.mrb[0].mxu0
        %v3827 = vadd.f32 %v3481, %v3826
        %v3828 = vpop.f32.mrb[0].mxu0
        %v3829 = vadd.f32 %v3485, %v3828
        %3830 = vmatprep.mubr.bf16.mxu0 %v3411
        %3831 = vmatmul.mubr.bf16.gmra.mrb[0].mxu0 %v3410
        %v3832 = vpop.f32.mrb[0].mxu0
        %v3833 = vadd.f32 %v3481, %v3832
        %v3834 = vpop.f32.mrb[0].mxu0
        %v3835 = vadd.f32 %v3485, %v3834
        %v3836 = vpop.f32.mrb[0].mxu0
        %v3837 = vadd.f32 %v3481, %v3836
        %v3838 = vpop.f32.mrb[0].mxu0
        %v3839 = vadd.f32 %v3485, %v3838
        %3840 = vmatprep.mubr.bf16.mxu0 %v3413
        %3841 = vmatmul.mubr.bf16.gmra.mrb[0].mxu0 %v3412
        %v3842 = vpop.f32.mrb[0].mxu0
        %v3843 = vadd.f32 %v3481, %v3842
        %v3844 = vpop.f32.mrb[0].mxu0
        %v3845 = vadd.f32 %v3485, %v3844
        %v3846 = vpop.f32.mrb[0].mxu0
        %v3847 = vadd.f32 %v3481, %v3846
        %v3848 = vpop.f32.mrb[0].mxu0
        %v3849 = vadd.f32 %v3485, %v3848
        %3850 = vmatprep.mubr.bf16.mxu0 %v3415
        %3851 = vmatmul.mubr.bf16.gmra.mrb[0].mxu0 %v3414
        %v3852 = vpop.f32.mrb[0].mxu0
        %v3853 = vadd.f32 %v3481, %v3852
        %v3854 = vpop.f32.mrb[0].mxu0
        %v3855 = vadd.f32 %v3485, %v3854
        %v3856 = vpop.f32.mrb[0].mxu0
        %v3857 = vadd.f32 %v3481, %v3856
        %v3858 = vpop.f32.mrb[0].mxu0
        %v3859 = vadd.f32 %v3485, %v3858
        %3860 = vmatprep.mubr.bf16.mxu0 %v3417
        %3861 = vmatmul.mubr.bf16.gmra.mrb[0].mxu0 %v3416
        %v3862 = vpop.f32.mrb[0].mxu0
        %v3863 = vadd.f32 %v3481, %v3862
        %v3864 = vpop.f32.mrb[0].mxu0
        %v3865 = vadd.f32 %v3485, %v3864
        %v3866 = vpop.f32.mrb[0].mxu0
        %v3867 = vadd.f32 %v3481, %v3866
        %v3868 = vpop.f32.mrb[0].mxu0
        %v3869 = vadd.f32 %v3485, %v3868
        %3870 = vmatprep.mubr.bf16.mxu0 %v3419
        %3871 = vmatmul.mubr.bf16.gmra.mrb[0].mxu0 %v3418
        %v3872 = vpop.f32.mrb[0].mxu0
        %v3873 = vadd.f32 %v3481, %v3872
        %v3874 = vpop.f32.mrb[0].mxu0
        %v3875 = vadd.f32 %v3485, %v3874
        %v3876 = vpop.f32.mrb[0].mxu0
        %v3877 = vadd.f32 %v3481, %v3876
        %v3878 = vpop.f32.mrb[0].mxu0
        %v3879 = vadd.f32 %v3485, %v3878
        %3880 = vmatprep.mubr.bf16.mxu0 %v3421
        %3881 = vmatmul.mubr.bf16.gmra.mrb[0].mxu0 %v3420
        %v3882 = vpop.f32.mrb[0].mxu0
        %v3883 = vadd.f32 %v3481, %v3882
        %v3884 = vpop.f32.mrb[0].mxu0
        %v3885 = vadd.f32 %v3485, %v3884
        %v3886 = vpop.f32.mrb[0].mxu0
        %v3887 = vadd.f32 %v3481, %v3886
        %v3888 = vpop.f32.mrb[0].mxu0
        %v3889 = vadd.f32 %v3485, %v3888
        %3890 = vmatprep.mubr.bf16.mxu0 %v3423
        %3891 = vmatmul.mubr.bf16.gmra.mrb[0].mxu0 %v3422
        %v3892 = vpop.f32.mrb[0].mxu0
        %v3893 = vadd.f32 %v3481, %v3892
        %v3894 = vpop.f32.mrb[0].mxu0
        %v3895 = vadd.f32 %v3485, %v3894
        %v3896 = vpop.f32.mrb[0].mxu0
        %v3897 = vadd.f32 %v3481, %v3896
        %v3898 = vpop.f32.mrb[0].mxu0
        %v3899 = vadd.f32 %v3485, %v3898
        %3900 = vmatprep.mubr.bf16.mxu0 %v3425
        %3901 = vmatmul.mubr.bf16.gmra.mrb[0].mxu0 %v3424
        %v3902 = vpop.f32.mrb[0].mxu0
        %v3903 = vadd.f32 %v3481, %v3902
        %v3904 = vpop.f32.mrb[0].mxu0
        %v3905 = vadd.f32 %v3485, %v3904
        %v3906 = vpop.f32.mrb[0].mxu0
        %v3907 = vadd.f32 %v3481, %v3906
        %v3908 = vpop.f32.mrb[0].mxu0
        %v3909 = vadd.f32 %v3485, %v3908
        %3910 = vmatprep.mubr.bf16.mxu0 %v3427
        %3911 = vmatmul.mubr.bf16.gmra.mrb[0].mxu0 %v3426
        %v3912 = vpop.f32.mrb[0].mxu0
        %v3913 = vadd.f32 %v3481, %v3912
        %v3914 = vpop.f32.mrb[0].mxu0
        %v3915 = vadd.f32 %v3485, %v3914
        %v3916 = vpop.f32.mrb[0].mxu0
        %v3917 = vadd.f32 %v3481, %v3916
        %v3918 = vpop.f32.mrb[0].mxu0
        %v3919 = vadd.f32 %v3485, %v3918
        %3920 = vmatprep.mubr.bf16.mxu0 %v3429
        %3921 = vmatmul.mubr.bf16.gmra.mrb[0].mxu0 %v3428
        %v3922 = vpop.f32.mrb[0].mxu0
        %v3923 = vadd.f32 %v3481, %v3922
        %v3924 = vpop.f32.mrb[0].mxu0
        %v3925 = vadd.f32 %v3485, %v3924
        %v3926 = vpop.f32.mrb[0].mxu0
        %v3927 = vadd.f32 %v3481, %v3926
        %v3928 = vpop.f32.mrb[0].mxu0
        %v3929 = vadd.f32 %v3485, %v3928
        %3930 = vmatprep.mubr.bf16.mxu0 %v3431
        %3931 = vmatmul.mubr.bf16.gmra.mrb[0].mxu0 %v3430
        %v3932 = vpop.f32.mrb[0].mxu0
        %v3933 = vadd.f32 %v3481, %v3932
        %v3934 = vpop.f32.mrb[0].mxu0
        %v3935 = vadd.f32 %v3485, %v3934
        %v3936 = vpop.f32.mrb[0].mxu0
        %v3937 = vadd.f32 %v3481, %v3936
        %v3938 = vpop.f32.mrb[0].mxu0
        %v3939 = vadd.f32 %v3485, %v3938
        %3940 = vmatprep.mubr.bf16.mxu0 %v3433
        %3941 = vmatmul.mubr.bf16.gmra.mrb[0].mxu0 %v3432
        %v3942 = vpop.f32.mrb[0].mxu0
        %v3943 = vadd.f32 %v3481, %v3942
        %v3944 = vpop.f32.mrb[0].mxu0
        %v3945 = vadd.f32 %v3485, %v3944
        %v3946 = vpop.f32.mrb[0].mxu0
        %v3947 = vadd.f32 %v3481, %v3946
        %v3948 = vpop.f32.mrb[0].mxu0
        %v3949 = vadd.f32 %v3485, %v3948
        %3950 = vmatprep.mubr.bf16.mxu0 %v3435
        %3951 = vmatmul.mubr.bf16.gmra.mrb[0].mxu0 %v3434
        %v3952 = vpop.f32.mrb[0].mxu0
        %v3953 = vadd.f32 %v3481, %v3952
        %v3954 = vpop.f32.mrb[0].mxu0
        %v3955 = vadd.f32 %v3485, %v3954
        %v3956 = vpop.f32.mrb[0].mxu0
        %v3957 = vadd.f32 %v3481, %v3956
        %v3958 = vpop.f32.mrb[0].mxu0
        %v3959 = vadd.f32 %v3485, %v3958
        %3960 = vmatprep.mubr.bf16.mxu0 %v3437
        %3961 = vmatmul.mubr.bf16.gmra.mrb[0].mxu0 %v3436
        %v3962 = vpop.f32.mrb[0].mxu0
        %v3963 = vadd.f32 %v3481, %v3962
        %v3964 = vpop.f32.mrb[0].mxu0
        %v3965 = vadd.f32 %v3485, %v3964
        %v3966 = vpop.f32.mrb[0].mxu0
        %v3967 = vadd.f32 %v3481, %v3966
        %v3968 = vpop.f32.mrb[0].mxu0
        %v3969 = vadd.f32 %v3485, %v3968
        %3970 = vmatprep.mubr.bf16.mxu0 %v3439
        %3971 = vmatmul.mubr.bf16.gmra.mrb[0].mxu0 %v3438
        %v3972 = vpop.f32.mrb[0].mxu0
        %v3973 = vadd.f32 %v3481, %v3972
        %v3974 = vpop.f32.mrb[0].mxu0
        %v3975 = vadd.f32 %v3485, %v3974
        %v3976 = vpop.f32.mrb[0].mxu0
        %v3977 = vadd.f32 %v3481, %v3976
        %v3978 = vpop.f32.mrb[0].mxu0
        %v3979 = vadd.f32 %v3485, %v3978
        %3980 = vmatprep.mubr.bf16.mxu0 %v3441
        %3981 = vmatmul.mubr.bf16.gmra.mrb[0].mxu0 %v3440
        %v3982 = vpop.f32.mrb[0].mxu0
        %v3983 = vadd.f32 %v3481, %v3982
        %v3984 = vpop.f32.mrb[0].mxu0
        %v3985 = vadd.f32 %v3485, %v3984
        %v3986 = vpop.f32.mrb[0].mxu0
        %v3987 = vadd.f32 %v3481, %v3986
        %v3988 = vpop.f32.mrb[0].mxu0
        %v3989 = vadd.f32 %v3485, %v3988
        %3990 = vmatprep.mubr.bf16.mxu0 %v3443
        %3991 = vmatmul.mubr.bf16.gmra.mrb[0].mxu0 %v3442
        %v3992 = vpop.f32.mrb[0].mxu0
        %v3993 = vadd.f32 %v3481, %v3992
        %v3994 = vpop.f32.mrb[0].mxu0
        %v3995 = vadd.f32 %v3485, %v3994
        %v3996 = vpop.f32.mrb[0].mxu0
        %v3997 = vadd.f32 %v3481, %v3996
        %v3998 = vpop.f32.mrb[0].mxu0
        %v3999 = vadd.f32 %v3485, %v3998
        %4000 = vdwg.mxu0
        %v4001 = vmax.f32 %v3683, 0.0
        %v4002 = vmax.f32 %v3685, 0.0
        %v4003 = vmax.f32 %v3687, 0.0
        %v4004 = vmax.f32 %v3689, 0.0
        %v4005 = vmax.f32 %v3693, 0.0
        %v4006 = vmax.f32 %v3695, 0.0
        %v4007 = vmax.f32 %v3697, 0.0
        %v4008 = vmax.f32 %v3699, 0.0
        %v4009 = vmax.f32 %v3703, 0.0
        %v4010 = vmax.f32 %v3705, 0.0
        %v4011 = vmax.f32 %v3707, 0.0
        %v4012 = vmax.f32 %v3709, 0.0
        %v4013 = vmax.f32 %v3713, 0.0
        %v4014 = vmax.f32 %v3715, 0.0
        %v4015 = vmax.f32 %v3717, 0.0
        %v4016 = vmax.f32 %v3719, 0.0
        %v4017 = vmax.f32 %v3723, 0.0
        %v4018 = vmax.f32 %v3725, 0.0
        %v4019 = vmax.f32 %v3727, 0.0
        %v4020 = vmax.f32 %v3729, 0.0
        %v4021 = vmax.f32 %v3733, 0.0
        %v4022 = vmax.f32 %v3735, 0.0
        %v4023 = vmax.f32 %v3737, 0.0
        %v4024 = vmax.f32 %v3739, 0.0
        %v4025 = vmax.f32 %v3743, 0.0
        %v4026 = vmax.f32 %v3745, 0.0
        %v4027 = vmax.f32 %v3747, 0.0
        %v4028 = vmax.f32 %v3749, 0.0
        %v4029 = vmax.f32 %v3753, 0.0
        %v4030 = vmax.f32 %v3755, 0.0
        %v4031 = vmax.f32 %v3757, 0.0
        %v4032 = vmax.f32 %v3759, 0.0
        %v4033 = vmax.f32 %v3763, 0.0
        %v4034 = vmax.f32 %v3765, 0.0
        %v4035 = vmax.f32 %v3767, 0.0
        %v4036 = vmax.f32 %v3769, 0.0
        %v4037 = vmax.f32 %v3773, 0.0
        %v4038 = vmax.f32 %v3775, 0.0
        %v4039 = vmax.f32 %v3777, 0.0
        %v4040 = vmax.f32 %v3779, 0.0
        %v4041 = vmax.f32 %v3783, 0.0
        %v4042 = vmax.f32 %v3785, 0.0
        %v4043 = vmax.f32 %v3787, 0.0
        %v4044 = vmax.f32 %v3789, 0.0
        %v4045 = vmax.f32 %v3793, 0.0
        %v4046 = vmax.f32 %v3795, 0.0
        %v4047 = vmax.f32 %v3797, 0.0
        %v4048 = vmax.f32 %v3799, 0.0
        %v4049 = vmax.f32 %v3803, 0.0
        %v4050 = vmax.f32 %v3805, 0.0
        %v4051 = vmax.f32 %v3807, 0.0
        %v4052 = vmax.f32 %v3809, 0.0
        %v4053 = vmax.f32 %v3813, 0.0
        %v4054 = vmax.f32 %v3815, 0.0
        %v4055 = vmax.f32 %v3817, 0.0
        %v4056 = vmax.f32 %v3819, 0.0
        %v4057 = vmax.f32 %v3823, 0.0
        %v4058 = vmax.f32 %v3825, 0.0
        %v4059 = vmax.f32 %v3827, 0.0
        %v4060 = vmax.f32 %v3829, 0.0
        %v4061 = vmax.f32 %v3833, 0.0
        %v4062 = vmax.f32 %v3835, 0.0
        %v4063 = vmax.f32 %v3837, 0.0
        %v4064 = vmax.f32 %v3839, 0.0
        %v4065 = vmax.f32 %v3843, 0.0
        %v4066 = vmax.f32 %v3845, 0.0
        %v4067 = vmax.f32 %v3847, 0.0
        %v4068 = vmax.f32 %v3849, 0.0
        %v4069 = vmax.f32 %v3853, 0.0
        %v4070 = vmax.f32 %v3855, 0.0
        %v4071 = vmax.f32 %v3857, 0.0
        %v4072 = vmax.f32 %v3859, 0.0
        %v4073 = vmax.f32 %v3863, 0.0
        %v4074 = vmax.f32 %v3865, 0.0
        %v4075 = vmax.f32 %v3867, 0.0
        %v4076 = vmax.f32 %v3869, 0.0
        %v4077 = vmax.f32 %v3873, 0.0
        %v4078 = vmax.f32 %v3875, 0.0
        %v4079 = vmax.f32 %v3877, 0.0
        %v4080 = vmax.f32 %v3879, 0.0
        %v4081 = vmax.f32 %v3883, 0.0
        %v4082 = vmax.f32 %v3885, 0.0
        %v4083 = vmax.f32 %v3887, 0.0
        %v4084 = vmax.f32 %v3889, 0.0
        %v4085 = vmax.f32 %v3893, 0.0
        %v4086 = vmax.f32 %v3895, 0.0
        %v4087 = vmax.f32 %v3897, 0.0
        %v4088 = vmax.f32 %v3899, 0.0
        %v4089 = vmax.f32 %v3903, 0.0
        %v4090 = vmax.f32 %v3905, 0.0
        %v4091 = vmax.f32 %v3907, 0.0
        %v4092 = vmax.f32 %v3909, 0.0
        %v4093 = vmax.f32 %v3913, 0.0
        %v4094 = vmax.f32 %v3915, 0.0
        %v4095 = vmax.f32 %v3917, 0.0
        %v4096 = vmax.f32 %v3919, 0.0
        %v4097 = vmax.f32 %v3923, 0.0
        %v4098 = vmax.f32 %v3925, 0.0
        %v4099 = vmax.f32 %v3927, 0.0
        %v4100 = vmax.f32 %v3929, 0.0
        %v4101 = vmax.f32 %v3933, 0.0
        %v4102 = vmax.f32 %v3935, 0.0
        %v4103 = vmax.f32 %v3937, 0.0
        %v4104 = vmax.f32 %v3939, 0.0
        %v4105 = vmax.f32 %v3943, 0.0
        %v4106 = vmax.f32 %v3945, 0.0
        %v4107 = vmax.f32 %v3947, 0.0
        %v4108 = vmax.f32 %v3949, 0.0
        %v4109 = vmax.f32 %v3953, 0.0
        %v4110 = vmax.f32 %v3955, 0.0
        %v4111 = vmax.f32 %v3957, 0.0
        %v4112 = vmax.f32 %v3959, 0.0
        %v4113 = vmax.f32 %v3963, 0.0
        %v4114 = vmax.f32 %v3965, 0.0
        %v4115 = vmax.f32 %v3967, 0.0
        %v4116 = vmax.f32 %v3969, 0.0
        %v4117 = vmax.f32 %v3973, 0.0
        %v4118 = vmax.f32 %v3975, 0.0
        %v4119 = vmax.f32 %v3977, 0.0
        %v4120 = vmax.f32 %v3979, 0.0
        %v4121 = vmax.f32 %v3983, 0.0
        %v4122 = vmax.f32 %v3985, 0.0
        %v4123 = vmax.f32 %v3987, 0.0
        %v4124 = vmax.f32 %v3989, 0.0
        %v4125 = vmax.f32 %v3993, 0.0
        %v4126 = vmax.f32 %v3995, 0.0
        %v4127 = vmax.f32 %v3997, 0.0
        %v4128 = vmax.f32 %v3999, 0.0
        %v4129 = vpack.c.bf16 %v4003, %v4001
        %v4130 = vpack.c.bf16 %v4004, %v4002
        %v4131 = vpack.c.bf16 %v4007, %v4005
        %v4132 = vpack.c.bf16 %v4008, %v4006
        %v4133 = vpack.c.bf16 %v4011, %v4009
        %v4134 = vpack.c.bf16 %v4012, %v4010
        %v4135 = vpack.c.bf16 %v4015, %v4013
        %v4136 = vpack.c.bf16 %v4016, %v4014
        %v4137 = vpack.c.bf16 %v4019, %v4017
        %v4138 = vpack.c.bf16 %v4020, %v4018
        %v4139 = vpack.c.bf16 %v4023, %v4021
        %v4140 = vpack.c.bf16 %v4024, %v4022
        %v4141 = vpack.c.bf16 %v4027, %v4025
        %v4142 = vpack.c.bf16 %v4028, %v4026
        %v4143 = vpack.c.bf16 %v4031, %v4029
        %v4144 = vpack.c.bf16 %v4032, %v4030
        %v4145 = vpack.c.bf16 %v4035, %v4033
        %v4146 = vpack.c.bf16 %v4036, %v4034
        %v4147 = vpack.c.bf16 %v4039, %v4037
        %v4148 = vpack.c.bf16 %v4040, %v4038
        %v4149 = vpack.c.bf16 %v4043, %v4041
        %v4150 = vpack.c.bf16 %v4044, %v4042
        %v4151 = vpack.c.bf16 %v4047, %v4045
        %v4152 = vpack.c.bf16 %v4048, %v4046
        %v4153 = vpack.c.bf16 %v4051, %v4049
        %v4154 = vpack.c.bf16 %v4052, %v4050
        %v4155 = vpack.c.bf16 %v4055, %v4053
        %v4156 = vpack.c.bf16 %v4056, %v4054
        %v4157 = vpack.c.bf16 %v4059, %v4057
        %v4158 = vpack.c.bf16 %v4060, %v4058
        %v4159 = vpack.c.bf16 %v4063, %v4061
        %v4160 = vpack.c.bf16 %v4064, %v4062
        %v4161 = vpack.c.bf16 %v4067, %v4065
        %v4162 = vpack.c.bf16 %v4068, %v4066
        %v4163 = vpack.c.bf16 %v4071, %v4069
        %v4164 = vpack.c.bf16 %v4072, %v4070
        %v4165 = vpack.c.bf16 %v4075, %v4073
        %v4166 = vpack.c.bf16 %v4076, %v4074
        %v4167 = vpack.c.bf16 %v4079, %v4077
        %v4168 = vpack.c.bf16 %v4080, %v4078
        %v4169 = vpack.c.bf16 %v4083, %v4081
        %v4170 = vpack.c.bf16 %v4084, %v4082
        %v4171 = vpack.c.bf16 %v4087, %v4085
        %v4172 = vpack.c.bf16 %v4088, %v4086
        %v4173 = vpack.c.bf16 %v4091, %v4089
        %v4174 = vpack.c.bf16 %v4092, %v4090
        %v4175 = vpack.c.bf16 %v4095, %v4093
        %v4176 = vpack.c.bf16 %v4096, %v4094
        %v4177 = vpack.c.bf16 %v4099, %v4097
        %v4178 = vpack.c.bf16 %v4100, %v4098
        %v4179 = vpack.c.bf16 %v4103, %v4101
        %v4180 = vpack.c.bf16 %v4104, %v4102
        %v4181 = vpack.c.bf16 %v4107, %v4105
        %v4182 = vpack.c.bf16 %v4108, %v4106
        %v4183 = vpack.c.bf16 %v4111, %v4109
        %v4184 = vpack.c.bf16 %v4112, %v4110
        %v4185 = vpack.c.bf16 %v4115, %v4113
        %v4186 = vpack.c.bf16 %v4116, %v4114
        %v4187 = vpack.c.bf16 %v4119, %v4117
        %v4188 = vpack.c.bf16 %v4120, %v4118
        %v4189 = vpack.c.bf16 %v4123, %v4121
        %v4190 = vpack.c.bf16 %v4124, %v4122
        %v4191 = vpack.c.bf16 %v4127, %v4125
        %v4192 = vpack.c.bf16 %v4128, %v4126
        %v4193 = vld [vmem:[%s8] sm:$0xff]
        %v4194 = vld [vmem:[%s8 + $0x8] sm:$0xf]
        %v4195 = vld [vmem:[%s8 + $0xc] sm:$0xff]
        %v4196 = vld [vmem:[%s8 + $0x14] sm:$0xf]
        %v4197 = vld [vmem:[%s8 + $0x18] sm:$0xff]
        %v4198 = vld [vmem:[%s8 + $0x20] sm:$0xf]
        %v4199 = vld [vmem:[%s8 + $0x24] sm:$0xff]
        %v4200 = vld [vmem:[%s8 + $0x2c] sm:$0xf]
        %v4201 = vld [vmem:[%s8 + $0x30] sm:$0xff]
        %v4202 = vld [vmem:[%s8 + $0x38] sm:$0xf]
        %v4203 = vld [vmem:[%s8 + $0x3c] sm:$0xff]
        %v4204 = vld [vmem:[%s8 + $0x44] sm:$0xf]
        %v4205 = vld [vmem:[%s8 + $0x48] sm:$0xff]
        %v4206 = vld [vmem:[%s8 + $0x50] sm:$0xf]
        %v4207 = vld [vmem:[%s8 + $0x54] sm:$0xff]
        %v4208 = vld [vmem:[%s8 + $0x5c] sm:$0xf]
        %v4209 = vld [vmem:[%s8 + $0x60] sm:$0xff]
        %v4210 = vld [vmem:[%s8 + $0x68] sm:$0xf]
        %v4211 = vld [vmem:[%s8 + $0x6c] sm:$0xff]
        %v4212 = vld [vmem:[%s8 + $0x74] sm:$0xf]
        %v4213 = vld [vmem:[%s8 + $0x78] sm:$0xff]
        %v4214 = vld [vmem:[%s8 + $0x80] sm:$0xf]
        %v4215 = vld [vmem:[%s8 + $0x84] sm:$0xff]
        %v4216 = vld [vmem:[%s8 + $0x8c] sm:$0xf]
        %v4217 = vld [vmem:[%s8 + $0x90] sm:$0xff]
        %v4218 = vld [vmem:[%s8 + $0x98] sm:$0xf]
        %v4219 = vld [vmem:[%s8 + $0x9c] sm:$0xff]
        %v4220 = vld [vmem:[%s8 + $0xa4] sm:$0xf]
        %v4221 = vld [vmem:[%s8 + $0xa8] sm:$0xff]
        %v4222 = vld [vmem:[%s8 + $0xb0] sm:$0xf]
        %v4223 = vld [vmem:[%s8 + $0xb4] sm:$0xff]
        %v4224 = vld [vmem:[%s8 + $0xbc] sm:$0xf]
        %v4225 = vld [vmem:[%s8 + $0xc0] sm:$0xff]
        %v4226 = vld [vmem:[%s8 + $0xc8] sm:$0xf]
        %v4227 = vld [vmem:[%s8 + $0xcc] sm:$0xff]
        %v4228 = vld [vmem:[%s8 + $0xd4] sm:$0xf]
        %v4229 = vld [vmem:[%s8 + $0xd8] sm:$0xff]
        %v4230 = vld [vmem:[%s8 + $0xe0] sm:$0xf]
        %v4231 = vld [vmem:[%s8 + $0xe4] sm:$0xff]
        %v4232 = vld [vmem:[%s8 + $0xec] sm:$0xf]
        %v4233 = vld [vmem:[%s8 + $0xf0] sm:$0xff]
        %v4234 = vld [vmem:[%s8 + $0xf8] sm:$0xf]
        %v4235 = vld [vmem:[%s8 + $0xfc] sm:$0xff]
        %v4236 = vld [vmem:[%s8 + $0x104] sm:$0xf]
        %v4237 = vld [vmem:[%s8 + $0x108] sm:$0xff]
        %v4238 = vld [vmem:[%s8 + $0x110] sm:$0xf]
        %v4239 = vld [vmem:[%s8 + $0x114] sm:$0xff]
        %v4240 = vld [vmem:[%s8 + $0x11c] sm:$0xf]
        %v4241 = vld [vmem:[%s8 + $0x120] sm:$0xff]
        %v4242 = vld [vmem:[%s8 + $0x128] sm:$0xf]
        %v4243 = vld [vmem:[%s8 + $0x12c] sm:$0xff]
        %v4244 = vld [vmem:[%s8 + $0x134] sm:$0xf]
        %v4245 = vld [vmem:[%s8 + $0x138] sm:$0xff]
        %v4246 = vld [vmem:[%s8 + $0x140] sm:$0xf]
        %v4247 = vld [vmem:[%s8 + $0x144] sm:$0xff]
        %v4248 = vld [vmem:[%s8 + $0x14c] sm:$0xf]
        %v4249 = vld [vmem:[%s8 + $0x150] sm:$0xff]
        %v4250 = vld [vmem:[%s8 + $0x158] sm:$0xf]
        %v4251 = vld [vmem:[%s8 + $0x15c] sm:$0xff]
        %v4252 = vld [vmem:[%s8 + $0x164] sm:$0xf]
        %v4253 = vld [vmem:[%s8 + $0x168] sm:$0xff]
        %v4254 = vld [vmem:[%s8 + $0x170] sm:$0xf]
        %v4255 = vld [vmem:[%s8 + $0x174] sm:$0xff]
        %v4256 = vld [vmem:[%s8 + $0x17c] sm:$0xf]
        %v4257 = vld [vmem:[%s9] sm:$0x7]
        %v4259 = vlaneseq
        %v4260 = vshrl.u32 %v4259, 7
        %v4261 = vsub.s32 0, %v4260
        %v4262 = vrot.slane %v4257, %v4261
        %v4263 = vlaneseq
        %v4264 = vshrl.u32 %v4263, 7
        %v4265 = vsub.s32 1, %v4264
        %v4266 = vrot.slane %v4257, %v4265
        %v4267 = vlaneseq
        %v4268 = vshrl.u32 %v4267, 7
        %v4269 = vsub.s32 2, %v4268
        %v4270 = vrot.slane %v4257, %v4269
        %v4338 = vunpack.c.l.b16 %v4193
        %v4339 = vunpack.c.h.b16 %v4193
        %v4340 = vunpack.c.l.b16 %v4194
        %v4341 = vunpack.c.l.b16 %v4195
        %v4342 = vunpack.c.h.b16 %v4195
        %v4343 = vunpack.c.l.b16 %v4196
        %v4344 = vunpack.c.l.b16 %v4197
        %v4345 = vunpack.c.h.b16 %v4197
        %v4346 = vunpack.c.l.b16 %v4198
        %v4347 = vunpack.c.l.b16 %v4199
        %v4348 = vunpack.c.h.b16 %v4199
        %v4349 = vunpack.c.l.b16 %v4200
        %v4350 = vunpack.c.l.b16 %v4201
        %v4351 = vunpack.c.h.b16 %v4201
        %v4352 = vunpack.c.l.b16 %v4202
        %v4353 = vunpack.c.l.b16 %v4203
        %v4354 = vunpack.c.h.b16 %v4203
        %v4355 = vunpack.c.l.b16 %v4204
        %v4356 = vunpack.c.l.b16 %v4205
        %v4357 = vunpack.c.h.b16 %v4205
        %v4358 = vunpack.c.l.b16 %v4206
        %v4359 = vunpack.c.l.b16 %v4207
        %v4360 = vunpack.c.h.b16 %v4207
        %v4361 = vunpack.c.l.b16 %v4208
        %v4362 = vunpack.c.l.b16 %v4209
        %v4363 = vunpack.c.h.b16 %v4209
        %v4364 = vunpack.c.l.b16 %v4210
        %v4365 = vunpack.c.l.b16 %v4211
        %v4366 = vunpack.c.h.b16 %v4211
        %v4367 = vunpack.c.l.b16 %v4212
        %v4368 = vunpack.c.l.b16 %v4213
        %v4369 = vunpack.c.h.b16 %v4213
        %v4370 = vunpack.c.l.b16 %v4214
        %v4371 = vunpack.c.l.b16 %v4215
        %v4372 = vunpack.c.h.b16 %v4215
        %v4373 = vunpack.c.l.b16 %v4216
        %v4374 = vunpack.c.l.b16 %v4217
        %v4375 = vunpack.c.h.b16 %v4217
        %v4376 = vunpack.c.l.b16 %v4218
        %v4377 = vunpack.c.l.b16 %v4219
        %v4378 = vunpack.c.h.b16 %v4219
        %v4379 = vunpack.c.l.b16 %v4220
        %v4380 = vunpack.c.l.b16 %v4221
        %v4381 = vunpack.c.h.b16 %v4221
        %v4382 = vunpack.c.l.b16 %v4222
        %v4383 = vunpack.c.l.b16 %v4223
        %v4384 = vunpack.c.h.b16 %v4223
        %v4385 = vunpack.c.l.b16 %v4224
        %v4386 = vunpack.c.l.b16 %v4225
        %v4387 = vunpack.c.h.b16 %v4225
        %v4388 = vunpack.c.l.b16 %v4226
        %v4389 = vunpack.c.l.b16 %v4227
        %v4390 = vunpack.c.h.b16 %v4227
        %v4391 = vunpack.c.l.b16 %v4228
        %v4392 = vunpack.c.l.b16 %v4229
        %v4393 = vunpack.c.h.b16 %v4229
        %v4394 = vunpack.c.l.b16 %v4230
        %v4395 = vunpack.c.l.b16 %v4231
        %v4396 = vunpack.c.h.b16 %v4231
        %v4397 = vunpack.c.l.b16 %v4232
        %v4398 = vunpack.c.l.b16 %v4233
        %v4399 = vunpack.c.h.b16 %v4233
        %v4400 = vunpack.c.l.b16 %v4234
        %v4401 = vunpack.c.l.b16 %v4235
        %v4402 = vunpack.c.h.b16 %v4235
        %v4403 = vunpack.c.l.b16 %v4236
        %v4404 = vunpack.c.l.b16 %v4237
        %v4405 = vunpack.c.h.b16 %v4237
        %v4406 = vunpack.c.l.b16 %v4238
        %v4407 = vunpack.c.l.b16 %v4239
        %v4408 = vunpack.c.h.b16 %v4239
        %v4409 = vunpack.c.l.b16 %v4240
        %v4410 = vunpack.c.l.b16 %v4241
        %v4411 = vunpack.c.h.b16 %v4241
        %v4412 = vunpack.c.l.b16 %v4242
        %v4413 = vunpack.c.l.b16 %v4243
        %v4414 = vunpack.c.h.b16 %v4243
        %v4415 = vunpack.c.l.b16 %v4244
        %v4416 = vunpack.c.l.b16 %v4245
        %v4417 = vunpack.c.h.b16 %v4245
        %v4418 = vunpack.c.l.b16 %v4246
        %v4419 = vunpack.c.l.b16 %v4247
        %v4420 = vunpack.c.h.b16 %v4247
        %v4421 = vunpack.c.l.b16 %v4248
        %v4422 = vunpack.c.l.b16 %v4249
        %v4423 = vunpack.c.h.b16 %v4249
        %v4424 = vunpack.c.l.b16 %v4250
        %v4425 = vunpack.c.l.b16 %v4251
        %v4426 = vunpack.c.h.b16 %v4251
        %v4427 = vunpack.c.l.b16 %v4252
        %v4428 = vunpack.c.l.b16 %v4253
        %v4429 = vunpack.c.h.b16 %v4253
        %v4430 = vunpack.c.l.b16 %v4254
        %v4431 = vunpack.c.l.b16 %v4255
        %v4432 = vunpack.c.h.b16 %v4255
        %v4433 = vunpack.c.l.b16 %v4256
        %v4434 = vpack.c.b16 %v4341, %v4338
        %v4435 = vpack.c.b16 %v4342, %v4339
        %v4436 = vpack.c.b16 %v4343, %v4340
        %v4437 = vpack.c.b16 %v4347, %v4344
        %v4438 = vpack.c.b16 %v4348, %v4345
        %v4439 = vpack.c.b16 %v4349, %v4346
        %v4440 = vpack.c.b16 %v4353, %v4350
        %v4441 = vpack.c.b16 %v4354, %v4351
        %v4442 = vpack.c.b16 %v4355, %v4352
        %v4443 = vpack.c.b16 %v4359, %v4356
        %v4444 = vpack.c.b16 %v4360, %v4357
        %v4445 = vpack.c.b16 %v4361, %v4358
        %v4446 = vpack.c.b16 %v4365, %v4362
        %v4447 = vpack.c.b16 %v4366, %v4363
        %v4448 = vpack.c.b16 %v4367, %v4364
        %v4449 = vpack.c.b16 %v4371, %v4368
        %v4450 = vpack.c.b16 %v4372, %v4369
        %v4451 = vpack.c.b16 %v4373, %v4370
        %v4452 = vpack.c.b16 %v4377, %v4374
        %v4453 = vpack.c.b16 %v4378, %v4375
        %v4454 = vpack.c.b16 %v4379, %v4376
        %v4455 = vpack.c.b16 %v4383, %v4380
        %v4456 = vpack.c.b16 %v4384, %v4381
        %v4457 = vpack.c.b16 %v4385, %v4382
        %v4458 = vpack.c.b16 %v4389, %v4386
        %v4459 = vpack.c.b16 %v4390, %v4387
        %v4460 = vpack.c.b16 %v4391, %v4388
        %v4461 = vpack.c.b16 %v4395, %v4392
        %v4462 = vpack.c.b16 %v4396, %v4393
        %v4463 = vpack.c.b16 %v4397, %v4394
        %v4464 = vpack.c.b16 %v4401, %v4398
        %v4465 = vpack.c.b16 %v4402, %v4399
        %v4466 = vpack.c.b16 %v4403, %v4400
        %v4467 = vpack.c.b16 %v4407, %v4404
        %v4468 = vpack.c.b16 %v4408, %v4405
        %v4469 = vpack.c.b16 %v4409, %v4406
        %v4470 = vpack.c.b16 %v4413, %v4410
        %v4471 = vpack.c.b16 %v4414, %v4411
        %v4472 = vpack.c.b16 %v4415, %v4412
        %v4473 = vpack.c.b16 %v4419, %v4416
        %v4474 = vpack.c.b16 %v4420, %v4417
        %v4475 = vpack.c.b16 %v4421, %v4418
        %v4476 = vpack.c.b16 %v4425, %v4422
        %v4477 = vpack.c.b16 %v4426, %v4423
        %v4478 = vpack.c.b16 %v4427, %v4424
        %v4479 = vpack.c.b16 %v4431, %v4428
        %v4480 = vpack.c.b16 %v4432, %v4429
        %v4481 = vpack.c.b16 %v4433, %v4430
        %4530 = vmatprep.subr.bf16.mxu0 %v4435
        %4531 = vmatpush1.bf16.msra.mxu0 %v4434
        %4532 = vmatprep.subr.bf16.mxu0 %v4438
        %4533 = vmatpush1.bf16.msra.mxu0 %v4437
        %4534 = vmatprep.subr.bf16.mxu0 %v4441
        %4535 = vmatpush1.bf16.msra.mxu0 %v4440
        %4536 = vmatprep.subr.bf16.mxu0 %v4444
        %4537 = vmatpush1.bf16.msra.mxu0 %v4443
        %4538 = vmatprep.subr.bf16.mxu0 %v4447
        %4539 = vmatpush1.bf16.msra.mxu0 %v4446
        %4540 = vmatprep.subr.bf16.mxu0 %v4450
        %4541 = vmatpush1.bf16.msra.mxu0 %v4449
        %4542 = vmatprep.subr.bf16.mxu0 %v4453
        %4543 = vmatpush1.bf16.msra.mxu0 %v4452
        %4544 = vmatprep.subr.bf16.mxu0 %v4456
        %4545 = vmatpush1.bf16.msra.mxu0 %v4455
        %4546 = vmatprep.subr.bf16.mxu0 %v4459
        %4547 = vmatpush1.bf16.msra.mxu0 %v4458
        %4548 = vmatprep.subr.bf16.mxu0 %v4462
        %4549 = vmatpush1.bf16.msra.mxu0 %v4461
        %4550 = vmatprep.subr.bf16.mxu0 %v4465
        %4551 = vmatpush1.bf16.msra.mxu0 %v4464
        %4552 = vmatprep.subr.bf16.mxu0 %v4468
        %4553 = vmatpush1.bf16.msra.mxu0 %v4467
        %4554 = vmatprep.subr.bf16.mxu0 %v4471
        %4555 = vmatpush1.bf16.msra.mxu0 %v4470
        %4556 = vmatprep.subr.bf16.mxu0 %v4474
        %4557 = vmatpush1.bf16.msra.mxu0 %v4473
        %4558 = vmatprep.subr.bf16.mxu0 %v4477
        %4559 = vmatpush1.bf16.msra.mxu0 %v4476
        %4560 = vmatprep.subr.bf16.mxu0 %v4480
        %4561 = vmatpush1.bf16.msra.mxu0 %v4479
        %4562 = vmatprep.mubr.bf16.mxu0 %v4130
        %4563 = vmatmul.mubr.bf16.gmra.mrb[0].mxu0 %v4129
        %v4564 = vpop.f32.mrb[0].mxu0
        %v4565 = vadd.f32 %v4262, %v4564
        %v4566 = vpop.f32.mrb[0].mxu0
        %v4567 = vadd.f32 %v4266, %v4566
        %v4568 = vpop.f32.mrb[0].mxu0
        %v4569 = vadd.f32 %v4262, %v4568
        %v4570 = vpop.f32.mrb[0].mxu0
        %v4571 = vadd.f32 %v4266, %v4570
        %4572 = vmatprep.mubr.bf16.mxu0 %v4132
        %4573 = vmatmul.mubr.bf16.gmra.mrb[0].mxu0 %v4131
        %v4574 = vpop.f32.mrb[0].mxu0
        %v4575 = vadd.f32 %v4262, %v4574
        %v4576 = vpop.f32.mrb[0].mxu0
        %v4577 = vadd.f32 %v4266, %v4576
        %v4578 = vpop.f32.mrb[0].mxu0
        %v4579 = vadd.f32 %v4262, %v4578
        %v4580 = vpop.f32.mrb[0].mxu0
        %v4581 = vadd.f32 %v4266, %v4580
        %4582 = vmatprep.mubr.bf16.mxu0 %v4134
        %4583 = vmatmul.mubr.bf16.gmra.mrb[0].mxu0 %v4133
        %v4584 = vpop.f32.mrb[0].mxu0
        %v4585 = vadd.f32 %v4262, %v4584
        %v4586 = vpop.f32.mrb[0].mxu0
        %v4587 = vadd.f32 %v4266, %v4586
        %v4588 = vpop.f32.mrb[0].mxu0
        %v4589 = vadd.f32 %v4262, %v4588
        %v4590 = vpop.f32.mrb[0].mxu0
        %v4591 = vadd.f32 %v4266, %v4590
        %4592 = vmatprep.mubr.bf16.mxu0 %v4136
        %4593 = vmatmul.mubr.bf16.gmra.mrb[0].mxu0 %v4135
        %v4594 = vpop.f32.mrb[0].mxu0
        %v4595 = vadd.f32 %v4262, %v4594
        %v4596 = vpop.f32.mrb[0].mxu0
        %v4597 = vadd.f32 %v4266, %v4596
        %v4598 = vpop.f32.mrb[0].mxu0
        %v4599 = vadd.f32 %v4262, %v4598
        %v4600 = vpop.f32.mrb[0].mxu0
        %v4601 = vadd.f32 %v4266, %v4600
        %4602 = vmatprep.mubr.bf16.mxu0 %v4138
        %4603 = vmatmul.mubr.bf16.gmra.mrb[0].mxu0 %v4137
        %v4604 = vpop.f32.mrb[0].mxu0
        %v4605 = vadd.f32 %v4262, %v4604
        %v4606 = vpop.f32.mrb[0].mxu0
        %v4607 = vadd.f32 %v4266, %v4606
        %v4608 = vpop.f32.mrb[0].mxu0
        %v4609 = vadd.f32 %v4262, %v4608
        %v4610 = vpop.f32.mrb[0].mxu0
        %v4611 = vadd.f32 %v4266, %v4610
        %4612 = vmatprep.mubr.bf16.mxu0 %v4140
        %4613 = vmatmul.mubr.bf16.gmra.mrb[0].mxu0 %v4139
        %v4614 = vpop.f32.mrb[0].mxu0
        %v4615 = vadd.f32 %v4262, %v4614
        %v4616 = vpop.f32.mrb[0].mxu0
        %v4617 = vadd.f32 %v4266, %v4616
        %v4618 = vpop.f32.mrb[0].mxu0
        %v4619 = vadd.f32 %v4262, %v4618
        %v4620 = vpop.f32.mrb[0].mxu0
        %v4621 = vadd.f32 %v4266, %v4620
        %4622 = vmatprep.mubr.bf16.mxu0 %v4142
        %4623 = vmatmul.mubr.bf16.gmra.mrb[0].mxu0 %v4141
        %v4624 = vpop.f32.mrb[0].mxu0
        %v4625 = vadd.f32 %v4262, %v4624
        %v4626 = vpop.f32.mrb[0].mxu0
        %v4627 = vadd.f32 %v4266, %v4626
        %v4628 = vpop.f32.mrb[0].mxu0
        %v4629 = vadd.f32 %v4262, %v4628
        %v4630 = vpop.f32.mrb[0].mxu0
        %v4631 = vadd.f32 %v4266, %v4630
        %4632 = vmatprep.mubr.bf16.mxu0 %v4144
        %4633 = vmatmul.mubr.bf16.gmra.mrb[0].mxu0 %v4143
        %v4634 = vpop.f32.mrb[0].mxu0
        %v4635 = vadd.f32 %v4262, %v4634
        %v4636 = vpop.f32.mrb[0].mxu0
        %v4637 = vadd.f32 %v4266, %v4636
        %v4638 = vpop.f32.mrb[0].mxu0
        %v4639 = vadd.f32 %v4262, %v4638
        %v4640 = vpop.f32.mrb[0].mxu0
        %v4641 = vadd.f32 %v4266, %v4640
        %4642 = vmatprep.mubr.bf16.mxu0 %v4146
        %4643 = vmatmul.mubr.bf16.gmra.mrb[0].mxu0 %v4145
        %v4644 = vpop.f32.mrb[0].mxu0
        %v4645 = vadd.f32 %v4262, %v4644
        %v4646 = vpop.f32.mrb[0].mxu0
        %v4647 = vadd.f32 %v4266, %v4646
        %v4648 = vpop.f32.mrb[0].mxu0
        %v4649 = vadd.f32 %v4262, %v4648
        %v4650 = vpop.f32.mrb[0].mxu0
        %v4651 = vadd.f32 %v4266, %v4650
        %4652 = vmatprep.mubr.bf16.mxu0 %v4148
        %4653 = vmatmul.mubr.bf16.gmra.mrb[0].mxu0 %v4147
        %v4654 = vpop.f32.mrb[0].mxu0
        %v4655 = vadd.f32 %v4262, %v4654
        %v4656 = vpop.f32.mrb[0].mxu0
        %v4657 = vadd.f32 %v4266, %v4656
        %v4658 = vpop.f32.mrb[0].mxu0
        %v4659 = vadd.f32 %v4262, %v4658
        %v4660 = vpop.f32.mrb[0].mxu0
        %v4661 = vadd.f32 %v4266, %v4660
        %4662 = vmatprep.mubr.bf16.mxu0 %v4150
        %4663 = vmatmul.mubr.bf16.gmra.mrb[0].mxu0 %v4149
        %v4664 = vpop.f32.mrb[0].mxu0
        %v4665 = vadd.f32 %v4262, %v4664
        %v4666 = vpop.f32.mrb[0].mxu0
        %v4667 = vadd.f32 %v4266, %v4666
        %v4668 = vpop.f32.mrb[0].mxu0
        %v4669 = vadd.f32 %v4262, %v4668
        %v4670 = vpop.f32.mrb[0].mxu0
        %v4671 = vadd.f32 %v4266, %v4670
        %4672 = vmatprep.mubr.bf16.mxu0 %v4152
        %4673 = vmatmul.mubr.bf16.gmra.mrb[0].mxu0 %v4151
        %v4674 = vpop.f32.mrb[0].mxu0
        %v4675 = vadd.f32 %v4262, %v4674
        %v4676 = vpop.f32.mrb[0].mxu0
        %v4677 = vadd.f32 %v4266, %v4676
        %v4678 = vpop.f32.mrb[0].mxu0
        %v4679 = vadd.f32 %v4262, %v4678
        %v4680 = vpop.f32.mrb[0].mxu0
        %v4681 = vadd.f32 %v4266, %v4680
        %4682 = vmatprep.mubr.bf16.mxu0 %v4154
        %4683 = vmatmul.mubr.bf16.gmra.mrb[0].mxu0 %v4153
        %v4684 = vpop.f32.mrb[0].mxu0
        %v4685 = vadd.f32 %v4262, %v4684
        %v4686 = vpop.f32.mrb[0].mxu0
        %v4687 = vadd.f32 %v4266, %v4686
        %v4688 = vpop.f32.mrb[0].mxu0
        %v4689 = vadd.f32 %v4262, %v4688
        %v4690 = vpop.f32.mrb[0].mxu0
        %v4691 = vadd.f32 %v4266, %v4690
        %4692 = vmatprep.mubr.bf16.mxu0 %v4156
        %4693 = vmatmul.mubr.bf16.gmra.mrb[0].mxu0 %v4155
        %v4694 = vpop.f32.mrb[0].mxu0
        %v4695 = vadd.f32 %v4262, %v4694
        %v4696 = vpop.f32.mrb[0].mxu0
        %v4697 = vadd.f32 %v4266, %v4696
        %v4698 = vpop.f32.mrb[0].mxu0
        %v4699 = vadd.f32 %v4262, %v4698
        %v4700 = vpop.f32.mrb[0].mxu0
        %v4701 = vadd.f32 %v4266, %v4700
        %4702 = vmatprep.mubr.bf16.mxu0 %v4158
        %4703 = vmatmul.mubr.bf16.gmra.mrb[0].mxu0 %v4157
        %v4704 = vpop.f32.mrb[0].mxu0
        %v4705 = vadd.f32 %v4262, %v4704
        %v4706 = vpop.f32.mrb[0].mxu0
        %v4707 = vadd.f32 %v4266, %v4706
        %v4708 = vpop.f32.mrb[0].mxu0
        %v4709 = vadd.f32 %v4262, %v4708
        %v4710 = vpop.f32.mrb[0].mxu0
        %v4711 = vadd.f32 %v4266, %v4710
        %4712 = vmatprep.mubr.bf16.mxu0 %v4160
        %4713 = vmatmul.mubr.bf16.gmra.mrb[0].mxu0 %v4159
        %v4714 = vpop.f32.mrb[0].mxu0
        %v4715 = vadd.f32 %v4262, %v4714
        %v4716 = vpop.f32.mrb[0].mxu0
        %v4717 = vadd.f32 %v4266, %v4716
        %v4718 = vpop.f32.mrb[0].mxu0
        %v4719 = vadd.f32 %v4262, %v4718
        %v4720 = vpop.f32.mrb[0].mxu0
        %v4721 = vadd.f32 %v4266, %v4720
        %4722 = vmatprep.mubr.bf16.mxu0 %v4162
        %4723 = vmatmul.mubr.bf16.gmra.mrb[0].mxu0 %v4161
        %v4724 = vpop.f32.mrb[0].mxu0
        %v4725 = vadd.f32 %v4262, %v4724
        %v4726 = vpop.f32.mrb[0].mxu0
        %v4727 = vadd.f32 %v4266, %v4726
        %v4728 = vpop.f32.mrb[0].mxu0
        %v4729 = vadd.f32 %v4262, %v4728
        %v4730 = vpop.f32.mrb[0].mxu0
        %v4731 = vadd.f32 %v4266, %v4730
        %4732 = vmatprep.mubr.bf16.mxu0 %v4164
        %4733 = vmatmul.mubr.bf16.gmra.mrb[0].mxu0 %v4163
        %v4734 = vpop.f32.mrb[0].mxu0
        %v4735 = vadd.f32 %v4262, %v4734
        %v4736 = vpop.f32.mrb[0].mxu0
        %v4737 = vadd.f32 %v4266, %v4736
        %v4738 = vpop.f32.mrb[0].mxu0
        %v4739 = vadd.f32 %v4262, %v4738
        %v4740 = vpop.f32.mrb[0].mxu0
        %v4741 = vadd.f32 %v4266, %v4740
        %4742 = vmatprep.mubr.bf16.mxu0 %v4166
        %4743 = vmatmul.mubr.bf16.gmra.mrb[0].mxu0 %v4165
        %v4744 = vpop.f32.mrb[0].mxu0
        %v4745 = vadd.f32 %v4262, %v4744
        %v4746 = vpop.f32.mrb[0].mxu0
        %v4747 = vadd.f32 %v4266, %v4746
        %v4748 = vpop.f32.mrb[0].mxu0
        %v4749 = vadd.f32 %v4262, %v4748
        %v4750 = vpop.f32.mrb[0].mxu0
        %v4751 = vadd.f32 %v4266, %v4750
        %4752 = vmatprep.mubr.bf16.mxu0 %v4168
        %4753 = vmatmul.mubr.bf16.gmra.mrb[0].mxu0 %v4167
        %v4754 = vpop.f32.mrb[0].mxu0
        %v4755 = vadd.f32 %v4262, %v4754
        %v4756 = vpop.f32.mrb[0].mxu0
        %v4757 = vadd.f32 %v4266, %v4756
        %v4758 = vpop.f32.mrb[0].mxu0
        %v4759 = vadd.f32 %v4262, %v4758
        %v4760 = vpop.f32.mrb[0].mxu0
        %v4761 = vadd.f32 %v4266, %v4760
        %4762 = vmatprep.mubr.bf16.mxu0 %v4170
        %4763 = vmatmul.mubr.bf16.gmra.mrb[0].mxu0 %v4169
        %v4764 = vpop.f32.mrb[0].mxu0
        %v4765 = vadd.f32 %v4262, %v4764
        %v4766 = vpop.f32.mrb[0].mxu0
        %v4767 = vadd.f32 %v4266, %v4766
        %v4768 = vpop.f32.mrb[0].mxu0
        %v4769 = vadd.f32 %v4262, %v4768
        %v4770 = vpop.f32.mrb[0].mxu0
        %v4771 = vadd.f32 %v4266, %v4770
        %4772 = vmatprep.mubr.bf16.mxu0 %v4172
        %4773 = vmatmul.mubr.bf16.gmra.mrb[0].mxu0 %v4171
        %v4774 = vpop.f32.mrb[0].mxu0
        %v4775 = vadd.f32 %v4262, %v4774
        %v4776 = vpop.f32.mrb[0].mxu0
        %v4777 = vadd.f32 %v4266, %v4776
        %v4778 = vpop.f32.mrb[0].mxu0
        %v4779 = vadd.f32 %v4262, %v4778
        %v4780 = vpop.f32.mrb[0].mxu0
        %v4781 = vadd.f32 %v4266, %v4780
        %4782 = vmatprep.mubr.bf16.mxu0 %v4174
        %4783 = vmatmul.mubr.bf16.gmra.mrb[0].mxu0 %v4173
        %v4784 = vpop.f32.mrb[0].mxu0
        %v4785 = vadd.f32 %v4262, %v4784
        %v4786 = vpop.f32.mrb[0].mxu0
        %v4787 = vadd.f32 %v4266, %v4786
        %v4788 = vpop.f32.mrb[0].mxu0
        %v4789 = vadd.f32 %v4262, %v4788
        %v4790 = vpop.f32.mrb[0].mxu0
        %v4791 = vadd.f32 %v4266, %v4790
        %4792 = vmatprep.mubr.bf16.mxu0 %v4176
        %4793 = vmatmul.mubr.bf16.gmra.mrb[0].mxu0 %v4175
        %v4794 = vpop.f32.mrb[0].mxu0
        %v4795 = vadd.f32 %v4262, %v4794
        %v4796 = vpop.f32.mrb[0].mxu0
        %v4797 = vadd.f32 %v4266, %v4796
        %v4798 = vpop.f32.mrb[0].mxu0
        %v4799 = vadd.f32 %v4262, %v4798
        %v4800 = vpop.f32.mrb[0].mxu0
        %v4801 = vadd.f32 %v4266, %v4800
        %4802 = vmatprep.mubr.bf16.mxu0 %v4178
        %4803 = vmatmul.mubr.bf16.gmra.mrb[0].mxu0 %v4177
        %v4804 = vpop.f32.mrb[0].mxu0
        %v4805 = vadd.f32 %v4262, %v4804
        %v4806 = vpop.f32.mrb[0].mxu0
        %v4807 = vadd.f32 %v4266, %v4806
        %v4808 = vpop.f32.mrb[0].mxu0
        %v4809 = vadd.f32 %v4262, %v4808
        %v4810 = vpop.f32.mrb[0].mxu0
        %v4811 = vadd.f32 %v4266, %v4810
        %4812 = vmatprep.mubr.bf16.mxu0 %v4180
        %4813 = vmatmul.mubr.bf16.gmra.mrb[0].mxu0 %v4179
        %v4814 = vpop.f32.mrb[0].mxu0
        %v4815 = vadd.f32 %v4262, %v4814
        %v4816 = vpop.f32.mrb[0].mxu0
        %v4817 = vadd.f32 %v4266, %v4816
        %v4818 = vpop.f32.mrb[0].mxu0
        %v4819 = vadd.f32 %v4262, %v4818
        %v4820 = vpop.f32.mrb[0].mxu0
        %v4821 = vadd.f32 %v4266, %v4820
        %4822 = vmatprep.mubr.bf16.mxu0 %v4182
        %4823 = vmatmul.mubr.bf16.gmra.mrb[0].mxu0 %v4181
        %v4824 = vpop.f32.mrb[0].mxu0
        %v4825 = vadd.f32 %v4262, %v4824
        %v4826 = vpop.f32.mrb[0].mxu0
        %v4827 = vadd.f32 %v4266, %v4826
        %v4828 = vpop.f32.mrb[0].mxu0
        %v4829 = vadd.f32 %v4262, %v4828
        %v4830 = vpop.f32.mrb[0].mxu0
        %v4831 = vadd.f32 %v4266, %v4830
        %4832 = vmatprep.mubr.bf16.mxu0 %v4184
        %4833 = vmatmul.mubr.bf16.gmra.mrb[0].mxu0 %v4183
        %v4834 = vpop.f32.mrb[0].mxu0
        %v4835 = vadd.f32 %v4262, %v4834
        %v4836 = vpop.f32.mrb[0].mxu0
        %v4837 = vadd.f32 %v4266, %v4836
        %v4838 = vpop.f32.mrb[0].mxu0
        %v4839 = vadd.f32 %v4262, %v4838
        %v4840 = vpop.f32.mrb[0].mxu0
        %v4841 = vadd.f32 %v4266, %v4840
        %4842 = vmatprep.mubr.bf16.mxu0 %v4186
        %4843 = vmatmul.mubr.bf16.gmra.mrb[0].mxu0 %v4185
        %v4844 = vpop.f32.mrb[0].mxu0
        %v4845 = vadd.f32 %v4262, %v4844
        %v4846 = vpop.f32.mrb[0].mxu0
        %v4847 = vadd.f32 %v4266, %v4846
        %v4848 = vpop.f32.mrb[0].mxu0
        %v4849 = vadd.f32 %v4262, %v4848
        %v4850 = vpop.f32.mrb[0].mxu0
        %v4851 = vadd.f32 %v4266, %v4850
        %4852 = vmatprep.mubr.bf16.mxu0 %v4188
        %4853 = vmatmul.mubr.bf16.gmra.mrb[0].mxu0 %v4187
        %v4854 = vpop.f32.mrb[0].mxu0
        %v4855 = vadd.f32 %v4262, %v4854
        %v4856 = vpop.f32.mrb[0].mxu0
        %v4857 = vadd.f32 %v4266, %v4856
        %v4858 = vpop.f32.mrb[0].mxu0
        %v4859 = vadd.f32 %v4262, %v4858
        %v4860 = vpop.f32.mrb[0].mxu0
        %v4861 = vadd.f32 %v4266, %v4860
        %4862 = vmatprep.mubr.bf16.mxu0 %v4190
        %4863 = vmatmul.mubr.bf16.gmra.mrb[0].mxu0 %v4189
        %v4864 = vpop.f32.mrb[0].mxu0
        %v4865 = vadd.f32 %v4262, %v4864
        %v4866 = vpop.f32.mrb[0].mxu0
        %v4867 = vadd.f32 %v4266, %v4866
        %v4868 = vpop.f32.mrb[0].mxu0
        %v4869 = vadd.f32 %v4262, %v4868
        %v4870 = vpop.f32.mrb[0].mxu0
        %v4871 = vadd.f32 %v4266, %v4870
        %4872 = vmatprep.mubr.bf16.mxu0 %v4192
        %4873 = vmatmul.mubr.bf16.gmra.mrb[0].mxu0 %v4191
        %v4874 = vpop.f32.mrb[0].mxu0
        %v4875 = vadd.f32 %v4262, %v4874
        %v4876 = vpop.f32.mrb[0].mxu0
        %v4877 = vadd.f32 %v4266, %v4876
        %v4878 = vpop.f32.mrb[0].mxu0
        %v4879 = vadd.f32 %v4262, %v4878
        %v4880 = vpop.f32.mrb[0].mxu0
        %v4881 = vadd.f32 %v4266, %v4880
        %4882 = vdwg.mxu0
        %4883 = vmatprep.subr.bf16.mxu0 0
        %4884 = vmatpush1.bf16.msra.mxu0 %v4436
        %4885 = vmatprep.subr.bf16.mxu0 0
        %4886 = vmatpush1.bf16.msra.mxu0 %v4439
        %4887 = vmatprep.subr.bf16.mxu0 0
        %4888 = vmatpush1.bf16.msra.mxu0 %v4442
        %4889 = vmatprep.subr.bf16.mxu0 0
        %4890 = vmatpush1.bf16.msra.mxu0 %v4445
        %4891 = vmatprep.subr.bf16.mxu0 0
        %4892 = vmatpush1.bf16.msra.mxu0 %v4448
        %4893 = vmatprep.subr.bf16.mxu0 0
        %4894 = vmatpush1.bf16.msra.mxu0 %v4451
        %4895 = vmatprep.subr.bf16.mxu0 0
        %4896 = vmatpush1.bf16.msra.mxu0 %v4454
        %4897 = vmatprep.subr.bf16.mxu0 0
        %4898 = vmatpush1.bf16.msra.mxu0 %v4457
        %4899 = vmatprep.subr.bf16.mxu0 0
        %4900 = vmatpush1.bf16.msra.mxu0 %v4460
        %4901 = vmatprep.subr.bf16.mxu0 0
        %4902 = vmatpush1.bf16.msra.mxu0 %v4463
        %4903 = vmatprep.subr.bf16.mxu0 0
        %4904 = vmatpush1.bf16.msra.mxu0 %v4466
        %4905 = vmatprep.subr.bf16.mxu0 0
        %4906 = vmatpush1.bf16.msra.mxu0 %v4469
        %4907 = vmatprep.subr.bf16.mxu0 0
        %4908 = vmatpush1.bf16.msra.mxu0 %v4472
        %4909 = vmatprep.subr.bf16.mxu0 0
        %4910 = vmatpush1.bf16.msra.mxu0 %v4475
        %4911 = vmatprep.subr.bf16.mxu0 0
        %4912 = vmatpush1.bf16.msra.mxu0 %v4478
        %4913 = vmatprep.subr.bf16.mxu0 0
        %4914 = vmatpush1.bf16.msra.mxu0 %v4481
        %4915 = vmatprep.mubr.bf16.mxu0 %v4130
        %4916 = vmatmul.mubr.bf16.gmra.mrb[0].mxu0 %v4129
        %v4917 = vpop.f32.mrb[0].mxu0
        %v4918 = vadd.f32 %v4270, %v4917
        %v4919 = vpop.f32.mrb[0].mxu0
        %v4920 = vpop.f32.mrb[0].mxu0
        %v4921 = vadd.f32 %v4270, %v4920
        %v4922 = vpop.f32.mrb[0].mxu0
        %4923 = vmatprep.mubr.bf16.mxu0 %v4132
        %4924 = vmatmul.mubr.bf16.gmra.mrb[0].mxu0 %v4131
        %v4925 = vpop.f32.mrb[0].mxu0
        %v4926 = vadd.f32 %v4270, %v4925
        %v4927 = vpop.f32.mrb[0].mxu0
        %v4928 = vpop.f32.mrb[0].mxu0
        %v4929 = vadd.f32 %v4270, %v4928
        %v4930 = vpop.f32.mrb[0].mxu0
        %4931 = vmatprep.mubr.bf16.mxu0 %v4134
        %4932 = vmatmul.mubr.bf16.gmra.mrb[0].mxu0 %v4133
        %v4933 = vpop.f32.mrb[0].mxu0
        %v4934 = vadd.f32 %v4270, %v4933
        %v4935 = vpop.f32.mrb[0].mxu0
        %v4936 = vpop.f32.mrb[0].mxu0
        %v4937 = vadd.f32 %v4270, %v4936
        %v4938 = vpop.f32.mrb[0].mxu0
        %4939 = vmatprep.mubr.bf16.mxu0 %v4136
        %4940 = vmatmul.mubr.bf16.gmra.mrb[0].mxu0 %v4135
        %v4941 = vpop.f32.mrb[0].mxu0
        %v4942 = vadd.f32 %v4270, %v4941
        %v4943 = vpop.f32.mrb[0].mxu0
        %v4944 = vpop.f32.mrb[0].mxu0
        %v4945 = vadd.f32 %v4270, %v4944
        %v4946 = vpop.f32.mrb[0].mxu0
        %4947 = vmatprep.mubr.bf16.mxu0 %v4138
        %4948 = vmatmul.mubr.bf16.gmra.mrb[0].mxu0 %v4137
        %v4949 = vpop.f32.mrb[0].mxu0
        %v4950 = vadd.f32 %v4270, %v4949
        %v4951 = vpop.f32.mrb[0].mxu0
        %v4952 = vpop.f32.mrb[0].mxu0
        %v4953 = vadd.f32 %v4270, %v4952
        %v4954 = vpop.f32.mrb[0].mxu0
        %4955 = vmatprep.mubr.bf16.mxu0 %v4140
        %4956 = vmatmul.mubr.bf16.gmra.mrb[0].mxu0 %v4139
        %v4957 = vpop.f32.mrb[0].mxu0
        %v4958 = vadd.f32 %v4270, %v4957
        %v4959 = vpop.f32.mrb[0].mxu0
        %v4960 = vpop.f32.mrb[0].mxu0
        %v4961 = vadd.f32 %v4270, %v4960
        %v4962 = vpop.f32.mrb[0].mxu0
        %4963 = vmatprep.mubr.bf16.mxu0 %v4142
        %4964 = vmatmul.mubr.bf16.gmra.mrb[0].mxu0 %v4141
        %v4965 = vpop.f32.mrb[0].mxu0
        %v4966 = vadd.f32 %v4270, %v4965
        %v4967 = vpop.f32.mrb[0].mxu0
        %v4968 = vpop.f32.mrb[0].mxu0
        %v4969 = vadd.f32 %v4270, %v4968
        %v4970 = vpop.f32.mrb[0].mxu0
        %4971 = vmatprep.mubr.bf16.mxu0 %v4144
        %4972 = vmatmul.mubr.bf16.gmra.mrb[0].mxu0 %v4143
        %v4973 = vpop.f32.mrb[0].mxu0
        %v4974 = vadd.f32 %v4270, %v4973
        %v4975 = vpop.f32.mrb[0].mxu0
        %v4976 = vpop.f32.mrb[0].mxu0
        %v4977 = vadd.f32 %v4270, %v4976
        %v4978 = vpop.f32.mrb[0].mxu0
        %4979 = vmatprep.mubr.bf16.mxu0 %v4146
        %4980 = vmatmul.mubr.bf16.gmra.mrb[0].mxu0 %v4145
        %v4981 = vpop.f32.mrb[0].mxu0
        %v4982 = vadd.f32 %v4270, %v4981
        %v4983 = vpop.f32.mrb[0].mxu0
        %v4984 = vpop.f32.mrb[0].mxu0
        %v4985 = vadd.f32 %v4270, %v4984
        %v4986 = vpop.f32.mrb[0].mxu0
        %4987 = vmatprep.mubr.bf16.mxu0 %v4148
        %4988 = vmatmul.mubr.bf16.gmra.mrb[0].mxu0 %v4147
        %v4989 = vpop.f32.mrb[0].mxu0
        %v4990 = vadd.f32 %v4270, %v4989
        %v4991 = vpop.f32.mrb[0].mxu0
        %v4992 = vpop.f32.mrb[0].mxu0
        %v4993 = vadd.f32 %v4270, %v4992
        %v4994 = vpop.f32.mrb[0].mxu0
        %4995 = vmatprep.mubr.bf16.mxu0 %v4150
        %4996 = vmatmul.mubr.bf16.gmra.mrb[0].mxu0 %v4149
        %v4997 = vpop.f32.mrb[0].mxu0
        %v4998 = vadd.f32 %v4270, %v4997
        %v4999 = vpop.f32.mrb[0].mxu0
        %v5000 = vpop.f32.mrb[0].mxu0
        %v5001 = vadd.f32 %v4270, %v5000
        %v5002 = vpop.f32.mrb[0].mxu0
        %5003 = vmatprep.mubr.bf16.mxu0 %v4152
        %5004 = vmatmul.mubr.bf16.gmra.mrb[0].mxu0 %v4151
        %v5005 = vpop.f32.mrb[0].mxu0
        %v5006 = vadd.f32 %v4270, %v5005
        %v5007 = vpop.f32.mrb[0].mxu0
        %v5008 = vpop.f32.mrb[0].mxu0
        %v5009 = vadd.f32 %v4270, %v5008
        %v5010 = vpop.f32.mrb[0].mxu0
        %5011 = vmatprep.mubr.bf16.mxu0 %v4154
        %5012 = vmatmul.mubr.bf16.gmra.mrb[0].mxu0 %v4153
        %v5013 = vpop.f32.mrb[0].mxu0
        %v5014 = vadd.f32 %v4270, %v5013
        %v5015 = vpop.f32.mrb[0].mxu0
        %v5016 = vpop.f32.mrb[0].mxu0
        %v5017 = vadd.f32 %v4270, %v5016
        %v5018 = vpop.f32.mrb[0].mxu0
        %5019 = vmatprep.mubr.bf16.mxu0 %v4156
        %5020 = vmatmul.mubr.bf16.gmra.mrb[0].mxu0 %v4155
        %v5021 = vpop.f32.mrb[0].mxu0
        %v5022 = vadd.f32 %v4270, %v5021
        %v5023 = vpop.f32.mrb[0].mxu0
        %v5024 = vpop.f32.mrb[0].mxu0
        %v5025 = vadd.f32 %v4270, %v5024
        %v5026 = vpop.f32.mrb[0].mxu0
        %5027 = vmatprep.mubr.bf16.mxu0 %v4158
        %5028 = vmatmul.mubr.bf16.gmra.mrb[0].mxu0 %v4157
        %v5029 = vpop.f32.mrb[0].mxu0
        %v5030 = vadd.f32 %v4270, %v5029
        %v5031 = vpop.f32.mrb[0].mxu0
        %v5032 = vpop.f32.mrb[0].mxu0
        %v5033 = vadd.f32 %v4270, %v5032
        %v5034 = vpop.f32.mrb[0].mxu0
        %5035 = vmatprep.mubr.bf16.mxu0 %v4160
        %5036 = vmatmul.mubr.bf16.gmra.mrb[0].mxu0 %v4159
        %v5037 = vpop.f32.mrb[0].mxu0
        %v5038 = vadd.f32 %v4270, %v5037
        %v5039 = vpop.f32.mrb[0].mxu0
        %v5040 = vpop.f32.mrb[0].mxu0
        %v5041 = vadd.f32 %v4270, %v5040
        %v5042 = vpop.f32.mrb[0].mxu0
        %5043 = vmatprep.mubr.bf16.mxu0 %v4162
        %5044 = vmatmul.mubr.bf16.gmra.mrb[0].mxu0 %v4161
        %v5045 = vpop.f32.mrb[0].mxu0
        %v5046 = vadd.f32 %v4270, %v5045
        %v5047 = vpop.f32.mrb[0].mxu0
        %v5048 = vpop.f32.mrb[0].mxu0
        %v5049 = vadd.f32 %v4270, %v5048
        %v5050 = vpop.f32.mrb[0].mxu0
        %5051 = vmatprep.mubr.bf16.mxu0 %v4164
        %5052 = vmatmul.mubr.bf16.gmra.mrb[0].mxu0 %v4163
        %v5053 = vpop.f32.mrb[0].mxu0
        %v5054 = vadd.f32 %v4270, %v5053
        %v5055 = vpop.f32.mrb[0].mxu0
        %v5056 = vpop.f32.mrb[0].mxu0
        %v5057 = vadd.f32 %v4270, %v5056
        %v5058 = vpop.f32.mrb[0].mxu0
        %5059 = vmatprep.mubr.bf16.mxu0 %v4166
        %5060 = vmatmul.mubr.bf16.gmra.mrb[0].mxu0 %v4165
        %v5061 = vpop.f32.mrb[0].mxu0
        %v5062 = vadd.f32 %v4270, %v5061
        %v5063 = vpop.f32.mrb[0].mxu0
        %v5064 = vpop.f32.mrb[0].mxu0
        %v5065 = vadd.f32 %v4270, %v5064
        %v5066 = vpop.f32.mrb[0].mxu0
        %5067 = vmatprep.mubr.bf16.mxu0 %v4168
        %5068 = vmatmul.mubr.bf16.gmra.mrb[0].mxu0 %v4167
        %v5069 = vpop.f32.mrb[0].mxu0
        %v5070 = vadd.f32 %v4270, %v5069
        %v5071 = vpop.f32.mrb[0].mxu0
        %v5072 = vpop.f32.mrb[0].mxu0
        %v5073 = vadd.f32 %v4270, %v5072
        %v5074 = vpop.f32.mrb[0].mxu0
        %5075 = vmatprep.mubr.bf16.mxu0 %v4170
        %5076 = vmatmul.mubr.bf16.gmra.mrb[0].mxu0 %v4169
        %v5077 = vpop.f32.mrb[0].mxu0
        %v5078 = vadd.f32 %v4270, %v5077
        %v5079 = vpop.f32.mrb[0].mxu0
        %v5080 = vpop.f32.mrb[0].mxu0
        %v5081 = vadd.f32 %v4270, %v5080
        %v5082 = vpop.f32.mrb[0].mxu0
        %5083 = vmatprep.mubr.bf16.mxu0 %v4172
        %5084 = vmatmul.mubr.bf16.gmra.mrb[0].mxu0 %v4171
        %v5085 = vpop.f32.mrb[0].mxu0
        %v5086 = vadd.f32 %v4270, %v5085
        %v5087 = vpop.f32.mrb[0].mxu0
        %v5088 = vpop.f32.mrb[0].mxu0
        %v5089 = vadd.f32 %v4270, %v5088
        %v5090 = vpop.f32.mrb[0].mxu0
        %5091 = vmatprep.mubr.bf16.mxu0 %v4174
        %5092 = vmatmul.mubr.bf16.gmra.mrb[0].mxu0 %v4173
        %v5093 = vpop.f32.mrb[0].mxu0
        %v5094 = vadd.f32 %v4270, %v5093
        %v5095 = vpop.f32.mrb[0].mxu0
        %v5096 = vpop.f32.mrb[0].mxu0
        %v5097 = vadd.f32 %v4270, %v5096
        %v5098 = vpop.f32.mrb[0].mxu0
        %5099 = vmatprep.mubr.bf16.mxu0 %v4176
        %5100 = vmatmul.mubr.bf16.gmra.mrb[0].mxu0 %v4175
        %v5101 = vpop.f32.mrb[0].mxu0
        %v5102 = vadd.f32 %v4270, %v5101
        %v5103 = vpop.f32.mrb[0].mxu0
        %v5104 = vpop.f32.mrb[0].mxu0
        %v5105 = vadd.f32 %v4270, %v5104
        %v5106 = vpop.f32.mrb[0].mxu0
        %5107 = vmatprep.mubr.bf16.mxu0 %v4178
        %5108 = vmatmul.mubr.bf16.gmra.mrb[0].mxu0 %v4177
        %v5109 = vpop.f32.mrb[0].mxu0
        %v5110 = vadd.f32 %v4270, %v5109
        %v5111 = vpop.f32.mrb[0].mxu0
        %v5112 = vpop.f32.mrb[0].mxu0
        %v5113 = vadd.f32 %v4270, %v5112
        %v5114 = vpop.f32.mrb[0].mxu0
        %5115 = vmatprep.mubr.bf16.mxu0 %v4180
        %5116 = vmatmul.mubr.bf16.gmra.mrb[0].mxu0 %v4179
        %v5117 = vpop.f32.mrb[0].mxu0
        %v5118 = vadd.f32 %v4270, %v5117
        %v5119 = vpop.f32.mrb[0].mxu0
        %v5120 = vpop.f32.mrb[0].mxu0
        %v5121 = vadd.f32 %v4270, %v5120
        %v5122 = vpop.f32.mrb[0].mxu0
        %5123 = vmatprep.mubr.bf16.mxu0 %v4182
        %5124 = vmatmul.mubr.bf16.gmra.mrb[0].mxu0 %v4181
        %v5125 = vpop.f32.mrb[0].mxu0
        %v5126 = vadd.f32 %v4270, %v5125
        %v5127 = vpop.f32.mrb[0].mxu0
        %v5128 = vpop.f32.mrb[0].mxu0
        %v5129 = vadd.f32 %v4270, %v5128
        %v5130 = vpop.f32.mrb[0].mxu0
        %5131 = vmatprep.mubr.bf16.mxu0 %v4184
        %5132 = vmatmul.mubr.bf16.gmra.mrb[0].mxu0 %v4183
        %v5133 = vpop.f32.mrb[0].mxu0
        %v5134 = vadd.f32 %v4270, %v5133
        %v5135 = vpop.f32.mrb[0].mxu0
        %v5136 = vpop.f32.mrb[0].mxu0
        %v5137 = vadd.f32 %v4270, %v5136
        %v5138 = vpop.f32.mrb[0].mxu0
        %5139 = vmatprep.mubr.bf16.mxu0 %v4186
        %5140 = vmatmul.mubr.bf16.gmra.mrb[0].mxu0 %v4185
        %v5141 = vpop.f32.mrb[0].mxu0
        %v5142 = vadd.f32 %v4270, %v5141
        %v5143 = vpop.f32.mrb[0].mxu0
        %v5144 = vpop.f32.mrb[0].mxu0
        %v5145 = vadd.f32 %v4270, %v5144
        %v5146 = vpop.f32.mrb[0].mxu0
        %5147 = vmatprep.mubr.bf16.mxu0 %v4188
        %5148 = vmatmul.mubr.bf16.gmra.mrb[0].mxu0 %v4187
        %v5149 = vpop.f32.mrb[0].mxu0
        %v5150 = vadd.f32 %v4270, %v5149
        %v5151 = vpop.f32.mrb[0].mxu0
        %v5152 = vpop.f32.mrb[0].mxu0
        %v5153 = vadd.f32 %v4270, %v5152
        %v5154 = vpop.f32.mrb[0].mxu0
        %5155 = vmatprep.mubr.bf16.mxu0 %v4190
        %5156 = vmatmul.mubr.bf16.gmra.mrb[0].mxu0 %v4189
        %v5157 = vpop.f32.mrb[0].mxu0
        %v5158 = vadd.f32 %v4270, %v5157
        %v5159 = vpop.f32.mrb[0].mxu0
        %v5160 = vpop.f32.mrb[0].mxu0
        %v5161 = vadd.f32 %v4270, %v5160
        %v5162 = vpop.f32.mrb[0].mxu0
        %5163 = vmatprep.mubr.bf16.mxu0 %v4192
        %5164 = vmatmul.mubr.bf16.gmra.mrb[0].mxu0 %v4191
        %v5165 = vpop.f32.mrb[0].mxu0
        %v5166 = vadd.f32 %v4270, %v5165
        %v5167 = vpop.f32.mrb[0].mxu0
        %v5168 = vpop.f32.mrb[0].mxu0
        %v5169 = vadd.f32 %v4270, %v5168
        %v5170 = vpop.f32.mrb[0].mxu0
        %5171 = vdwg.mxu0
        %v5172 = vpack.c.bf16 %v4569, %v4565
        %v5173 = vpack.c.bf16 %v4571, %v4567
        %v5174 = vpack.c.bf16 %v4579, %v4575
        %v5175 = vpack.c.bf16 %v4581, %v4577
        %v5176 = vpack.c.bf16 %v4589, %v4585
        %v5177 = vpack.c.bf16 %v4591, %v4587
        %v5178 = vpack.c.bf16 %v4599, %v4595
        %v5179 = vpack.c.bf16 %v4601, %v4597
        %v5180 = vpack.c.bf16 %v4609, %v4605
        %v5181 = vpack.c.bf16 %v4611, %v4607
        %v5182 = vpack.c.bf16 %v4619, %v4615
        %v5183 = vpack.c.bf16 %v4621, %v4617
        %v5184 = vpack.c.bf16 %v4629, %v4625
        %v5185 = vpack.c.bf16 %v4631, %v4627
        %v5186 = vpack.c.bf16 %v4639, %v4635
        %v5187 = vpack.c.bf16 %v4641, %v4637
        %v5188 = vpack.c.bf16 %v4649, %v4645
        %v5189 = vpack.c.bf16 %v4651, %v4647
        %v5190 = vpack.c.bf16 %v4659, %v4655
        %v5191 = vpack.c.bf16 %v4661, %v4657
        %v5192 = vpack.c.bf16 %v4669, %v4665
        %v5193 = vpack.c.bf16 %v4671, %v4667
        %v5194 = vpack.c.bf16 %v4679, %v4675
        %v5195 = vpack.c.bf16 %v4681, %v4677
        %v5196 = vpack.c.bf16 %v4689, %v4685
        %v5197 = vpack.c.bf16 %v4691, %v4687
        %v5198 = vpack.c.bf16 %v4699, %v4695
        %v5199 = vpack.c.bf16 %v4701, %v4697
        %v5200 = vpack.c.bf16 %v4709, %v4705
        %v5201 = vpack.c.bf16 %v4711, %v4707
        %v5202 = vpack.c.bf16 %v4719, %v4715
        %v5203 = vpack.c.bf16 %v4721, %v4717
        %v5204 = vpack.c.bf16 %v4729, %v4725
        %v5205 = vpack.c.bf16 %v4731, %v4727
        %v5206 = vpack.c.bf16 %v4739, %v4735
        %v5207 = vpack.c.bf16 %v4741, %v4737
        %v5208 = vpack.c.bf16 %v4749, %v4745
        %v5209 = vpack.c.bf16 %v4751, %v4747
        %v5210 = vpack.c.bf16 %v4759, %v4755
        %v5211 = vpack.c.bf16 %v4761, %v4757
        %v5212 = vpack.c.bf16 %v4769, %v4765
        %v5213 = vpack.c.bf16 %v4771, %v4767
        %v5214 = vpack.c.bf16 %v4779, %v4775
        %v5215 = vpack.c.bf16 %v4781, %v4777
        %v5216 = vpack.c.bf16 %v4789, %v4785
        %v5217 = vpack.c.bf16 %v4791, %v4787
        %v5218 = vpack.c.bf16 %v4799, %v4795
        %v5219 = vpack.c.bf16 %v4801, %v4797
        %v5220 = vpack.c.bf16 %v4809, %v4805
        %v5221 = vpack.c.bf16 %v4811, %v4807
        %v5222 = vpack.c.bf16 %v4819, %v4815
        %v5223 = vpack.c.bf16 %v4821, %v4817
        %v5224 = vpack.c.bf16 %v4829, %v4825
        %v5225 = vpack.c.bf16 %v4831, %v4827
        %v5226 = vpack.c.bf16 %v4839, %v4835
        %v5227 = vpack.c.bf16 %v4841, %v4837
        %v5228 = vpack.c.bf16 %v4849, %v4845
        %v5229 = vpack.c.bf16 %v4851, %v4847
        %v5230 = vpack.c.bf16 %v4859, %v4855
        %v5231 = vpack.c.bf16 %v4861, %v4857
        %v5232 = vpack.c.bf16 %v4869, %v4865
        %v5233 = vpack.c.bf16 %v4871, %v4867
        %v5234 = vpack.c.bf16 %v4879, %v4875
        %v5235 = vpack.c.bf16 %v4881, %v4877
        %v5236 = vld [vmem:[%s10] sm:$0xf]
        %v5237 = vld [vmem:[%s10 + $0x4] sm:$0xf]
        %v5238 = vld [vmem:[%s10 + $0x8] sm:$0xf]
        %v5239 = vld [vmem:[%s10 + $0xc] sm:$0xf]
        %v5240 = vld [vmem:[%s10 + $0x10] sm:$0xf]
        %v5241 = vld [vmem:[%s10 + $0x14] sm:$0xf]
        %v5242 = vld [vmem:[%s10 + $0x18] sm:$0xf]
        %v5243 = vld [vmem:[%s10 + $0x1c] sm:$0xf]
        %v5244 = vld [vmem:[%s10 + $0x20] sm:$0xf]
        %v5245 = vld [vmem:[%s10 + $0x24] sm:$0xf]
        %v5246 = vld [vmem:[%s10 + $0x28] sm:$0xf]
        %v5247 = vld [vmem:[%s10 + $0x2c] sm:$0xf]
        %v5248 = vld [vmem:[%s10 + $0x30] sm:$0xf]
        %v5249 = vld [vmem:[%s10 + $0x34] sm:$0xf]
        %v5250 = vld [vmem:[%s10 + $0x38] sm:$0xf]
        %v5251 = vld [vmem:[%s10 + $0x3c] sm:$0xf]
        %v5252 = vld [vmem:[%s10 + $0x40] sm:$0xf]
        %v5253 = vld [vmem:[%s10 + $0x44] sm:$0xf]
        %v5254 = vld [vmem:[%s10 + $0x48] sm:$0xf]
        %v5255 = vld [vmem:[%s10 + $0x4c] sm:$0xf]
        %v5256 = vld [vmem:[%s10 + $0x50] sm:$0xf]
        %v5257 = vld [vmem:[%s10 + $0x54] sm:$0xf]
        %v5258 = vld [vmem:[%s10 + $0x58] sm:$0xf]
        %v5259 = vld [vmem:[%s10 + $0x5c] sm:$0xf]
        %v5260 = vld [vmem:[%s10 + $0x60] sm:$0xf]
        %v5261 = vld [vmem:[%s10 + $0x64] sm:$0xf]
        %v5262 = vld [vmem:[%s10 + $0x68] sm:$0xf]
        %v5263 = vld [vmem:[%s10 + $0x6c] sm:$0xf]
        %v5264 = vld [vmem:[%s10 + $0x70] sm:$0xf]
        %v5265 = vld [vmem:[%s10 + $0x74] sm:$0xf]
        %v5266 = vld [vmem:[%s10 + $0x78] sm:$0xf]
        %v5267 = vld [vmem:[%s10 + $0x7c] sm:$0xf]
        %v5268 = vld [vmem:[%s12] sm:$0x1]
        %v5270 = vlaneseq
        %v5271 = vshrl.u32 %v5270, 7
        %v5272 = vsub.s32 0, %v5271
        %v5273 = vrot.slane %v5268, %v5272
        %v5307 = vunpack.c.l.b16 %v5236
        %v5308 = vunpack.c.l.b16 %v5237
        %v5309 = vunpack.c.l.b16 %v5238
        %v5310 = vunpack.c.l.b16 %v5239
        %v5311 = vunpack.c.l.b16 %v5240
        %v5312 = vunpack.c.l.b16 %v5241
        %v5313 = vunpack.c.l.b16 %v5242
        %v5314 = vunpack.c.l.b16 %v5243
        %v5315 = vunpack.c.l.b16 %v5244
        %v5316 = vunpack.c.l.b16 %v5245
        %v5317 = vunpack.c.l.b16 %v5246
        %v5318 = vunpack.c.l.b16 %v5247
        %v5319 = vunpack.c.l.b16 %v5248
        %v5320 = vunpack.c.l.b16 %v5249
        %v5321 = vunpack.c.l.b16 %v5250
        %v5322 = vunpack.c.l.b16 %v5251
        %v5323 = vunpack.c.l.b16 %v5252
        %v5324 = vunpack.c.l.b16 %v5253
        %v5325 = vunpack.c.l.b16 %v5254
        %v5326 = vunpack.c.l.b16 %v5255
        %v5327 = vunpack.c.l.b16 %v5256
        %v5328 = vunpack.c.l.b16 %v5257
        %v5329 = vunpack.c.l.b16 %v5258
        %v5330 = vunpack.c.l.b16 %v5259
        %v5331 = vunpack.c.l.b16 %v5260
        %v5332 = vunpack.c.l.b16 %v5261
        %v5333 = vunpack.c.l.b16 %v5262
        %v5334 = vunpack.c.l.b16 %v5263
        %v5335 = vunpack.c.l.b16 %v5264
        %v5336 = vunpack.c.l.b16 %v5265
        %v5337 = vunpack.c.l.b16 %v5266
        %v5338 = vunpack.c.l.b16 %v5267
        %v5339 = vpack.c.b16 %v5308, %v5307
        %v5340 = vpack.c.b16 %v5310, %v5309
        %v5341 = vpack.c.b16 %v5312, %v5311
        %v5342 = vpack.c.b16 %v5314, %v5313
        %v5343 = vpack.c.b16 %v5316, %v5315
        %v5344 = vpack.c.b16 %v5318, %v5317
        %v5345 = vpack.c.b16 %v5320, %v5319
        %v5346 = vpack.c.b16 %v5322, %v5321
        %v5347 = vpack.c.b16 %v5324, %v5323
        %v5348 = vpack.c.b16 %v5326, %v5325
        %v5349 = vpack.c.b16 %v5328, %v5327
        %v5350 = vpack.c.b16 %v5330, %v5329
        %v5351 = vpack.c.b16 %v5332, %v5331
        %v5352 = vpack.c.b16 %v5334, %v5333
        %v5353 = vpack.c.b16 %v5336, %v5335
        %v5354 = vpack.c.b16 %v5338, %v5337
        %5371 = vmatprep.subr.bf16.mxu0 0
        %5372 = vmatpush1.bf16.msra.mxu0 %v5339
        %5373 = vmatprep.subr.bf16.mxu0 0
        %5374 = vmatpush1.bf16.msra.mxu0 %v5340
        %5375 = vmatprep.subr.bf16.mxu0 0
        %5376 = vmatpush1.bf16.msra.mxu0 %v5341
        %5377 = vmatprep.subr.bf16.mxu0 0
        %5378 = vmatpush1.bf16.msra.mxu0 %v5342
        %5379 = vmatprep.subr.bf16.mxu0 0
        %5380 = vmatpush1.bf16.msra.mxu0 %v5343
        %5381 = vmatprep.subr.bf16.mxu0 0
        %5382 = vmatpush1.bf16.msra.mxu0 %v5344
        %5383 = vmatprep.subr.bf16.mxu0 0
        %5384 = vmatpush1.bf16.msra.mxu0 %v5345
        %5385 = vmatprep.subr.bf16.mxu0 0
        %5386 = vmatpush1.bf16.msra.mxu0 %v5346
        %5387 = vmatprep.subr.bf16.mxu0 0
        %5388 = vmatpush1.bf16.msra.mxu0 %v5347
        %5389 = vmatprep.subr.bf16.mxu0 0
        %5390 = vmatpush1.bf16.msra.mxu0 %v5348
        %5391 = vmatprep.subr.bf16.mxu0 0
        %5392 = vmatpush1.bf16.msra.mxu0 %v5349
        %5393 = vmatprep.subr.bf16.mxu0 0
        %5394 = vmatpush1.bf16.msra.mxu0 %v5350
        %5395 = vmatprep.subr.bf16.mxu0 0
        %5396 = vmatpush1.bf16.msra.mxu0 %v5351
        %5397 = vmatprep.subr.bf16.mxu0 0
        %5398 = vmatpush1.bf16.msra.mxu0 %v5352
        %5399 = vmatprep.subr.bf16.mxu0 0
        %5400 = vmatpush1.bf16.msra.mxu0 %v5353
        %5401 = vmatprep.subr.bf16.mxu0 0
        %5402 = vmatpush1.bf16.msra.mxu0 %v5354
        %5403 = vmatprep.mubr.bf16.mxu0 %v5173
        %5404 = vmatmul.mubr.bf16.gmra.mrb[0].mxu0 %v5172
        %v5405 = vpop.f32.mrb[0].mxu0
        %v5406 = vadd.f32 %v5273, %v5405
        %v5407 = vpop.f32.mrb[0].mxu0
        %v5408 = vpop.f32.mrb[0].mxu0
        %v5409 = vadd.f32 %v5273, %v5408
        %v5410 = vpop.f32.mrb[0].mxu0
        %5411 = vmatprep.mubr.bf16.mxu0 %v5175
        %5412 = vmatmul.mubr.bf16.gmra.mrb[0].mxu0 %v5174
        %v5413 = vpop.f32.mrb[0].mxu0
        %v5414 = vadd.f32 %v5273, %v5413
        %v5415 = vpop.f32.mrb[0].mxu0
        %v5416 = vpop.f32.mrb[0].mxu0
        %v5417 = vadd.f32 %v5273, %v5416
        %v5418 = vpop.f32.mrb[0].mxu0
        %5419 = vmatprep.mubr.bf16.mxu0 %v5177
        %5420 = vmatmul.mubr.bf16.gmra.mrb[0].mxu0 %v5176
        %v5421 = vpop.f32.mrb[0].mxu0
        %v5422 = vadd.f32 %v5273, %v5421
        %v5423 = vpop.f32.mrb[0].mxu0
        %v5424 = vpop.f32.mrb[0].mxu0
        %v5425 = vadd.f32 %v5273, %v5424
        %v5426 = vpop.f32.mrb[0].mxu0
        %5427 = vmatprep.mubr.bf16.mxu0 %v5179
        %5428 = vmatmul.mubr.bf16.gmra.mrb[0].mxu0 %v5178
        %v5429 = vpop.f32.mrb[0].mxu0
        %v5430 = vadd.f32 %v5273, %v5429
        %v5431 = vpop.f32.mrb[0].mxu0
        %v5432 = vpop.f32.mrb[0].mxu0
        %v5433 = vadd.f32 %v5273, %v5432
        %v5434 = vpop.f32.mrb[0].mxu0
        %5435 = vmatprep.mubr.bf16.mxu0 %v5181
        %5436 = vmatmul.mubr.bf16.gmra.mrb[0].mxu0 %v5180
        %v5437 = vpop.f32.mrb[0].mxu0
        %v5438 = vadd.f32 %v5273, %v5437
        %v5439 = vpop.f32.mrb[0].mxu0
        %v5440 = vpop.f32.mrb[0].mxu0
        %v5441 = vadd.f32 %v5273, %v5440
        %v5442 = vpop.f32.mrb[0].mxu0
        %5443 = vmatprep.mubr.bf16.mxu0 %v5183
        %5444 = vmatmul.mubr.bf16.gmra.mrb[0].mxu0 %v5182
        %v5445 = vpop.f32.mrb[0].mxu0
        %v5446 = vadd.f32 %v5273, %v5445
        %v5447 = vpop.f32.mrb[0].mxu0
        %v5448 = vpop.f32.mrb[0].mxu0
        %v5449 = vadd.f32 %v5273, %v5448
        %v5450 = vpop.f32.mrb[0].mxu0
        %5451 = vmatprep.mubr.bf16.mxu0 %v5185
        %5452 = vmatmul.mubr.bf16.gmra.mrb[0].mxu0 %v5184
        %v5453 = vpop.f32.mrb[0].mxu0
        %v5454 = vadd.f32 %v5273, %v5453
        %v5455 = vpop.f32.mrb[0].mxu0
        %v5456 = vpop.f32.mrb[0].mxu0
        %v5457 = vadd.f32 %v5273, %v5456
        %v5458 = vpop.f32.mrb[0].mxu0
        %5459 = vmatprep.mubr.bf16.mxu0 %v5187
        %5460 = vmatmul.mubr.bf16.gmra.mrb[0].mxu0 %v5186
        %v5461 = vpop.f32.mrb[0].mxu0
        %v5462 = vadd.f32 %v5273, %v5461
        %v5463 = vpop.f32.mrb[0].mxu0
        %v5464 = vpop.f32.mrb[0].mxu0
        %v5465 = vadd.f32 %v5273, %v5464
        %v5466 = vpop.f32.mrb[0].mxu0
        %5467 = vmatprep.mubr.bf16.mxu0 %v5189
        %5468 = vmatmul.mubr.bf16.gmra.mrb[0].mxu0 %v5188
        %v5469 = vpop.f32.mrb[0].mxu0
        %v5470 = vadd.f32 %v5273, %v5469
        %v5471 = vpop.f32.mrb[0].mxu0
        %v5472 = vpop.f32.mrb[0].mxu0
        %v5473 = vadd.f32 %v5273, %v5472
        %v5474 = vpop.f32.mrb[0].mxu0
        %5475 = vmatprep.mubr.bf16.mxu0 %v5191
        %5476 = vmatmul.mubr.bf16.gmra.mrb[0].mxu0 %v5190
        %v5477 = vpop.f32.mrb[0].mxu0
        %v5478 = vadd.f32 %v5273, %v5477
        %v5479 = vpop.f32.mrb[0].mxu0
        %v5480 = vpop.f32.mrb[0].mxu0
        %v5481 = vadd.f32 %v5273, %v5480
        %v5482 = vpop.f32.mrb[0].mxu0
        %5483 = vmatprep.mubr.bf16.mxu0 %v5193
        %5484 = vmatmul.mubr.bf16.gmra.mrb[0].mxu0 %v5192
        %v5485 = vpop.f32.mrb[0].mxu0
        %v5486 = vadd.f32 %v5273, %v5485
        %v5487 = vpop.f32.mrb[0].mxu0
        %v5488 = vpop.f32.mrb[0].mxu0
        %v5489 = vadd.f32 %v5273, %v5488
        %v5490 = vpop.f32.mrb[0].mxu0
        %5491 = vmatprep.mubr.bf16.mxu0 %v5195
        %5492 = vmatmul.mubr.bf16.gmra.mrb[0].mxu0 %v5194
        %v5493 = vpop.f32.mrb[0].mxu0
        %v5494 = vadd.f32 %v5273, %v5493
        %v5495 = vpop.f32.mrb[0].mxu0
        %v5496 = vpop.f32.mrb[0].mxu0
        %v5497 = vadd.f32 %v5273, %v5496
        %v5498 = vpop.f32.mrb[0].mxu0
        %5499 = vmatprep.mubr.bf16.mxu0 %v5197
        %5500 = vmatmul.mubr.bf16.gmra.mrb[0].mxu0 %v5196
        %v5501 = vpop.f32.mrb[0].mxu0
        %v5502 = vadd.f32 %v5273, %v5501
        %v5503 = vpop.f32.mrb[0].mxu0
        %v5504 = vpop.f32.mrb[0].mxu0
        %v5505 = vadd.f32 %v5273, %v5504
        %v5506 = vpop.f32.mrb[0].mxu0
        %5507 = vmatprep.mubr.bf16.mxu0 %v5199
        %5508 = vmatmul.mubr.bf16.gmra.mrb[0].mxu0 %v5198
        %v5509 = vpop.f32.mrb[0].mxu0
        %v5510 = vadd.f32 %v5273, %v5509
        %v5511 = vpop.f32.mrb[0].mxu0
        %v5512 = vpop.f32.mrb[0].mxu0
        %v5513 = vadd.f32 %v5273, %v5512
        %v5514 = vpop.f32.mrb[0].mxu0
        %5515 = vmatprep.mubr.bf16.mxu0 %v5201
        %5516 = vmatmul.mubr.bf16.gmra.mrb[0].mxu0 %v5200
        %v5517 = vpop.f32.mrb[0].mxu0
        %v5518 = vadd.f32 %v5273, %v5517
        %v5519 = vpop.f32.mrb[0].mxu0
        %v5520 = vpop.f32.mrb[0].mxu0
        %v5521 = vadd.f32 %v5273, %v5520
        %v5522 = vpop.f32.mrb[0].mxu0
        %5523 = vmatprep.mubr.bf16.mxu0 %v5203
        %5524 = vmatmul.mubr.bf16.gmra.mrb[0].mxu0 %v5202
        %v5525 = vpop.f32.mrb[0].mxu0
        %v5526 = vadd.f32 %v5273, %v5525
        %v5527 = vpop.f32.mrb[0].mxu0
        %v5528 = vpop.f32.mrb[0].mxu0
        %v5529 = vadd.f32 %v5273, %v5528
        %v5530 = vpop.f32.mrb[0].mxu0
        %5531 = vmatprep.mubr.bf16.mxu0 %v5205
        %5532 = vmatmul.mubr.bf16.gmra.mrb[0].mxu0 %v5204
        %v5533 = vpop.f32.mrb[0].mxu0
        %v5534 = vadd.f32 %v5273, %v5533
        %v5535 = vpop.f32.mrb[0].mxu0
        %v5536 = vpop.f32.mrb[0].mxu0
        %v5537 = vadd.f32 %v5273, %v5536
        %v5538 = vpop.f32.mrb[0].mxu0
        %5539 = vmatprep.mubr.bf16.mxu0 %v5207
        %5540 = vmatmul.mubr.bf16.gmra.mrb[0].mxu0 %v5206
        %v5541 = vpop.f32.mrb[0].mxu0
        %v5542 = vadd.f32 %v5273, %v5541
        %v5543 = vpop.f32.mrb[0].mxu0
        %v5544 = vpop.f32.mrb[0].mxu0
        %v5545 = vadd.f32 %v5273, %v5544
        %v5546 = vpop.f32.mrb[0].mxu0
        %5547 = vmatprep.mubr.bf16.mxu0 %v5209
        %5548 = vmatmul.mubr.bf16.gmra.mrb[0].mxu0 %v5208
        %v5549 = vpop.f32.mrb[0].mxu0
        %v5550 = vadd.f32 %v5273, %v5549
        %v5551 = vpop.f32.mrb[0].mxu0
        %v5552 = vpop.f32.mrb[0].mxu0
        %v5553 = vadd.f32 %v5273, %v5552
        %v5554 = vpop.f32.mrb[0].mxu0
        %5555 = vmatprep.mubr.bf16.mxu0 %v5211
        %5556 = vmatmul.mubr.bf16.gmra.mrb[0].mxu0 %v5210
        %v5557 = vpop.f32.mrb[0].mxu0
        %v5558 = vadd.f32 %v5273, %v5557
        %v5559 = vpop.f32.mrb[0].mxu0
        %v5560 = vpop.f32.mrb[0].mxu0
        %v5561 = vadd.f32 %v5273, %v5560
        %v5562 = vpop.f32.mrb[0].mxu0
        %5563 = vmatprep.mubr.bf16.mxu0 %v5213
        %5564 = vmatmul.mubr.bf16.gmra.mrb[0].mxu0 %v5212
        %v5565 = vpop.f32.mrb[0].mxu0
        %v5566 = vadd.f32 %v5273, %v5565
        %v5567 = vpop.f32.mrb[0].mxu0
        %v5568 = vpop.f32.mrb[0].mxu0
        %v5569 = vadd.f32 %v5273, %v5568
        %v5570 = vpop.f32.mrb[0].mxu0
        %5571 = vmatprep.mubr.bf16.mxu0 %v5215
        %5572 = vmatmul.mubr.bf16.gmra.mrb[0].mxu0 %v5214
        %v5573 = vpop.f32.mrb[0].mxu0
        %v5574 = vadd.f32 %v5273, %v5573
        %v5575 = vpop.f32.mrb[0].mxu0
        %v5576 = vpop.f32.mrb[0].mxu0
        %v5577 = vadd.f32 %v5273, %v5576
        %v5578 = vpop.f32.mrb[0].mxu0
        %5579 = vmatprep.mubr.bf16.mxu0 %v5217
        %5580 = vmatmul.mubr.bf16.gmra.mrb[0].mxu0 %v5216
        %v5581 = vpop.f32.mrb[0].mxu0
        %v5582 = vadd.f32 %v5273, %v5581
        %v5583 = vpop.f32.mrb[0].mxu0
        %v5584 = vpop.f32.mrb[0].mxu0
        %v5585 = vadd.f32 %v5273, %v5584
        %v5586 = vpop.f32.mrb[0].mxu0
        %5587 = vmatprep.mubr.bf16.mxu0 %v5219
        %5588 = vmatmul.mubr.bf16.gmra.mrb[0].mxu0 %v5218
        %v5589 = vpop.f32.mrb[0].mxu0
        %v5590 = vadd.f32 %v5273, %v5589
        %v5591 = vpop.f32.mrb[0].mxu0
        %v5592 = vpop.f32.mrb[0].mxu0
        %v5593 = vadd.f32 %v5273, %v5592
        %v5594 = vpop.f32.mrb[0].mxu0
        %5595 = vmatprep.mubr.bf16.mxu0 %v5221
        %5596 = vmatmul.mubr.bf16.gmra.mrb[0].mxu0 %v5220
        %v5597 = vpop.f32.mrb[0].mxu0
        %v5598 = vadd.f32 %v5273, %v5597
        %v5599 = vpop.f32.mrb[0].mxu0
        %v5600 = vpop.f32.mrb[0].mxu0
        %v5601 = vadd.f32 %v5273, %v5600
        %v5602 = vpop.f32.mrb[0].mxu0
        %5603 = vmatprep.mubr.bf16.mxu0 %v5223
        %5604 = vmatmul.mubr.bf16.gmra.mrb[0].mxu0 %v5222
        %v5605 = vpop.f32.mrb[0].mxu0
        %v5606 = vadd.f32 %v5273, %v5605
        %v5607 = vpop.f32.mrb[0].mxu0
        %v5608 = vpop.f32.mrb[0].mxu0
        %v5609 = vadd.f32 %v5273, %v5608
        %v5610 = vpop.f32.mrb[0].mxu0
        %5611 = vmatprep.mubr.bf16.mxu0 %v5225
        %5612 = vmatmul.mubr.bf16.gmra.mrb[0].mxu0 %v5224
        %v5613 = vpop.f32.mrb[0].mxu0
        %v5614 = vadd.f32 %v5273, %v5613
        %v5615 = vpop.f32.mrb[0].mxu0
        %v5616 = vpop.f32.mrb[0].mxu0
        %v5617 = vadd.f32 %v5273, %v5616
        %v5618 = vpop.f32.mrb[0].mxu0
        %5619 = vmatprep.mubr.bf16.mxu0 %v5227
        %5620 = vmatmul.mubr.bf16.gmra.mrb[0].mxu0 %v5226
        %v5621 = vpop.f32.mrb[0].mxu0
        %v5622 = vadd.f32 %v5273, %v5621
        %v5623 = vpop.f32.mrb[0].mxu0
        %v5624 = vpop.f32.mrb[0].mxu0
        %v5625 = vadd.f32 %v5273, %v5624
        %v5626 = vpop.f32.mrb[0].mxu0
        %5627 = vmatprep.mubr.bf16.mxu0 %v5229
        %5628 = vmatmul.mubr.bf16.gmra.mrb[0].mxu0 %v5228
        %v5629 = vpop.f32.mrb[0].mxu0
        %v5630 = vadd.f32 %v5273, %v5629
        %v5631 = vpop.f32.mrb[0].mxu0
        %v5632 = vpop.f32.mrb[0].mxu0
        %v5633 = vadd.f32 %v5273, %v5632
        %v5634 = vpop.f32.mrb[0].mxu0
        %5635 = vmatprep.mubr.bf16.mxu0 %v5231
        %5636 = vmatmul.mubr.bf16.gmra.mrb[0].mxu0 %v5230
        %v5637 = vpop.f32.mrb[0].mxu0
        %v5638 = vadd.f32 %v5273, %v5637
        %v5639 = vpop.f32.mrb[0].mxu0
        %v5640 = vpop.f32.mrb[0].mxu0
        %v5641 = vadd.f32 %v5273, %v5640
        %v5642 = vpop.f32.mrb[0].mxu0
        %5643 = vmatprep.mubr.bf16.mxu0 %v5233
        %5644 = vmatmul.mubr.bf16.gmra.mrb[0].mxu0 %v5232
        %v5645 = vpop.f32.mrb[0].mxu0
        %v5646 = vadd.f32 %v5273, %v5645
        %v5647 = vpop.f32.mrb[0].mxu0
        %v5648 = vpop.f32.mrb[0].mxu0
        %v5649 = vadd.f32 %v5273, %v5648
        %v5650 = vpop.f32.mrb[0].mxu0
        %5651 = vmatprep.mubr.bf16.mxu0 %v5235
        %5652 = vmatmul.mubr.bf16.gmra.mrb[0].mxu0 %v5234
        %v5653 = vpop.f32.mrb[0].mxu0
        %v5654 = vadd.f32 %v5273, %v5653
        %v5655 = vpop.f32.mrb[0].mxu0
        %v5656 = vpop.f32.mrb[0].mxu0
        %v5657 = vadd.f32 %v5273, %v5656
        %v5658 = vpop.f32.mrb[0].mxu0
        %5659 = vdwg.mxu0
        %v5660 = vld [vmem:[%s597] sm:$0xff]
        %v5661 = vld [vmem:[%s597 + $0x8] sm:$0xff]
        %v5662 = vld [vmem:[%s597 + $0x10] sm:$0xff]
        %v5663 = vld [vmem:[%s597 + $0x18] sm:$0xff]
        %v5664 = vld [vmem:[%s597 + $0x20] sm:$0xff]
        %v5665 = vld [vmem:[%s597 + $0x28] sm:$0xff]
        %v5666 = vld [vmem:[%s597 + $0x30] sm:$0xff]
        %v5667 = vld [vmem:[%s597 + $0x38] sm:$0xff]
        %v5668 = vld [vmem:[%s597 + $0x40] sm:$0xff]
        %v5669 = vld [vmem:[%s597 + $0x48] sm:$0xff]
        %v5670 = vld [vmem:[%s597 + $0x50] sm:$0xff]
        %v5671 = vld [vmem:[%s597 + $0x58] sm:$0xff]
        %v5672 = vld [vmem:[%s597 + $0x60] sm:$0xff]
        %v5673 = vld [vmem:[%s597 + $0x68] sm:$0xff]
        %v5674 = vld [vmem:[%s597 + $0x70] sm:$0xff]
        %v5675 = vld [vmem:[%s597 + $0x78] sm:$0xff]
        %v5676 = vld [vmem:[%s597 + $0x80] sm:$0xff]
        %v5677 = vld [vmem:[%s597 + $0x88] sm:$0xff]
        %v5678 = vld [vmem:[%s597 + $0x90] sm:$0xff]
        %v5679 = vld [vmem:[%s597 + $0x98] sm:$0xff]
        %v5680 = vld [vmem:[%s597 + $0xa0] sm:$0xff]
        %v5681 = vld [vmem:[%s597 + $0xa8] sm:$0xff]
        %v5682 = vld [vmem:[%s597 + $0xb0] sm:$0xff]
        %v5683 = vld [vmem:[%s597 + $0xb8] sm:$0xff]
        %v5684 = vld [vmem:[%s597 + $0xc0] sm:$0xff]
        %v5685 = vld [vmem:[%s597 + $0xc8] sm:$0xff]
        %v5686 = vld [vmem:[%s597 + $0xd0] sm:$0xff]
        %v5687 = vld [vmem:[%s597 + $0xd8] sm:$0xff]
        %v5688 = vld [vmem:[%s597 + $0xe0] sm:$0xff]
        %v5689 = vld [vmem:[%s597 + $0xe8] sm:$0xff]
        %v5690 = vld [vmem:[%s597 + $0xf0] sm:$0xff]
        %v5691 = vld [vmem:[%s597 + $0xf8] sm:$0xff]
        %v5692 = vld [vmem:[%s597 + $0x100] sm:$0xff]
        %v5693 = vld [vmem:[%s597 + $0x108] sm:$0xff]
        %v5694 = vld [vmem:[%s597 + $0x110] sm:$0xff]
        %v5695 = vld [vmem:[%s597 + $0x118] sm:$0xff]
        %v5696 = vld [vmem:[%s597 + $0x120] sm:$0xff]
        %v5697 = vld [vmem:[%s597 + $0x128] sm:$0xff]
        %v5698 = vld [vmem:[%s597 + $0x130] sm:$0xff]
        %v5699 = vld [vmem:[%s597 + $0x138] sm:$0xff]
        %v5700 = vld [vmem:[%s597 + $0x140] sm:$0xff]
        %v5701 = vld [vmem:[%s597 + $0x148] sm:$0xff]
        %v5702 = vld [vmem:[%s597 + $0x150] sm:$0xff]
        %v5703 = vld [vmem:[%s597 + $0x158] sm:$0xff]
        %v5704 = vld [vmem:[%s597 + $0x160] sm:$0xff]
        %v5705 = vld [vmem:[%s597 + $0x168] sm:$0xff]
        %v5706 = vld [vmem:[%s597 + $0x170] sm:$0xff]
        %v5707 = vld [vmem:[%s597 + $0x178] sm:$0xff]
        %v5708 = vld [vmem:[%s597 + $0x180] sm:$0xff]
        %v5709 = vld [vmem:[%s597 + $0x188] sm:$0xff]
        %v5710 = vld [vmem:[%s597 + $0x190] sm:$0xff]
        %v5711 = vld [vmem:[%s597 + $0x198] sm:$0xff]
        %v5712 = vld [vmem:[%s597 + $0x1a0] sm:$0xff]
        %v5713 = vld [vmem:[%s597 + $0x1a8] sm:$0xff]
        %v5714 = vld [vmem:[%s597 + $0x1b0] sm:$0xff]
        %v5715 = vld [vmem:[%s597 + $0x1b8] sm:$0xff]
        %v5716 = vld [vmem:[%s597 + $0x1c0] sm:$0xff]
        %v5717 = vld [vmem:[%s597 + $0x1c8] sm:$0xff]
        %v5718 = vld [vmem:[%s597 + $0x1d0] sm:$0xff]
        %v5719 = vld [vmem:[%s597 + $0x1d8] sm:$0xff]
        %v5720 = vld [vmem:[%s597 + $0x1e0] sm:$0xff]
        %v5721 = vld [vmem:[%s597 + $0x1e8] sm:$0xff]
        %v5722 = vld [vmem:[%s597 + $0x1f0] sm:$0xff]
        %v5723 = vld [vmem:[%s597 + $0x1f8] sm:$0xff]
        %v5724 = vld [vmem:[%s11] sm:$0x1]
        %5726 = vset.pattern.permute.xlu0 0
        %5727 = vperm.xlu0 %5726, %v5660
        %v5728 = vpop.permute.xlu0 %5727
        %5731 = vset.pattern.permute.xlu0 0
        %5732 = vperm.xlu0 %5731, %v5661
        %v5733 = vpop.permute.xlu0 %5732
        %5736 = vset.pattern.permute.xlu0 0
        %5737 = vperm.xlu0 %5736, %v5662
        %v5738 = vpop.permute.xlu0 %5737
        %5741 = vset.pattern.permute.xlu0 0
        %5742 = vperm.xlu0 %5741, %v5663
        %v5743 = vpop.permute.xlu0 %5742
        %5746 = vset.pattern.permute.xlu0 0
        %5747 = vperm.xlu0 %5746, %v5664
        %v5748 = vpop.permute.xlu0 %5747
        %5751 = vset.pattern.permute.xlu0 0
        %5752 = vperm.xlu0 %5751, %v5665
        %v5753 = vpop.permute.xlu0 %5752
        %5756 = vset.pattern.permute.xlu0 0
        %5757 = vperm.xlu0 %5756, %v5666
        %v5758 = vpop.permute.xlu0 %5757
        %5761 = vset.pattern.permute.xlu0 0
        %5762 = vperm.xlu0 %5761, %v5667
        %v5763 = vpop.permute.xlu0 %5762
        %5766 = vset.pattern.permute.xlu0 0
        %5767 = vperm.xlu0 %5766, %v5668
        %v5768 = vpop.permute.xlu0 %5767
        %5771 = vset.pattern.permute.xlu0 0
        %5772 = vperm.xlu0 %5771, %v5669
        %v5773 = vpop.permute.xlu0 %5772
        %5776 = vset.pattern.permute.xlu0 0
        %5777 = vperm.xlu0 %5776, %v5670
        %v5778 = vpop.permute.xlu0 %5777
        %5781 = vset.pattern.permute.xlu0 0
        %5782 = vperm.xlu0 %5781, %v5671
        %v5783 = vpop.permute.xlu0 %5782
        %5786 = vset.pattern.permute.xlu0 0
        %5787 = vperm.xlu0 %5786, %v5672
        %v5788 = vpop.permute.xlu0 %5787
        %5791 = vset.pattern.permute.xlu0 0
        %5792 = vperm.xlu0 %5791, %v5673
        %v5793 = vpop.permute.xlu0 %5792
        %5796 = vset.pattern.permute.xlu0 0
        %5797 = vperm.xlu0 %5796, %v5674
        %v5798 = vpop.permute.xlu0 %5797
        %5801 = vset.pattern.permute.xlu0 0
        %5802 = vperm.xlu0 %5801, %v5675
        %v5803 = vpop.permute.xlu0 %5802
        %5806 = vset.pattern.permute.xlu0 0
        %5807 = vperm.xlu0 %5806, %v5676
        %v5808 = vpop.permute.xlu0 %5807
        %5811 = vset.pattern.permute.xlu0 0
        %5812 = vperm.xlu0 %5811, %v5677
        %v5813 = vpop.permute.xlu0 %5812
        %5816 = vset.pattern.permute.xlu0 0
        %5817 = vperm.xlu0 %5816, %v5678
        %v5818 = vpop.permute.xlu0 %5817
        %5821 = vset.pattern.permute.xlu0 0
        %5822 = vperm.xlu0 %5821, %v5679
        %v5823 = vpop.permute.xlu0 %5822
        %5826 = vset.pattern.permute.xlu0 0
        %5827 = vperm.xlu0 %5826, %v5680
        %v5828 = vpop.permute.xlu0 %5827
        %5831 = vset.pattern.permute.xlu0 0
        %5832 = vperm.xlu0 %5831, %v5681
        %v5833 = vpop.permute.xlu0 %5832
        %5836 = vset.pattern.permute.xlu0 0
        %5837 = vperm.xlu0 %5836, %v5682
        %v5838 = vpop.permute.xlu0 %5837
        %5841 = vset.pattern.permute.xlu0 0
        %5842 = vperm.xlu0 %5841, %v5683
        %v5843 = vpop.permute.xlu0 %5842
        %5846 = vset.pattern.permute.xlu0 0
        %5847 = vperm.xlu0 %5846, %v5684
        %v5848 = vpop.permute.xlu0 %5847
        %5851 = vset.pattern.permute.xlu0 0
        %5852 = vperm.xlu0 %5851, %v5685
        %v5853 = vpop.permute.xlu0 %5852
        %5856 = vset.pattern.permute.xlu0 0
        %5857 = vperm.xlu0 %5856, %v5686
        %v5858 = vpop.permute.xlu0 %5857
        %5861 = vset.pattern.permute.xlu0 0
        %5862 = vperm.xlu0 %5861, %v5687
        %v5863 = vpop.permute.xlu0 %5862
        %5866 = vset.pattern.permute.xlu0 0
        %5867 = vperm.xlu0 %5866, %v5688
        %v5868 = vpop.permute.xlu0 %5867
        %5871 = vset.pattern.permute.xlu0 0
        %5872 = vperm.xlu0 %5871, %v5689
        %v5873 = vpop.permute.xlu0 %5872
        %5876 = vset.pattern.permute.xlu0 0
        %5877 = vperm.xlu0 %5876, %v5690
        %v5878 = vpop.permute.xlu0 %5877
        %5881 = vset.pattern.permute.xlu0 0
        %5882 = vperm.xlu0 %5881, %v5691
        %v5883 = vpop.permute.xlu0 %5882
        %5886 = vset.pattern.permute.xlu0 0
        %5887 = vperm.xlu0 %5886, %v5692
        %v5888 = vpop.permute.xlu0 %5887
        %5891 = vset.pattern.permute.xlu0 0
        %5892 = vperm.xlu0 %5891, %v5693
        %v5893 = vpop.permute.xlu0 %5892
        %5896 = vset.pattern.permute.xlu0 0
        %5897 = vperm.xlu0 %5896, %v5694
        %v5898 = vpop.permute.xlu0 %5897
        %5901 = vset.pattern.permute.xlu0 0
        %5902 = vperm.xlu0 %5901, %v5695
        %v5903 = vpop.permute.xlu0 %5902
        %5906 = vset.pattern.permute.xlu0 0
        %5907 = vperm.xlu0 %5906, %v5696
        %v5908 = vpop.permute.xlu0 %5907
        %5911 = vset.pattern.permute.xlu0 0
        %5912 = vperm.xlu0 %5911, %v5697
        %v5913 = vpop.permute.xlu0 %5912
        %5916 = vset.pattern.permute.xlu0 0
        %5917 = vperm.xlu0 %5916, %v5698
        %v5918 = vpop.permute.xlu0 %5917
        %5921 = vset.pattern.permute.xlu0 0
        %5922 = vperm.xlu0 %5921, %v5699
        %v5923 = vpop.permute.xlu0 %5922
        %5926 = vset.pattern.permute.xlu0 0
        %5927 = vperm.xlu0 %5926, %v5700
        %v5928 = vpop.permute.xlu0 %5927
        %5931 = vset.pattern.permute.xlu0 0
        %5932 = vperm.xlu0 %5931, %v5701
        %v5933 = vpop.permute.xlu0 %5932
        %5936 = vset.pattern.permute.xlu0 0
        %5937 = vperm.xlu0 %5936, %v5702
        %v5938 = vpop.permute.xlu0 %5937
        %5941 = vset.pattern.permute.xlu0 0
        %5942 = vperm.xlu0 %5941, %v5703
        %v5943 = vpop.permute.xlu0 %5942
        %5946 = vset.pattern.permute.xlu0 0
        %5947 = vperm.xlu0 %5946, %v5704
        %v5948 = vpop.permute.xlu0 %5947
        %5951 = vset.pattern.permute.xlu0 0
        %5952 = vperm.xlu0 %5951, %v5705
        %v5953 = vpop.permute.xlu0 %5952
        %5956 = vset.pattern.permute.xlu0 0
        %5957 = vperm.xlu0 %5956, %v5706
        %v5958 = vpop.permute.xlu0 %5957
        %5961 = vset.pattern.permute.xlu0 0
        %5962 = vperm.xlu0 %5961, %v5707
        %v5963 = vpop.permute.xlu0 %5962
        %5966 = vset.pattern.permute.xlu0 0
        %5967 = vperm.xlu0 %5966, %v5708
        %v5968 = vpop.permute.xlu0 %5967
        %5971 = vset.pattern.permute.xlu0 0
        %5972 = vperm.xlu0 %5971, %v5709
        %v5973 = vpop.permute.xlu0 %5972
        %5976 = vset.pattern.permute.xlu0 0
        %5977 = vperm.xlu0 %5976, %v5710
        %v5978 = vpop.permute.xlu0 %5977
        %5981 = vset.pattern.permute.xlu0 0
        %5982 = vperm.xlu0 %5981, %v5711
        %v5983 = vpop.permute.xlu0 %5982
        %5986 = vset.pattern.permute.xlu0 0
        %5987 = vperm.xlu0 %5986, %v5712
        %v5988 = vpop.permute.xlu0 %5987
        %5991 = vset.pattern.permute.xlu0 0
        %5992 = vperm.xlu0 %5991, %v5713
        %v5993 = vpop.permute.xlu0 %5992
        %5996 = vset.pattern.permute.xlu0 0
        %5997 = vperm.xlu0 %5996, %v5714
        %v5998 = vpop.permute.xlu0 %5997
        %6001 = vset.pattern.permute.xlu0 0
        %6002 = vperm.xlu0 %6001, %v5715
        %v6003 = vpop.permute.xlu0 %6002
        %6006 = vset.pattern.permute.xlu0 0
        %6007 = vperm.xlu0 %6006, %v5716
        %v6008 = vpop.permute.xlu0 %6007
        %6011 = vset.pattern.permute.xlu0 0
        %6012 = vperm.xlu0 %6011, %v5717
        %v6013 = vpop.permute.xlu0 %6012
        %6016 = vset.pattern.permute.xlu0 0
        %6017 = vperm.xlu0 %6016, %v5718
        %v6018 = vpop.permute.xlu0 %6017
        %6021 = vset.pattern.permute.xlu0 0
        %6022 = vperm.xlu0 %6021, %v5719
        %v6023 = vpop.permute.xlu0 %6022
        %6026 = vset.pattern.permute.xlu0 0
        %6027 = vperm.xlu0 %6026, %v5720
        %v6028 = vpop.permute.xlu0 %6027
        %6031 = vset.pattern.permute.xlu0 0
        %6032 = vperm.xlu0 %6031, %v5721
        %v6033 = vpop.permute.xlu0 %6032
        %6036 = vset.pattern.permute.xlu0 0
        %6037 = vperm.xlu0 %6036, %v5722
        %v6038 = vpop.permute.xlu0 %6037
        %6041 = vset.pattern.permute.xlu0 0
        %6042 = vperm.xlu0 %6041, %v5723
        %v6043 = vpop.permute.xlu0 %6042
        %v6045 = vlaneseq
        %v6046 = vshrl.u32 %v6045, 7
        %v6047 = vsub.s32 0, %v6046
        %v6048 = vrot.slane %v5724, %v6047
        %v6049 = vmul.f32 %v5728, %v6048
        %v6050 = vmul.f32 %v5733, %v6048
        %v6051 = vmul.f32 %v5738, %v6048
        %v6052 = vmul.f32 %v5743, %v6048
        %v6053 = vmul.f32 %v5748, %v6048
        %v6054 = vmul.f32 %v5753, %v6048
        %v6055 = vmul.f32 %v5758, %v6048
        %v6056 = vmul.f32 %v5763, %v6048
        %v6057 = vmul.f32 %v5768, %v6048
        %v6058 = vmul.f32 %v5773, %v6048
        %v6059 = vmul.f32 %v5778, %v6048
        %v6060 = vmul.f32 %v5783, %v6048
        %v6061 = vmul.f32 %v5788, %v6048
        %v6062 = vmul.f32 %v5793, %v6048
        %v6063 = vmul.f32 %v5798, %v6048
        %v6064 = vmul.f32 %v5803, %v6048
        %v6065 = vmul.f32 %v5808, %v6048
        %v6066 = vmul.f32 %v5813, %v6048
        %v6067 = vmul.f32 %v5818, %v6048
        %v6068 = vmul.f32 %v5823, %v6048
        %v6069 = vmul.f32 %v5828, %v6048
        %v6070 = vmul.f32 %v5833, %v6048
        %v6071 = vmul.f32 %v5838, %v6048
        %v6072 = vmul.f32 %v5843, %v6048
        %v6073 = vmul.f32 %v5848, %v6048
        %v6074 = vmul.f32 %v5853, %v6048
        %v6075 = vmul.f32 %v5858, %v6048
        %v6076 = vmul.f32 %v5863, %v6048
        %v6077 = vmul.f32 %v5868, %v6048
        %v6078 = vmul.f32 %v5873, %v6048
        %v6079 = vmul.f32 %v5878, %v6048
        %v6080 = vmul.f32 %v5883, %v6048
        %v6081 = vmul.f32 %v5888, %v6048
        %v6082 = vmul.f32 %v5893, %v6048
        %v6083 = vmul.f32 %v5898, %v6048
        %v6084 = vmul.f32 %v5903, %v6048
        %v6085 = vmul.f32 %v5908, %v6048
        %v6086 = vmul.f32 %v5913, %v6048
        %v6087 = vmul.f32 %v5918, %v6048
        %v6088 = vmul.f32 %v5923, %v6048
        %v6089 = vmul.f32 %v5928, %v6048
        %v6090 = vmul.f32 %v5933, %v6048
        %v6091 = vmul.f32 %v5938, %v6048
        %v6092 = vmul.f32 %v5943, %v6048
        %v6093 = vmul.f32 %v5948, %v6048
        %v6094 = vmul.f32 %v5953, %v6048
        %v6095 = vmul.f32 %v5958, %v6048
        %v6096 = vmul.f32 %v5963, %v6048
        %v6097 = vmul.f32 %v5968, %v6048
        %v6098 = vmul.f32 %v5973, %v6048
        %v6099 = vmul.f32 %v5978, %v6048
        %v6100 = vmul.f32 %v5983, %v6048
        %v6101 = vmul.f32 %v5988, %v6048
        %v6102 = vmul.f32 %v5993, %v6048
        %v6103 = vmul.f32 %v5998, %v6048
        %v6104 = vmul.f32 %v6003, %v6048
        %v6105 = vmul.f32 %v6008, %v6048
        %v6106 = vmul.f32 %v6013, %v6048
        %v6107 = vmul.f32 %v6018, %v6048
        %v6108 = vmul.f32 %v6023, %v6048
        %v6109 = vmul.f32 %v6028, %v6048
        %v6110 = vmul.f32 %v6033, %v6048
        %v6111 = vmul.f32 %v6038, %v6048
        %v6112 = vmul.f32 %v6043, %v6048
        %v6113 = vadd.f32 %v5406, %v6049
        %v6114 = vadd.f32 %v5409, %v6050
        %v6115 = vadd.f32 %v5414, %v6051
        %v6116 = vadd.f32 %v5417, %v6052
        %v6117 = vadd.f32 %v5422, %v6053
        %v6118 = vadd.f32 %v5425, %v6054
        %v6119 = vadd.f32 %v5430, %v6055
        %v6120 = vadd.f32 %v5433, %v6056
        %v6121 = vadd.f32 %v5438, %v6057
        %v6122 = vadd.f32 %v5441, %v6058
        %v6123 = vadd.f32 %v5446, %v6059
        %v6124 = vadd.f32 %v5449, %v6060
        %v6125 = vadd.f32 %v5454, %v6061
        %v6126 = vadd.f32 %v5457, %v6062
        %v6127 = vadd.f32 %v5462, %v6063
        %v6128 = vadd.f32 %v5465, %v6064
        %v6129 = vadd.f32 %v5470, %v6065
        %v6130 = vadd.f32 %v5473, %v6066
        %v6131 = vadd.f32 %v5478, %v6067
        %v6132 = vadd.f32 %v5481, %v6068
        %v6133 = vadd.f32 %v5486, %v6069
        %v6134 = vadd.f32 %v5489, %v6070
        %v6135 = vadd.f32 %v5494, %v6071
        %v6136 = vadd.f32 %v5497, %v6072
        %v6137 = vadd.f32 %v5502, %v6073
        %v6138 = vadd.f32 %v5505, %v6074
        %v6139 = vadd.f32 %v5510, %v6075
        %v6140 = vadd.f32 %v5513, %v6076
        %v6141 = vadd.f32 %v5518, %v6077
        %v6142 = vadd.f32 %v5521, %v6078
        %v6143 = vadd.f32 %v5526, %v6079
        %v6144 = vadd.f32 %v5529, %v6080
        %v6145 = vadd.f32 %v5534, %v6081
        %v6146 = vadd.f32 %v5537, %v6082
        %v6147 = vadd.f32 %v5542, %v6083
        %v6148 = vadd.f32 %v5545, %v6084
        %v6149 = vadd.f32 %v5550, %v6085
        %v6150 = vadd.f32 %v5553, %v6086
        %v6151 = vadd.f32 %v5558, %v6087
        %v6152 = vadd.f32 %v5561, %v6088
        %v6153 = vadd.f32 %v5566, %v6089
        %v6154 = vadd.f32 %v5569, %v6090
        %v6155 = vadd.f32 %v5574, %v6091
        %v6156 = vadd.f32 %v5577, %v6092
        %v6157 = vadd.f32 %v5582, %v6093
        %v6158 = vadd.f32 %v5585, %v6094
        %v6159 = vadd.f32 %v5590, %v6095
        %v6160 = vadd.f32 %v5593, %v6096
        %v6161 = vadd.f32 %v5598, %v6097
        %v6162 = vadd.f32 %v5601, %v6098
        %v6163 = vadd.f32 %v5606, %v6099
        %v6164 = vadd.f32 %v5609, %v6100
        %v6165 = vadd.f32 %v5614, %v6101
        %v6166 = vadd.f32 %v5617, %v6102
        %v6167 = vadd.f32 %v5622, %v6103
        %v6168 = vadd.f32 %v5625, %v6104
        %v6169 = vadd.f32 %v5630, %v6105
        %v6170 = vadd.f32 %v5633, %v6106
        %v6171 = vadd.f32 %v5638, %v6107
        %v6172 = vadd.f32 %v5641, %v6108
        %v6173 = vadd.f32 %v5646, %v6109
        %v6174 = vadd.f32 %v5649, %v6110
        %v6175 = vadd.f32 %v5654, %v6111
        %v6176 = vadd.f32 %v5657, %v6112
        %v6177 = vld [vmem:[%s11 + $0x1] sm:$0x1]
        %6178 = vset.pattern.permute.xlu0 1
        %6179 = vperm.xlu0 %6178, %v5660
        %v6180 = vpop.permute.xlu0 %6179
        %6182 = vset.pattern.permute.xlu0 1
        %6183 = vperm.xlu0 %6182, %v5661
        %v6184 = vpop.permute.xlu0 %6183
        %6186 = vset.pattern.permute.xlu0 1
        %6187 = vperm.xlu0 %6186, %v5662
        %v6188 = vpop.permute.xlu0 %6187
        %6190 = vset.pattern.permute.xlu0 1
        %6191 = vperm.xlu0 %6190, %v5663
        %v6192 = vpop.permute.xlu0 %6191
        %6194 = vset.pattern.permute.xlu0 1
        %6195 = vperm.xlu0 %6194, %v5664
        %v6196 = vpop.permute.xlu0 %6195
        %6198 = vset.pattern.permute.xlu0 1
        %6199 = vperm.xlu0 %6198, %v5665
        %v6200 = vpop.permute.xlu0 %6199
        %6202 = vset.pattern.permute.xlu0 1
        %6203 = vperm.xlu0 %6202, %v5666
        %v6204 = vpop.permute.xlu0 %6203
        %6206 = vset.pattern.permute.xlu0 1
        %6207 = vperm.xlu0 %6206, %v5667
        %v6208 = vpop.permute.xlu0 %6207
        %6210 = vset.pattern.permute.xlu0 1
        %6211 = vperm.xlu0 %6210, %v5668
        %v6212 = vpop.permute.xlu0 %6211
        %6214 = vset.pattern.permute.xlu0 1
        %6215 = vperm.xlu0 %6214, %v5669
        %v6216 = vpop.permute.xlu0 %6215
        %6218 = vset.pattern.permute.xlu0 1
        %6219 = vperm.xlu0 %6218, %v5670
        %v6220 = vpop.permute.xlu0 %6219
        %6222 = vset.pattern.permute.xlu0 1
        %6223 = vperm.xlu0 %6222, %v5671
        %v6224 = vpop.permute.xlu0 %6223
        %6226 = vset.pattern.permute.xlu0 1
        %6227 = vperm.xlu0 %6226, %v5672
        %v6228 = vpop.permute.xlu0 %6227
        %6230 = vset.pattern.permute.xlu0 1
        %6231 = vperm.xlu0 %6230, %v5673
        %v6232 = vpop.permute.xlu0 %6231
        %6234 = vset.pattern.permute.xlu0 1
        %6235 = vperm.xlu0 %6234, %v5674
        %v6236 = vpop.permute.xlu0 %6235
        %6238 = vset.pattern.permute.xlu0 1
        %6239 = vperm.xlu0 %6238, %v5675
        %v6240 = vpop.permute.xlu0 %6239
        %6242 = vset.pattern.permute.xlu0 1
        %6243 = vperm.xlu0 %6242, %v5676
        %v6244 = vpop.permute.xlu0 %6243
        %6246 = vset.pattern.permute.xlu0 1
        %6247 = vperm.xlu0 %6246, %v5677
        %v6248 = vpop.permute.xlu0 %6247
        %6250 = vset.pattern.permute.xlu0 1
        %6251 = vperm.xlu0 %6250, %v5678
        %v6252 = vpop.permute.xlu0 %6251
        %6254 = vset.pattern.permute.xlu0 1
        %6255 = vperm.xlu0 %6254, %v5679
        %v6256 = vpop.permute.xlu0 %6255
        %6258 = vset.pattern.permute.xlu0 1
        %6259 = vperm.xlu0 %6258, %v5680
        %v6260 = vpop.permute.xlu0 %6259
        %6262 = vset.pattern.permute.xlu0 1
        %6263 = vperm.xlu0 %6262, %v5681
        %v6264 = vpop.permute.xlu0 %6263
        %6266 = vset.pattern.permute.xlu0 1
        %6267 = vperm.xlu0 %6266, %v5682
        %v6268 = vpop.permute.xlu0 %6267
        %6270 = vset.pattern.permute.xlu0 1
        %6271 = vperm.xlu0 %6270, %v5683
        %v6272 = vpop.permute.xlu0 %6271
        %6274 = vset.pattern.permute.xlu0 1
        %6275 = vperm.xlu0 %6274, %v5684
        %v6276 = vpop.permute.xlu0 %6275
        %6278 = vset.pattern.permute.xlu0 1
        %6279 = vperm.xlu0 %6278, %v5685
        %v6280 = vpop.permute.xlu0 %6279
        %6282 = vset.pattern.permute.xlu0 1
        %6283 = vperm.xlu0 %6282, %v5686
        %v6284 = vpop.permute.xlu0 %6283
        %6286 = vset.pattern.permute.xlu0 1
        %6287 = vperm.xlu0 %6286, %v5687
        %v6288 = vpop.permute.xlu0 %6287
        %6290 = vset.pattern.permute.xlu0 1
        %6291 = vperm.xlu0 %6290, %v5688
        %v6292 = vpop.permute.xlu0 %6291
        %6294 = vset.pattern.permute.xlu0 1
        %6295 = vperm.xlu0 %6294, %v5689
        %v6296 = vpop.permute.xlu0 %6295
        %6298 = vset.pattern.permute.xlu0 1
        %6299 = vperm.xlu0 %6298, %v5690
        %v6300 = vpop.permute.xlu0 %6299
        %6302 = vset.pattern.permute.xlu0 1
        %6303 = vperm.xlu0 %6302, %v5691
        %v6304 = vpop.permute.xlu0 %6303
        %6306 = vset.pattern.permute.xlu0 1
        %6307 = vperm.xlu0 %6306, %v5692
        %v6308 = vpop.permute.xlu0 %6307
        %6310 = vset.pattern.permute.xlu0 1
        %6311 = vperm.xlu0 %6310, %v5693
        %v6312 = vpop.permute.xlu0 %6311
        %6314 = vset.pattern.permute.xlu0 1
        %6315 = vperm.xlu0 %6314, %v5694
        %v6316 = vpop.permute.xlu0 %6315
        %6318 = vset.pattern.permute.xlu0 1
        %6319 = vperm.xlu0 %6318, %v5695
        %v6320 = vpop.permute.xlu0 %6319
        %6322 = vset.pattern.permute.xlu0 1
        %6323 = vperm.xlu0 %6322, %v5696
        %v6324 = vpop.permute.xlu0 %6323
        %6326 = vset.pattern.permute.xlu0 1
        %6327 = vperm.xlu0 %6326, %v5697
        %v6328 = vpop.permute.xlu0 %6327
        %6330 = vset.pattern.permute.xlu0 1
        %6331 = vperm.xlu0 %6330, %v5698
        %v6332 = vpop.permute.xlu0 %6331
        %6334 = vset.pattern.permute.xlu0 1
        %6335 = vperm.xlu0 %6334, %v5699
        %v6336 = vpop.permute.xlu0 %6335
        %6338 = vset.pattern.permute.xlu0 1
        %6339 = vperm.xlu0 %6338, %v5700
        %v6340 = vpop.permute.xlu0 %6339
        %6342 = vset.pattern.permute.xlu0 1
        %6343 = vperm.xlu0 %6342, %v5701
        %v6344 = vpop.permute.xlu0 %6343
        %6346 = vset.pattern.permute.xlu0 1
        %6347 = vperm.xlu0 %6346, %v5702
        %v6348 = vpop.permute.xlu0 %6347
        %6350 = vset.pattern.permute.xlu0 1
        %6351 = vperm.xlu0 %6350, %v5703
        %v6352 = vpop.permute.xlu0 %6351
        %6354 = vset.pattern.permute.xlu0 1
        %6355 = vperm.xlu0 %6354, %v5704
        %v6356 = vpop.permute.xlu0 %6355
        %6358 = vset.pattern.permute.xlu0 1
        %6359 = vperm.xlu0 %6358, %v5705
        %v6360 = vpop.permute.xlu0 %6359
        %6362 = vset.pattern.permute.xlu0 1
        %6363 = vperm.xlu0 %6362, %v5706
        %v6364 = vpop.permute.xlu0 %6363
        %6366 = vset.pattern.permute.xlu0 1
        %6367 = vperm.xlu0 %6366, %v5707
        %v6368 = vpop.permute.xlu0 %6367
        %6370 = vset.pattern.permute.xlu0 1
        %6371 = vperm.xlu0 %6370, %v5708
        %v6372 = vpop.permute.xlu0 %6371
        %6374 = vset.pattern.permute.xlu0 1
        %6375 = vperm.xlu0 %6374, %v5709
        %v6376 = vpop.permute.xlu0 %6375
        %6378 = vset.pattern.permute.xlu0 1
        %6379 = vperm.xlu0 %6378, %v5710
        %v6380 = vpop.permute.xlu0 %6379
        %6382 = vset.pattern.permute.xlu0 1
        %6383 = vperm.xlu0 %6382, %v5711
        %v6384 = vpop.permute.xlu0 %6383
        %6386 = vset.pattern.permute.xlu0 1
        %6387 = vperm.xlu0 %6386, %v5712
        %v6388 = vpop.permute.xlu0 %6387
        %6390 = vset.pattern.permute.xlu0 1
        %6391 = vperm.xlu0 %6390, %v5713
        %v6392 = vpop.permute.xlu0 %6391
        %6394 = vset.pattern.permute.xlu0 1
        %6395 = vperm.xlu0 %6394, %v5714
        %v6396 = vpop.permute.xlu0 %6395
        %6398 = vset.pattern.permute.xlu0 1
        %6399 = vperm.xlu0 %6398, %v5715
        %v6400 = vpop.permute.xlu0 %6399
        %6402 = vset.pattern.permute.xlu0 1
        %6403 = vperm.xlu0 %6402, %v5716
        %v6404 = vpop.permute.xlu0 %6403
        %6406 = vset.pattern.permute.xlu0 1
        %6407 = vperm.xlu0 %6406, %v5717
        %v6408 = vpop.permute.xlu0 %6407
        %6410 = vset.pattern.permute.xlu0 1
        %6411 = vperm.xlu0 %6410, %v5718
        %v6412 = vpop.permute.xlu0 %6411
        %6414 = vset.pattern.permute.xlu0 1
        %6415 = vperm.xlu0 %6414, %v5719
        %v6416 = vpop.permute.xlu0 %6415
        %6418 = vset.pattern.permute.xlu0 1
        %6419 = vperm.xlu0 %6418, %v5720
        %v6420 = vpop.permute.xlu0 %6419
        %6422 = vset.pattern.permute.xlu0 1
        %6423 = vperm.xlu0 %6422, %v5721
        %v6424 = vpop.permute.xlu0 %6423
        %6426 = vset.pattern.permute.xlu0 1
        %6427 = vperm.xlu0 %6426, %v5722
        %v6428 = vpop.permute.xlu0 %6427
        %6430 = vset.pattern.permute.xlu0 1
        %6431 = vperm.xlu0 %6430, %v5723
        %v6432 = vpop.permute.xlu0 %6431
        %v6434 = vlaneseq
        %v6435 = vshrl.u32 %v6434, 7
        %v6436 = vsub.s32 0, %v6435
        %v6437 = vrot.slane %v6177, %v6436
        %v6438 = vmul.f32 %v6180, %v6437
        %v6439 = vmul.f32 %v6184, %v6437
        %v6440 = vmul.f32 %v6188, %v6437
        %v6441 = vmul.f32 %v6192, %v6437
        %v6442 = vmul.f32 %v6196, %v6437
        %v6443 = vmul.f32 %v6200, %v6437
        %v6444 = vmul.f32 %v6204, %v6437
        %v6445 = vmul.f32 %v6208, %v6437
        %v6446 = vmul.f32 %v6212, %v6437
        %v6447 = vmul.f32 %v6216, %v6437
        %v6448 = vmul.f32 %v6220, %v6437
        %v6449 = vmul.f32 %v6224, %v6437
        %v6450 = vmul.f32 %v6228, %v6437
        %v6451 = vmul.f32 %v6232, %v6437
        %v6452 = vmul.f32 %v6236, %v6437
        %v6453 = vmul.f32 %v6240, %v6437
        %v6454 = vmul.f32 %v6244, %v6437
        %v6455 = vmul.f32 %v6248, %v6437
        %v6456 = vmul.f32 %v6252, %v6437
        %v6457 = vmul.f32 %v6256, %v6437
        %v6458 = vmul.f32 %v6260, %v6437
        %v6459 = vmul.f32 %v6264, %v6437
        %v6460 = vmul.f32 %v6268, %v6437
        %v6461 = vmul.f32 %v6272, %v6437
        %v6462 = vmul.f32 %v6276, %v6437
        %v6463 = vmul.f32 %v6280, %v6437
        %v6464 = vmul.f32 %v6284, %v6437
        %v6465 = vmul.f32 %v6288, %v6437
        %v6466 = vmul.f32 %v6292, %v6437
        %v6467 = vmul.f32 %v6296, %v6437
        %v6468 = vmul.f32 %v6300, %v6437
        %v6469 = vmul.f32 %v6304, %v6437
        %v6470 = vmul.f32 %v6308, %v6437
        %v6471 = vmul.f32 %v6312, %v6437
        %v6472 = vmul.f32 %v6316, %v6437
        %v6473 = vmul.f32 %v6320, %v6437
        %v6474 = vmul.f32 %v6324, %v6437
        %v6475 = vmul.f32 %v6328, %v6437
        %v6476 = vmul.f32 %v6332, %v6437
        %v6477 = vmul.f32 %v6336, %v6437
        %v6478 = vmul.f32 %v6340, %v6437
        %v6479 = vmul.f32 %v6344, %v6437
        %v6480 = vmul.f32 %v6348, %v6437
        %v6481 = vmul.f32 %v6352, %v6437
        %v6482 = vmul.f32 %v6356, %v6437
        %v6483 = vmul.f32 %v6360, %v6437
        %v6484 = vmul.f32 %v6364, %v6437
        %v6485 = vmul.f32 %v6368, %v6437
        %v6486 = vmul.f32 %v6372, %v6437
        %v6487 = vmul.f32 %v6376, %v6437
        %v6488 = vmul.f32 %v6380, %v6437
        %v6489 = vmul.f32 %v6384, %v6437
        %v6490 = vmul.f32 %v6388, %v6437
        %v6491 = vmul.f32 %v6392, %v6437
        %v6492 = vmul.f32 %v6396, %v6437
        %v6493 = vmul.f32 %v6400, %v6437
        %v6494 = vmul.f32 %v6404, %v6437
        %v6495 = vmul.f32 %v6408, %v6437
        %v6496 = vmul.f32 %v6412, %v6437
        %v6497 = vmul.f32 %v6416, %v6437
        %v6498 = vmul.f32 %v6420, %v6437
        %v6499 = vmul.f32 %v6424, %v6437
        %v6500 = vmul.f32 %v6428, %v6437
        %v6501 = vmul.f32 %v6432, %v6437
        %v6502 = vadd.f32 %v6113, %v6438
        %v6503 = vadd.f32 %v6114, %v6439
        %v6504 = vadd.f32 %v6115, %v6440
        %v6505 = vadd.f32 %v6116, %v6441
        %v6506 = vadd.f32 %v6117, %v6442
        %v6507 = vadd.f32 %v6118, %v6443
        %v6508 = vadd.f32 %v6119, %v6444
        %v6509 = vadd.f32 %v6120, %v6445
        %v6510 = vadd.f32 %v6121, %v6446
        %v6511 = vadd.f32 %v6122, %v6447
        %v6512 = vadd.f32 %v6123, %v6448
        %v6513 = vadd.f32 %v6124, %v6449
        %v6514 = vadd.f32 %v6125, %v6450
        %v6515 = vadd.f32 %v6126, %v6451
        %v6516 = vadd.f32 %v6127, %v6452
        %v6517 = vadd.f32 %v6128, %v6453
        %v6518 = vadd.f32 %v6129, %v6454
        %v6519 = vadd.f32 %v6130, %v6455
        %v6520 = vadd.f32 %v6131, %v6456
        %v6521 = vadd.f32 %v6132, %v6457
        %v6522 = vadd.f32 %v6133, %v6458
        %v6523 = vadd.f32 %v6134, %v6459
        %v6524 = vadd.f32 %v6135, %v6460
        %v6525 = vadd.f32 %v6136, %v6461
        %v6526 = vadd.f32 %v6137, %v6462
        %v6527 = vadd.f32 %v6138, %v6463
        %v6528 = vadd.f32 %v6139, %v6464
        %v6529 = vadd.f32 %v6140, %v6465
        %v6530 = vadd.f32 %v6141, %v6466
        %v6531 = vadd.f32 %v6142, %v6467
        %v6532 = vadd.f32 %v6143, %v6468
        %v6533 = vadd.f32 %v6144, %v6469
        %v6534 = vadd.f32 %v6145, %v6470
        %v6535 = vadd.f32 %v6146, %v6471
        %v6536 = vadd.f32 %v6147, %v6472
        %v6537 = vadd.f32 %v6148, %v6473
        %v6538 = vadd.f32 %v6149, %v6474
        %v6539 = vadd.f32 %v6150, %v6475
        %v6540 = vadd.f32 %v6151, %v6476
        %v6541 = vadd.f32 %v6152, %v6477
        %v6542 = vadd.f32 %v6153, %v6478
        %v6543 = vadd.f32 %v6154, %v6479
        %v6544 = vadd.f32 %v6155, %v6480
        %v6545 = vadd.f32 %v6156, %v6481
        %v6546 = vadd.f32 %v6157, %v6482
        %v6547 = vadd.f32 %v6158, %v6483
        %v6548 = vadd.f32 %v6159, %v6484
        %v6549 = vadd.f32 %v6160, %v6485
        %v6550 = vadd.f32 %v6161, %v6486
        %v6551 = vadd.f32 %v6162, %v6487
        %v6552 = vadd.f32 %v6163, %v6488
        %v6553 = vadd.f32 %v6164, %v6489
        %v6554 = vadd.f32 %v6165, %v6490
        %v6555 = vadd.f32 %v6166, %v6491
        %v6556 = vadd.f32 %v6167, %v6492
        %v6557 = vadd.f32 %v6168, %v6493
        %v6558 = vadd.f32 %v6169, %v6494
        %v6559 = vadd.f32 %v6170, %v6495
        %v6560 = vadd.f32 %v6171, %v6496
        %v6561 = vadd.f32 %v6172, %v6497
        %v6562 = vadd.f32 %v6173, %v6498
        %v6563 = vadd.f32 %v6174, %v6499
        %v6564 = vadd.f32 %v6175, %v6500
        %v6565 = vadd.f32 %v6176, %v6501
        %v6566 = vld [vmem:[%s11 + $0x2] sm:$0x1]
        %6567 = vset.pattern.permute.xlu0 2
        %6568 = vperm.xlu0 %6567, %v5660
        %v6569 = vpop.permute.xlu0 %6568
        %6571 = vset.pattern.permute.xlu0 2
        %6572 = vperm.xlu0 %6571, %v5661
        %v6573 = vpop.permute.xlu0 %6572
        %6575 = vset.pattern.permute.xlu0 2
        %6576 = vperm.xlu0 %6575, %v5662
        %v6577 = vpop.permute.xlu0 %6576
        %6579 = vset.pattern.permute.xlu0 2
        %6580 = vperm.xlu0 %6579, %v5663
        %v6581 = vpop.permute.xlu0 %6580
        %6583 = vset.pattern.permute.xlu0 2
        %6584 = vperm.xlu0 %6583, %v5664
        %v6585 = vpop.permute.xlu0 %6584
        %6587 = vset.pattern.permute.xlu0 2
        %6588 = vperm.xlu0 %6587, %v5665
        %v6589 = vpop.permute.xlu0 %6588
        %6591 = vset.pattern.permute.xlu0 2
        %6592 = vperm.xlu0 %6591, %v5666
        %v6593 = vpop.permute.xlu0 %6592
        %6595 = vset.pattern.permute.xlu0 2
        %6596 = vperm.xlu0 %6595, %v5667
        %v6597 = vpop.permute.xlu0 %6596
        %6599 = vset.pattern.permute.xlu0 2
        %6600 = vperm.xlu0 %6599, %v5668
        %v6601 = vpop.permute.xlu0 %6600
        %6603 = vset.pattern.permute.xlu0 2
        %6604 = vperm.xlu0 %6603, %v5669
        %v6605 = vpop.permute.xlu0 %6604
        %6607 = vset.pattern.permute.xlu0 2
        %6608 = vperm.xlu0 %6607, %v5670
        %v6609 = vpop.permute.xlu0 %6608
        %6611 = vset.pattern.permute.xlu0 2
        %6612 = vperm.xlu0 %6611, %v5671
        %v6613 = vpop.permute.xlu0 %6612
        %6615 = vset.pattern.permute.xlu0 2
        %6616 = vperm.xlu0 %6615, %v5672
        %v6617 = vpop.permute.xlu0 %6616
        %6619 = vset.pattern.permute.xlu0 2
        %6620 = vperm.xlu0 %6619, %v5673
        %v6621 = vpop.permute.xlu0 %6620
        %6623 = vset.pattern.permute.xlu0 2
        %6624 = vperm.xlu0 %6623, %v5674
        %v6625 = vpop.permute.xlu0 %6624
        %6627 = vset.pattern.permute.xlu0 2
        %6628 = vperm.xlu0 %6627, %v5675
        %v6629 = vpop.permute.xlu0 %6628
        %6631 = vset.pattern.permute.xlu0 2
        %6632 = vperm.xlu0 %6631, %v5676
        %v6633 = vpop.permute.xlu0 %6632
        %6635 = vset.pattern.permute.xlu0 2
        %6636 = vperm.xlu0 %6635, %v5677
        %v6637 = vpop.permute.xlu0 %6636
        %6639 = vset.pattern.permute.xlu0 2
        %6640 = vperm.xlu0 %6639, %v5678
        %v6641 = vpop.permute.xlu0 %6640
        %6643 = vset.pattern.permute.xlu0 2
        %6644 = vperm.xlu0 %6643, %v5679
        %v6645 = vpop.permute.xlu0 %6644
        %6647 = vset.pattern.permute.xlu0 2
        %6648 = vperm.xlu0 %6647, %v5680
        %v6649 = vpop.permute.xlu0 %6648
        %6651 = vset.pattern.permute.xlu0 2
        %6652 = vperm.xlu0 %6651, %v5681
        %v6653 = vpop.permute.xlu0 %6652
        %6655 = vset.pattern.permute.xlu0 2
        %6656 = vperm.xlu0 %6655, %v5682
        %v6657 = vpop.permute.xlu0 %6656
        %6659 = vset.pattern.permute.xlu0 2
        %6660 = vperm.xlu0 %6659, %v5683
        %v6661 = vpop.permute.xlu0 %6660
        %6663 = vset.pattern.permute.xlu0 2
        %6664 = vperm.xlu0 %6663, %v5684
        %v6665 = vpop.permute.xlu0 %6664
        %6667 = vset.pattern.permute.xlu0 2
        %6668 = vperm.xlu0 %6667, %v5685
        %v6669 = vpop.permute.xlu0 %6668
        %6671 = vset.pattern.permute.xlu0 2
        %6672 = vperm.xlu0 %6671, %v5686
        %v6673 = vpop.permute.xlu0 %6672
        %6675 = vset.pattern.permute.xlu0 2
        %6676 = vperm.xlu0 %6675, %v5687
        %v6677 = vpop.permute.xlu0 %6676
        %6679 = vset.pattern.permute.xlu0 2
        %6680 = vperm.xlu0 %6679, %v5688
        %v6681 = vpop.permute.xlu0 %6680
        %6683 = vset.pattern.permute.xlu0 2
        %6684 = vperm.xlu0 %6683, %v5689
        %v6685 = vpop.permute.xlu0 %6684
        %6687 = vset.pattern.permute.xlu0 2
        %6688 = vperm.xlu0 %6687, %v5690
        %v6689 = vpop.permute.xlu0 %6688
        %6691 = vset.pattern.permute.xlu0 2
        %6692 = vperm.xlu0 %6691, %v5691
        %v6693 = vpop.permute.xlu0 %6692
        %6695 = vset.pattern.permute.xlu0 2
        %6696 = vperm.xlu0 %6695, %v5692
        %v6697 = vpop.permute.xlu0 %6696
        %6699 = vset.pattern.permute.xlu0 2
        %6700 = vperm.xlu0 %6699, %v5693
        %v6701 = vpop.permute.xlu0 %6700
        %6703 = vset.pattern.permute.xlu0 2
        %6704 = vperm.xlu0 %6703, %v5694
        %v6705 = vpop.permute.xlu0 %6704
        %6707 = vset.pattern.permute.xlu0 2
        %6708 = vperm.xlu0 %6707, %v5695
        %v6709 = vpop.permute.xlu0 %6708
        %6711 = vset.pattern.permute.xlu0 2
        %6712 = vperm.xlu0 %6711, %v5696
        %v6713 = vpop.permute.xlu0 %6712
        %6715 = vset.pattern.permute.xlu0 2
        %6716 = vperm.xlu0 %6715, %v5697
        %v6717 = vpop.permute.xlu0 %6716
        %6719 = vset.pattern.permute.xlu0 2
        %6720 = vperm.xlu0 %6719, %v5698
        %v6721 = vpop.permute.xlu0 %6720
        %6723 = vset.pattern.permute.xlu0 2
        %6724 = vperm.xlu0 %6723, %v5699
        %v6725 = vpop.permute.xlu0 %6724
        %6727 = vset.pattern.permute.xlu0 2
        %6728 = vperm.xlu0 %6727, %v5700
        %v6729 = vpop.permute.xlu0 %6728
        %6731 = vset.pattern.permute.xlu0 2
        %6732 = vperm.xlu0 %6731, %v5701
        %v6733 = vpop.permute.xlu0 %6732
        %6735 = vset.pattern.permute.xlu0 2
        %6736 = vperm.xlu0 %6735, %v5702
        %v6737 = vpop.permute.xlu0 %6736
        %6739 = vset.pattern.permute.xlu0 2
        %6740 = vperm.xlu0 %6739, %v5703
        %v6741 = vpop.permute.xlu0 %6740
        %6743 = vset.pattern.permute.xlu0 2
        %6744 = vperm.xlu0 %6743, %v5704
        %v6745 = vpop.permute.xlu0 %6744
        %6747 = vset.pattern.permute.xlu0 2
        %6748 = vperm.xlu0 %6747, %v5705
        %v6749 = vpop.permute.xlu0 %6748
        %6751 = vset.pattern.permute.xlu0 2
        %6752 = vperm.xlu0 %6751, %v5706
        %v6753 = vpop.permute.xlu0 %6752
        %6755 = vset.pattern.permute.xlu0 2
        %6756 = vperm.xlu0 %6755, %v5707
        %v6757 = vpop.permute.xlu0 %6756
        %6759 = vset.pattern.permute.xlu0 2
        %6760 = vperm.xlu0 %6759, %v5708
        %v6761 = vpop.permute.xlu0 %6760
        %6763 = vset.pattern.permute.xlu0 2
        %6764 = vperm.xlu0 %6763, %v5709
        %v6765 = vpop.permute.xlu0 %6764
        %6767 = vset.pattern.permute.xlu0 2
        %6768 = vperm.xlu0 %6767, %v5710
        %v6769 = vpop.permute.xlu0 %6768
        %6771 = vset.pattern.permute.xlu0 2
        %6772 = vperm.xlu0 %6771, %v5711
        %v6773 = vpop.permute.xlu0 %6772
        %6775 = vset.pattern.permute.xlu0 2
        %6776 = vperm.xlu0 %6775, %v5712
        %v6777 = vpop.permute.xlu0 %6776
        %6779 = vset.pattern.permute.xlu0 2
        %6780 = vperm.xlu0 %6779, %v5713
        %v6781 = vpop.permute.xlu0 %6780
        %6783 = vset.pattern.permute.xlu0 2
        %6784 = vperm.xlu0 %6783, %v5714
        %v6785 = vpop.permute.xlu0 %6784
        %6787 = vset.pattern.permute.xlu0 2
        %6788 = vperm.xlu0 %6787, %v5715
        %v6789 = vpop.permute.xlu0 %6788
        %6791 = vset.pattern.permute.xlu0 2
        %6792 = vperm.xlu0 %6791, %v5716
        %v6793 = vpop.permute.xlu0 %6792
        %6795 = vset.pattern.permute.xlu0 2
        %6796 = vperm.xlu0 %6795, %v5717
        %v6797 = vpop.permute.xlu0 %6796
        %6799 = vset.pattern.permute.xlu0 2
        %6800 = vperm.xlu0 %6799, %v5718
        %v6801 = vpop.permute.xlu0 %6800
        %6803 = vset.pattern.permute.xlu0 2
        %6804 = vperm.xlu0 %6803, %v5719
        %v6805 = vpop.permute.xlu0 %6804
        %6807 = vset.pattern.permute.xlu0 2
        %6808 = vperm.xlu0 %6807, %v5720
        %v6809 = vpop.permute.xlu0 %6808
        %6811 = vset.pattern.permute.xlu0 2
        %6812 = vperm.xlu0 %6811, %v5721
        %v6813 = vpop.permute.xlu0 %6812
        %6815 = vset.pattern.permute.xlu0 2
        %6816 = vperm.xlu0 %6815, %v5722
        %v6817 = vpop.permute.xlu0 %6816
        %6819 = vset.pattern.permute.xlu0 2
        %6820 = vperm.xlu0 %6819, %v5723
        %v6821 = vpop.permute.xlu0 %6820
        %v6823 = vlaneseq
        %v6824 = vshrl.u32 %v6823, 7
        %v6825 = vsub.s32 0, %v6824
        %v6826 = vrot.slane %v6566, %v6825
        %v6827 = vmul.f32 %v6569, %v6826
        %v6828 = vmul.f32 %v6573, %v6826
        %v6829 = vmul.f32 %v6577, %v6826
        %v6830 = vmul.f32 %v6581, %v6826
        %v6831 = vmul.f32 %v6585, %v6826
        %v6832 = vmul.f32 %v6589, %v6826
        %v6833 = vmul.f32 %v6593, %v6826
        %v6834 = vmul.f32 %v6597, %v6826
        %v6835 = vmul.f32 %v6601, %v6826
        %v6836 = vmul.f32 %v6605, %v6826
        %v6837 = vmul.f32 %v6609, %v6826
        %v6838 = vmul.f32 %v6613, %v6826
        %v6839 = vmul.f32 %v6617, %v6826
        %v6840 = vmul.f32 %v6621, %v6826
        %v6841 = vmul.f32 %v6625, %v6826
        %v6842 = vmul.f32 %v6629, %v6826
        %v6843 = vmul.f32 %v6633, %v6826
        %v6844 = vmul.f32 %v6637, %v6826
        %v6845 = vmul.f32 %v6641, %v6826
        %v6846 = vmul.f32 %v6645, %v6826
        %v6847 = vmul.f32 %v6649, %v6826
        %v6848 = vmul.f32 %v6653, %v6826
        %v6849 = vmul.f32 %v6657, %v6826
        %v6850 = vmul.f32 %v6661, %v6826
        %v6851 = vmul.f32 %v6665, %v6826
        %v6852 = vmul.f32 %v6669, %v6826
        %v6853 = vmul.f32 %v6673, %v6826
        %v6854 = vmul.f32 %v6677, %v6826
        %v6855 = vmul.f32 %v6681, %v6826
        %v6856 = vmul.f32 %v6685, %v6826
        %v6857 = vmul.f32 %v6689, %v6826
        %v6858 = vmul.f32 %v6693, %v6826
        %v6859 = vmul.f32 %v6697, %v6826
        %v6860 = vmul.f32 %v6701, %v6826
        %v6861 = vmul.f32 %v6705, %v6826
        %v6862 = vmul.f32 %v6709, %v6826
        %v6863 = vmul.f32 %v6713, %v6826
        %v6864 = vmul.f32 %v6717, %v6826
        %v6865 = vmul.f32 %v6721, %v6826
        %v6866 = vmul.f32 %v6725, %v6826
        %v6867 = vmul.f32 %v6729, %v6826
        %v6868 = vmul.f32 %v6733, %v6826
        %v6869 = vmul.f32 %v6737, %v6826
        %v6870 = vmul.f32 %v6741, %v6826
        %v6871 = vmul.f32 %v6745, %v6826
        %v6872 = vmul.f32 %v6749, %v6826
        %v6873 = vmul.f32 %v6753, %v6826
        %v6874 = vmul.f32 %v6757, %v6826
        %v6875 = vmul.f32 %v6761, %v6826
        %v6876 = vmul.f32 %v6765, %v6826
        %v6877 = vmul.f32 %v6769, %v6826
        %v6878 = vmul.f32 %v6773, %v6826
        %v6879 = vmul.f32 %v6777, %v6826
        %v6880 = vmul.f32 %v6781, %v6826
        %v6881 = vmul.f32 %v6785, %v6826
        %v6882 = vmul.f32 %v6789, %v6826
        %v6883 = vmul.f32 %v6793, %v6826
        %v6884 = vmul.f32 %v6797, %v6826
        %v6885 = vmul.f32 %v6801, %v6826
        %v6886 = vmul.f32 %v6805, %v6826
        %v6887 = vmul.f32 %v6809, %v6826
        %v6888 = vmul.f32 %v6813, %v6826
        %v6889 = vmul.f32 %v6817, %v6826
        %v6890 = vmul.f32 %v6821, %v6826
        %v6891 = vadd.f32 %v6502, %v6827
        %v6892 = vadd.f32 %v6503, %v6828
        %v6893 = vadd.f32 %v6504, %v6829
        %v6894 = vadd.f32 %v6505, %v6830
        %v6895 = vadd.f32 %v6506, %v6831
        %v6896 = vadd.f32 %v6507, %v6832
        %v6897 = vadd.f32 %v6508, %v6833
        %v6898 = vadd.f32 %v6509, %v6834
        %v6899 = vadd.f32 %v6510, %v6835
        %v6900 = vadd.f32 %v6511, %v6836
        %v6901 = vadd.f32 %v6512, %v6837
        %v6902 = vadd.f32 %v6513, %v6838
        %v6903 = vadd.f32 %v6514, %v6839
        %v6904 = vadd.f32 %v6515, %v6840
        %v6905 = vadd.f32 %v6516, %v6841
        %v6906 = vadd.f32 %v6517, %v6842
        %v6907 = vadd.f32 %v6518, %v6843
        %v6908 = vadd.f32 %v6519, %v6844
        %v6909 = vadd.f32 %v6520, %v6845
        %v6910 = vadd.f32 %v6521, %v6846
        %v6911 = vadd.f32 %v6522, %v6847
        %v6912 = vadd.f32 %v6523, %v6848
        %v6913 = vadd.f32 %v6524, %v6849
        %v6914 = vadd.f32 %v6525, %v6850
        %v6915 = vadd.f32 %v6526, %v6851
        %v6916 = vadd.f32 %v6527, %v6852
        %v6917 = vadd.f32 %v6528, %v6853
        %v6918 = vadd.f32 %v6529, %v6854
        %v6919 = vadd.f32 %v6530, %v6855
        %v6920 = vadd.f32 %v6531, %v6856
        %v6921 = vadd.f32 %v6532, %v6857
        %v6922 = vadd.f32 %v6533, %v6858
        %v6923 = vadd.f32 %v6534, %v6859
        %v6924 = vadd.f32 %v6535, %v6860
        %v6925 = vadd.f32 %v6536, %v6861
        %v6926 = vadd.f32 %v6537, %v6862
        %v6927 = vadd.f32 %v6538, %v6863
        %v6928 = vadd.f32 %v6539, %v6864
        %v6929 = vadd.f32 %v6540, %v6865
        %v6930 = vadd.f32 %v6541, %v6866
        %v6931 = vadd.f32 %v6542, %v6867
        %v6932 = vadd.f32 %v6543, %v6868
        %v6933 = vadd.f32 %v6544, %v6869
        %v6934 = vadd.f32 %v6545, %v6870
        %v6935 = vadd.f32 %v6546, %v6871
        %v6936 = vadd.f32 %v6547, %v6872
        %v6937 = vadd.f32 %v6548, %v6873
        %v6938 = vadd.f32 %v6549, %v6874
        %v6939 = vadd.f32 %v6550, %v6875
        %v6940 = vadd.f32 %v6551, %v6876
        %v6941 = vadd.f32 %v6552, %v6877
        %v6942 = vadd.f32 %v6553, %v6878
        %v6943 = vadd.f32 %v6554, %v6879
        %v6944 = vadd.f32 %v6555, %v6880
        %v6945 = vadd.f32 %v6556, %v6881
        %v6946 = vadd.f32 %v6557, %v6882
        %v6947 = vadd.f32 %v6558, %v6883
        %v6948 = vadd.f32 %v6559, %v6884
        %v6949 = vadd.f32 %v6560, %v6885
        %v6950 = vadd.f32 %v6561, %v6886
        %v6951 = vadd.f32 %v6562, %v6887
        %v6952 = vadd.f32 %v6563, %v6888
        %v6953 = vadd.f32 %v6564, %v6889
        %v6954 = vadd.f32 %v6565, %v6890
        %v6955 = vmax.f32 %v6891, 0.0
        %v6956 = vmax.f32 %v6892, 0.0
        %v6957 = vmax.f32 %v6893, 0.0
        %v6958 = vmax.f32 %v6894, 0.0
        %v6959 = vmax.f32 %v6895, 0.0
        %v6960 = vmax.f32 %v6896, 0.0
        %v6961 = vmax.f32 %v6897, 0.0
        %v6962 = vmax.f32 %v6898, 0.0
        %v6963 = vmax.f32 %v6899, 0.0
        %v6964 = vmax.f32 %v6900, 0.0
        %v6965 = vmax.f32 %v6901, 0.0
        %v6966 = vmax.f32 %v6902, 0.0
        %v6967 = vmax.f32 %v6903, 0.0
        %v6968 = vmax.f32 %v6904, 0.0
        %v6969 = vmax.f32 %v6905, 0.0
        %v6970 = vmax.f32 %v6906, 0.0
        %v6971 = vmax.f32 %v6907, 0.0
        %v6972 = vmax.f32 %v6908, 0.0
        %v6973 = vmax.f32 %v6909, 0.0
        %v6974 = vmax.f32 %v6910, 0.0
        %v6975 = vmax.f32 %v6911, 0.0
        %v6976 = vmax.f32 %v6912, 0.0
        %v6977 = vmax.f32 %v6913, 0.0
        %v6978 = vmax.f32 %v6914, 0.0
        %v6979 = vmax.f32 %v6915, 0.0
        %v6980 = vmax.f32 %v6916, 0.0
        %v6981 = vmax.f32 %v6917, 0.0
        %v6982 = vmax.f32 %v6918, 0.0
        %v6983 = vmax.f32 %v6919, 0.0
        %v6984 = vmax.f32 %v6920, 0.0
        %v6985 = vmax.f32 %v6921, 0.0
        %v6986 = vmax.f32 %v6922, 0.0
        %v6987 = vmax.f32 %v6923, 0.0
        %v6988 = vmax.f32 %v6924, 0.0
        %v6989 = vmax.f32 %v6925, 0.0
        %v6990 = vmax.f32 %v6926, 0.0
        %v6991 = vmax.f32 %v6927, 0.0
        %v6992 = vmax.f32 %v6928, 0.0
        %v6993 = vmax.f32 %v6929, 0.0
        %v6994 = vmax.f32 %v6930, 0.0
        %v6995 = vmax.f32 %v6931, 0.0
        %v6996 = vmax.f32 %v6932, 0.0
        %v6997 = vmax.f32 %v6933, 0.0
        %v6998 = vmax.f32 %v6934, 0.0
        %v6999 = vmax.f32 %v6935, 0.0
        %v7000 = vmax.f32 %v6936, 0.0
        %v7001 = vmax.f32 %v6937, 0.0
        %v7002 = vmax.f32 %v6938, 0.0
        %v7003 = vmax.f32 %v6939, 0.0
        %v7004 = vmax.f32 %v6940, 0.0
        %v7005 = vmax.f32 %v6941, 0.0
        %v7006 = vmax.f32 %v6942, 0.0
        %v7007 = vmax.f32 %v6943, 0.0
        %v7008 = vmax.f32 %v6944, 0.0
        %v7009 = vmax.f32 %v6945, 0.0
        %v7010 = vmax.f32 %v6946, 0.0
        %v7011 = vmax.f32 %v6947, 0.0
        %v7012 = vmax.f32 %v6948, 0.0
        %v7013 = vmax.f32 %v6949, 0.0
        %v7014 = vmax.f32 %v6950, 0.0
        %v7015 = vmax.f32 %v6951, 0.0
        %v7016 = vmax.f32 %v6952, 0.0
        %v7017 = vmax.f32 %v6953, 0.0
        %v7018 = vmax.f32 %v6954, 0.0
        %v7019 = vpack.c.bf16 %v6956, %v6955
        %v7020 = vpack.c.bf16 %v6958, %v6957
        %v7021 = vpack.c.bf16 %v6960, %v6959
        %v7022 = vpack.c.bf16 %v6962, %v6961
        %v7023 = vpack.c.bf16 %v6964, %v6963
        %v7024 = vpack.c.bf16 %v6966, %v6965
        %v7025 = vpack.c.bf16 %v6968, %v6967
        %v7026 = vpack.c.bf16 %v6970, %v6969
        %v7027 = vpack.c.bf16 %v6972, %v6971
        %v7028 = vpack.c.bf16 %v6974, %v6973
        %v7029 = vpack.c.bf16 %v6976, %v6975
        %v7030 = vpack.c.bf16 %v6978, %v6977
        %v7031 = vpack.c.bf16 %v6980, %v6979
        %v7032 = vpack.c.bf16 %v6982, %v6981
        %v7033 = vpack.c.bf16 %v6984, %v6983
        %v7034 = vpack.c.bf16 %v6986, %v6985
        %v7035 = vpack.c.bf16 %v6988, %v6987
        %v7036 = vpack.c.bf16 %v6990, %v6989
        %v7037 = vpack.c.bf16 %v6992, %v6991
        %v7038 = vpack.c.bf16 %v6994, %v6993
        %v7039 = vpack.c.bf16 %v6996, %v6995
        %v7040 = vpack.c.bf16 %v6998, %v6997
        %v7041 = vpack.c.bf16 %v7000, %v6999
        %v7042 = vpack.c.bf16 %v7002, %v7001
        %v7043 = vpack.c.bf16 %v7004, %v7003
        %v7044 = vpack.c.bf16 %v7006, %v7005
        %v7045 = vpack.c.bf16 %v7008, %v7007
        %v7046 = vpack.c.bf16 %v7010, %v7009
        %v7047 = vpack.c.bf16 %v7012, %v7011
        %v7048 = vpack.c.bf16 %v7014, %v7013
        %v7049 = vpack.c.bf16 %v7016, %v7015
        %v7050 = vpack.c.bf16 %v7018, %v7017
        %v7051 = vld [vmem:[%s13] sm:$0xf]
        %v7052 = vld [vmem:[%s13 + $0x4] sm:$0xf]
        %v7053 = vld [vmem:[%s13 + $0x8] sm:$0xf]
        %v7054 = vld [vmem:[%s13 + $0xc] sm:$0xf]
        %v7055 = vld [vmem:[%s13 + $0x10] sm:$0xf]
        %v7056 = vld [vmem:[%s13 + $0x14] sm:$0xf]
        %v7057 = vld [vmem:[%s13 + $0x18] sm:$0xf]
        %v7058 = vld [vmem:[%s13 + $0x1c] sm:$0xf]
        %v7059 = vld [vmem:[%s13 + $0x20] sm:$0xf]
        %v7060 = vld [vmem:[%s13 + $0x24] sm:$0xf]
        %v7061 = vld [vmem:[%s13 + $0x28] sm:$0xf]
        %v7062 = vld [vmem:[%s13 + $0x2c] sm:$0xf]
        %v7063 = vld [vmem:[%s13 + $0x30] sm:$0xf]
        %v7064 = vld [vmem:[%s13 + $0x34] sm:$0xf]
        %v7065 = vld [vmem:[%s13 + $0x38] sm:$0xf]
        %v7066 = vld [vmem:[%s13 + $0x3c] sm:$0xf]
        %v7067 = vld [vmem:[%s14] sm:$0x1]
        %v7069 = vlaneseq
        %v7070 = vshrl.u32 %v7069, 7
        %v7071 = vsub.s32 0, %v7070
        %v7072 = vrot.slane %v7067, %v7071
        %v7090 = vunpack.c.l.b16 %v7051
        %v7091 = vunpack.c.l.b16 %v7052
        %v7092 = vunpack.c.l.b16 %v7053
        %v7093 = vunpack.c.l.b16 %v7054
        %v7094 = vunpack.c.l.b16 %v7055
        %v7095 = vunpack.c.l.b16 %v7056
        %v7096 = vunpack.c.l.b16 %v7057
        %v7097 = vunpack.c.l.b16 %v7058
        %v7098 = vunpack.c.l.b16 %v7059
        %v7099 = vunpack.c.l.b16 %v7060
        %v7100 = vunpack.c.l.b16 %v7061
        %v7101 = vunpack.c.l.b16 %v7062
        %v7102 = vunpack.c.l.b16 %v7063
        %v7103 = vunpack.c.l.b16 %v7064
        %v7104 = vunpack.c.l.b16 %v7065
        %v7105 = vunpack.c.l.b16 %v7066
        %v7106 = vpack.c.b16 %v7091, %v7090
        %v7107 = vpack.c.b16 %v7093, %v7092
        %v7108 = vpack.c.b16 %v7095, %v7094
        %v7109 = vpack.c.b16 %v7097, %v7096
        %v7110 = vpack.c.b16 %v7099, %v7098
        %v7111 = vpack.c.b16 %v7101, %v7100
        %v7112 = vpack.c.b16 %v7103, %v7102
        %v7113 = vpack.c.b16 %v7105, %v7104
        %7122 = vmatprep.subr.bf16.mxu0 0
        %7123 = vmatpush1.bf16.msra.mxu0 %v7106
        %7124 = vmatprep.subr.bf16.mxu0 0
        %7125 = vmatpush1.bf16.msra.mxu0 %v7107
        %7126 = vmatprep.subr.bf16.mxu0 0
        %7127 = vmatpush1.bf16.msra.mxu0 %v7108
        %7128 = vmatprep.subr.bf16.mxu0 0
        %7129 = vmatpush1.bf16.msra.mxu0 %v7109
        %7130 = vmatprep.subr.bf16.mxu0 0
        %7131 = vmatpush1.bf16.msra.mxu0 %v7110
        %7132 = vmatprep.subr.bf16.mxu0 0
        %7133 = vmatpush1.bf16.msra.mxu0 %v7111
        %7134 = vmatprep.subr.bf16.mxu0 0
        %7135 = vmatpush1.bf16.msra.mxu0 %v7112
        %7136 = vmatprep.subr.bf16.mxu0 0
        %7137 = vmatpush1.bf16.msra.mxu0 %v7113
        %7138 = vmatprep.subr.bf16.mxu0 0
        %7139 = vmatpush1.bf16.msra.mxu0 0
        %7140 = vmatprep.subr.bf16.mxu0 0
        %7141 = vmatpush1.bf16.msra.mxu0 0
        %7142 = vmatprep.subr.bf16.mxu0 0
        %7143 = vmatpush1.bf16.msra.mxu0 0
        %7144 = vmatprep.subr.bf16.mxu0 0
        %7145 = vmatpush1.bf16.msra.mxu0 0
        %7146 = vmatprep.subr.bf16.mxu0 0
        %7147 = vmatpush1.bf16.msra.mxu0 0
        %7148 = vmatprep.subr.bf16.mxu0 0
        %7149 = vmatpush1.bf16.msra.mxu0 0
        %7150 = vmatprep.subr.bf16.mxu0 0
        %7151 = vmatpush1.bf16.msra.mxu0 0
        %7152 = vmatprep.subr.bf16.mxu0 0
        %7153 = vmatpush1.bf16.msra.mxu0 0
        %7154 = vmatprep.mubr.bf16.mxu0 0
        %7155 = vmatmul.mubr.bf16.gmra.mrb[0].mxu0 %v7019
        %v7156 = vpop.f32.mrb[0].mxu0
        %v7157 = vadd.f32 %v7072, %v7156
        %v7158 = vpop.f32.mrb[0].mxu0
        %v7159 = vpop.f32.mrb[0].mxu0
        %v7160 = vadd.f32 %v7072, %v7159
        %v7161 = vpop.f32.mrb[0].mxu0
        %7162 = vmatprep.mubr.bf16.mxu0 0
        %7163 = vmatmul.mubr.bf16.gmra.mrb[0].mxu0 %v7020
        %v7164 = vpop.f32.mrb[0].mxu0
        %v7165 = vadd.f32 %v7072, %v7164
        %v7166 = vpop.f32.mrb[0].mxu0
        %v7167 = vpop.f32.mrb[0].mxu0
        %v7168 = vadd.f32 %v7072, %v7167
        %v7169 = vpop.f32.mrb[0].mxu0
        %7170 = vmatprep.mubr.bf16.mxu0 0
        %7171 = vmatmul.mubr.bf16.gmra.mrb[0].mxu0 %v7021
        %v7172 = vpop.f32.mrb[0].mxu0
        %v7173 = vadd.f32 %v7072, %v7172
        %v7174 = vpop.f32.mrb[0].mxu0
        %v7175 = vpop.f32.mrb[0].mxu0
        %v7176 = vadd.f32 %v7072, %v7175
        %v7177 = vpop.f32.mrb[0].mxu0
        %7178 = vmatprep.mubr.bf16.mxu0 0
        %7179 = vmatmul.mubr.bf16.gmra.mrb[0].mxu0 %v7022
        %v7180 = vpop.f32.mrb[0].mxu0
        %v7181 = vadd.f32 %v7072, %v7180
        %v7182 = vpop.f32.mrb[0].mxu0
        %v7183 = vpop.f32.mrb[0].mxu0
        %v7184 = vadd.f32 %v7072, %v7183
        %v7185 = vpop.f32.mrb[0].mxu0
        %7186 = vmatprep.mubr.bf16.mxu0 0
        %7187 = vmatmul.mubr.bf16.gmra.mrb[0].mxu0 %v7023
        %v7188 = vpop.f32.mrb[0].mxu0
        %v7189 = vadd.f32 %v7072, %v7188
        %v7190 = vpop.f32.mrb[0].mxu0
        %v7191 = vpop.f32.mrb[0].mxu0
        %v7192 = vadd.f32 %v7072, %v7191
        %v7193 = vpop.f32.mrb[0].mxu0
        %7194 = vmatprep.mubr.bf16.mxu0 0
        %7195 = vmatmul.mubr.bf16.gmra.mrb[0].mxu0 %v7024
        %v7196 = vpop.f32.mrb[0].mxu0
        %v7197 = vadd.f32 %v7072, %v7196
        %v7198 = vpop.f32.mrb[0].mxu0
        %v7199 = vpop.f32.mrb[0].mxu0
        %v7200 = vadd.f32 %v7072, %v7199
        %v7201 = vpop.f32.mrb[0].mxu0
        %7202 = vmatprep.mubr.bf16.mxu0 0
        %7203 = vmatmul.mubr.bf16.gmra.mrb[0].mxu0 %v7025
        %v7204 = vpop.f32.mrb[0].mxu0
        %v7205 = vadd.f32 %v7072, %v7204
        %v7206 = vpop.f32.mrb[0].mxu0
        %v7207 = vpop.f32.mrb[0].mxu0
        %v7208 = vadd.f32 %v7072, %v7207
        %v7209 = vpop.f32.mrb[0].mxu0
        %7210 = vmatprep.mubr.bf16.mxu0 0
        %7211 = vmatmul.mubr.bf16.gmra.mrb[0].mxu0 %v7026
        %v7212 = vpop.f32.mrb[0].mxu0
        %v7213 = vadd.f32 %v7072, %v7212
        %v7214 = vpop.f32.mrb[0].mxu0
        %v7215 = vpop.f32.mrb[0].mxu0
        %v7216 = vadd.f32 %v7072, %v7215
        %v7217 = vpop.f32.mrb[0].mxu0
        %7218 = vmatprep.mubr.bf16.mxu0 0
        %7219 = vmatmul.mubr.bf16.gmra.mrb[0].mxu0 %v7027
        %v7220 = vpop.f32.mrb[0].mxu0
        %v7221 = vadd.f32 %v7072, %v7220
        %v7222 = vpop.f32.mrb[0].mxu0
        %v7223 = vpop.f32.mrb[0].mxu0
        %v7224 = vadd.f32 %v7072, %v7223
        %v7225 = vpop.f32.mrb[0].mxu0
        %7226 = vmatprep.mubr.bf16.mxu0 0
        %7227 = vmatmul.mubr.bf16.gmra.mrb[0].mxu0 %v7028
        %v7228 = vpop.f32.mrb[0].mxu0
        %v7229 = vadd.f32 %v7072, %v7228
        %v7230 = vpop.f32.mrb[0].mxu0
        %v7231 = vpop.f32.mrb[0].mxu0
        %v7232 = vadd.f32 %v7072, %v7231
        %v7233 = vpop.f32.mrb[0].mxu0
        %7234 = vmatprep.mubr.bf16.mxu0 0
        %7235 = vmatmul.mubr.bf16.gmra.mrb[0].mxu0 %v7029
        %v7236 = vpop.f32.mrb[0].mxu0
        %v7237 = vadd.f32 %v7072, %v7236
        %v7238 = vpop.f32.mrb[0].mxu0
        %v7239 = vpop.f32.mrb[0].mxu0
        %v7240 = vadd.f32 %v7072, %v7239
        %v7241 = vpop.f32.mrb[0].mxu0
        %7242 = vmatprep.mubr.bf16.mxu0 0
        %7243 = vmatmul.mubr.bf16.gmra.mrb[0].mxu0 %v7030
        %v7244 = vpop.f32.mrb[0].mxu0
        %v7245 = vadd.f32 %v7072, %v7244
        %v7246 = vpop.f32.mrb[0].mxu0
        %v7247 = vpop.f32.mrb[0].mxu0
        %v7248 = vadd.f32 %v7072, %v7247
        %v7249 = vpop.f32.mrb[0].mxu0
        %7250 = vmatprep.mubr.bf16.mxu0 0
        %7251 = vmatmul.mubr.bf16.gmra.mrb[0].mxu0 %v7031
        %v7252 = vpop.f32.mrb[0].mxu0
        %v7253 = vadd.f32 %v7072, %v7252
        %v7254 = vpop.f32.mrb[0].mxu0
        %v7255 = vpop.f32.mrb[0].mxu0
        %v7256 = vadd.f32 %v7072, %v7255
        %v7257 = vpop.f32.mrb[0].mxu0
        %7258 = vmatprep.mubr.bf16.mxu0 0
        %7259 = vmatmul.mubr.bf16.gmra.mrb[0].mxu0 %v7032
        %v7260 = vpop.f32.mrb[0].mxu0
        %v7261 = vadd.f32 %v7072, %v7260
        %v7262 = vpop.f32.mrb[0].mxu0
        %v7263 = vpop.f32.mrb[0].mxu0
        %v7264 = vadd.f32 %v7072, %v7263
        %v7265 = vpop.f32.mrb[0].mxu0
        %7266 = vmatprep.mubr.bf16.mxu0 0
        %7267 = vmatmul.mubr.bf16.gmra.mrb[0].mxu0 %v7033
        %v7268 = vpop.f32.mrb[0].mxu0
        %v7269 = vadd.f32 %v7072, %v7268
        %v7270 = vpop.f32.mrb[0].mxu0
        %v7271 = vpop.f32.mrb[0].mxu0
        %v7272 = vadd.f32 %v7072, %v7271
        %v7273 = vpop.f32.mrb[0].mxu0
        %7274 = vmatprep.mubr.bf16.mxu0 0
        %7275 = vmatmul.mubr.bf16.gmra.mrb[0].mxu0 %v7034
        %v7276 = vpop.f32.mrb[0].mxu0
        %v7277 = vadd.f32 %v7072, %v7276
        %v7278 = vpop.f32.mrb[0].mxu0
        %v7279 = vpop.f32.mrb[0].mxu0
        %v7280 = vadd.f32 %v7072, %v7279
        %v7281 = vpop.f32.mrb[0].mxu0
        %7282 = vmatprep.mubr.bf16.mxu0 0
        %7283 = vmatmul.mubr.bf16.gmra.mrb[0].mxu0 %v7035
        %v7284 = vpop.f32.mrb[0].mxu0
        %v7285 = vadd.f32 %v7072, %v7284
        %v7286 = vpop.f32.mrb[0].mxu0
        %v7287 = vpop.f32.mrb[0].mxu0
        %v7288 = vadd.f32 %v7072, %v7287
        %v7289 = vpop.f32.mrb[0].mxu0
        %7290 = vmatprep.mubr.bf16.mxu0 0
        %7291 = vmatmul.mubr.bf16.gmra.mrb[0].mxu0 %v7036
        %v7292 = vpop.f32.mrb[0].mxu0
        %v7293 = vadd.f32 %v7072, %v7292
        %v7294 = vpop.f32.mrb[0].mxu0
        %v7295 = vpop.f32.mrb[0].mxu0
        %v7296 = vadd.f32 %v7072, %v7295
        %v7297 = vpop.f32.mrb[0].mxu0
        %7298 = vmatprep.mubr.bf16.mxu0 0
        %7299 = vmatmul.mubr.bf16.gmra.mrb[0].mxu0 %v7037
        %v7300 = vpop.f32.mrb[0].mxu0
        %v7301 = vadd.f32 %v7072, %v7300
        %v7302 = vpop.f32.mrb[0].mxu0
        %v7303 = vpop.f32.mrb[0].mxu0
        %v7304 = vadd.f32 %v7072, %v7303
        %v7305 = vpop.f32.mrb[0].mxu0
        %7306 = vmatprep.mubr.bf16.mxu0 0
        %7307 = vmatmul.mubr.bf16.gmra.mrb[0].mxu0 %v7038
        %v7308 = vpop.f32.mrb[0].mxu0
        %v7309 = vadd.f32 %v7072, %v7308
        %v7310 = vpop.f32.mrb[0].mxu0
        %v7311 = vpop.f32.mrb[0].mxu0
        %v7312 = vadd.f32 %v7072, %v7311
        %v7313 = vpop.f32.mrb[0].mxu0
        %7314 = vmatprep.mubr.bf16.mxu0 0
        %7315 = vmatmul.mubr.bf16.gmra.mrb[0].mxu0 %v7039
        %v7316 = vpop.f32.mrb[0].mxu0
        %v7317 = vadd.f32 %v7072, %v7316
        %v7318 = vpop.f32.mrb[0].mxu0
        %v7319 = vpop.f32.mrb[0].mxu0
        %v7320 = vadd.f32 %v7072, %v7319
        %v7321 = vpop.f32.mrb[0].mxu0
        %7322 = vmatprep.mubr.bf16.mxu0 0
        %7323 = vmatmul.mubr.bf16.gmra.mrb[0].mxu0 %v7040
        %v7324 = vpop.f32.mrb[0].mxu0
        %v7325 = vadd.f32 %v7072, %v7324
        %v7326 = vpop.f32.mrb[0].mxu0
        %v7327 = vpop.f32.mrb[0].mxu0
        %v7328 = vadd.f32 %v7072, %v7327
        %v7329 = vpop.f32.mrb[0].mxu0
        %7330 = vmatprep.mubr.bf16.mxu0 0
        %7331 = vmatmul.mubr.bf16.gmra.mrb[0].mxu0 %v7041
        %v7332 = vpop.f32.mrb[0].mxu0
        %v7333 = vadd.f32 %v7072, %v7332
        %v7334 = vpop.f32.mrb[0].mxu0
        %v7335 = vpop.f32.mrb[0].mxu0
        %v7336 = vadd.f32 %v7072, %v7335
        %v7337 = vpop.f32.mrb[0].mxu0
        %7338 = vmatprep.mubr.bf16.mxu0 0
        %7339 = vmatmul.mubr.bf16.gmra.mrb[0].mxu0 %v7042
        %v7340 = vpop.f32.mrb[0].mxu0
        %v7341 = vadd.f32 %v7072, %v7340
        %v7342 = vpop.f32.mrb[0].mxu0
        %v7343 = vpop.f32.mrb[0].mxu0
        %v7344 = vadd.f32 %v7072, %v7343
        %v7345 = vpop.f32.mrb[0].mxu0
        %7346 = vmatprep.mubr.bf16.mxu0 0
        %7347 = vmatmul.mubr.bf16.gmra.mrb[0].mxu0 %v7043
        %v7348 = vpop.f32.mrb[0].mxu0
        %v7349 = vadd.f32 %v7072, %v7348
        %v7350 = vpop.f32.mrb[0].mxu0
        %v7351 = vpop.f32.mrb[0].mxu0
        %v7352 = vadd.f32 %v7072, %v7351
        %v7353 = vpop.f32.mrb[0].mxu0
        %7354 = vmatprep.mubr.bf16.mxu0 0
        %7355 = vmatmul.mubr.bf16.gmra.mrb[0].mxu0 %v7044
        %v7356 = vpop.f32.mrb[0].mxu0
        %v7357 = vadd.f32 %v7072, %v7356
        %v7358 = vpop.f32.mrb[0].mxu0
        %v7359 = vpop.f32.mrb[0].mxu0
        %v7360 = vadd.f32 %v7072, %v7359
        %v7361 = vpop.f32.mrb[0].mxu0
        %7362 = vmatprep.mubr.bf16.mxu0 0
        %7363 = vmatmul.mubr.bf16.gmra.mrb[0].mxu0 %v7045
        %v7364 = vpop.f32.mrb[0].mxu0
        %v7365 = vadd.f32 %v7072, %v7364
        %v7366 = vpop.f32.mrb[0].mxu0
        %v7367 = vpop.f32.mrb[0].mxu0
        %v7368 = vadd.f32 %v7072, %v7367
        %v7369 = vpop.f32.mrb[0].mxu0
        %7370 = vmatprep.mubr.bf16.mxu0 0
        %7371 = vmatmul.mubr.bf16.gmra.mrb[0].mxu0 %v7046
        %v7372 = vpop.f32.mrb[0].mxu0
        %v7373 = vadd.f32 %v7072, %v7372
        %v7374 = vpop.f32.mrb[0].mxu0
        %v7375 = vpop.f32.mrb[0].mxu0
        %v7376 = vadd.f32 %v7072, %v7375
        %v7377 = vpop.f32.mrb[0].mxu0
        %7378 = vmatprep.mubr.bf16.mxu0 0
        %7379 = vmatmul.mubr.bf16.gmra.mrb[0].mxu0 %v7047
        %v7380 = vpop.f32.mrb[0].mxu0
        %v7381 = vadd.f32 %v7072, %v7380
        %v7382 = vpop.f32.mrb[0].mxu0
        %v7383 = vpop.f32.mrb[0].mxu0
        %v7384 = vadd.f32 %v7072, %v7383
        %v7385 = vpop.f32.mrb[0].mxu0
        %7386 = vmatprep.mubr.bf16.mxu0 0
        %7387 = vmatmul.mubr.bf16.gmra.mrb[0].mxu0 %v7048
        %v7388 = vpop.f32.mrb[0].mxu0
        %v7389 = vadd.f32 %v7072, %v7388
        %v7390 = vpop.f32.mrb[0].mxu0
        %v7391 = vpop.f32.mrb[0].mxu0
        %v7392 = vadd.f32 %v7072, %v7391
        %v7393 = vpop.f32.mrb[0].mxu0
        %7394 = vmatprep.mubr.bf16.mxu0 0
        %7395 = vmatmul.mubr.bf16.gmra.mrb[0].mxu0 %v7049
        %v7396 = vpop.f32.mrb[0].mxu0
        %v7397 = vadd.f32 %v7072, %v7396
        %v7398 = vpop.f32.mrb[0].mxu0
        %v7399 = vpop.f32.mrb[0].mxu0
        %v7400 = vadd.f32 %v7072, %v7399
        %v7401 = vpop.f32.mrb[0].mxu0
        %7402 = vmatprep.mubr.bf16.mxu0 0
        %7403 = vmatmul.mubr.bf16.gmra.mrb[0].mxu0 %v7050
        %v7404 = vpop.f32.mrb[0].mxu0
        %v7405 = vadd.f32 %v7072, %v7404
        %v7406 = vpop.f32.mrb[0].mxu0
        %v7407 = vpop.f32.mrb[0].mxu0
        %v7408 = vadd.f32 %v7072, %v7407
        %v7409 = vpop.f32.mrb[0].mxu0
        %7410 = vdwg.mxu0
        %v7411 = vlaneseq
        %v7412 = vand.u32 %v7411, 127
        %vm7413 = vcmp.eq.s32.totalorder %v7412, 3
        %7415 = vset.pattern.permute.xlu0 0
        %7416 = vperm.xlu0 %7415, %v4918
        %v7417 = vpop.permute.xlu0 %7416
        %7420 = vset.pattern.permute.xlu0 0
        %7421 = vperm.xlu0 %7420, %v4921
        %v7422 = vpop.permute.xlu0 %7421
        %7425 = vset.pattern.permute.xlu0 0
        %7426 = vperm.xlu0 %7425, %v4926
        %v7427 = vpop.permute.xlu0 %7426
        %7430 = vset.pattern.permute.xlu0 0
        %7431 = vperm.xlu0 %7430, %v4929
        %v7432 = vpop.permute.xlu0 %7431
        %7435 = vset.pattern.permute.xlu0 0
        %7436 = vperm.xlu0 %7435, %v4934
        %v7437 = vpop.permute.xlu0 %7436
        %7440 = vset.pattern.permute.xlu0 0
        %7441 = vperm.xlu0 %7440, %v4937
        %v7442 = vpop.permute.xlu0 %7441
        %7445 = vset.pattern.permute.xlu0 0
        %7446 = vperm.xlu0 %7445, %v4942
        %v7447 = vpop.permute.xlu0 %7446
        %7450 = vset.pattern.permute.xlu0 0
        %7451 = vperm.xlu0 %7450, %v4945
        %v7452 = vpop.permute.xlu0 %7451
        %7455 = vset.pattern.permute.xlu0 0
        %7456 = vperm.xlu0 %7455, %v4950
        %v7457 = vpop.permute.xlu0 %7456
        %7460 = vset.pattern.permute.xlu0 0
        %7461 = vperm.xlu0 %7460, %v4953
        %v7462 = vpop.permute.xlu0 %7461
        %7465 = vset.pattern.permute.xlu0 0
        %7466 = vperm.xlu0 %7465, %v4958
        %v7467 = vpop.permute.xlu0 %7466
        %7470 = vset.pattern.permute.xlu0 0
        %7471 = vperm.xlu0 %7470, %v4961
        %v7472 = vpop.permute.xlu0 %7471
        %7475 = vset.pattern.permute.xlu0 0
        %7476 = vperm.xlu0 %7475, %v4966
        %v7477 = vpop.permute.xlu0 %7476
        %7480 = vset.pattern.permute.xlu0 0
        %7481 = vperm.xlu0 %7480, %v4969
        %v7482 = vpop.permute.xlu0 %7481
        %7485 = vset.pattern.permute.xlu0 0
        %7486 = vperm.xlu0 %7485, %v4974
        %v7487 = vpop.permute.xlu0 %7486
        %7490 = vset.pattern.permute.xlu0 0
        %7491 = vperm.xlu0 %7490, %v4977
        %v7492 = vpop.permute.xlu0 %7491
        %7495 = vset.pattern.permute.xlu0 0
        %7496 = vperm.xlu0 %7495, %v4982
        %v7497 = vpop.permute.xlu0 %7496
        %7500 = vset.pattern.permute.xlu0 0
        %7501 = vperm.xlu0 %7500, %v4985
        %v7502 = vpop.permute.xlu0 %7501
        %7505 = vset.pattern.permute.xlu0 0
        %7506 = vperm.xlu0 %7505, %v4990
        %v7507 = vpop.permute.xlu0 %7506
        %7510 = vset.pattern.permute.xlu0 0
        %7511 = vperm.xlu0 %7510, %v4993
        %v7512 = vpop.permute.xlu0 %7511
        %7515 = vset.pattern.permute.xlu0 0
        %7516 = vperm.xlu0 %7515, %v4998
        %v7517 = vpop.permute.xlu0 %7516
        %7520 = vset.pattern.permute.xlu0 0
        %7521 = vperm.xlu0 %7520, %v5001
        %v7522 = vpop.permute.xlu0 %7521
        %7525 = vset.pattern.permute.xlu0 0
        %7526 = vperm.xlu0 %7525, %v5006
        %v7527 = vpop.permute.xlu0 %7526
        %7530 = vset.pattern.permute.xlu0 0
        %7531 = vperm.xlu0 %7530, %v5009
        %v7532 = vpop.permute.xlu0 %7531
        %7535 = vset.pattern.permute.xlu0 0
        %7536 = vperm.xlu0 %7535, %v5014
        %v7537 = vpop.permute.xlu0 %7536
        %7540 = vset.pattern.permute.xlu0 0
        %7541 = vperm.xlu0 %7540, %v5017
        %v7542 = vpop.permute.xlu0 %7541
        %7545 = vset.pattern.permute.xlu0 0
        %7546 = vperm.xlu0 %7545, %v5022
        %v7547 = vpop.permute.xlu0 %7546
        %7550 = vset.pattern.permute.xlu0 0
        %7551 = vperm.xlu0 %7550, %v5025
        %v7552 = vpop.permute.xlu0 %7551
        %7555 = vset.pattern.permute.xlu0 0
        %7556 = vperm.xlu0 %7555, %v5030
        %v7557 = vpop.permute.xlu0 %7556
        %7560 = vset.pattern.permute.xlu0 0
        %7561 = vperm.xlu0 %7560, %v5033
        %v7562 = vpop.permute.xlu0 %7561
        %7565 = vset.pattern.permute.xlu0 0
        %7566 = vperm.xlu0 %7565, %v5038
        %v7567 = vpop.permute.xlu0 %7566
        %7570 = vset.pattern.permute.xlu0 0
        %7571 = vperm.xlu0 %7570, %v5041
        %v7572 = vpop.permute.xlu0 %7571
        %7575 = vset.pattern.permute.xlu0 0
        %7576 = vperm.xlu0 %7575, %v5046
        %v7577 = vpop.permute.xlu0 %7576
        %7580 = vset.pattern.permute.xlu0 0
        %7581 = vperm.xlu0 %7580, %v5049
        %v7582 = vpop.permute.xlu0 %7581
        %7585 = vset.pattern.permute.xlu0 0
        %7586 = vperm.xlu0 %7585, %v5054
        %v7587 = vpop.permute.xlu0 %7586
        %7590 = vset.pattern.permute.xlu0 0
        %7591 = vperm.xlu0 %7590, %v5057
        %v7592 = vpop.permute.xlu0 %7591
        %7595 = vset.pattern.permute.xlu0 0
        %7596 = vperm.xlu0 %7595, %v5062
        %v7597 = vpop.permute.xlu0 %7596
        %7600 = vset.pattern.permute.xlu0 0
        %7601 = vperm.xlu0 %7600, %v5065
        %v7602 = vpop.permute.xlu0 %7601
        %7605 = vset.pattern.permute.xlu0 0
        %7606 = vperm.xlu0 %7605, %v5070
        %v7607 = vpop.permute.xlu0 %7606
        %7610 = vset.pattern.permute.xlu0 0
        %7611 = vperm.xlu0 %7610, %v5073
        %v7612 = vpop.permute.xlu0 %7611
        %7615 = vset.pattern.permute.xlu0 0
        %7616 = vperm.xlu0 %7615, %v5078
        %v7617 = vpop.permute.xlu0 %7616
        %7620 = vset.pattern.permute.xlu0 0
        %7621 = vperm.xlu0 %7620, %v5081
        %v7622 = vpop.permute.xlu0 %7621
        %7625 = vset.pattern.permute.xlu0 0
        %7626 = vperm.xlu0 %7625, %v5086
        %v7627 = vpop.permute.xlu0 %7626
        %7630 = vset.pattern.permute.xlu0 0
        %7631 = vperm.xlu0 %7630, %v5089
        %v7632 = vpop.permute.xlu0 %7631
        %7635 = vset.pattern.permute.xlu0 0
        %7636 = vperm.xlu0 %7635, %v5094
        %v7637 = vpop.permute.xlu0 %7636
        %7640 = vset.pattern.permute.xlu0 0
        %7641 = vperm.xlu0 %7640, %v5097
        %v7642 = vpop.permute.xlu0 %7641
        %7645 = vset.pattern.permute.xlu0 0
        %7646 = vperm.xlu0 %7645, %v5102
        %v7647 = vpop.permute.xlu0 %7646
        %7650 = vset.pattern.permute.xlu0 0
        %7651 = vperm.xlu0 %7650, %v5105
        %v7652 = vpop.permute.xlu0 %7651
        %7655 = vset.pattern.permute.xlu0 0
        %7656 = vperm.xlu0 %7655, %v5110
        %v7657 = vpop.permute.xlu0 %7656
        %7660 = vset.pattern.permute.xlu0 0
        %7661 = vperm.xlu0 %7660, %v5113
        %v7662 = vpop.permute.xlu0 %7661
        %7665 = vset.pattern.permute.xlu0 0
        %7666 = vperm.xlu0 %7665, %v5118
        %v7667 = vpop.permute.xlu0 %7666
        %7670 = vset.pattern.permute.xlu0 0
        %7671 = vperm.xlu0 %7670, %v5121
        %v7672 = vpop.permute.xlu0 %7671
        %7675 = vset.pattern.permute.xlu0 0
        %7676 = vperm.xlu0 %7675, %v5126
        %v7677 = vpop.permute.xlu0 %7676
        %7680 = vset.pattern.permute.xlu0 0
        %7681 = vperm.xlu0 %7680, %v5129
        %v7682 = vpop.permute.xlu0 %7681
        %7685 = vset.pattern.permute.xlu0 0
        %7686 = vperm.xlu0 %7685, %v5134
        %v7687 = vpop.permute.xlu0 %7686
        %7690 = vset.pattern.permute.xlu0 0
        %7691 = vperm.xlu0 %7690, %v5137
        %v7692 = vpop.permute.xlu0 %7691
        %7695 = vset.pattern.permute.xlu0 0
        %7696 = vperm.xlu0 %7695, %v5142
        %v7697 = vpop.permute.xlu0 %7696
        %7700 = vset.pattern.permute.xlu0 0
        %7701 = vperm.xlu0 %7700, %v5145
        %v7702 = vpop.permute.xlu0 %7701
        %7705 = vset.pattern.permute.xlu0 0
        %7706 = vperm.xlu0 %7705, %v5150
        %v7707 = vpop.permute.xlu0 %7706
        %7710 = vset.pattern.permute.xlu0 0
        %7711 = vperm.xlu0 %7710, %v5153
        %v7712 = vpop.permute.xlu0 %7711
        %7715 = vset.pattern.permute.xlu0 0
        %7716 = vperm.xlu0 %7715, %v5158
        %v7717 = vpop.permute.xlu0 %7716
        %7720 = vset.pattern.permute.xlu0 0
        %7721 = vperm.xlu0 %7720, %v5161
        %v7722 = vpop.permute.xlu0 %7721
        %7725 = vset.pattern.permute.xlu0 0
        %7726 = vperm.xlu0 %7725, %v5166
        %v7727 = vpop.permute.xlu0 %7726
        %7730 = vset.pattern.permute.xlu0 0
        %7731 = vperm.xlu0 %7730, %v5169
        %v7732 = vpop.permute.xlu0 %7731
        %v7734 = vsel %vm7413, %v7417, %v7157
        %v7735 = vsel %vm7413, %v7422, %v7160
        %v7736 = vsel %vm7413, %v7427, %v7165
        %v7737 = vsel %vm7413, %v7432, %v7168
        %v7738 = vsel %vm7413, %v7437, %v7173
        %v7739 = vsel %vm7413, %v7442, %v7176
        %v7740 = vsel %vm7413, %v7447, %v7181
        %v7741 = vsel %vm7413, %v7452, %v7184
        %v7742 = vsel %vm7413, %v7457, %v7189
        %v7743 = vsel %vm7413, %v7462, %v7192
        %v7744 = vsel %vm7413, %v7467, %v7197
        %v7745 = vsel %vm7413, %v7472, %v7200
        %v7746 = vsel %vm7413, %v7477, %v7205
        %v7747 = vsel %vm7413, %v7482, %v7208
        %v7748 = vsel %vm7413, %v7487, %v7213
        %v7749 = vsel %vm7413, %v7492, %v7216
        %v7750 = vsel %vm7413, %v7497, %v7221
        %v7751 = vsel %vm7413, %v7502, %v7224
        %v7752 = vsel %vm7413, %v7507, %v7229
        %v7753 = vsel %vm7413, %v7512, %v7232
        %v7754 = vsel %vm7413, %v7517, %v7237
        %v7755 = vsel %vm7413, %v7522, %v7240
        %v7756 = vsel %vm7413, %v7527, %v7245
        %v7757 = vsel %vm7413, %v7532, %v7248
        %v7758 = vsel %vm7413, %v7537, %v7253
        %v7759 = vsel %vm7413, %v7542, %v7256
        %v7760 = vsel %vm7413, %v7547, %v7261
        %v7761 = vsel %vm7413, %v7552, %v7264
        %v7762 = vsel %vm7413, %v7557, %v7269
        %v7763 = vsel %vm7413, %v7562, %v7272
        %v7764 = vsel %vm7413, %v7567, %v7277
        %v7765 = vsel %vm7413, %v7572, %v7280
        %v7766 = vsel %vm7413, %v7577, %v7285
        %v7767 = vsel %vm7413, %v7582, %v7288
        %v7768 = vsel %vm7413, %v7587, %v7293
        %v7769 = vsel %vm7413, %v7592, %v7296
        %v7770 = vsel %vm7413, %v7597, %v7301
        %v7771 = vsel %vm7413, %v7602, %v7304
        %v7772 = vsel %vm7413, %v7607, %v7309
        %v7773 = vsel %vm7413, %v7612, %v7312
        %v7774 = vsel %vm7413, %v7617, %v7317
        %v7775 = vsel %vm7413, %v7622, %v7320
        %v7776 = vsel %vm7413, %v7627, %v7325
        %v7777 = vsel %vm7413, %v7632, %v7328
        %v7778 = vsel %vm7413, %v7637, %v7333
        %v7779 = vsel %vm7413, %v7642, %v7336
        %v7780 = vsel %vm7413, %v7647, %v7341
        %v7781 = vsel %vm7413, %v7652, %v7344
        %v7782 = vsel %vm7413, %v7657, %v7349
        %v7783 = vsel %vm7413, %v7662, %v7352
        %v7784 = vsel %vm7413, %v7667, %v7357
        %v7785 = vsel %vm7413, %v7672, %v7360
        %v7786 = vsel %vm7413, %v7677, %v7365
        %v7787 = vsel %vm7413, %v7682, %v7368
        %v7788 = vsel %vm7413, %v7687, %v7373
        %v7789 = vsel %vm7413, %v7692, %v7376
        %v7790 = vsel %vm7413, %v7697, %v7381
        %v7791 = vsel %vm7413, %v7702, %v7384
        %v7792 = vsel %vm7413, %v7707, %v7389
        %v7793 = vsel %vm7413, %v7712, %v7392
        %v7794 = vsel %vm7413, %v7717, %v7397
        %v7795 = vsel %vm7413, %v7722, %v7400
        %v7796 = vsel %vm7413, %v7727, %v7405
        %v7797 = vsel %vm7413, %v7732, %v7408
        %7798 = vst [vmem:[%s579] sm:$0xff] %v7734
        %7799 = vst [vmem:[%s579 + $0x8] sm:$0xff] %v7735
        %7800 = vst [vmem:[%s579 + $0x10] sm:$0xff] %v7736
        %7801 = vst [vmem:[%s579 + $0x18] sm:$0xff] %v7737
        %7802 = vst [vmem:[%s579 + $0x20] sm:$0xff] %v7738
        %7803 = vst [vmem:[%s579 + $0x28] sm:$0xff] %v7739
        %7804 = vst [vmem:[%s579 + $0x30] sm:$0xff] %v7740
        %7805 = vst [vmem:[%s579 + $0x38] sm:$0xff] %v7741
        %7806 = vst [vmem:[%s579 + $0x40] sm:$0xff] %v7742
        %7807 = vst [vmem:[%s579 + $0x48] sm:$0xff] %v7743
        %7808 = vst [vmem:[%s579 + $0x50] sm:$0xff] %v7744
        %7809 = vst [vmem:[%s579 + $0x58] sm:$0xff] %v7745
        %7810 = vst [vmem:[%s579 + $0x60] sm:$0xff] %v7746
        %7811 = vst [vmem:[%s579 + $0x68] sm:$0xff] %v7747
        %7812 = vst [vmem:[%s579 + $0x70] sm:$0xff] %v7748
        %7813 = vst [vmem:[%s579 + $0x78] sm:$0xff] %v7749
        %7814 = vst [vmem:[%s579 + $0x80] sm:$0xff] %v7750
        %7815 = vst [vmem:[%s579 + $0x88] sm:$0xff] %v7751
        %7816 = vst [vmem:[%s579 + $0x90] sm:$0xff] %v7752
        %7817 = vst [vmem:[%s579 + $0x98] sm:$0xff] %v7753
        %7818 = vst [vmem:[%s579 + $0xa0] sm:$0xff] %v7754
        %7819 = vst [vmem:[%s579 + $0xa8] sm:$0xff] %v7755
        %7820 = vst [vmem:[%s579 + $0xb0] sm:$0xff] %v7756
        %7821 = vst [vmem:[%s579 + $0xb8] sm:$0xff] %v7757
        %7822 = vst [vmem:[%s579 + $0xc0] sm:$0xff] %v7758
        %7823 = vst [vmem:[%s579 + $0xc8] sm:$0xff] %v7759
        %7824 = vst [vmem:[%s579 + $0xd0] sm:$0xff] %v7760
        %7825 = vst [vmem:[%s579 + $0xd8] sm:$0xff] %v7761
        %7826 = vst [vmem:[%s579 + $0xe0] sm:$0xff] %v7762
        %7827 = vst [vmem:[%s579 + $0xe8] sm:$0xff] %v7763
        %7828 = vst [vmem:[%s579 + $0xf0] sm:$0xff] %v7764
        %7829 = vst [vmem:[%s579 + $0xf8] sm:$0xff] %v7765
        %7830 = vst [vmem:[%s579 + $0x100] sm:$0xff] %v7766
        %7831 = vst [vmem:[%s579 + $0x108] sm:$0xff] %v7767
        %7832 = vst [vmem:[%s579 + $0x110] sm:$0xff] %v7768
        %7833 = vst [vmem:[%s579 + $0x118] sm:$0xff] %v7769
        %7834 = vst [vmem:[%s579 + $0x120] sm:$0xff] %v7770
        %7835 = vst [vmem:[%s579 + $0x128] sm:$0xff] %v7771
        %7836 = vst [vmem:[%s579 + $0x130] sm:$0xff] %v7772
        %7837 = vst [vmem:[%s579 + $0x138] sm:$0xff] %v7773
        %7838 = vst [vmem:[%s579 + $0x140] sm:$0xff] %v7774
        %7839 = vst [vmem:[%s579 + $0x148] sm:$0xff] %v7775
        %7840 = vst [vmem:[%s579 + $0x150] sm:$0xff] %v7776
        %7841 = vst [vmem:[%s579 + $0x158] sm:$0xff] %v7777
        %7842 = vst [vmem:[%s579 + $0x160] sm:$0xff] %v7778
        %7843 = vst [vmem:[%s579 + $0x168] sm:$0xff] %v7779
        %7844 = vst [vmem:[%s579 + $0x170] sm:$0xff] %v7780
        %7845 = vst [vmem:[%s579 + $0x178] sm:$0xff] %v7781
        %7846 = vst [vmem:[%s579 + $0x180] sm:$0xff] %v7782
        %7847 = vst [vmem:[%s579 + $0x188] sm:$0xff] %v7783
        %7848 = vst [vmem:[%s579 + $0x190] sm:$0xff] %v7784
        %7849 = vst [vmem:[%s579 + $0x198] sm:$0xff] %v7785
        %7850 = vst [vmem:[%s579 + $0x1a0] sm:$0xff] %v7786
        %7851 = vst [vmem:[%s579 + $0x1a8] sm:$0xff] %v7787
        %7852 = vst [vmem:[%s579 + $0x1b0] sm:$0xff] %v7788
        %7853 = vst [vmem:[%s579 + $0x1b8] sm:$0xff] %v7789
        %7854 = vst [vmem:[%s579 + $0x1c0] sm:$0xff] %v7790
        %7855 = vst [vmem:[%s579 + $0x1c8] sm:$0xff] %v7791
        %7856 = vst [vmem:[%s579 + $0x1d0] sm:$0xff] %v7792
        %7857 = vst [vmem:[%s579 + $0x1d8] sm:$0xff] %v7793
        %7858 = vst [vmem:[%s579 + $0x1e0] sm:$0xff] %v7794
        %7859 = vst [vmem:[%s579 + $0x1e8] sm:$0xff] %v7795
        %7860 = vst [vmem:[%s579 + $0x1f0] sm:$0xff] %v7796
        %7861 = vst [vmem:[%s579 + $0x1f8] sm:$0xff] %v7797
        %7862 = vst [vmem:[%s586] sm:$0xff] %v4001
        %7863 = vst [vmem:[%s586 + $0x8] sm:$0xff] %v4002
        %7864 = vst [vmem:[%s586 + $0x10] sm:$0xff] %v4003
        %7865 = vst [vmem:[%s586 + $0x18] sm:$0xff] %v4004
        %7866 = vst [vmem:[%s586 + $0x20] sm:$0xff] %v4005
        %7867 = vst [vmem:[%s586 + $0x28] sm:$0xff] %v4006
        %7868 = vst [vmem:[%s586 + $0x30] sm:$0xff] %v4007
        %7869 = vst [vmem:[%s586 + $0x38] sm:$0xff] %v4008
        %7870 = vst [vmem:[%s586 + $0x40] sm:$0xff] %v4009
        %7871 = vst [vmem:[%s586 + $0x48] sm:$0xff] %v4010
        %7872 = vst [vmem:[%s586 + $0x50] sm:$0xff] %v4011
        %7873 = vst [vmem:[%s586 + $0x58] sm:$0xff] %v4012
        %7874 = vst [vmem:[%s586 + $0x60] sm:$0xff] %v4013
        %7875 = vst [vmem:[%s586 + $0x68] sm:$0xff] %v4014
        %7876 = vst [vmem:[%s586 + $0x70] sm:$0xff] %v4015
        %7877 = vst [vmem:[%s586 + $0x78] sm:$0xff] %v4016
        %7878 = vst [vmem:[%s586 + $0x80] sm:$0xff] %v4017
        %7879 = vst [vmem:[%s586 + $0x88] sm:$0xff] %v4018
        %7880 = vst [vmem:[%s586 + $0x90] sm:$0xff] %v4019
        %7881 = vst [vmem:[%s586 + $0x98] sm:$0xff] %v4020
        %7882 = vst [vmem:[%s586 + $0xa0] sm:$0xff] %v4021
        %7883 = vst [vmem:[%s586 + $0xa8] sm:$0xff] %v4022
        %7884 = vst [vmem:[%s586 + $0xb0] sm:$0xff] %v4023
        %7885 = vst [vmem:[%s586 + $0xb8] sm:$0xff] %v4024
        %7886 = vst [vmem:[%s586 + $0xc0] sm:$0xff] %v4025
        %7887 = vst [vmem:[%s586 + $0xc8] sm:$0xff] %v4026
        %7888 = vst [vmem:[%s586 + $0xd0] sm:$0xff] %v4027
        %7889 = vst [vmem:[%s586 + $0xd8] sm:$0xff] %v4028
        %7890 = vst [vmem:[%s586 + $0xe0] sm:$0xff] %v4029
        %7891 = vst [vmem:[%s586 + $0xe8] sm:$0xff] %v4030
        %7892 = vst [vmem:[%s586 + $0xf0] sm:$0xff] %v4031
        %7893 = vst [vmem:[%s586 + $0xf8] sm:$0xff] %v4032
        %7894 = vst [vmem:[%s586 + $0x100] sm:$0xff] %v4033
        %7895 = vst [vmem:[%s586 + $0x108] sm:$0xff] %v4034
        %7896 = vst [vmem:[%s586 + $0x110] sm:$0xff] %v4035
        %7897 = vst [vmem:[%s586 + $0x118] sm:$0xff] %v4036
        %7898 = vst [vmem:[%s586 + $0x120] sm:$0xff] %v4037
        %7899 = vst [vmem:[%s586 + $0x128] sm:$0xff] %v4038
        %7900 = vst [vmem:[%s586 + $0x130] sm:$0xff] %v4039
        %7901 = vst [vmem:[%s586 + $0x138] sm:$0xff] %v4040
        %7902 = vst [vmem:[%s586 + $0x140] sm:$0xff] %v4041
        %7903 = vst [vmem:[%s586 + $0x148] sm:$0xff] %v4042
        %7904 = vst [vmem:[%s586 + $0x150] sm:$0xff] %v4043
        %7905 = vst [vmem:[%s586 + $0x158] sm:$0xff] %v4044
        %7906 = vst [vmem:[%s586 + $0x160] sm:$0xff] %v4045
        %7907 = vst [vmem:[%s586 + $0x168] sm:$0xff] %v4046
        %7908 = vst [vmem:[%s586 + $0x170] sm:$0xff] %v4047
        %7909 = vst [vmem:[%s586 + $0x178] sm:$0xff] %v4048
        %7910 = vst [vmem:[%s586 + $0x180] sm:$0xff] %v4049
        %7911 = vst [vmem:[%s586 + $0x188] sm:$0xff] %v4050
        %7912 = vst [vmem:[%s586 + $0x190] sm:$0xff] %v4051
        %7913 = vst [vmem:[%s586 + $0x198] sm:$0xff] %v4052
        %7914 = vst [vmem:[%s586 + $0x1a0] sm:$0xff] %v4053
        %7915 = vst [vmem:[%s586 + $0x1a8] sm:$0xff] %v4054
        %7916 = vst [vmem:[%s586 + $0x1b0] sm:$0xff] %v4055
        %7917 = vst [vmem:[%s586 + $0x1b8] sm:$0xff] %v4056
        %7918 = vst [vmem:[%s586 + $0x1c0] sm:$0xff] %v4057
        %7919 = vst [vmem:[%s586 + $0x1c8] sm:$0xff] %v4058
        %7920 = vst [vmem:[%s586 + $0x1d0] sm:$0xff] %v4059
        %7921 = vst [vmem:[%s586 + $0x1d8] sm:$0xff] %v4060
        %7922 = vst [vmem:[%s586 + $0x1e0] sm:$0xff] %v4061
        %7923 = vst [vmem:[%s586 + $0x1e8] sm:$0xff] %v4062
        %7924 = vst [vmem:[%s586 + $0x1f0] sm:$0xff] %v4063
        %7925 = vst [vmem:[%s586 + $0x1f8] sm:$0xff] %v4064
        %7926 = vst [vmem:[%s586 + $0x200] sm:$0xff] %v4065
        %7927 = vst [vmem:[%s586 + $0x208] sm:$0xff] %v4066
        %7928 = vst [vmem:[%s586 + $0x210] sm:$0xff] %v4067
        %7929 = vst [vmem:[%s586 + $0x218] sm:$0xff] %v4068
        %7930 = vst [vmem:[%s586 + $0x220] sm:$0xff] %v4069
        %7931 = vst [vmem:[%s586 + $0x228] sm:$0xff] %v4070
        %7932 = vst [vmem:[%s586 + $0x230] sm:$0xff] %v4071
        %7933 = vst [vmem:[%s586 + $0x238] sm:$0xff] %v4072
        %7934 = vst [vmem:[%s586 + $0x240] sm:$0xff] %v4073
        %7935 = vst [vmem:[%s586 + $0x248] sm:$0xff] %v4074
        %7936 = vst [vmem:[%s586 + $0x250] sm:$0xff] %v4075
        %7937 = vst [vmem:[%s586 + $0x258] sm:$0xff] %v4076
        %7938 = vst [vmem:[%s586 + $0x260] sm:$0xff] %v4077
        %7939 = vst [vmem:[%s586 + $0x268] sm:$0xff] %v4078
        %7940 = vst [vmem:[%s586 + $0x270] sm:$0xff] %v4079
        %7941 = vst [vmem:[%s586 + $0x278] sm:$0xff] %v4080
        %7942 = vst [vmem:[%s586 + $0x280] sm:$0xff] %v4081
        %7943 = vst [vmem:[%s586 + $0x288] sm:$0xff] %v4082
        %7944 = vst [vmem:[%s586 + $0x290] sm:$0xff] %v4083
        %7945 = vst [vmem:[%s586 + $0x298] sm:$0xff] %v4084
        %7946 = vst [vmem:[%s586 + $0x2a0] sm:$0xff] %v4085
        %7947 = vst [vmem:[%s586 + $0x2a8] sm:$0xff] %v4086
        %7948 = vst [vmem:[%s586 + $0x2b0] sm:$0xff] %v4087
        %7949 = vst [vmem:[%s586 + $0x2b8] sm:$0xff] %v4088
        %7950 = vst [vmem:[%s586 + $0x2c0] sm:$0xff] %v4089
        %7951 = vst [vmem:[%s586 + $0x2c8] sm:$0xff] %v4090
        %7952 = vst [vmem:[%s586 + $0x2d0] sm:$0xff] %v4091
        %7953 = vst [vmem:[%s586 + $0x2d8] sm:$0xff] %v4092
        %7954 = vst [vmem:[%s586 + $0x2e0] sm:$0xff] %v4093
        %7955 = vst [vmem:[%s586 + $0x2e8] sm:$0xff] %v4094
        %7956 = vst [vmem:[%s586 + $0x2f0] sm:$0xff] %v4095
        %7957 = vst [vmem:[%s586 + $0x2f8] sm:$0xff] %v4096
        %7958 = vst [vmem:[%s586 + $0x300] sm:$0xff] %v4097
        %7959 = vst [vmem:[%s586 + $0x308] sm:$0xff] %v4098
        %7960 = vst [vmem:[%s586 + $0x310] sm:$0xff] %v4099
        %7961 = vst [vmem:[%s586 + $0x318] sm:$0xff] %v4100
        %7962 = vst [vmem:[%s586 + $0x320] sm:$0xff] %v4101
        %7963 = vst [vmem:[%s586 + $0x328] sm:$0xff] %v4102
        %7964 = vst [vmem:[%s586 + $0x330] sm:$0xff] %v4103
        %7965 = vst [vmem:[%s586 + $0x338] sm:$0xff] %v4104
        %7966 = vst [vmem:[%s586 + $0x340] sm:$0xff] %v4105
        %7967 = vst [vmem:[%s586 + $0x348] sm:$0xff] %v4106
        %7968 = vst [vmem:[%s586 + $0x350] sm:$0xff] %v4107
        %7969 = vst [vmem:[%s586 + $0x358] sm:$0xff] %v4108
        %7970 = vst [vmem:[%s586 + $0x360] sm:$0xff] %v4109
        %7971 = vst [vmem:[%s586 + $0x368] sm:$0xff] %v4110
        %7972 = vst [vmem:[%s586 + $0x370] sm:$0xff] %v4111
        %7973 = vst [vmem:[%s586 + $0x378] sm:$0xff] %v4112
        %7974 = vst [vmem:[%s586 + $0x380] sm:$0xff] %v4113
        %7975 = vst [vmem:[%s586 + $0x388] sm:$0xff] %v4114
        %7976 = vst [vmem:[%s586 + $0x390] sm:$0xff] %v4115
        %7977 = vst [vmem:[%s586 + $0x398] sm:$0xff] %v4116
        %7978 = vst [vmem:[%s586 + $0x3a0] sm:$0xff] %v4117
        %7979 = vst [vmem:[%s586 + $0x3a8] sm:$0xff] %v4118
        %7980 = vst [vmem:[%s586 + $0x3b0] sm:$0xff] %v4119
        %7981 = vst [vmem:[%s586 + $0x3b8] sm:$0xff] %v4120
        %7982 = vst [vmem:[%s586 + $0x3c0] sm:$0xff] %v4121
        %7983 = vst [vmem:[%s586 + $0x3c8] sm:$0xff] %v4122
        %7984 = vst [vmem:[%s586 + $0x3d0] sm:$0xff] %v4123
        %7985 = vst [vmem:[%s586 + $0x3d8] sm:$0xff] %v4124
        %7986 = vst [vmem:[%s586 + $0x3e0] sm:$0xff] %v4125
        %7987 = vst [vmem:[%s586 + $0x3e8] sm:$0xff] %v4126
        %7988 = vst [vmem:[%s586 + $0x3f0] sm:$0xff] %v4127
        %7989 = vst [vmem:[%s586 + $0x3f8] sm:$0xff] %v4128
        %s7990 = sand.u32 %s374, 1
        %s7991 = scalar_lea.sflag [#allocation4], %s7990
        %s7992 = sand.u32 %s374, 1
        %s7993 = smul.addr %s7992, 512
        %s7994 = scalar_lea.vmem [#allocation7], %s7993
        %s7995 = sand.u32 %s400, 1
        %s7996 = scalar_lea.sflag [#allocation9], %s7995
        %s7997 = sand.u32 %s400, 1
        %s7998 = smul.addr %s7997, 1024
        %s7999 = scalar_lea.vmem [#allocation8], %s7998
        // Predicated region
        $region89: #{tpu_custom_call.1} parent=79 // pred_check
          %p8000 = pneg %p384
        $region90: #{tpu_custom_call.1} parent=79 // pred_check_branch
          %8002 = sbr.rel (%p8000) target = $region92
        $region91: #{tpu_custom_call.1} parent=79 // pred_region
          %s8003 = smul.u32 64, %s36
          %s8005 = ssub.s32 8192, 8192
          %8006 = vsyncadd %s7991, %s8005
          %s8007 = smul.addr %s8003, 128
          %s8008 = scalar_lea.hbm %s15, %s8007
          %s8009 = sshll.u32 %s7994, 4
          %s8010 = int_to_ptr.vmem [resolvable:$true] %s8009
          %8015 = dma.vmem_to_hbm [thread:$0]  %s8010, 8192, %s8008, %s7991, 128, 128, 8
        $region92: #{tpu_custom_call.1} parent=79 // pred_fallthru
          _
        // Predicated region
        $region93: #{tpu_custom_call.1} parent=79 // pred_check
          %p8016 = pneg %p410
        $region94: #{tpu_custom_call.1} parent=79 // pred_check_branch
          %8018 = sbr.rel (%p8016) target = $region96
        $region95: #{tpu_custom_call.1} parent=79 // pred_region
          %s8019 = smul.u32 64, %s36
          %s8021 = ssub.s32 16384, 16384
          %8022 = vsyncadd %s7996, %s8021
          %s8023 = smul.addr %s8019, 2
          %s8024 = smul.addr %s8023, 128
          %s8025 = scalar_lea.hbm %s16, %s8024
          %s8026 = sshll.u32 %s7999, 4
          %s8027 = int_to_ptr.vmem [resolvable:$true] %s8026
          %8032 = dma.vmem_to_hbm [thread:$0]  %s8027, 16384, %s8025, %s7996, 256, 256, 16
        $region96: #{tpu_custom_call.1} parent=79 // pred_fallthru
          _
      $region80: #{tpu_custom_call.1} parent=5 // pred_fallthru
        _
      %p8033 = scmp.le.s32.totalorder 2, %s31
      // Predicated region
      $region97: #{tpu_custom_call.1} parent=5 // pred_check
        %p8034 = pneg %p8033
      $region98: #{tpu_custom_call.1} parent=5 // pred_check_branch
        %8036 = sbr.rel (%p8034) target = $region100
      $region99: #{tpu_custom_call.1} parent=5 // pred_region
        %s8037 = ssub.s32 %s31, 2
        // Predicated region
        $region101: #{tpu_custom_call.1} parent=99 // pred_check
          %p8038 = pneg %p390
        $region102: #{tpu_custom_call.1} parent=99 // pred_check_branch
          %8040 = sbr.rel (%p8038) target = $region104
        $region103: #{tpu_custom_call.1} parent=99 // pred_region
          %s8041 = sand.u32 %s375, 1
          %s8042 = scalar_lea.sflag [#allocation4], %s8041
          %s8043 = sand.u32 %s375, 1
          %s8044 = smul.addr %s8043, 512
          %s8045 = scalar_lea.vmem [#allocation7], %s8044
          %8046 = dma.done %s8042, 8192
        $region104: #{tpu_custom_call.1} parent=99 // pred_fallthru
          _
        // Predicated region
        $region105: #{tpu_custom_call.1} parent=99 // pred_check
          %p8047 = pneg %p416
        $region106: #{tpu_custom_call.1} parent=99 // pred_check_branch
          %8049 = sbr.rel (%p8047) target = $region108
        $region107: #{tpu_custom_call.1} parent=99 // pred_region
          %s8050 = sand.u32 %s401, 1
          %s8051 = scalar_lea.sflag [#allocation9], %s8050
          %s8052 = sand.u32 %s401, 1
          %s8053 = smul.addr %s8052, 1024
          %s8054 = scalar_lea.vmem [#allocation8], %s8053
          %8055 = dma.done %s8051, 16384
        $region108: #{tpu_custom_call.1} parent=99 // pred_fallthru
          _
      $region100: #{tpu_custom_call.1} parent=5 // pred_fallthru
        _
    $region6: #{tpu_custom_call.1} parent=1 // loop_footer
      %s35 = sadd.s32 1, %s31
    $region7: #{tpu_custom_call.1} parent=1 // loop_footer_branch
      %30 = sbr.rel target = $region3
    $region8: #{tpu_custom_call.1} parent=1 // loop_exit
      _
    %8056 = vsyncpa [#allocation3], 1
    %s8057 = scalar_lea.sflag [#allocation3], 1
    %8058 = vsyncpa %s8057, 1
    %8059 = vsyncpa [#allocation6], 1
    %8060 = vsyncpa [#allocation4], 1
    %s8061 = scalar_lea.sflag [#allocation4], 1
    %8062 = vsyncpa %s8061, 1
    %8063 = vsyncpa [#allocation9], 1
    %s8064 = scalar_lea.sflag [#allocation9], 1
    %8065 = vsyncpa %s8064, 1

</llo_original>
